<compile_context>
chip_gen: v7x
topology: tpu7x:2x2x1
jax: 0.10.0
libtpu: 0.0.40
codegen_flags: <defaults>
</compile_context>

<pallas_src>
import functools

import numpy as np
import jax
import jax.numpy as jnp
from jax.experimental import pallas as pl
from jax.experimental.pallas import tpu as pltpu

_BN_EPS = 1e-5
# Scoped-VMEM budget: stays inside v7x's 64 MiB physical VMEM; on v5e/v6e
# (128 MiB) it could be raised, but every per-step working set here is tiny.
_VMEM_LIMIT = 48 * 1024 * 1024


def _pick_lane_tile(L, target=1024):
    """Largest lane tile <= target that divides L (multiple of 128 if possible)."""
    if L <= target:
        return L
    t = (target // 128) * 128
    while t >= 128:
        if L % t == 0:
            return t
        t -= 128
    return L


# --------------------- pass 1 (down): conv + per-image stats ---------------------
def _conv_stats_kernel(xph_ref, w_ref, b_ref, y_ref, sum_ref, sq_ref, patch_ref,
                       *, s, ks, Ho, Wo, C):
    """5x5 / stride-s conv for one image as a single MXU matmul + BN partials.

    xph_ref  : (s*s, 1, C, Hq, Wq)   phase-decomposed padded image (channel-major)
    w_ref    : (Cout, ks*ks*C)       weight, columns ordered (di, dj, ci)
    b_ref    : (Cout, 1)             conv bias
    y_ref    : (1, Cout, Ho*Wo)      conv output, channel-major (lanes = pixels)
    sum_ref  : (1, Cout, 1)          per-image per-channel sum   (partial)
    sq_ref   : (1, Cout, 1)          per-image per-channel sum^2 (partial)
    patch_ref: (ks*ks*C, Ho*Wo)      VMEM im2col patch scratch
    """
    # Build the patch matrix with plain 2-D VMEM copies (no reshapes): for each
    # tap, copy each output row's window (C, Wo) into the flattened lane range.
    # TODO(synk): for large Ho*Wo, collapse these per-row copies by keeping
    # Wq-wide rows in the patch (single copy per tap) + lane-masked stats.
    for di in range(ks):
        r0, pi = divmod(di, s)
        for dj in range(ks):
            c0, pj = divmod(dj, s)
            tap = di * ks + dj
            p = pi * s + pj
            for h in range(Ho):
                patch_ref[tap * C:(tap + 1) * C, h * Wo:(h + 1) * Wo] = (
                    xph_ref[p, 0, :, r0 + h, c0:c0 + Wo])
    # One big matmul: K = ks*ks*C, lanes = Ho*Wo, output already channel-major.
    y = jnp.dot(w_ref[...], patch_ref[...],
                preferred_element_type=jnp.float32) + b_ref[...]
    y_ref[0] = y
    sum_ref[0] = jnp.sum(y, axis=1, keepdims=True)
    sq_ref[0] = jnp.sum(y * y, axis=1, keepdims=True)


# ---------------- pass 1 (up): conv-transpose (stride == k) + stats ----------------
def _tconv_stats_kernel(x_ref, w_ref, b_ref, y_ref, sum_ref, sq_ref):
    """ConvTranspose2d with stride == kernel_size for one image + BN partials.

    x_ref   : (1, Cin, H*W)
    w_ref   : (Cout*k*k, Cin)        rows ordered (co, di, dj)
    b_ref   : (Cout*k*k, 1)
    y_ref   : (1, Cout*k*k, H*W)     lanes = input pixels
    sum_ref : (1, Cout*k*k, 1)       per-image per-row partial sums
    sq_ref  : (1, Cout*k*k, 1)
    """
    y = jnp.dot(w_ref[...], x_ref[0],
                preferred_element_type=jnp.float32) + b_ref[...]
    y_ref[0] = y
    sum_ref[0] = jnp.sum(y, axis=1, keepdims=True)
    sq_ref[0] = jnp.sum(y * y, axis=1, keepdims=True)


# --------------------- pass 2 (shared): BN apply + ReLU ---------------------
def _bn_apply_relu_kernel(y_ref, scale_ref, shift_ref, o_ref):
    """Pure scale-add-ReLU stream on one (1, C, Lt) lane tile."""
    o_ref[...] = jnp.maximum(y_ref[...] * scale_ref[...] + shift_ref[...], 0.0)


def _bn_scale_shift(ch_sum, ch_sq, gamma, beta, *, count):
    """Fold per-channel sums into BN scale/shift once (tiny XLA op)."""
    mean = ch_sum / count
    # TODO(synk): E[y^2]-E[y]^2 in f32 can cancel for large |mean|/std; switch to
    # a centered second pass / Welford if tighter tolerances are ever required.
    var = jnp.maximum(ch_sq / count - mean * mean, 0.0)
    scale = gamma.reshape(-1, 1) * jax.lax.rsqrt(var + _BN_EPS)
    shift = beta.reshape(-1, 1) - mean * scale
    return scale, shift


class TransitionModulePallas:
    def __init__(self, input_channels, output_channels, input_size, output_size, key):
        if not (input_size % output_size == 0 or output_size % input_size == 0):
            raise Exception('Activation Map Size Mismatch!')
        self.cin = input_channels
        self.cout = output_channels
        k0, k1, k2, k3 = jax.random.split(key, 4)
        if input_size >= output_size:
            self.mode = 'down'
            self.stride = input_size // output_size
            self.ksize = 5
            self.pad = 2
            # Conv2d weight shape (Cout, Cin, 5, 5)
            self.w = 0.1 * jax.random.normal(
                k0, (output_channels, input_channels, 5, 5), jnp.float32)
            self.b = 0.1 * jax.random.normal(k1, (output_channels,), jnp.float32)
        else:
            self.mode = 'up'
            self.k = output_size // input_size
            # ConvTranspose2d weight shape (Cin, Cout, k, k)
            self.w = 0.1 * jax.random.normal(
                k0, (input_channels, output_channels, self.k, self.k), jnp.float32)
            self.b = 0.1 * jax.random.normal(k1, (output_channels,), jnp.float32)
        # BatchNorm affine params (deterministic, non-trivial)
        self.gamma = 1.0 + 0.1 * jax.random.normal(k2, (output_channels,), jnp.float32)
        self.beta = 0.1 * jax.random.normal(k3, (output_channels,), jnp.float32)

    def __call__(self, x):
        if self.mode == 'down':
            return self._forward_down(x)
        return self._forward_up(x)

    # ---------------- shared pass 2 launcher ----------------
    def _bn_relu(self, y, scale_rows, shift_rows):
        N, Crows, L = y.shape
        Lt = _pick_lane_tile(L)
        grid = (N, L // Lt)
        return pl.pallas_call(
            _bn_apply_relu_kernel,
            grid=grid,
            in_specs=[
                pl.BlockSpec((1, Crows, Lt), lambda n, t: (n, 0, t)),
                pl.BlockSpec((Crows, 1), lambda n, t: (0, 0)),
                pl.BlockSpec((Crows, 1), lambda n, t: (0, 0)),
            ],
            out_specs=pl.BlockSpec((1, Crows, Lt), lambda n, t: (n, 0, t)),
            out_shape=jax.ShapeDtypeStruct((N, Crows, L), jnp.float32),
            compiler_params=pltpu.CompilerParams(
                dimension_semantics=("parallel", "parallel"),
                vmem_limit_bytes=_VMEM_LIMIT),
        )(y, scale_rows, shift_rows)

    # ---------------- downsample branch: Conv2d(5, s, pad=2) + BN + ReLU ------------
    def _forward_down(self, x):
        N, C, H, W = x.shape
        s, ks, pad = self.stride, self.ksize, self.pad
        cout = self.cout
        Ho = (H + 2 * pad - ks) // s + 1
        Wo = (W + 2 * pad - ks) // s + 1
        L = Ho * Wo
        # Phase-decomposed padded input, channel-major (lane axis = spatial),
        # ~1x input bytes of wrapper glue instead of a 25x host im2col.
        Hq = max(-(-(H + 2 * pad) // s), (ks - 1) // s + Ho)
        Wq = max(-(-(W + 2 * pad) // s), (ks - 1) // s + Wo)
        xp = jnp.pad(x, ((0, 0), (0, 0),
                         (pad, Hq * s - H - pad),
                         (pad, Wq * s - W - pad)))
        xph = xp.reshape(N, C, Hq, s, Wq, s)
        xph = xph.transpose(3, 5, 0, 1, 2, 4).reshape(s * s, N, C, Hq, Wq)
        # Weight (Cout, Cin, 5, 5) -> (Cout, ks*ks*Cin), columns ordered (di,dj,ci).
        w2 = jnp.transpose(self.w, (0, 2, 3, 1)).reshape(cout, ks * ks * C)
        b2 = self.b.reshape(cout, 1)

        # TODO(synk): for very large H*W, additionally tile the pixel axis with
        # halo windows instead of one whole padded image per grid step.
        y, sum_p, sq_p = pl.pallas_call(
            functools.partial(_conv_stats_kernel, s=s, ks=ks, Ho=Ho, Wo=Wo, C=C),
            grid=(N,),
            in_specs=[
                pl.BlockSpec((s * s, 1, C, Hq, Wq), lambda n: (0, n, 0, 0, 0)),
                pl.BlockSpec((cout, ks * ks * C), lambda n: (0, 0)),
                pl.BlockSpec((cout, 1), lambda n: (0, 0)),
            ],
            out_specs=(
                pl.BlockSpec((1, cout, L), lambda n: (n, 0, 0)),
                pl.BlockSpec((1, cout, 1), lambda n: (n, 0, 0)),
                pl.BlockSpec((1, cout, 1), lambda n: (n, 0, 0)),
            ),
            out_shape=(
                jax.ShapeDtypeStruct((N, cout, L), jnp.float32),
                jax.ShapeDtypeStruct((N, cout, 1), jnp.float32),
                jax.ShapeDtypeStruct((N, cout, 1), jnp.float32),
            ),
            scratch_shapes=[pltpu.VMEM((ks * ks * C, L), jnp.float32)],
            compiler_params=pltpu.CompilerParams(
                dimension_semantics=("parallel",),   # per-image partial stats: no race
                vmem_limit_bytes=_VMEM_LIMIT),
        )(xph, w2, b2)

        ch_sum = jnp.sum(sum_p, axis=0)              # (Cout, 1)
        ch_sq = jnp.sum(sq_p, axis=0)                # (Cout, 1)
        scale, shift = _bn_scale_shift(ch_sum, ch_sq, self.gamma, self.beta,
                                       count=N * L)
        out = self._bn_relu(y, scale, shift)
        # Output is already channel-major -> NCHW reshape is free (no transpose).
        return out.reshape(N, cout, Ho, Wo)

    # ------------- upsample branch: ConvTranspose2d(k, stride=k) + BN + ReLU --------
    def _forward_up(self, x):
        N, C, H, W = x.shape
        k, cout = self.k, self.cout
        kk = k * k
        ckk = cout * kk
        HW = H * W
        x2 = x.reshape(N, C, HW)                          # free (NCHW is contiguous)
        wt2 = self.w.reshape(C, ckk).T                    # (Cout*kk, Cin), tiny
        b_rep = jnp.repeat(self.b, kk).reshape(ckk, 1)    # kk copies of the bias

        y, sum_p, sq_p = pl.pallas_call(
            _tconv_stats_kernel,
            grid=(N,),
            in_specs=[
                pl.BlockSpec((1, C, HW), lambda n: (n, 0, 0)),
                pl.BlockSpec((ckk, C), lambda n: (0, 0)),
                pl.BlockSpec((ckk, 1), lambda n: (0, 0)),
            ],
            out_specs=(
                pl.BlockSpec((1, ckk, HW), lambda n: (n, 0, 0)),
                pl.BlockSpec((1, ckk, 1), lambda n: (n, 0, 0)),
                pl.BlockSpec((1, ckk, 1), lambda n: (n, 0, 0)),
            ),
            out_shape=(
                jax.ShapeDtypeStruct((N, ckk, HW), jnp.float32),
                jax.ShapeDtypeStruct((N, ckk, 1), jnp.float32),
                jax.ShapeDtypeStruct((N, ckk, 1), jnp.float32),
            ),
            compiler_params=pltpu.CompilerParams(
                dimension_semantics=("parallel",),   # per-image partial stats
                vmem_limit_bytes=_VMEM_LIMIT),
        )(x2, wt2, b_rep)

        # Fold per-image per-(co,di,dj) partials into per-channel BN scale/shift
        # (tiny XLA ops; heavy pixel reductions already happened in the kernel).
        row_sum = jnp.sum(sum_p, axis=0)[:, 0]            # (ckk,)
        row_sq = jnp.sum(sq_p, axis=0)[:, 0]
        ch_sum = jnp.sum(row_sum.reshape(cout, kk), axis=1, keepdims=True)
        ch_sq = jnp.sum(row_sq.reshape(cout, kk), axis=1, keepdims=True)
        scale, shift = _bn_scale_shift(ch_sum, ch_sq, self.gamma, self.beta,
                                       count=N * HW * kk)
        scale_rows = jnp.repeat(scale[:, 0], kk).reshape(ckk, 1)
        shift_rows = jnp.repeat(shift[:, 0], kk).reshape(ckk, 1)

        o = self._bn_relu(y, scale_rows, shift_rows)
        # TODO(synk): fuse this depth-to-space interleave into the pass-2 store
        # pattern (in-kernel k-way lane interleave + dense store) to save one
        # HBM round trip of the upsampled activation.
        o = o.reshape(N, cout, k, k, H, W)
        o = jnp.transpose(o, (0, 1, 4, 2, 5, 3)).reshape(N, cout, H * k, W * k)
        return o


# ----------------------------- pure-JAX reference ---------------------------
def _ref_forward(mod, x):
    if mod.mode == 'down':
        y = jax.lax.conv_general_dilated(
            x, mod.w, window_strides=(mod.stride, mod.stride),
            padding=((2, 2), (2, 2)),
            dimension_numbers=('NCHW', 'OIHW', 'NCHW'))
        y = y + mod.b.reshape(1, -1, 1, 1)
    else:
        k = mod.k
        N, C, H, W = x.shape
        y6 = jnp.einsum('bcij,codq->boijdq', x, mod.w)       # (N, Cout, H, W, k, k)
        y = jnp.transpose(y6, (0, 1, 2, 4, 3, 5)).reshape(N, mod.cout, H * k, W * k)
        y = y + mod.b.reshape(1, -1, 1, 1)
    mean = jnp.mean(y, axis=(0, 2, 3), keepdims=True)
    var = jnp.mean((y - mean) ** 2, axis=(0, 2, 3), keepdims=True)
    yn = (y - mean) * jax.lax.rsqrt(var + _BN_EPS)
    yn = yn * mod.gamma.reshape(1, -1, 1, 1) + mod.beta.reshape(1, -1, 1, 1)
    return jnp.maximum(yn, 0.0)


if __name__ == "__main__":
    key = jax.random.PRNGKey(0)
    kx1, kx2, kp1, kp2 = jax.random.split(key, 4)

    # Downsample config: Conv2d branch (input_size=16 >= output_size=8, stride=2)
    mod_d = TransitionModulePallas(4, 8, 16, 8, kp1)
    x_d = jax.random.normal(kx1, (2, 4, 16, 16), jnp.float32)
    fwd_d = jax.jit(mod_d.__call__)
    out_d = jax.block_until_ready(fwd_d(x_d))
    ref_d = _ref_forward(mod_d, x_d)
    np.testing.assert_allclose(np.asarray(out_d), np.asarray(ref_d), rtol=1e-4, atol=1e-4)

    # Upsample config: ConvTranspose2d branch (input_size=8 < output_size=16, k=2)
    mod_u = TransitionModulePallas(4, 8, 8, 16, kp2)
    x_u = jax.random.normal(kx2, (2, 4, 8, 8), jnp.float32)
    fwd_u = jax.jit(mod_u.__call__)
    out_u = jax.block_until_ready(fwd_u(x_u))
    ref_u = _ref_forward(mod_u, x_u)
    np.testing.assert_allclose(np.asarray(out_u), np.asarray(ref_u), rtol=1e-4, atol=1e-4)

    print("KERNEL_OK")
</pallas_src>

<mosaic_0001>
module attributes {stable_mosaic.version = 11 : i64} {
  func.func @_conv_stats_kernel(%arg0: i32, %arg1: memref<4x1x4x10x10xf32, #tpu.memory_space<vmem>>, %arg2: memref<8x100xf32, #tpu.memory_space<vmem>>, %arg3: memref<8x1xf32, #tpu.memory_space<vmem>>, %arg4: memref<1x8x64xf32, #tpu.memory_space<vmem>>, %arg5: memref<1x8x1xf32, #tpu.memory_space<vmem>>, %arg6: memref<1x8x1xf32, #tpu.memory_space<vmem>>, %arg7: memref<100x64xf32, #tpu.memory_space<vmem>>) attributes {dimension_semantics = [#tpu.dimension_semantics<parallel>], iteration_bounds = array<i64: 2>, scalar_prefetch = 0 : i64, scratch_operands = 1 : i64, tpu.core_type = #tpu.core_type<tc>, window_params = [{transform_indices = @transform_0, window_bounds = array<i64: 4, 1, 4, 10, 10>}, {pipeline_mode = #tpu.pipeline_mode<synchronous>, transform_indices = @transform_1, window_bounds = array<i64: 8, 100>}, {pipeline_mode = #tpu.pipeline_mode<synchronous>, transform_indices = @transform_2, window_bounds = array<i64: 8, 1>}, {transform_indices = @transform_3, window_bounds = array<i64: 1, 8, 64>}, {transform_indices = @transform_4, window_bounds = array<i64: 1, 8, 1>}, {transform_indices = @transform_5, window_bounds = array<i64: 1, 8, 1>}]} {
    %c0 = arith.constant 0 : index
    %c0_0 = arith.constant 0 : index
    %c0_1 = arith.constant 0 : index
    %c0_2 = arith.constant 0 : index
    %c0_3 = arith.constant 0 : index
    %0 = vector.load %arg1[%c0, %c0_0, %c0_1, %c0_2, %c0_3] : memref<4x1x4x10x10xf32, #tpu.memory_space<vmem>>, vector<1x1x4x1x8xf32>
    %1 = vector.shape_cast %0 : vector<1x1x4x1x8xf32> to vector<4x8xf32>
    %c0_4 = arith.constant 0 : index
    %c0_5 = arith.constant 0 : index
    %2 = vector.load %arg7[%c0_4, %c0_5] : memref<100x64xf32, #tpu.memory_space<vmem>>, vector<4x8xf32>
    tpu.vector_store %arg7[%c0_4, %c0_5], %1 {strides = array<i32>} : memref<100x64xf32, #tpu.memory_space<vmem>>, vector<4x8xf32>,
    %c0_6 = arith.constant 0 : index
    %c0_7 = arith.constant 0 : index
    %c0_8 = arith.constant 0 : index
    %c1 = arith.constant 1 : index
    %c0_9 = arith.constant 0 : index
    %3 = vector.load %arg1[%c0_6, %c0_7, %c0_8, %c1, %c0_9] : memref<4x1x4x10x10xf32, #tpu.memory_space<vmem>>, vector<1x1x4x1x8xf32>
    %4 = vector.shape_cast %3 : vector<1x1x4x1x8xf32> to vector<4x8xf32>
    %c0_10 = arith.constant 0 : index
    %c8 = arith.constant 8 : index
    %5 = vector.load %arg7[%c0_10, %c8] : memref<100x64xf32, #tpu.memory_space<vmem>>, vector<4x8xf32>
    tpu.vector_store %arg7[%c0_10, %c8], %4 {strides = array<i32>} : memref<100x64xf32, #tpu.memory_space<vmem>>, vector<4x8xf32>,
    %c0_11 = arith.constant 0 : index
    %c0_12 = arith.constant 0 : index
    %c0_13 = arith.constant 0 : index
    %c2 = arith.constant 2 : index
    %c0_14 = arith.constant 0 : index
    %6 = vector.load %arg1[%c0_11, %c0_12, %c0_13, %c2, %c0_14] : memref<4x1x4x10x10xf32, #tpu.memory_space<vmem>>, vector<1x1x4x1x8xf32>
    %7 = vector.shape_cast %6 : vector<1x1x4x1x8xf32> to vector<4x8xf32>
    %c0_15 = arith.constant 0 : index
    %c16 = arith.constant 16 : index
    %8 = vector.load %arg7[%c0_15, %c16] : memref<100x64xf32, #tpu.memory_space<vmem>>, vector<4x8xf32>
    tpu.vector_store %arg7[%c0_15, %c16], %7 {strides = array<i32>} : memref<100x64xf32, #tpu.memory_space<vmem>>, vector<4x8xf32>,
    %c0_16 = arith.constant 0 : index
    %c0_17 = arith.constant 0 : index
    %c0_18 = arith.constant 0 : index
    %c3 = arith.constant 3 : index
    %c0_19 = arith.constant 0 : index
    %9 = vector.load %arg1[%c0_16, %c0_17, %c0_18, %c3, %c0_19] : memref<4x1x4x10x10xf32, #tpu.memory_space<vmem>>, vector<1x1x4x1x8xf32>
    %10 = vector.shape_cast %9 : vector<1x1x4x1x8xf32> to vector<4x8xf32>
    %c0_20 = arith.constant 0 : index
    %c24 = arith.constant 24 : index
    %11 = vector.load %arg7[%c0_20, %c24] : memref<100x64xf32, #tpu.memory_space<vmem>>, vector<4x8xf32>
    tpu.vector_store %arg7[%c0_20, %c24], %10 {strides = array<i32>} : memref<100x64xf32, #tpu.memory_space<vmem>>, vector<4x8xf32>,
    %c0_21 = arith.constant 0 : index
    %c0_22 = arith.constant 0 : index
    %c0_23 = arith.constant 0 : index
    %c4 = arith.constant 4 : index
    %c0_24 = arith.constant 0 : index
    %12 = vector.load %arg1[%c0_21, %c0_22, %c0_23, %c4, %c0_24] : memref<4x1x4x10x10xf32, #tpu.memory_space<vmem>>, vector<1x1x4x1x8xf32>
    %13 = vector.shape_cast %12 : vector<1x1x4x1x8xf32> to vector<4x8xf32>
    %c0_25 = arith.constant 0 : index
    %c32 = arith.constant 32 : index
    %14 = vector.load %arg7[%c0_25, %c32] : memref<100x64xf32, #tpu.memory_space<vmem>>, vector<4x8xf32>
    tpu.vector_store %arg7[%c0_25, %c32], %13 {strides = array<i32>} : memref<100x64xf32, #tpu.memory_space<vmem>>, vector<4x8xf32>,
    %c0_26 = arith.constant 0 : index
    %c0_27 = arith.constant 0 : index
    %c0_28 = arith.constant 0 : index
    %c5 = arith.constant 5 : index
    %c0_29 = arith.constant 0 : index
    %15 = vector.load %arg1[%c0_26, %c0_27, %c0_28, %c5, %c0_29] : memref<4x1x4x10x10xf32, #tpu.memory_space<vmem>>, vector<1x1x4x1x8xf32>
    %16 = vector.shape_cast %15 : vector<1x1x4x1x8xf32> to vector<4x8xf32>
    %c0_30 = arith.constant 0 : index
    %c40 = arith.constant 40 : index
    %17 = vector.load %arg7[%c0_30, %c40] : memref<100x64xf32, #tpu.memory_space<vmem>>, vector<4x8xf32>
    tpu.vector_store %arg7[%c0_30, %c40], %16 {strides = array<i32>} : memref<100x64xf32, #tpu.memory_space<vmem>>, vector<4x8xf32>,
    %c0_31 = arith.constant 0 : index
    %c0_32 = arith.constant 0 : index
    %c0_33 = arith.constant 0 : index
    %c6 = arith.constant 6 : index
    %c0_34 = arith.constant 0 : index
    %18 = vector.load %arg1[%c0_31, %c0_32, %c0_33, %c6, %c0_34] : memref<4x1x4x10x10xf32, #tpu.memory_space<vmem>>, vector<1x1x4x1x8xf32>
    %19 = vector.shape_cast %18 : vector<1x1x4x1x8xf32> to vector<4x8xf32>
    %c0_35 = arith.constant 0 : index
    %c48 = arith.constant 48 : index
    %20 = vector.load %arg7[%c0_35, %c48] : memref<100x64xf32, #tpu.memory_space<vmem>>, vector<4x8xf32>
    tpu.vector_store %arg7[%c0_35, %c48], %19 {strides = array<i32>} : memref<100x64xf32, #tpu.memory_space<vmem>>, vector<4x8xf32>,
    %c0_36 = arith.constant 0 : index
    %c0_37 = arith.constant 0 : index
    %c0_38 = arith.constant 0 : index
    %c7 = arith.constant 7 : index
    %c0_39 = arith.constant 0 : index
    %21 = vector.load %arg1[%c0_36, %c0_37, %c0_38, %c7, %c0_39] : memref<4x1x4x10x10xf32, #tpu.memory_space<vmem>>, vector<1x1x4x1x8xf32>
    %22 = vector.shape_cast %21 : vector<1x1x4x1x8xf32> to vector<4x8xf32>
    %c0_40 = arith.constant 0 : index
    %c56 = arith.constant 56 : index
    %23 = vector.load %arg7[%c0_40, %c56] : memref<100x64xf32, #tpu.memory_space<vmem>>, vector<4x8xf32>
    tpu.vector_store %arg7[%c0_40, %c56], %22 {strides = array<i32>} : memref<100x64xf32, #tpu.memory_space<vmem>>, vector<4x8xf32>,
    %c1_41 = arith.constant 1 : index
    %c0_42 = arith.constant 0 : index
    %c0_43 = arith.constant 0 : index
    %c0_44 = arith.constant 0 : index
    %c0_45 = arith.constant 0 : index
    %24 = vector.load %arg1[%c1_41, %c0_42, %c0_43, %c0_44, %c0_45] : memref<4x1x4x10x10xf32, #tpu.memory_space<vmem>>, vector<1x1x4x1x8xf32>
    %25 = vector.shape_cast %24 : vector<1x1x4x1x8xf32> to vector<4x8xf32>
    %c4_46 = arith.constant 4 : index
    %c0_47 = arith.constant 0 : index
    %26 = vector.load %arg7[%c4_46, %c0_47] : memref<100x64xf32, #tpu.memory_space<vmem>>, vector<4x8xf32>
    tpu.vector_store %arg7[%c4_46, %c0_47], %25 {strides = array<i32>} : memref<100x64xf32, #tpu.memory_space<vmem>>, vector<4x8xf32>,
    %c1_48 = arith.constant 1 : index
    %c0_49 = arith.constant 0 : index
    %c0_50 = arith.constant 0 : index
    %c1_51 = arith.constant 1 : index
    %c0_52 = arith.constant 0 : index
    %27 = vector.load %arg1[%c1_48, %c0_49, %c0_50, %c1_51, %c0_52] : memref<4x1x4x10x10xf32, #tpu.memory_space<vmem>>, vector<1x1x4x1x8xf32>
    %28 = vector.shape_cast %27 : vector<1x1x4x1x8xf32> to vector<4x8xf32>
    %c4_53 = arith.constant 4 : index
    %c8_54 = arith.constant 8 : index
    %29 = vector.load %arg7[%c4_53, %c8_54] : memref<100x64xf32, #tpu.memory_space<vmem>>, vector<4x8xf32>
    tpu.vector_store %arg7[%c4_53, %c8_54], %28 {strides = array<i32>} : memref<100x64xf32, #tpu.memory_space<vmem>>, vector<4x8xf32>,
    %c1_55 = arith.constant 1 : index
    %c0_56 = arith.constant 0 : index
    %c0_57 = arith.constant 0 : index
    %c2_58 = arith.constant 2 : index
    %c0_59 = arith.constant 0 : index
    %30 = vector.load %arg1[%c1_55, %c0_56, %c0_57, %c2_58, %c0_59] : memref<4x1x4x10x10xf32, #tpu.memory_space<vmem>>, vector<1x1x4x1x8xf32>
    %31 = vector.shape_cast %30 : vector<1x1x4x1x8xf32> to vector<4x8xf32>
    %c4_60 = arith.constant 4 : index
    %c16_61 = arith.constant 16 : index
    %32 = vector.load %arg7[%c4_60, %c16_61] : memref<100x64xf32, #tpu.memory_space<vmem>>, vector<4x8xf32>
    tpu.vector_store %arg7[%c4_60, %c16_61], %31 {strides = array<i32>} : memref<100x64xf32, #tpu.memory_space<vmem>>, vector<4x8xf32>,
    %c1_62 = arith.constant 1 : index
    %c0_63 = arith.constant 0 : index
    %c0_64 = arith.constant 0 : index
    %c3_65 = arith.constant 3 : index
    %c0_66 = arith.constant 0 : index
    %33 = vector.load %arg1[%c1_62, %c0_63, %c0_64, %c3_65, %c0_66] : memref<4x1x4x10x10xf32, #tpu.memory_space<vmem>>, vector<1x1x4x1x8xf32>
    %34 = vector.shape_cast %33 : vector<1x1x4x1x8xf32> to vector<4x8xf32>
    %c4_67 = arith.constant 4 : index
    %c24_68 = arith.constant 24 : index
    %35 = vector.load %arg7[%c4_67, %c24_68] : memref<100x64xf32, #tpu.memory_space<vmem>>, vector<4x8xf32>
    tpu.vector_store %arg7[%c4_67, %c24_68], %34 {strides = array<i32>} : memref<100x64xf32, #tpu.memory_space<vmem>>, vector<4x8xf32>,
    %c1_69 = arith.constant 1 : index
    %c0_70 = arith.constant 0 : index
    %c0_71 = arith.constant 0 : index
    %c4_72 = arith.constant 4 : index
    %c0_73 = arith.constant 0 : index
    %36 = vector.load %arg1[%c1_69, %c0_70, %c0_71, %c4_72, %c0_73] : memref<4x1x4x10x10xf32, #tpu.memory_space<vmem>>, vector<1x1x4x1x8xf32>
    %37 = vector.shape_cast %36 : vector<1x1x4x1x8xf32> to vector<4x8xf32>
    %c4_74 = arith.constant 4 : index
    %c32_75 = arith.constant 32 : index
    %38 = vector.load %arg7[%c4_74, %c32_75] : memref<100x64xf32, #tpu.memory_space<vmem>>, vector<4x8xf32>
    tpu.vector_store %arg7[%c4_74, %c32_75], %37 {strides = array<i32>} : memref<100x64xf32, #tpu.memory_space<vmem>>, vector<4x8xf32>,
    %c1_76 = arith.constant 1 : index
    %c0_77 = arith.constant 0 : index
    %c0_78 = arith.constant 0 : index
    %c5_79 = arith.constant 5 : index
    %c0_80 = arith.constant 0 : index
    %39 = vector.load %arg1[%c1_76, %c0_77, %c0_78, %c5_79, %c0_80] : memref<4x1x4x10x10xf32, #tpu.memory_space<vmem>>, vector<1x1x4x1x8xf32>
    %40 = vector.shape_cast %39 : vector<1x1x4x1x8xf32> to vector<4x8xf32>
    %c4_81 = arith.constant 4 : index
    %c40_82 = arith.constant 40 : index
    %41 = vector.load %arg7[%c4_81, %c40_82] : memref<100x64xf32, #tpu.memory_space<vmem>>, vector<4x8xf32>
    tpu.vector_store %arg7[%c4_81, %c40_82], %40 {strides = array<i32>} : memref<100x64xf32, #tpu.memory_space<vmem>>, vector<4x8xf32>,
    %c1_83 = arith.constant 1 : index
    %c0_84 = arith.constant 0 : index
    %c0_85 = arith.constant 0 : index
    %c6_86 = arith.constant 6 : index
    %c0_87 = arith.constant 0 : index
    %42 = vector.load %arg1[%c1_83, %c0_84, %c0_85, %c6_86, %c0_87] : memref<4x1x4x10x10xf32, #tpu.memory_space<vmem>>, vector<1x1x4x1x8xf32>
    %43 = vector.shape_cast %42 : vector<1x1x4x1x8xf32> to vector<4x8xf32>
    %c4_88 = arith.constant 4 : index
    %c48_89 = arith.constant 48 : index
    %44 = vector.load %arg7[%c4_88, %c48_89] : memref<100x64xf32, #tpu.memory_space<vmem>>, vector<4x8xf32>
    tpu.vector_store %arg7[%c4_88, %c48_89], %43 {strides = array<i32>} : memref<100x64xf32, #tpu.memory_space<vmem>>, vector<4x8xf32>,
    %c1_90 = arith.constant 1 : index
    %c0_91 = arith.constant 0 : index
    %c0_92 = arith.constant 0 : index
    %c7_93 = arith.constant 7 : index
    %c0_94 = arith.constant 0 : index
    %45 = vector.load %arg1[%c1_90, %c0_91, %c0_92, %c7_93, %c0_94] : memref<4x1x4x10x10xf32, #tpu.memory_space<vmem>>, vector<1x1x4x1x8xf32>
    %46 = vector.shape_cast %45 : vector<1x1x4x1x8xf32> to vector<4x8xf32>
    %c4_95 = arith.constant 4 : index
    %c56_96 = arith.constant 56 : index
    %47 = vector.load %arg7[%c4_95, %c56_96] : memref<100x64xf32, #tpu.memory_space<vmem>>, vector<4x8xf32>
    tpu.vector_store %arg7[%c4_95, %c56_96], %46 {strides = array<i32>} : memref<100x64xf32, #tpu.memory_space<vmem>>, vector<4x8xf32>,
    %c0_97 = arith.constant 0 : index
    %c0_98 = arith.constant 0 : index
    %c0_99 = arith.constant 0 : index
    %c0_100 = arith.constant 0 : index
    %c1_101 = arith.constant 1 : index
    %48 = vector.load %arg1[%c0_97, %c0_98, %c0_99, %c0_100, %c1_101] : memref<4x1x4x10x10xf32, #tpu.memory_space<vmem>>, vector<1x1x4x1x8xf32>
    %49 = vector.shape_cast %48 : vector<1x1x4x1x8xf32> to vector<4x8xf32>
    %c8_102 = arith.constant 8 : index
    %c0_103 = arith.constant 0 : index
    %50 = vector.load %arg7[%c8_102, %c0_103] : memref<100x64xf32, #tpu.memory_space<vmem>>, vector<4x8xf32>
    tpu.vector_store %arg7[%c8_102, %c0_103], %49 {strides = array<i32>} : memref<100x64xf32, #tpu.memory_space<vmem>>, vector<4x8xf32>,
    %c0_104 = arith.constant 0 : index
    %c0_105 = arith.constant 0 : index
    %c0_106 = arith.constant 0 : index
    %c1_107 = arith.constant 1 : index
    %c1_108 = arith.constant 1 : index
    %51 = vector.load %arg1[%c0_104, %c0_105, %c0_106, %c1_107, %c1_108] : memref<4x1x4x10x10xf32, #tpu.memory_space<vmem>>, vector<1x1x4x1x8xf32>
    %52 = vector.shape_cast %51 : vector<1x1x4x1x8xf32> to vector<4x8xf32>
    %c8_109 = arith.constant 8 : index
    %c8_110 = arith.constant 8 : index
    %53 = vector.load %arg7[%c8_109, %c8_110] : memref<100x64xf32, #tpu.memory_space<vmem>>, vector<4x8xf32>
    tpu.vector_store %arg7[%c8_109, %c8_110], %52 {strides = array<i32>} : memref<100x64xf32, #tpu.memory_space<vmem>>, vector<4x8xf32>,
    %c0_111 = arith.constant 0 : index
    %c0_112 = arith.constant 0 : index
    %c0_113 = arith.constant 0 : index
    %c2_114 = arith.constant 2 : index
    %c1_115 = arith.constant 1 : index
    %54 = vector.load %arg1[%c0_111, %c0_112, %c0_113, %c2_114, %c1_115] : memref<4x1x4x10x10xf32, #tpu.memory_space<vmem>>, vector<1x1x4x1x8xf32>
    %55 = vector.shape_cast %54 : vector<1x1x4x1x8xf32> to vector<4x8xf32>
    %c8_116 = arith.constant 8 : index
    %c16_117 = arith.constant 16 : index
    %56 = vector.load %arg7[%c8_116, %c16_117] : memref<100x64xf32, #tpu.memory_space<vmem>>, vector<4x8xf32>
    tpu.vector_store %arg7[%c8_116, %c16_117], %55 {strides = array<i32>} : memref<100x64xf32, #tpu.memory_space<vmem>>, vector<4x8xf32>,
    %c0_118 = arith.constant 0 : index
    %c0_119 = arith.constant 0 : index
    %c0_120 = arith.constant 0 : index
    %c3_121 = arith.constant 3 : index
    %c1_122 = arith.constant 1 : index
    %57 = vector.load %arg1[%c0_118, %c0_119, %c0_120, %c3_121, %c1_122] : memref<4x1x4x10x10xf32, #tpu.memory_space<vmem>>, vector<1x1x4x1x8xf32>
    %58 = vector.shape_cast %57 : vector<1x1x4x1x8xf32> to vector<4x8xf32>
    %c8_123 = arith.constant 8 : index
    %c24_124 = arith.constant 24 : index
    %59 = vector.load %arg7[%c8_123, %c24_124] : memref<100x64xf32, #tpu.memory_space<vmem>>, vector<4x8xf32>
    tpu.vector_store %arg7[%c8_123, %c24_124], %58 {strides = array<i32>} : memref<100x64xf32, #tpu.memory_space<vmem>>, vector<4x8xf32>,
    %c0_125 = arith.constant 0 : index
    %c0_126 = arith.constant 0 : index
    %c0_127 = arith.constant 0 : index
    %c4_128 = arith.constant 4 : index
    %c1_129 = arith.constant 1 : index
    %60 = vector.load %arg1[%c0_125, %c0_126, %c0_127, %c4_128, %c1_129] : memref<4x1x4x10x10xf32, #tpu.memory_space<vmem>>, vector<1x1x4x1x8xf32>
    %61 = vector.shape_cast %60 : vector<1x1x4x1x8xf32> to vector<4x8xf32>
    %c8_130 = arith.constant 8 : index
    %c32_131 = arith.constant 32 : index
    %62 = vector.load %arg7[%c8_130, %c32_131] : memref<100x64xf32, #tpu.memory_space<vmem>>, vector<4x8xf32>
    tpu.vector_store %arg7[%c8_130, %c32_131], %61 {strides = array<i32>} : memref<100x64xf32, #tpu.memory_space<vmem>>, vector<4x8xf32>,
    %c0_132 = arith.constant 0 : index
    %c0_133 = arith.constant 0 : index
    %c0_134 = arith.constant 0 : index
    %c5_135 = arith.constant 5 : index
    %c1_136 = arith.constant 1 : index
    %63 = vector.load %arg1[%c0_132, %c0_133, %c0_134, %c5_135, %c1_136] : memref<4x1x4x10x10xf32, #tpu.memory_space<vmem>>, vector<1x1x4x1x8xf32>
    %64 = vector.shape_cast %63 : vector<1x1x4x1x8xf32> to vector<4x8xf32>
    %c8_137 = arith.constant 8 : index
    %c40_138 = arith.constant 40 : index
    %65 = vector.load %arg7[%c8_137, %c40_138] : memref<100x64xf32, #tpu.memory_space<vmem>>, vector<4x8xf32>
    tpu.vector_store %arg7[%c8_137, %c40_138], %64 {strides = array<i32>} : memref<100x64xf32, #tpu.memory_space<vmem>>, vector<4x8xf32>,
    %c0_139 = arith.constant 0 : index
    %c0_140 = arith.constant 0 : index
    %c0_141 = arith.constant 0 : index
    %c6_142 = arith.constant 6 : index
    %c1_143 = arith.constant 1 : index
    %66 = vector.load %arg1[%c0_139, %c0_140, %c0_141, %c6_142, %c1_143] : memref<4x1x4x10x10xf32, #tpu.memory_space<vmem>>, vector<1x1x4x1x8xf32>
    %67 = vector.shape_cast %66 : vector<1x1x4x1x8xf32> to vector<4x8xf32>
    %c8_144 = arith.constant 8 : index
    %c48_145 = arith.constant 48 : index
    %68 = vector.load %arg7[%c8_144, %c48_145] : memref<100x64xf32, #tpu.memory_space<vmem>>, vector<4x8xf32>
    tpu.vector_store %arg7[%c8_144, %c48_145], %67 {strides = array<i32>} : memref<100x64xf32, #tpu.memory_space<vmem>>, vector<4x8xf32>,
    %c0_146 = arith.constant 0 : index
    %c0_147 = arith.constant 0 : index
    %c0_148 = arith.constant 0 : index
    %c7_149 = arith.constant 7 : index
    %c1_150 = arith.constant 1 : index
    %69 = vector.load %arg1[%c0_146, %c0_147, %c0_148, %c7_149, %c1_150] : memref<4x1x4x10x10xf32, #tpu.memory_space<vmem>>, vector<1x1x4x1x8xf32>
    %70 = vector.shape_cast %69 : vector<1x1x4x1x8xf32> to vector<4x8xf32>
    %c8_151 = arith.constant 8 : index
    %c56_152 = arith.constant 56 : index
    %71 = vector.load %arg7[%c8_151, %c56_152] : memref<100x64xf32, #tpu.memory_space<vmem>>, vector<4x8xf32>
    tpu.vector_store %arg7[%c8_151, %c56_152], %70 {strides = array<i32>} : memref<100x64xf32, #tpu.memory_space<vmem>>, vector<4x8xf32>,
    %c1_153 = arith.constant 1 : index
    %c0_154 = arith.constant 0 : index
    %c0_155 = arith.constant 0 : index
    %c0_156 = arith.constant 0 : index
    %c1_157 = arith.constant 1 : index
    %72 = vector.load %arg1[%c1_153, %c0_154, %c0_155, %c0_156, %c1_157] : memref<4x1x4x10x10xf32, #tpu.memory_space<vmem>>, vector<1x1x4x1x8xf32>
    %73 = vector.shape_cast %72 : vector<1x1x4x1x8xf32> to vector<4x8xf32>
    %c12 = arith.constant 12 : index
    %c0_158 = arith.constant 0 : index
    %74 = vector.load %arg7[%c12, %c0_158] : memref<100x64xf32, #tpu.memory_space<vmem>>, vector<4x8xf32>
    tpu.vector_store %arg7[%c12, %c0_158], %73 {strides = array<i32>} : memref<100x64xf32, #tpu.memory_space<vmem>>, vector<4x8xf32>,
    %c1_159 = arith.constant 1 : index
    %c0_160 = arith.constant 0 : index
    %c0_161 = arith.constant 0 : index
    %c1_162 = arith.constant 1 : index
    %c1_163 = arith.constant 1 : index
    %75 = vector.load %arg1[%c1_159, %c0_160, %c0_161, %c1_162, %c1_163] : memref<4x1x4x10x10xf32, #tpu.memory_space<vmem>>, vector<1x1x4x1x8xf32>
    %76 = vector.shape_cast %75 : vector<1x1x4x1x8xf32> to vector<4x8xf32>
    %c12_164 = arith.constant 12 : index
    %c8_165 = arith.constant 8 : index
    %77 = vector.load %arg7[%c12_164, %c8_165] : memref<100x64xf32, #tpu.memory_space<vmem>>, vector<4x8xf32>
    tpu.vector_store %arg7[%c12_164, %c8_165], %76 {strides = array<i32>} : memref<100x64xf32, #tpu.memory_space<vmem>>, vector<4x8xf32>,
    %c1_166 = arith.constant 1 : index
    %c0_167 = arith.constant 0 : index
    %c0_168 = arith.constant 0 : index
    %c2_169 = arith.constant 2 : index
    %c1_170 = arith.constant 1 : index
    %78 = vector.load %arg1[%c1_166, %c0_167, %c0_168, %c2_169, %c1_170] : memref<4x1x4x10x10xf32, #tpu.memory_space<vmem>>, vector<1x1x4x1x8xf32>
    %79 = vector.shape_cast %78 : vector<1x1x4x1x8xf32> to vector<4x8xf32>
    %c12_171 = arith.constant 12 : index
    %c16_172 = arith.constant 16 : index
    %80 = vector.load %arg7[%c12_171, %c16_172] : memref<100x64xf32, #tpu.memory_space<vmem>>, vector<4x8xf32>
    tpu.vector_store %arg7[%c12_171, %c16_172], %79 {strides = array<i32>} : memref<100x64xf32, #tpu.memory_space<vmem>>, vector<4x8xf32>,
    %c1_173 = arith.constant 1 : index
    %c0_174 = arith.constant 0 : index
    %c0_175 = arith.constant 0 : index
    %c3_176 = arith.constant 3 : index
    %c1_177 = arith.constant 1 : index
    %81 = vector.load %arg1[%c1_173, %c0_174, %c0_175, %c3_176, %c1_177] : memref<4x1x4x10x10xf32, #tpu.memory_space<vmem>>, vector<1x1x4x1x8xf32>
    %82 = vector.shape_cast %81 : vector<1x1x4x1x8xf32> to vector<4x8xf32>
    %c12_178 = arith.constant 12 : index
    %c24_179 = arith.constant 24 : index
    %83 = vector.load %arg7[%c12_178, %c24_179] : memref<100x64xf32, #tpu.memory_space<vmem>>, vector<4x8xf32>
    tpu.vector_store %arg7[%c12_178, %c24_179], %82 {strides = array<i32>} : memref<100x64xf32, #tpu.memory_space<vmem>>, vector<4x8xf32>,
    %c1_180 = arith.constant 1 : index
    %c0_181 = arith.constant 0 : index
    %c0_182 = arith.constant 0 : index
    %c4_183 = arith.constant 4 : index
    %c1_184 = arith.constant 1 : index
    %84 = vector.load %arg1[%c1_180, %c0_181, %c0_182, %c4_183, %c1_184] : memref<4x1x4x10x10xf32, #tpu.memory_space<vmem>>, vector<1x1x4x1x8xf32>
    %85 = vector.shape_cast %84 : vector<1x1x4x1x8xf32> to vector<4x8xf32>
    %c12_185 = arith.constant 12 : index
    %c32_186 = arith.constant 32 : index
    %86 = vector.load %arg7[%c12_185, %c32_186] : memref<100x64xf32, #tpu.memory_space<vmem>>, vector<4x8xf32>
    tpu.vector_store %arg7[%c12_185, %c32_186], %85 {strides = array<i32>} : memref<100x64xf32, #tpu.memory_space<vmem>>, vector<4x8xf32>,
    %c1_187 = arith.constant 1 : index
    %c0_188 = arith.constant 0 : index
    %c0_189 = arith.constant 0 : index
    %c5_190 = arith.constant 5 : index
    %c1_191 = arith.constant 1 : index
    %87 = vector.load %arg1[%c1_187, %c0_188, %c0_189, %c5_190, %c1_191] : memref<4x1x4x10x10xf32, #tpu.memory_space<vmem>>, vector<1x1x4x1x8xf32>
    %88 = vector.shape_cast %87 : vector<1x1x4x1x8xf32> to vector<4x8xf32>
    %c12_192 = arith.constant 12 : index
    %c40_193 = arith.constant 40 : index
    %89 = vector.load %arg7[%c12_192, %c40_193] : memref<100x64xf32, #tpu.memory_space<vmem>>, vector<4x8xf32>
    tpu.vector_store %arg7[%c12_192, %c40_193], %88 {strides = array<i32>} : memref<100x64xf32, #tpu.memory_space<vmem>>, vector<4x8xf32>,
    %c1_194 = arith.constant 1 : index
    %c0_195 = arith.constant 0 : index
    %c0_196 = arith.constant 0 : index
    %c6_197 = arith.constant 6 : index
    %c1_198 = arith.constant 1 : index
    %90 = vector.load %arg1[%c1_194, %c0_195, %c0_196, %c6_197, %c1_198] : memref<4x1x4x10x10xf32, #tpu.memory_space<vmem>>, vector<1x1x4x1x8xf32>
    %91 = vector.shape_cast %90 : vector<1x1x4x1x8xf32> to vector<4x8xf32>
    %c12_199 = arith.constant 12 : index
    %c48_200 = arith.constant 48 : index
    %92 = vector.load %arg7[%c12_199, %c48_200] : memref<100x64xf32, #tpu.memory_space<vmem>>, vector<4x8xf32>
    tpu.vector_store %arg7[%c12_199, %c48_200], %91 {strides = array<i32>} : memref<100x64xf32, #tpu.memory_space<vmem>>, vector<4x8xf32>,
    %c1_201 = arith.constant 1 : index
    %c0_202 = arith.constant 0 : index
    %c0_203 = arith.constant 0 : index
    %c7_204 = arith.constant 7 : index
    %c1_205 = arith.constant 1 : index
    %93 = vector.load %arg1[%c1_201, %c0_202, %c0_203, %c7_204, %c1_205] : memref<4x1x4x10x10xf32, #tpu.memory_space<vmem>>, vector<1x1x4x1x8xf32>
    %94 = vector.shape_cast %93 : vector<1x1x4x1x8xf32> to vector<4x8xf32>
    %c12_206 = arith.constant 12 : index
    %c56_207 = arith.constant 56 : index
    %95 = vector.load %arg7[%c12_206, %c56_207] : memref<100x64xf32, #tpu.memory_space<vmem>>, vector<4x8xf32>
    tpu.vector_store %arg7[%c12_206, %c56_207], %94 {strides = array<i32>} : memref<100x64xf32, #tpu.memory_space<vmem>>, vector<4x8xf32>,
    %c0_208 = arith.constant 0 : index
    %c0_209 = arith.constant 0 : index
    %c0_210 = arith.constant 0 : index
    %c0_211 = arith.constant 0 : index
    %c2_212 = arith.constant 2 : index
    %96 = vector.load %arg1[%c0_208, %c0_209, %c0_210, %c0_211, %c2_212] : memref<4x1x4x10x10xf32, #tpu.memory_space<vmem>>, vector<1x1x4x1x8xf32>
    %97 = vector.shape_cast %96 : vector<1x1x4x1x8xf32> to vector<4x8xf32>
    %c16_213 = arith.constant 16 : index
    %c0_214 = arith.constant 0 : index
    %98 = vector.load %arg7[%c16_213, %c0_214] : memref<100x64xf32, #tpu.memory_space<vmem>>, vector<4x8xf32>
    tpu.vector_store %arg7[%c16_213, %c0_214], %97 {strides = array<i32>} : memref<100x64xf32, #tpu.memory_space<vmem>>, vector<4x8xf32>,
    %c0_215 = arith.constant 0 : index
    %c0_216 = arith.constant 0 : index
    %c0_217 = arith.constant 0 : index
    %c1_218 = arith.constant 1 : index
    %c2_219 = arith.constant 2 : index
    %99 = vector.load %arg1[%c0_215, %c0_216, %c0_217, %c1_218, %c2_219] : memref<4x1x4x10x10xf32, #tpu.memory_space<vmem>>, vector<1x1x4x1x8xf32>
    %100 = vector.shape_cast %99 : vector<1x1x4x1x8xf32> to vector<4x8xf32>
    %c16_220 = arith.constant 16 : index
    %c8_221 = arith.constant 8 : index
    %101 = vector.load %arg7[%c16_220, %c8_221] : memref<100x64xf32, #tpu.memory_space<vmem>>, vector<4x8xf32>
    tpu.vector_store %arg7[%c16_220, %c8_221], %100 {strides = array<i32>} : memref<100x64xf32, #tpu.memory_space<vmem>>, vector<4x8xf32>,
    %c0_222 = arith.constant 0 : index
    %c0_223 = arith.constant 0 : index
    %c0_224 = arith.constant 0 : index
    %c2_225 = arith.constant 2 : index
    %c2_226 = arith.constant 2 : index
    %102 = vector.load %arg1[%c0_222, %c0_223, %c0_224, %c2_225, %c2_226] : memref<4x1x4x10x10xf32, #tpu.memory_space<vmem>>, vector<1x1x4x1x8xf32>
    %103 = vector.shape_cast %102 : vector<1x1x4x1x8xf32> to vector<4x8xf32>
    %c16_227 = arith.constant 16 : index
    %c16_228 = arith.constant 16 : index
    %104 = vector.load %arg7[%c16_227, %c16_228] : memref<100x64xf32, #tpu.memory_space<vmem>>, vector<4x8xf32>
    tpu.vector_store %arg7[%c16_227, %c16_228], %103 {strides = array<i32>} : memref<100x64xf32, #tpu.memory_space<vmem>>, vector<4x8xf32>,
    %c0_229 = arith.constant 0 : index
    %c0_230 = arith.constant 0 : index
    %c0_231 = arith.constant 0 : index
    %c3_232 = arith.constant 3 : index
    %c2_233 = arith.constant 2 : index
    %105 = vector.load %arg1[%c0_229, %c0_230, %c0_231, %c3_232, %c2_233] : memref<4x1x4x10x10xf32, #tpu.memory_space<vmem>>, vector<1x1x4x1x8xf32>
    %106 = vector.shape_cast %105 : vector<1x1x4x1x8xf32> to vector<4x8xf32>
    %c16_234 = arith.constant 16 : index
    %c24_235 = arith.constant 24 : index
    %107 = vector.load %arg7[%c16_234, %c24_235] : memref<100x64xf32, #tpu.memory_space<vmem>>, vector<4x8xf32>
    tpu.vector_store %arg7[%c16_234, %c24_235], %106 {strides = array<i32>} : memref<100x64xf32, #tpu.memory_space<vmem>>, vector<4x8xf32>,
    %c0_236 = arith.constant 0 : index
    %c0_237 = arith.constant 0 : index
    %c0_238 = arith.constant 0 : index
    %c4_239 = arith.constant 4 : index
    %c2_240 = arith.constant 2 : index
    %108 = vector.load %arg1[%c0_236, %c0_237, %c0_238, %c4_239, %c2_240] : memref<4x1x4x10x10xf32, #tpu.memory_space<vmem>>, vector<1x1x4x1x8xf32>
    %109 = vector.shape_cast %108 : vector<1x1x4x1x8xf32> to vector<4x8xf32>
    %c16_241 = arith.constant 16 : index
    %c32_242 = arith.constant 32 : index
    %110 = vector.load %arg7[%c16_241, %c32_242] : memref<100x64xf32, #tpu.memory_space<vmem>>, vector<4x8xf32>
    tpu.vector_store %arg7[%c16_241, %c32_242], %109 {strides = array<i32>} : memref<100x64xf32, #tpu.memory_space<vmem>>, vector<4x8xf32>,
    %c0_243 = arith.constant 0 : index
    %c0_244 = arith.constant 0 : index
    %c0_245 = arith.constant 0 : index
    %c5_246 = arith.constant 5 : index
    %c2_247 = arith.constant 2 : index
    %111 = vector.load %arg1[%c0_243, %c0_244, %c0_245, %c5_246, %c2_247] : memref<4x1x4x10x10xf32, #tpu.memory_space<vmem>>, vector<1x1x4x1x8xf32>
    %112 = vector.shape_cast %111 : vector<1x1x4x1x8xf32> to vector<4x8xf32>
    %c16_248 = arith.constant 16 : index
    %c40_249 = arith.constant 40 : index
    %113 = vector.load %arg7[%c16_248, %c40_249] : memref<100x64xf32, #tpu.memory_space<vmem>>, vector<4x8xf32>
    tpu.vector_store %arg7[%c16_248, %c40_249], %112 {strides = array<i32>} : memref<100x64xf32, #tpu.memory_space<vmem>>, vector<4x8xf32>,
    %c0_250 = arith.constant 0 : index
    %c0_251 = arith.constant 0 : index
    %c0_252 = arith.constant 0 : index
    %c6_253 = arith.constant 6 : index
    %c2_254 = arith.constant 2 : index
    %114 = vector.load %arg1[%c0_250, %c0_251, %c0_252, %c6_253, %c2_254] : memref<4x1x4x10x10xf32, #tpu.memory_space<vmem>>, vector<1x1x4x1x8xf32>
    %115 = vector.shape_cast %114 : vector<1x1x4x1x8xf32> to vector<4x8xf32>
    %c16_255 = arith.constant 16 : index
    %c48_256 = arith.constant 48 : index
    %116 = vector.load %arg7[%c16_255, %c48_256] : memref<100x64xf32, #tpu.memory_space<vmem>>, vector<4x8xf32>
    tpu.vector_store %arg7[%c16_255, %c48_256], %115 {strides = array<i32>} : memref<100x64xf32, #tpu.memory_space<vmem>>, vector<4x8xf32>,
    %c0_257 = arith.constant 0 : index
    %c0_258 = arith.constant 0 : index
    %c0_259 = arith.constant 0 : index
    %c7_260 = arith.constant 7 : index
    %c2_261 = arith.constant 2 : index
    %117 = vector.load %arg1[%c0_257, %c0_258, %c0_259, %c7_260, %c2_261] : memref<4x1x4x10x10xf32, #tpu.memory_space<vmem>>, vector<1x1x4x1x8xf32>
    %118 = vector.shape_cast %117 : vector<1x1x4x1x8xf32> to vector<4x8xf32>
    %c16_262 = arith.constant 16 : index
    %c56_263 = arith.constant 56 : index
    %119 = vector.load %arg7[%c16_262, %c56_263] : memref<100x64xf32, #tpu.memory_space<vmem>>, vector<4x8xf32>
    tpu.vector_store %arg7[%c16_262, %c56_263], %118 {strides = array<i32>} : memref<100x64xf32, #tpu.memory_space<vmem>>, vector<4x8xf32>,
    %c2_264 = arith.constant 2 : index
    %c0_265 = arith.constant 0 : index
    %c0_266 = arith.constant 0 : index
    %c0_267 = arith.constant 0 : index
    %c0_268 = arith.constant 0 : index
    %120 = vector.load %arg1[%c2_264, %c0_265, %c0_266, %c0_267, %c0_268] : memref<4x1x4x10x10xf32, #tpu.memory_space<vmem>>, vector<1x1x4x1x8xf32>
    %121 = vector.shape_cast %120 : vector<1x1x4x1x8xf32> to vector<4x8xf32>
    %c20 = arith.constant 20 : index
    %c0_269 = arith.constant 0 : index
    %122 = vector.load %arg7[%c20, %c0_269] : memref<100x64xf32, #tpu.memory_space<vmem>>, vector<4x8xf32>
    tpu.vector_store %arg7[%c20, %c0_269], %121 {strides = array<i32>} : memref<100x64xf32, #tpu.memory_space<vmem>>, vector<4x8xf32>,
    %c2_270 = arith.constant 2 : index
    %c0_271 = arith.constant 0 : index
    %c0_272 = arith.constant 0 : index
    %c1_273 = arith.constant 1 : index
    %c0_274 = arith.constant 0 : index
    %123 = vector.load %arg1[%c2_270, %c0_271, %c0_272, %c1_273, %c0_274] : memref<4x1x4x10x10xf32, #tpu.memory_space<vmem>>, vector<1x1x4x1x8xf32>
    %124 = vector.shape_cast %123 : vector<1x1x4x1x8xf32> to vector<4x8xf32>
    %c20_275 = arith.constant 20 : index
    %c8_276 = arith.constant 8 : index
    %125 = vector.load %arg7[%c20_275, %c8_276] : memref<100x64xf32, #tpu.memory_space<vmem>>, vector<4x8xf32>
    tpu.vector_store %arg7[%c20_275, %c8_276], %124 {strides = array<i32>} : memref<100x64xf32, #tpu.memory_space<vmem>>, vector<4x8xf32>,
    %c2_277 = arith.constant 2 : index
    %c0_278 = arith.constant 0 : index
    %c0_279 = arith.constant 0 : index
    %c2_280 = arith.constant 2 : index
    %c0_281 = arith.constant 0 : index
    %126 = vector.load %arg1[%c2_277, %c0_278, %c0_279, %c2_280, %c0_281] : memref<4x1x4x10x10xf32, #tpu.memory_space<vmem>>, vector<1x1x4x1x8xf32>
    %127 = vector.shape_cast %126 : vector<1x1x4x1x8xf32> to vector<4x8xf32>
    %c20_282 = arith.constant 20 : index
    %c16_283 = arith.constant 16 : index
    %128 = vector.load %arg7[%c20_282, %c16_283] : memref<100x64xf32, #tpu.memory_space<vmem>>, vector<4x8xf32>
    tpu.vector_store %arg7[%c20_282, %c16_283], %127 {strides = array<i32>} : memref<100x64xf32, #tpu.memory_space<vmem>>, vector<4x8xf32>,
    %c2_284 = arith.constant 2 : index
    %c0_285 = arith.constant 0 : index
    %c0_286 = arith.constant 0 : index
    %c3_287 = arith.constant 3 : index
    %c0_288 = arith.constant 0 : index
    %129 = vector.load %arg1[%c2_284, %c0_285, %c0_286, %c3_287, %c0_288] : memref<4x1x4x10x10xf32, #tpu.memory_space<vmem>>, vector<1x1x4x1x8xf32>
    %130 = vector.shape_cast %129 : vector<1x1x4x1x8xf32> to vector<4x8xf32>
    %c20_289 = arith.constant 20 : index
    %c24_290 = arith.constant 24 : index
    %131 = vector.load %arg7[%c20_289, %c24_290] : memref<100x64xf32, #tpu.memory_space<vmem>>, vector<4x8xf32>
    tpu.vector_store %arg7[%c20_289, %c24_290], %130 {strides = array<i32>} : memref<100x64xf32, #tpu.memory_space<vmem>>, vector<4x8xf32>,
    %c2_291 = arith.constant 2 : index
    %c0_292 = arith.constant 0 : index
    %c0_293 = arith.constant 0 : index
    %c4_294 = arith.constant 4 : index
    %c0_295 = arith.constant 0 : index
    %132 = vector.load %arg1[%c2_291, %c0_292, %c0_293, %c4_294, %c0_295] : memref<4x1x4x10x10xf32, #tpu.memory_space<vmem>>, vector<1x1x4x1x8xf32>
    %133 = vector.shape_cast %132 : vector<1x1x4x1x8xf32> to vector<4x8xf32>
    %c20_296 = arith.constant 20 : index
    %c32_297 = arith.constant 32 : index
    %134 = vector.load %arg7[%c20_296, %c32_297] : memref<100x64xf32, #tpu.memory_space<vmem>>, vector<4x8xf32>
    tpu.vector_store %arg7[%c20_296, %c32_297], %133 {strides = array<i32>} : memref<100x64xf32, #tpu.memory_space<vmem>>, vector<4x8xf32>,
    %c2_298 = arith.constant 2 : index
    %c0_299 = arith.constant 0 : index
    %c0_300 = arith.constant 0 : index
    %c5_301 = arith.constant 5 : index
    %c0_302 = arith.constant 0 : index
    %135 = vector.load %arg1[%c2_298, %c0_299, %c0_300, %c5_301, %c0_302] : memref<4x1x4x10x10xf32, #tpu.memory_space<vmem>>, vector<1x1x4x1x8xf32>
    %136 = vector.shape_cast %135 : vector<1x1x4x1x8xf32> to vector<4x8xf32>
    %c20_303 = arith.constant 20 : index
    %c40_304 = arith.constant 40 : index
    %137 = vector.load %arg7[%c20_303, %c40_304] : memref<100x64xf32, #tpu.memory_space<vmem>>, vector<4x8xf32>
    tpu.vector_store %arg7[%c20_303, %c40_304], %136 {strides = array<i32>} : memref<100x64xf32, #tpu.memory_space<vmem>>, vector<4x8xf32>,
    %c2_305 = arith.constant 2 : index
    %c0_306 = arith.constant 0 : index
    %c0_307 = arith.constant 0 : index
    %c6_308 = arith.constant 6 : index
    %c0_309 = arith.constant 0 : index
    %138 = vector.load %arg1[%c2_305, %c0_306, %c0_307, %c6_308, %c0_309] : memref<4x1x4x10x10xf32, #tpu.memory_space<vmem>>, vector<1x1x4x1x8xf32>
    %139 = vector.shape_cast %138 : vector<1x1x4x1x8xf32> to vector<4x8xf32>
    %c20_310 = arith.constant 20 : index
    %c48_311 = arith.constant 48 : index
    %140 = vector.load %arg7[%c20_310, %c48_311] : memref<100x64xf32, #tpu.memory_space<vmem>>, vector<4x8xf32>
    tpu.vector_store %arg7[%c20_310, %c48_311], %139 {strides = array<i32>} : memref<100x64xf32, #tpu.memory_space<vmem>>, vector<4x8xf32>,
    %c2_312 = arith.constant 2 : index
    %c0_313 = arith.constant 0 : index
    %c0_314 = arith.constant 0 : index
    %c7_315 = arith.constant 7 : index
    %c0_316 = arith.constant 0 : index
    %141 = vector.load %arg1[%c2_312, %c0_313, %c0_314, %c7_315, %c0_316] : memref<4x1x4x10x10xf32, #tpu.memory_space<vmem>>, vector<1x1x4x1x8xf32>
    %142 = vector.shape_cast %141 : vector<1x1x4x1x8xf32> to vector<4x8xf32>
    %c20_317 = arith.constant 20 : index
    %c56_318 = arith.constant 56 : index
    %143 = vector.load %arg7[%c20_317, %c56_318] : memref<100x64xf32, #tpu.memory_space<vmem>>, vector<4x8xf32>
    tpu.vector_store %arg7[%c20_317, %c56_318], %142 {strides = array<i32>} : memref<100x64xf32, #tpu.memory_space<vmem>>, vector<4x8xf32>,
    %c3_319 = arith.constant 3 : index
    %c0_320 = arith.constant 0 : index
    %c0_321 = arith.constant 0 : index
    %c0_322 = arith.constant 0 : index
    %c0_323 = arith.constant 0 : index
    %144 = vector.load %arg1[%c3_319, %c0_320, %c0_321, %c0_322, %c0_323] : memref<4x1x4x10x10xf32, #tpu.memory_space<vmem>>, vector<1x1x4x1x8xf32>
    %145 = vector.shape_cast %144 : vector<1x1x4x1x8xf32> to vector<4x8xf32>
    %c24_324 = arith.constant 24 : index
    %c0_325 = arith.constant 0 : index
    %146 = vector.load %arg7[%c24_324, %c0_325] : memref<100x64xf32, #tpu.memory_space<vmem>>, vector<4x8xf32>
    tpu.vector_store %arg7[%c24_324, %c0_325], %145 {strides = array<i32>} : memref<100x64xf32, #tpu.memory_space<vmem>>, vector<4x8xf32>,
    %c3_326 = arith.constant 3 : index
    %c0_327 = arith.constant 0 : index
    %c0_328 = arith.constant 0 : index
    %c1_329 = arith.constant 1 : index
    %c0_330 = arith.constant 0 : index
    %147 = vector.load %arg1[%c3_326, %c0_327, %c0_328, %c1_329, %c0_330] : memref<4x1x4x10x10xf32, #tpu.memory_space<vmem>>, vector<1x1x4x1x8xf32>
    %148 = vector.shape_cast %147 : vector<1x1x4x1x8xf32> to vector<4x8xf32>
    %c24_331 = arith.constant 24 : index
    %c8_332 = arith.constant 8 : index
    %149 = vector.load %arg7[%c24_331, %c8_332] : memref<100x64xf32, #tpu.memory_space<vmem>>, vector<4x8xf32>
    tpu.vector_store %arg7[%c24_331, %c8_332], %148 {strides = array<i32>} : memref<100x64xf32, #tpu.memory_space<vmem>>, vector<4x8xf32>,
    %c3_333 = arith.constant 3 : index
    %c0_334 = arith.constant 0 : index
    %c0_335 = arith.constant 0 : index
    %c2_336 = arith.constant 2 : index
    %c0_337 = arith.constant 0 : index
    %150 = vector.load %arg1[%c3_333, %c0_334, %c0_335, %c2_336, %c0_337] : memref<4x1x4x10x10xf32, #tpu.memory_space<vmem>>, vector<1x1x4x1x8xf32>
    %151 = vector.shape_cast %150 : vector<1x1x4x1x8xf32> to vector<4x8xf32>
    %c24_338 = arith.constant 24 : index
    %c16_339 = arith.constant 16 : index
    %152 = vector.load %arg7[%c24_338, %c16_339] : memref<100x64xf32, #tpu.memory_space<vmem>>, vector<4x8xf32>
    tpu.vector_store %arg7[%c24_338, %c16_339], %151 {strides = array<i32>} : memref<100x64xf32, #tpu.memory_space<vmem>>, vector<4x8xf32>,
    %c3_340 = arith.constant 3 : index
    %c0_341 = arith.constant 0 : index
    %c0_342 = arith.constant 0 : index
    %c3_343 = arith.constant 3 : index
    %c0_344 = arith.constant 0 : index
    %153 = vector.load %arg1[%c3_340, %c0_341, %c0_342, %c3_343, %c0_344] : memref<4x1x4x10x10xf32, #tpu.memory_space<vmem>>, vector<1x1x4x1x8xf32>
    %154 = vector.shape_cast %153 : vector<1x1x4x1x8xf32> to vector<4x8xf32>
    %c24_345 = arith.constant 24 : index
    %c24_346 = arith.constant 24 : index
    %155 = vector.load %arg7[%c24_345, %c24_346] : memref<100x64xf32, #tpu.memory_space<vmem>>, vector<4x8xf32>
    tpu.vector_store %arg7[%c24_345, %c24_346], %154 {strides = array<i32>} : memref<100x64xf32, #tpu.memory_space<vmem>>, vector<4x8xf32>,
    %c3_347 = arith.constant 3 : index
    %c0_348 = arith.constant 0 : index
    %c0_349 = arith.constant 0 : index
    %c4_350 = arith.constant 4 : index
    %c0_351 = arith.constant 0 : index
    %156 = vector.load %arg1[%c3_347, %c0_348, %c0_349, %c4_350, %c0_351] : memref<4x1x4x10x10xf32, #tpu.memory_space<vmem>>, vector<1x1x4x1x8xf32>
    %157 = vector.shape_cast %156 : vector<1x1x4x1x8xf32> to vector<4x8xf32>
    %c24_352 = arith.constant 24 : index
    %c32_353 = arith.constant 32 : index
    %158 = vector.load %arg7[%c24_352, %c32_353] : memref<100x64xf32, #tpu.memory_space<vmem>>, vector<4x8xf32>
    tpu.vector_store %arg7[%c24_352, %c32_353], %157 {strides = array<i32>} : memref<100x64xf32, #tpu.memory_space<vmem>>, vector<4x8xf32>,
    %c3_354 = arith.constant 3 : index
    %c0_355 = arith.constant 0 : index
    %c0_356 = arith.constant 0 : index
    %c5_357 = arith.constant 5 : index
    %c0_358 = arith.constant 0 : index
    %159 = vector.load %arg1[%c3_354, %c0_355, %c0_356, %c5_357, %c0_358] : memref<4x1x4x10x10xf32, #tpu.memory_space<vmem>>, vector<1x1x4x1x8xf32>
    %160 = vector.shape_cast %159 : vector<1x1x4x1x8xf32> to vector<4x8xf32>
    %c24_359 = arith.constant 24 : index
    %c40_360 = arith.constant 40 : index
    %161 = vector.load %arg7[%c24_359, %c40_360] : memref<100x64xf32, #tpu.memory_space<vmem>>, vector<4x8xf32>
    tpu.vector_store %arg7[%c24_359, %c40_360], %160 {strides = array<i32>} : memref<100x64xf32, #tpu.memory_space<vmem>>, vector<4x8xf32>,
    %c3_361 = arith.constant 3 : index
    %c0_362 = arith.constant 0 : index
    %c0_363 = arith.constant 0 : index
    %c6_364 = arith.constant 6 : index
    %c0_365 = arith.constant 0 : index
    %162 = vector.load %arg1[%c3_361, %c0_362, %c0_363, %c6_364, %c0_365] : memref<4x1x4x10x10xf32, #tpu.memory_space<vmem>>, vector<1x1x4x1x8xf32>
    %163 = vector.shape_cast %162 : vector<1x1x4x1x8xf32> to vector<4x8xf32>
    %c24_366 = arith.constant 24 : index
    %c48_367 = arith.constant 48 : index
    %164 = vector.load %arg7[%c24_366, %c48_367] : memref<100x64xf32, #tpu.memory_space<vmem>>, vector<4x8xf32>
    tpu.vector_store %arg7[%c24_366, %c48_367], %163 {strides = array<i32>} : memref<100x64xf32, #tpu.memory_space<vmem>>, vector<4x8xf32>,
    %c3_368 = arith.constant 3 : index
    %c0_369 = arith.constant 0 : index
    %c0_370 = arith.constant 0 : index
    %c7_371 = arith.constant 7 : index
    %c0_372 = arith.constant 0 : index
    %165 = vector.load %arg1[%c3_368, %c0_369, %c0_370, %c7_371, %c0_372] : memref<4x1x4x10x10xf32, #tpu.memory_space<vmem>>, vector<1x1x4x1x8xf32>
    %166 = vector.shape_cast %165 : vector<1x1x4x1x8xf32> to vector<4x8xf32>
    %c24_373 = arith.constant 24 : index
    %c56_374 = arith.constant 56 : index
    %167 = vector.load %arg7[%c24_373, %c56_374] : memref<100x64xf32, #tpu.memory_space<vmem>>, vector<4x8xf32>
    tpu.vector_store %arg7[%c24_373, %c56_374], %166 {strides = array<i32>} : memref<100x64xf32, #tpu.memory_space<vmem>>, vector<4x8xf32>,
    %c2_375 = arith.constant 2 : index
    %c0_376 = arith.constant 0 : index
    %c0_377 = arith.constant 0 : index
    %c0_378 = arith.constant 0 : index
    %c1_379 = arith.constant 1 : index
    %168 = vector.load %arg1[%c2_375, %c0_376, %c0_377, %c0_378, %c1_379] : memref<4x1x4x10x10xf32, #tpu.memory_space<vmem>>, vector<1x1x4x1x8xf32>
    %169 = vector.shape_cast %168 : vector<1x1x4x1x8xf32> to vector<4x8xf32>
    %c28 = arith.constant 28 : index
    %c0_380 = arith.constant 0 : index
    %170 = vector.load %arg7[%c28, %c0_380] : memref<100x64xf32, #tpu.memory_space<vmem>>, vector<4x8xf32>
    tpu.vector_store %arg7[%c28, %c0_380], %169 {strides = array<i32>} : memref<100x64xf32, #tpu.memory_space<vmem>>, vector<4x8xf32>,
    %c2_381 = arith.constant 2 : index
    %c0_382 = arith.constant 0 : index
    %c0_383 = arith.constant 0 : index
    %c1_384 = arith.constant 1 : index
    %c1_385 = arith.constant 1 : index
    %171 = vector.load %arg1[%c2_381, %c0_382, %c0_383, %c1_384, %c1_385] : memref<4x1x4x10x10xf32, #tpu.memory_space<vmem>>, vector<1x1x4x1x8xf32>
    %172 = vector.shape_cast %171 : vector<1x1x4x1x8xf32> to vector<4x8xf32>
    %c28_386 = arith.constant 28 : index
    %c8_387 = arith.constant 8 : index
    %173 = vector.load %arg7[%c28_386, %c8_387] : memref<100x64xf32, #tpu.memory_space<vmem>>, vector<4x8xf32>
    tpu.vector_store %arg7[%c28_386, %c8_387], %172 {strides = array<i32>} : memref<100x64xf32, #tpu.memory_space<vmem>>, vector<4x8xf32>,
    %c2_388 = arith.constant 2 : index
    %c0_389 = arith.constant 0 : index
    %c0_390 = arith.constant 0 : index
    %c2_391 = arith.constant 2 : index
    %c1_392 = arith.constant 1 : index
    %174 = vector.load %arg1[%c2_388, %c0_389, %c0_390, %c2_391, %c1_392] : memref<4x1x4x10x10xf32, #tpu.memory_space<vmem>>, vector<1x1x4x1x8xf32>
    %175 = vector.shape_cast %174 : vector<1x1x4x1x8xf32> to vector<4x8xf32>
    %c28_393 = arith.constant 28 : index
    %c16_394 = arith.constant 16 : index
    %176 = vector.load %arg7[%c28_393, %c16_394] : memref<100x64xf32, #tpu.memory_space<vmem>>, vector<4x8xf32>
    tpu.vector_store %arg7[%c28_393, %c16_394], %175 {strides = array<i32>} : memref<100x64xf32, #tpu.memory_space<vmem>>, vector<4x8xf32>,
    %c2_395 = arith.constant 2 : index
    %c0_396 = arith.constant 0 : index
    %c0_397 = arith.constant 0 : index
    %c3_398 = arith.constant 3 : index
    %c1_399 = arith.constant 1 : index
    %177 = vector.load %arg1[%c2_395, %c0_396, %c0_397, %c3_398, %c1_399] : memref<4x1x4x10x10xf32, #tpu.memory_space<vmem>>, vector<1x1x4x1x8xf32>
    %178 = vector.shape_cast %177 : vector<1x1x4x1x8xf32> to vector<4x8xf32>
    %c28_400 = arith.constant 28 : index
    %c24_401 = arith.constant 24 : index
    %179 = vector.load %arg7[%c28_400, %c24_401] : memref<100x64xf32, #tpu.memory_space<vmem>>, vector<4x8xf32>
    tpu.vector_store %arg7[%c28_400, %c24_401], %178 {strides = array<i32>} : memref<100x64xf32, #tpu.memory_space<vmem>>, vector<4x8xf32>,
    %c2_402 = arith.constant 2 : index
    %c0_403 = arith.constant 0 : index
    %c0_404 = arith.constant 0 : index
    %c4_405 = arith.constant 4 : index
    %c1_406 = arith.constant 1 : index
    %180 = vector.load %arg1[%c2_402, %c0_403, %c0_404, %c4_405, %c1_406] : memref<4x1x4x10x10xf32, #tpu.memory_space<vmem>>, vector<1x1x4x1x8xf32>
    %181 = vector.shape_cast %180 : vector<1x1x4x1x8xf32> to vector<4x8xf32>
    %c28_407 = arith.constant 28 : index
    %c32_408 = arith.constant 32 : index
    %182 = vector.load %arg7[%c28_407, %c32_408] : memref<100x64xf32, #tpu.memory_space<vmem>>, vector<4x8xf32>
    tpu.vector_store %arg7[%c28_407, %c32_408], %181 {strides = array<i32>} : memref<100x64xf32, #tpu.memory_space<vmem>>, vector<4x8xf32>,
    %c2_409 = arith.constant 2 : index
    %c0_410 = arith.constant 0 : index
    %c0_411 = arith.constant 0 : index
    %c5_412 = arith.constant 5 : index
    %c1_413 = arith.constant 1 : index
    %183 = vector.load %arg1[%c2_409, %c0_410, %c0_411, %c5_412, %c1_413] : memref<4x1x4x10x10xf32, #tpu.memory_space<vmem>>, vector<1x1x4x1x8xf32>
    %184 = vector.shape_cast %183 : vector<1x1x4x1x8xf32> to vector<4x8xf32>
    %c28_414 = arith.constant 28 : index
    %c40_415 = arith.constant 40 : index
    %185 = vector.load %arg7[%c28_414, %c40_415] : memref<100x64xf32, #tpu.memory_space<vmem>>, vector<4x8xf32>
    tpu.vector_store %arg7[%c28_414, %c40_415], %184 {strides = array<i32>} : memref<100x64xf32, #tpu.memory_space<vmem>>, vector<4x8xf32>,
    %c2_416 = arith.constant 2 : index
    %c0_417 = arith.constant 0 : index
    %c0_418 = arith.constant 0 : index
    %c6_419 = arith.constant 6 : index
    %c1_420 = arith.constant 1 : index
    %186 = vector.load %arg1[%c2_416, %c0_417, %c0_418, %c6_419, %c1_420] : memref<4x1x4x10x10xf32, #tpu.memory_space<vmem>>, vector<1x1x4x1x8xf32>
    %187 = vector.shape_cast %186 : vector<1x1x4x1x8xf32> to vector<4x8xf32>
    %c28_421 = arith.constant 28 : index
    %c48_422 = arith.constant 48 : index
    %188 = vector.load %arg7[%c28_421, %c48_422] : memref<100x64xf32, #tpu.memory_space<vmem>>, vector<4x8xf32>
    tpu.vector_store %arg7[%c28_421, %c48_422], %187 {strides = array<i32>} : memref<100x64xf32, #tpu.memory_space<vmem>>, vector<4x8xf32>,
    %c2_423 = arith.constant 2 : index
    %c0_424 = arith.constant 0 : index
    %c0_425 = arith.constant 0 : index
    %c7_426 = arith.constant 7 : index
    %c1_427 = arith.constant 1 : index
    %189 = vector.load %arg1[%c2_423, %c0_424, %c0_425, %c7_426, %c1_427] : memref<4x1x4x10x10xf32, #tpu.memory_space<vmem>>, vector<1x1x4x1x8xf32>
    %190 = vector.shape_cast %189 : vector<1x1x4x1x8xf32> to vector<4x8xf32>
    %c28_428 = arith.constant 28 : index
    %c56_429 = arith.constant 56 : index
    %191 = vector.load %arg7[%c28_428, %c56_429] : memref<100x64xf32, #tpu.memory_space<vmem>>, vector<4x8xf32>
    tpu.vector_store %arg7[%c28_428, %c56_429], %190 {strides = array<i32>} : memref<100x64xf32, #tpu.memory_space<vmem>>, vector<4x8xf32>,
    %c3_430 = arith.constant 3 : index
    %c0_431 = arith.constant 0 : index
    %c0_432 = arith.constant 0 : index
    %c0_433 = arith.constant 0 : index
    %c1_434 = arith.constant 1 : index
    %192 = vector.load %arg1[%c3_430, %c0_431, %c0_432, %c0_433, %c1_434] : memref<4x1x4x10x10xf32, #tpu.memory_space<vmem>>, vector<1x1x4x1x8xf32>
    %193 = vector.shape_cast %192 : vector<1x1x4x1x8xf32> to vector<4x8xf32>
    %c32_435 = arith.constant 32 : index
    %c0_436 = arith.constant 0 : index
    %194 = vector.load %arg7[%c32_435, %c0_436] : memref<100x64xf32, #tpu.memory_space<vmem>>, vector<4x8xf32>
    tpu.vector_store %arg7[%c32_435, %c0_436], %193 {strides = array<i32>} : memref<100x64xf32, #tpu.memory_space<vmem>>, vector<4x8xf32>,
    %c3_437 = arith.constant 3 : index
    %c0_438 = arith.constant 0 : index
    %c0_439 = arith.constant 0 : index
    %c1_440 = arith.constant 1 : index
    %c1_441 = arith.constant 1 : index
    %195 = vector.load %arg1[%c3_437, %c0_438, %c0_439, %c1_440, %c1_441] : memref<4x1x4x10x10xf32, #tpu.memory_space<vmem>>, vector<1x1x4x1x8xf32>
    %196 = vector.shape_cast %195 : vector<1x1x4x1x8xf32> to vector<4x8xf32>
    %c32_442 = arith.constant 32 : index
    %c8_443 = arith.constant 8 : index
    %197 = vector.load %arg7[%c32_442, %c8_443] : memref<100x64xf32, #tpu.memory_space<vmem>>, vector<4x8xf32>
    tpu.vector_store %arg7[%c32_442, %c8_443], %196 {strides = array<i32>} : memref<100x64xf32, #tpu.memory_space<vmem>>, vector<4x8xf32>,
    %c3_444 = arith.constant 3 : index
    %c0_445 = arith.constant 0 : index
    %c0_446 = arith.constant 0 : index
    %c2_447 = arith.constant 2 : index
    %c1_448 = arith.constant 1 : index
    %198 = vector.load %arg1[%c3_444, %c0_445, %c0_446, %c2_447, %c1_448] : memref<4x1x4x10x10xf32, #tpu.memory_space<vmem>>, vector<1x1x4x1x8xf32>
    %199 = vector.shape_cast %198 : vector<1x1x4x1x8xf32> to vector<4x8xf32>
    %c32_449 = arith.constant 32 : index
    %c16_450 = arith.constant 16 : index
    %200 = vector.load %arg7[%c32_449, %c16_450] : memref<100x64xf32, #tpu.memory_space<vmem>>, vector<4x8xf32>
    tpu.vector_store %arg7[%c32_449, %c16_450], %199 {strides = array<i32>} : memref<100x64xf32, #tpu.memory_space<vmem>>, vector<4x8xf32>,
    %c3_451 = arith.constant 3 : index
    %c0_452 = arith.constant 0 : index
    %c0_453 = arith.constant 0 : index
    %c3_454 = arith.constant 3 : index
    %c1_455 = arith.constant 1 : index
    %201 = vector.load %arg1[%c3_451, %c0_452, %c0_453, %c3_454, %c1_455] : memref<4x1x4x10x10xf32, #tpu.memory_space<vmem>>, vector<1x1x4x1x8xf32>
    %202 = vector.shape_cast %201 : vector<1x1x4x1x8xf32> to vector<4x8xf32>
    %c32_456 = arith.constant 32 : index
    %c24_457 = arith.constant 24 : index
    %203 = vector.load %arg7[%c32_456, %c24_457] : memref<100x64xf32, #tpu.memory_space<vmem>>, vector<4x8xf32>
    tpu.vector_store %arg7[%c32_456, %c24_457], %202 {strides = array<i32>} : memref<100x64xf32, #tpu.memory_space<vmem>>, vector<4x8xf32>,
    %c3_458 = arith.constant 3 : index
    %c0_459 = arith.constant 0 : index
    %c0_460 = arith.constant 0 : index
    %c4_461 = arith.constant 4 : index
    %c1_462 = arith.constant 1 : index
    %204 = vector.load %arg1[%c3_458, %c0_459, %c0_460, %c4_461, %c1_462] : memref<4x1x4x10x10xf32, #tpu.memory_space<vmem>>, vector<1x1x4x1x8xf32>
    %205 = vector.shape_cast %204 : vector<1x1x4x1x8xf32> to vector<4x8xf32>
    %c32_463 = arith.constant 32 : index
    %c32_464 = arith.constant 32 : index
    %206 = vector.load %arg7[%c32_463, %c32_464] : memref<100x64xf32, #tpu.memory_space<vmem>>, vector<4x8xf32>
    tpu.vector_store %arg7[%c32_463, %c32_464], %205 {strides = array<i32>} : memref<100x64xf32, #tpu.memory_space<vmem>>, vector<4x8xf32>,
    %c3_465 = arith.constant 3 : index
    %c0_466 = arith.constant 0 : index
    %c0_467 = arith.constant 0 : index
    %c5_468 = arith.constant 5 : index
    %c1_469 = arith.constant 1 : index
    %207 = vector.load %arg1[%c3_465, %c0_466, %c0_467, %c5_468, %c1_469] : memref<4x1x4x10x10xf32, #tpu.memory_space<vmem>>, vector<1x1x4x1x8xf32>
    %208 = vector.shape_cast %207 : vector<1x1x4x1x8xf32> to vector<4x8xf32>
    %c32_470 = arith.constant 32 : index
    %c40_471 = arith.constant 40 : index
    %209 = vector.load %arg7[%c32_470, %c40_471] : memref<100x64xf32, #tpu.memory_space<vmem>>, vector<4x8xf32>
    tpu.vector_store %arg7[%c32_470, %c40_471], %208 {strides = array<i32>} : memref<100x64xf32, #tpu.memory_space<vmem>>, vector<4x8xf32>,
    %c3_472 = arith.constant 3 : index
    %c0_473 = arith.constant 0 : index
    %c0_474 = arith.constant 0 : index
    %c6_475 = arith.constant 6 : index
    %c1_476 = arith.constant 1 : index
    %210 = vector.load %arg1[%c3_472, %c0_473, %c0_474, %c6_475, %c1_476] : memref<4x1x4x10x10xf32, #tpu.memory_space<vmem>>, vector<1x1x4x1x8xf32>
    %211 = vector.shape_cast %210 : vector<1x1x4x1x8xf32> to vector<4x8xf32>
    %c32_477 = arith.constant 32 : index
    %c48_478 = arith.constant 48 : index
    %212 = vector.load %arg7[%c32_477, %c48_478] : memref<100x64xf32, #tpu.memory_space<vmem>>, vector<4x8xf32>
    tpu.vector_store %arg7[%c32_477, %c48_478], %211 {strides = array<i32>} : memref<100x64xf32, #tpu.memory_space<vmem>>, vector<4x8xf32>,
    %c3_479 = arith.constant 3 : index
    %c0_480 = arith.constant 0 : index
    %c0_481 = arith.constant 0 : index
    %c7_482 = arith.constant 7 : index
    %c1_483 = arith.constant 1 : index
    %213 = vector.load %arg1[%c3_479, %c0_480, %c0_481, %c7_482, %c1_483] : memref<4x1x4x10x10xf32, #tpu.memory_space<vmem>>, vector<1x1x4x1x8xf32>
    %214 = vector.shape_cast %213 : vector<1x1x4x1x8xf32> to vector<4x8xf32>
    %c32_484 = arith.constant 32 : index
    %c56_485 = arith.constant 56 : index
    %215 = vector.load %arg7[%c32_484, %c56_485] : memref<100x64xf32, #tpu.memory_space<vmem>>, vector<4x8xf32>
    tpu.vector_store %arg7[%c32_484, %c56_485], %214 {strides = array<i32>} : memref<100x64xf32, #tpu.memory_space<vmem>>, vector<4x8xf32>,
    %c2_486 = arith.constant 2 : index
    %c0_487 = arith.constant 0 : index
    %c0_488 = arith.constant 0 : index
    %c0_489 = arith.constant 0 : index
    %c2_490 = arith.constant 2 : index
    %216 = vector.load %arg1[%c2_486, %c0_487, %c0_488, %c0_489, %c2_490] : memref<4x1x4x10x10xf32, #tpu.memory_space<vmem>>, vector<1x1x4x1x8xf32>
    %217 = vector.shape_cast %216 : vector<1x1x4x1x8xf32> to vector<4x8xf32>
    %c36 = arith.constant 36 : index
    %c0_491 = arith.constant 0 : index
    %218 = vector.load %arg7[%c36, %c0_491] : memref<100x64xf32, #tpu.memory_space<vmem>>, vector<4x8xf32>
    tpu.vector_store %arg7[%c36, %c0_491], %217 {strides = array<i32>} : memref<100x64xf32, #tpu.memory_space<vmem>>, vector<4x8xf32>,
    %c2_492 = arith.constant 2 : index
    %c0_493 = arith.constant 0 : index
    %c0_494 = arith.constant 0 : index
    %c1_495 = arith.constant 1 : index
    %c2_496 = arith.constant 2 : index
    %219 = vector.load %arg1[%c2_492, %c0_493, %c0_494, %c1_495, %c2_496] : memref<4x1x4x10x10xf32, #tpu.memory_space<vmem>>, vector<1x1x4x1x8xf32>
    %220 = vector.shape_cast %219 : vector<1x1x4x1x8xf32> to vector<4x8xf32>
    %c36_497 = arith.constant 36 : index
    %c8_498 = arith.constant 8 : index
    %221 = vector.load %arg7[%c36_497, %c8_498] : memref<100x64xf32, #tpu.memory_space<vmem>>, vector<4x8xf32>
    tpu.vector_store %arg7[%c36_497, %c8_498], %220 {strides = array<i32>} : memref<100x64xf32, #tpu.memory_space<vmem>>, vector<4x8xf32>,
    %c2_499 = arith.constant 2 : index
    %c0_500 = arith.constant 0 : index
    %c0_501 = arith.constant 0 : index
    %c2_502 = arith.constant 2 : index
    %c2_503 = arith.constant 2 : index
    %222 = vector.load %arg1[%c2_499, %c0_500, %c0_501, %c2_502, %c2_503] : memref<4x1x4x10x10xf32, #tpu.memory_space<vmem>>, vector<1x1x4x1x8xf32>
    %223 = vector.shape_cast %222 : vector<1x1x4x1x8xf32> to vector<4x8xf32>
    %c36_504 = arith.constant 36 : index
    %c16_505 = arith.constant 16 : index
    %224 = vector.load %arg7[%c36_504, %c16_505] : memref<100x64xf32, #tpu.memory_space<vmem>>, vector<4x8xf32>
    tpu.vector_store %arg7[%c36_504, %c16_505], %223 {strides = array<i32>} : memref<100x64xf32, #tpu.memory_space<vmem>>, vector<4x8xf32>,
    %c2_506 = arith.constant 2 : index
    %c0_507 = arith.constant 0 : index
    %c0_508 = arith.constant 0 : index
    %c3_509 = arith.constant 3 : index
    %c2_510 = arith.constant 2 : index
    %225 = vector.load %arg1[%c2_506, %c0_507, %c0_508, %c3_509, %c2_510] : memref<4x1x4x10x10xf32, #tpu.memory_space<vmem>>, vector<1x1x4x1x8xf32>
    %226 = vector.shape_cast %225 : vector<1x1x4x1x8xf32> to vector<4x8xf32>
    %c36_511 = arith.constant 36 : index
    %c24_512 = arith.constant 24 : index
    %227 = vector.load %arg7[%c36_511, %c24_512] : memref<100x64xf32, #tpu.memory_space<vmem>>, vector<4x8xf32>
    tpu.vector_store %arg7[%c36_511, %c24_512], %226 {strides = array<i32>} : memref<100x64xf32, #tpu.memory_space<vmem>>, vector<4x8xf32>,
    %c2_513 = arith.constant 2 : index
    %c0_514 = arith.constant 0 : index
    %c0_515 = arith.constant 0 : index
    %c4_516 = arith.constant 4 : index
    %c2_517 = arith.constant 2 : index
    %228 = vector.load %arg1[%c2_513, %c0_514, %c0_515, %c4_516, %c2_517] : memref<4x1x4x10x10xf32, #tpu.memory_space<vmem>>, vector<1x1x4x1x8xf32>
    %229 = vector.shape_cast %228 : vector<1x1x4x1x8xf32> to vector<4x8xf32>
    %c36_518 = arith.constant 36 : index
    %c32_519 = arith.constant 32 : index
    %230 = vector.load %arg7[%c36_518, %c32_519] : memref<100x64xf32, #tpu.memory_space<vmem>>, vector<4x8xf32>
    tpu.vector_store %arg7[%c36_518, %c32_519], %229 {strides = array<i32>} : memref<100x64xf32, #tpu.memory_space<vmem>>, vector<4x8xf32>,
    %c2_520 = arith.constant 2 : index
    %c0_521 = arith.constant 0 : index
    %c0_522 = arith.constant 0 : index
    %c5_523 = arith.constant 5 : index
    %c2_524 = arith.constant 2 : index
    %231 = vector.load %arg1[%c2_520, %c0_521, %c0_522, %c5_523, %c2_524] : memref<4x1x4x10x10xf32, #tpu.memory_space<vmem>>, vector<1x1x4x1x8xf32>
    %232 = vector.shape_cast %231 : vector<1x1x4x1x8xf32> to vector<4x8xf32>
    %c36_525 = arith.constant 36 : index
    %c40_526 = arith.constant 40 : index
    %233 = vector.load %arg7[%c36_525, %c40_526] : memref<100x64xf32, #tpu.memory_space<vmem>>, vector<4x8xf32>
    tpu.vector_store %arg7[%c36_525, %c40_526], %232 {strides = array<i32>} : memref<100x64xf32, #tpu.memory_space<vmem>>, vector<4x8xf32>,
    %c2_527 = arith.constant 2 : index
    %c0_528 = arith.constant 0 : index
    %c0_529 = arith.constant 0 : index
    %c6_530 = arith.constant 6 : index
    %c2_531 = arith.constant 2 : index
    %234 = vector.load %arg1[%c2_527, %c0_528, %c0_529, %c6_530, %c2_531] : memref<4x1x4x10x10xf32, #tpu.memory_space<vmem>>, vector<1x1x4x1x8xf32>
    %235 = vector.shape_cast %234 : vector<1x1x4x1x8xf32> to vector<4x8xf32>
    %c36_532 = arith.constant 36 : index
    %c48_533 = arith.constant 48 : index
    %236 = vector.load %arg7[%c36_532, %c48_533] : memref<100x64xf32, #tpu.memory_space<vmem>>, vector<4x8xf32>
    tpu.vector_store %arg7[%c36_532, %c48_533], %235 {strides = array<i32>} : memref<100x64xf32, #tpu.memory_space<vmem>>, vector<4x8xf32>,
    %c2_534 = arith.constant 2 : index
    %c0_535 = arith.constant 0 : index
    %c0_536 = arith.constant 0 : index
    %c7_537 = arith.constant 7 : index
    %c2_538 = arith.constant 2 : index
    %237 = vector.load %arg1[%c2_534, %c0_535, %c0_536, %c7_537, %c2_538] : memref<4x1x4x10x10xf32, #tpu.memory_space<vmem>>, vector<1x1x4x1x8xf32>
    %238 = vector.shape_cast %237 : vector<1x1x4x1x8xf32> to vector<4x8xf32>
    %c36_539 = arith.constant 36 : index
    %c56_540 = arith.constant 56 : index
    %239 = vector.load %arg7[%c36_539, %c56_540] : memref<100x64xf32, #tpu.memory_space<vmem>>, vector<4x8xf32>
    tpu.vector_store %arg7[%c36_539, %c56_540], %238 {strides = array<i32>} : memref<100x64xf32, #tpu.memory_space<vmem>>, vector<4x8xf32>,
    %c0_541 = arith.constant 0 : index
    %c0_542 = arith.constant 0 : index
    %c0_543 = arith.constant 0 : index
    %c1_544 = arith.constant 1 : index
    %c0_545 = arith.constant 0 : index
    %240 = vector.load %arg1[%c0_541, %c0_542, %c0_543, %c1_544, %c0_545] : memref<4x1x4x10x10xf32, #tpu.memory_space<vmem>>, vector<1x1x4x1x8xf32>
    %241 = vector.shape_cast %240 : vector<1x1x4x1x8xf32> to vector<4x8xf32>
    %c40_546 = arith.constant 40 : index
    %c0_547 = arith.constant 0 : index
    %242 = vector.load %arg7[%c40_546, %c0_547] : memref<100x64xf32, #tpu.memory_space<vmem>>, vector<4x8xf32>
    tpu.vector_store %arg7[%c40_546, %c0_547], %241 {strides = array<i32>} : memref<100x64xf32, #tpu.memory_space<vmem>>, vector<4x8xf32>,
    %c0_548 = arith.constant 0 : index
    %c0_549 = arith.constant 0 : index
    %c0_550 = arith.constant 0 : index
    %c2_551 = arith.constant 2 : index
    %c0_552 = arith.constant 0 : index
    %243 = vector.load %arg1[%c0_548, %c0_549, %c0_550, %c2_551, %c0_552] : memref<4x1x4x10x10xf32, #tpu.memory_space<vmem>>, vector<1x1x4x1x8xf32>
    %244 = vector.shape_cast %243 : vector<1x1x4x1x8xf32> to vector<4x8xf32>
    %c40_553 = arith.constant 40 : index
    %c8_554 = arith.constant 8 : index
    %245 = vector.load %arg7[%c40_553, %c8_554] : memref<100x64xf32, #tpu.memory_space<vmem>>, vector<4x8xf32>
    tpu.vector_store %arg7[%c40_553, %c8_554], %244 {strides = array<i32>} : memref<100x64xf32, #tpu.memory_space<vmem>>, vector<4x8xf32>,
    %c0_555 = arith.constant 0 : index
    %c0_556 = arith.constant 0 : index
    %c0_557 = arith.constant 0 : index
    %c3_558 = arith.constant 3 : index
    %c0_559 = arith.constant 0 : index
    %246 = vector.load %arg1[%c0_555, %c0_556, %c0_557, %c3_558, %c0_559] : memref<4x1x4x10x10xf32, #tpu.memory_space<vmem>>, vector<1x1x4x1x8xf32>
    %247 = vector.shape_cast %246 : vector<1x1x4x1x8xf32> to vector<4x8xf32>
    %c40_560 = arith.constant 40 : index
    %c16_561 = arith.constant 16 : index
    %248 = vector.load %arg7[%c40_560, %c16_561] : memref<100x64xf32, #tpu.memory_space<vmem>>, vector<4x8xf32>
    tpu.vector_store %arg7[%c40_560, %c16_561], %247 {strides = array<i32>} : memref<100x64xf32, #tpu.memory_space<vmem>>, vector<4x8xf32>,
    %c0_562 = arith.constant 0 : index
    %c0_563 = arith.constant 0 : index
    %c0_564 = arith.constant 0 : index
    %c4_565 = arith.constant 4 : index
    %c0_566 = arith.constant 0 : index
    %249 = vector.load %arg1[%c0_562, %c0_563, %c0_564, %c4_565, %c0_566] : memref<4x1x4x10x10xf32, #tpu.memory_space<vmem>>, vector<1x1x4x1x8xf32>
    %250 = vector.shape_cast %249 : vector<1x1x4x1x8xf32> to vector<4x8xf32>
    %c40_567 = arith.constant 40 : index
    %c24_568 = arith.constant 24 : index
    %251 = vector.load %arg7[%c40_567, %c24_568] : memref<100x64xf32, #tpu.memory_space<vmem>>, vector<4x8xf32>
    tpu.vector_store %arg7[%c40_567, %c24_568], %250 {strides = array<i32>} : memref<100x64xf32, #tpu.memory_space<vmem>>, vector<4x8xf32>,
    %c0_569 = arith.constant 0 : index
    %c0_570 = arith.constant 0 : index
    %c0_571 = arith.constant 0 : index
    %c5_572 = arith.constant 5 : index
    %c0_573 = arith.constant 0 : index
    %252 = vector.load %arg1[%c0_569, %c0_570, %c0_571, %c5_572, %c0_573] : memref<4x1x4x10x10xf32, #tpu.memory_space<vmem>>, vector<1x1x4x1x8xf32>
    %253 = vector.shape_cast %252 : vector<1x1x4x1x8xf32> to vector<4x8xf32>
    %c40_574 = arith.constant 40 : index
    %c32_575 = arith.constant 32 : index
    %254 = vector.load %arg7[%c40_574, %c32_575] : memref<100x64xf32, #tpu.memory_space<vmem>>, vector<4x8xf32>
    tpu.vector_store %arg7[%c40_574, %c32_575], %253 {strides = array<i32>} : memref<100x64xf32, #tpu.memory_space<vmem>>, vector<4x8xf32>,
    %c0_576 = arith.constant 0 : index
    %c0_577 = arith.constant 0 : index
    %c0_578 = arith.constant 0 : index
    %c6_579 = arith.constant 6 : index
    %c0_580 = arith.constant 0 : index
    %255 = vector.load %arg1[%c0_576, %c0_577, %c0_578, %c6_579, %c0_580] : memref<4x1x4x10x10xf32, #tpu.memory_space<vmem>>, vector<1x1x4x1x8xf32>
    %256 = vector.shape_cast %255 : vector<1x1x4x1x8xf32> to vector<4x8xf32>
    %c40_581 = arith.constant 40 : index
    %c40_582 = arith.constant 40 : index
    %257 = vector.load %arg7[%c40_581, %c40_582] : memref<100x64xf32, #tpu.memory_space<vmem>>, vector<4x8xf32>
    tpu.vector_store %arg7[%c40_581, %c40_582], %256 {strides = array<i32>} : memref<100x64xf32, #tpu.memory_space<vmem>>, vector<4x8xf32>,
    %c0_583 = arith.constant 0 : index
    %c0_584 = arith.constant 0 : index
    %c0_585 = arith.constant 0 : index
    %c7_586 = arith.constant 7 : index
    %c0_587 = arith.constant 0 : index
    %258 = vector.load %arg1[%c0_583, %c0_584, %c0_585, %c7_586, %c0_587] : memref<4x1x4x10x10xf32, #tpu.memory_space<vmem>>, vector<1x1x4x1x8xf32>
    %259 = vector.shape_cast %258 : vector<1x1x4x1x8xf32> to vector<4x8xf32>
    %c40_588 = arith.constant 40 : index
    %c48_589 = arith.constant 48 : index
    %260 = vector.load %arg7[%c40_588, %c48_589] : memref<100x64xf32, #tpu.memory_space<vmem>>, vector<4x8xf32>
    tpu.vector_store %arg7[%c40_588, %c48_589], %259 {strides = array<i32>} : memref<100x64xf32, #tpu.memory_space<vmem>>, vector<4x8xf32>,
    %c0_590 = arith.constant 0 : index
    %c0_591 = arith.constant 0 : index
    %c0_592 = arith.constant 0 : index
    %c8_593 = arith.constant 8 : index
    %c0_594 = arith.constant 0 : index
    %261 = vector.load %arg1[%c0_590, %c0_591, %c0_592, %c8_593, %c0_594] : memref<4x1x4x10x10xf32, #tpu.memory_space<vmem>>, vector<1x1x4x1x8xf32>
    %262 = vector.shape_cast %261 : vector<1x1x4x1x8xf32> to vector<4x8xf32>
    %c40_595 = arith.constant 40 : index
    %c56_596 = arith.constant 56 : index
    %263 = vector.load %arg7[%c40_595, %c56_596] : memref<100x64xf32, #tpu.memory_space<vmem>>, vector<4x8xf32>
    tpu.vector_store %arg7[%c40_595, %c56_596], %262 {strides = array<i32>} : memref<100x64xf32, #tpu.memory_space<vmem>>, vector<4x8xf32>,
    %c1_597 = arith.constant 1 : index
    %c0_598 = arith.constant 0 : index
    %c0_599 = arith.constant 0 : index
    %c1_600 = arith.constant 1 : index
    %c0_601 = arith.constant 0 : index
    %264 = vector.load %arg1[%c1_597, %c0_598, %c0_599, %c1_600, %c0_601] : memref<4x1x4x10x10xf32, #tpu.memory_space<vmem>>, vector<1x1x4x1x8xf32>
    %265 = vector.shape_cast %264 : vector<1x1x4x1x8xf32> to vector<4x8xf32>
    %c44 = arith.constant 44 : index
    %c0_602 = arith.constant 0 : index
    %266 = vector.load %arg7[%c44, %c0_602] : memref<100x64xf32, #tpu.memory_space<vmem>>, vector<4x8xf32>
    tpu.vector_store %arg7[%c44, %c0_602], %265 {strides = array<i32>} : memref<100x64xf32, #tpu.memory_space<vmem>>, vector<4x8xf32>,
    %c1_603 = arith.constant 1 : index
    %c0_604 = arith.constant 0 : index
    %c0_605 = arith.constant 0 : index
    %c2_606 = arith.constant 2 : index
    %c0_607 = arith.constant 0 : index
    %267 = vector.load %arg1[%c1_603, %c0_604, %c0_605, %c2_606, %c0_607] : memref<4x1x4x10x10xf32, #tpu.memory_space<vmem>>, vector<1x1x4x1x8xf32>
    %268 = vector.shape_cast %267 : vector<1x1x4x1x8xf32> to vector<4x8xf32>
    %c44_608 = arith.constant 44 : index
    %c8_609 = arith.constant 8 : index
    %269 = vector.load %arg7[%c44_608, %c8_609] : memref<100x64xf32, #tpu.memory_space<vmem>>, vector<4x8xf32>
    tpu.vector_store %arg7[%c44_608, %c8_609], %268 {strides = array<i32>} : memref<100x64xf32, #tpu.memory_space<vmem>>, vector<4x8xf32>,
    %c1_610 = arith.constant 1 : index
    %c0_611 = arith.constant 0 : index
    %c0_612 = arith.constant 0 : index
    %c3_613 = arith.constant 3 : index
    %c0_614 = arith.constant 0 : index
    %270 = vector.load %arg1[%c1_610, %c0_611, %c0_612, %c3_613, %c0_614] : memref<4x1x4x10x10xf32, #tpu.memory_space<vmem>>, vector<1x1x4x1x8xf32>
    %271 = vector.shape_cast %270 : vector<1x1x4x1x8xf32> to vector<4x8xf32>
    %c44_615 = arith.constant 44 : index
    %c16_616 = arith.constant 16 : index
    %272 = vector.load %arg7[%c44_615, %c16_616] : memref<100x64xf32, #tpu.memory_space<vmem>>, vector<4x8xf32>
    tpu.vector_store %arg7[%c44_615, %c16_616], %271 {strides = array<i32>} : memref<100x64xf32, #tpu.memory_space<vmem>>, vector<4x8xf32>,
    %c1_617 = arith.constant 1 : index
    %c0_618 = arith.constant 0 : index
    %c0_619 = arith.constant 0 : index
    %c4_620 = arith.constant 4 : index
    %c0_621 = arith.constant 0 : index
    %273 = vector.load %arg1[%c1_617, %c0_618, %c0_619, %c4_620, %c0_621] : memref<4x1x4x10x10xf32, #tpu.memory_space<vmem>>, vector<1x1x4x1x8xf32>
    %274 = vector.shape_cast %273 : vector<1x1x4x1x8xf32> to vector<4x8xf32>
    %c44_622 = arith.constant 44 : index
    %c24_623 = arith.constant 24 : index
    %275 = vector.load %arg7[%c44_622, %c24_623] : memref<100x64xf32, #tpu.memory_space<vmem>>, vector<4x8xf32>
    tpu.vector_store %arg7[%c44_622, %c24_623], %274 {strides = array<i32>} : memref<100x64xf32, #tpu.memory_space<vmem>>, vector<4x8xf32>,
    %c1_624 = arith.constant 1 : index
    %c0_625 = arith.constant 0 : index
    %c0_626 = arith.constant 0 : index
    %c5_627 = arith.constant 5 : index
    %c0_628 = arith.constant 0 : index
    %276 = vector.load %arg1[%c1_624, %c0_625, %c0_626, %c5_627, %c0_628] : memref<4x1x4x10x10xf32, #tpu.memory_space<vmem>>, vector<1x1x4x1x8xf32>
    %277 = vector.shape_cast %276 : vector<1x1x4x1x8xf32> to vector<4x8xf32>
    %c44_629 = arith.constant 44 : index
    %c32_630 = arith.constant 32 : index
    %278 = vector.load %arg7[%c44_629, %c32_630] : memref<100x64xf32, #tpu.memory_space<vmem>>, vector<4x8xf32>
    tpu.vector_store %arg7[%c44_629, %c32_630], %277 {strides = array<i32>} : memref<100x64xf32, #tpu.memory_space<vmem>>, vector<4x8xf32>,
    %c1_631 = arith.constant 1 : index
    %c0_632 = arith.constant 0 : index
    %c0_633 = arith.constant 0 : index
    %c6_634 = arith.constant 6 : index
    %c0_635 = arith.constant 0 : index
    %279 = vector.load %arg1[%c1_631, %c0_632, %c0_633, %c6_634, %c0_635] : memref<4x1x4x10x10xf32, #tpu.memory_space<vmem>>, vector<1x1x4x1x8xf32>
    %280 = vector.shape_cast %279 : vector<1x1x4x1x8xf32> to vector<4x8xf32>
    %c44_636 = arith.constant 44 : index
    %c40_637 = arith.constant 40 : index
    %281 = vector.load %arg7[%c44_636, %c40_637] : memref<100x64xf32, #tpu.memory_space<vmem>>, vector<4x8xf32>
    tpu.vector_store %arg7[%c44_636, %c40_637], %280 {strides = array<i32>} : memref<100x64xf32, #tpu.memory_space<vmem>>, vector<4x8xf32>,
    %c1_638 = arith.constant 1 : index
    %c0_639 = arith.constant 0 : index
    %c0_640 = arith.constant 0 : index
    %c7_641 = arith.constant 7 : index
    %c0_642 = arith.constant 0 : index
    %282 = vector.load %arg1[%c1_638, %c0_639, %c0_640, %c7_641, %c0_642] : memref<4x1x4x10x10xf32, #tpu.memory_space<vmem>>, vector<1x1x4x1x8xf32>
    %283 = vector.shape_cast %282 : vector<1x1x4x1x8xf32> to vector<4x8xf32>
    %c44_643 = arith.constant 44 : index
    %c48_644 = arith.constant 48 : index
    %284 = vector.load %arg7[%c44_643, %c48_644] : memref<100x64xf32, #tpu.memory_space<vmem>>, vector<4x8xf32>
    tpu.vector_store %arg7[%c44_643, %c48_644], %283 {strides = array<i32>} : memref<100x64xf32, #tpu.memory_space<vmem>>, vector<4x8xf32>,
    %c1_645 = arith.constant 1 : index
    %c0_646 = arith.constant 0 : index
    %c0_647 = arith.constant 0 : index
    %c8_648 = arith.constant 8 : index
    %c0_649 = arith.constant 0 : index
    %285 = vector.load %arg1[%c1_645, %c0_646, %c0_647, %c8_648, %c0_649] : memref<4x1x4x10x10xf32, #tpu.memory_space<vmem>>, vector<1x1x4x1x8xf32>
    %286 = vector.shape_cast %285 : vector<1x1x4x1x8xf32> to vector<4x8xf32>
    %c44_650 = arith.constant 44 : index
    %c56_651 = arith.constant 56 : index
    %287 = vector.load %arg7[%c44_650, %c56_651] : memref<100x64xf32, #tpu.memory_space<vmem>>, vector<4x8xf32>
    tpu.vector_store %arg7[%c44_650, %c56_651], %286 {strides = array<i32>} : memref<100x64xf32, #tpu.memory_space<vmem>>, vector<4x8xf32>,
    %c0_652 = arith.constant 0 : index
    %c0_653 = arith.constant 0 : index
    %c0_654 = arith.constant 0 : index
    %c1_655 = arith.constant 1 : index
    %c1_656 = arith.constant 1 : index
    %288 = vector.load %arg1[%c0_652, %c0_653, %c0_654, %c1_655, %c1_656] : memref<4x1x4x10x10xf32, #tpu.memory_space<vmem>>, vector<1x1x4x1x8xf32>
    %289 = vector.shape_cast %288 : vector<1x1x4x1x8xf32> to vector<4x8xf32>
    %c48_657 = arith.constant 48 : index
    %c0_658 = arith.constant 0 : index
    %290 = vector.load %arg7[%c48_657, %c0_658] : memref<100x64xf32, #tpu.memory_space<vmem>>, vector<4x8xf32>
    tpu.vector_store %arg7[%c48_657, %c0_658], %289 {strides = array<i32>} : memref<100x64xf32, #tpu.memory_space<vmem>>, vector<4x8xf32>,
    %c0_659 = arith.constant 0 : index
    %c0_660 = arith.constant 0 : index
    %c0_661 = arith.constant 0 : index
    %c2_662 = arith.constant 2 : index
    %c1_663 = arith.constant 1 : index
    %291 = vector.load %arg1[%c0_659, %c0_660, %c0_661, %c2_662, %c1_663] : memref<4x1x4x10x10xf32, #tpu.memory_space<vmem>>, vector<1x1x4x1x8xf32>
    %292 = vector.shape_cast %291 : vector<1x1x4x1x8xf32> to vector<4x8xf32>
    %c48_664 = arith.constant 48 : index
    %c8_665 = arith.constant 8 : index
    %293 = vector.load %arg7[%c48_664, %c8_665] : memref<100x64xf32, #tpu.memory_space<vmem>>, vector<4x8xf32>
    tpu.vector_store %arg7[%c48_664, %c8_665], %292 {strides = array<i32>} : memref<100x64xf32, #tpu.memory_space<vmem>>, vector<4x8xf32>,
    %c0_666 = arith.constant 0 : index
    %c0_667 = arith.constant 0 : index
    %c0_668 = arith.constant 0 : index
    %c3_669 = arith.constant 3 : index
    %c1_670 = arith.constant 1 : index
    %294 = vector.load %arg1[%c0_666, %c0_667, %c0_668, %c3_669, %c1_670] : memref<4x1x4x10x10xf32, #tpu.memory_space<vmem>>, vector<1x1x4x1x8xf32>
    %295 = vector.shape_cast %294 : vector<1x1x4x1x8xf32> to vector<4x8xf32>
    %c48_671 = arith.constant 48 : index
    %c16_672 = arith.constant 16 : index
    %296 = vector.load %arg7[%c48_671, %c16_672] : memref<100x64xf32, #tpu.memory_space<vmem>>, vector<4x8xf32>
    tpu.vector_store %arg7[%c48_671, %c16_672], %295 {strides = array<i32>} : memref<100x64xf32, #tpu.memory_space<vmem>>, vector<4x8xf32>,
    %c0_673 = arith.constant 0 : index
    %c0_674 = arith.constant 0 : index
    %c0_675 = arith.constant 0 : index
    %c4_676 = arith.constant 4 : index
    %c1_677 = arith.constant 1 : index
    %297 = vector.load %arg1[%c0_673, %c0_674, %c0_675, %c4_676, %c1_677] : memref<4x1x4x10x10xf32, #tpu.memory_space<vmem>>, vector<1x1x4x1x8xf32>
    %298 = vector.shape_cast %297 : vector<1x1x4x1x8xf32> to vector<4x8xf32>
    %c48_678 = arith.constant 48 : index
    %c24_679 = arith.constant 24 : index
    %299 = vector.load %arg7[%c48_678, %c24_679] : memref<100x64xf32, #tpu.memory_space<vmem>>, vector<4x8xf32>
    tpu.vector_store %arg7[%c48_678, %c24_679], %298 {strides = array<i32>} : memref<100x64xf32, #tpu.memory_space<vmem>>, vector<4x8xf32>,
    %c0_680 = arith.constant 0 : index
    %c0_681 = arith.constant 0 : index
    %c0_682 = arith.constant 0 : index
    %c5_683 = arith.constant 5 : index
    %c1_684 = arith.constant 1 : index
    %300 = vector.load %arg1[%c0_680, %c0_681, %c0_682, %c5_683, %c1_684] : memref<4x1x4x10x10xf32, #tpu.memory_space<vmem>>, vector<1x1x4x1x8xf32>
    %301 = vector.shape_cast %300 : vector<1x1x4x1x8xf32> to vector<4x8xf32>
    %c48_685 = arith.constant 48 : index
    %c32_686 = arith.constant 32 : index
    %302 = vector.load %arg7[%c48_685, %c32_686] : memref<100x64xf32, #tpu.memory_space<vmem>>, vector<4x8xf32>
    tpu.vector_store %arg7[%c48_685, %c32_686], %301 {strides = array<i32>} : memref<100x64xf32, #tpu.memory_space<vmem>>, vector<4x8xf32>,
    %c0_687 = arith.constant 0 : index
    %c0_688 = arith.constant 0 : index
    %c0_689 = arith.constant 0 : index
    %c6_690 = arith.constant 6 : index
    %c1_691 = arith.constant 1 : index
    %303 = vector.load %arg1[%c0_687, %c0_688, %c0_689, %c6_690, %c1_691] : memref<4x1x4x10x10xf32, #tpu.memory_space<vmem>>, vector<1x1x4x1x8xf32>
    %304 = vector.shape_cast %303 : vector<1x1x4x1x8xf32> to vector<4x8xf32>
    %c48_692 = arith.constant 48 : index
    %c40_693 = arith.constant 40 : index
    %305 = vector.load %arg7[%c48_692, %c40_693] : memref<100x64xf32, #tpu.memory_space<vmem>>, vector<4x8xf32>
    tpu.vector_store %arg7[%c48_692, %c40_693], %304 {strides = array<i32>} : memref<100x64xf32, #tpu.memory_space<vmem>>, vector<4x8xf32>,
    %c0_694 = arith.constant 0 : index
    %c0_695 = arith.constant 0 : index
    %c0_696 = arith.constant 0 : index
    %c7_697 = arith.constant 7 : index
    %c1_698 = arith.constant 1 : index
    %306 = vector.load %arg1[%c0_694, %c0_695, %c0_696, %c7_697, %c1_698] : memref<4x1x4x10x10xf32, #tpu.memory_space<vmem>>, vector<1x1x4x1x8xf32>
    %307 = vector.shape_cast %306 : vector<1x1x4x1x8xf32> to vector<4x8xf32>
    %c48_699 = arith.constant 48 : index
    %c48_700 = arith.constant 48 : index
    %308 = vector.load %arg7[%c48_699, %c48_700] : memref<100x64xf32, #tpu.memory_space<vmem>>, vector<4x8xf32>
    tpu.vector_store %arg7[%c48_699, %c48_700], %307 {strides = array<i32>} : memref<100x64xf32, #tpu.memory_space<vmem>>, vector<4x8xf32>,
    %c0_701 = arith.constant 0 : index
    %c0_702 = arith.constant 0 : index
    %c0_703 = arith.constant 0 : index
    %c8_704 = arith.constant 8 : index
    %c1_705 = arith.constant 1 : index
    %309 = vector.load %arg1[%c0_701, %c0_702, %c0_703, %c8_704, %c1_705] : memref<4x1x4x10x10xf32, #tpu.memory_space<vmem>>, vector<1x1x4x1x8xf32>
    %310 = vector.shape_cast %309 : vector<1x1x4x1x8xf32> to vector<4x8xf32>
    %c48_706 = arith.constant 48 : index
    %c56_707 = arith.constant 56 : index
    %311 = vector.load %arg7[%c48_706, %c56_707] : memref<100x64xf32, #tpu.memory_space<vmem>>, vector<4x8xf32>
    tpu.vector_store %arg7[%c48_706, %c56_707], %310 {strides = array<i32>} : memref<100x64xf32, #tpu.memory_space<vmem>>, vector<4x8xf32>,
    %c1_708 = arith.constant 1 : index
    %c0_709 = arith.constant 0 : index
    %c0_710 = arith.constant 0 : index
    %c1_711 = arith.constant 1 : index
    %c1_712 = arith.constant 1 : index
    %312 = vector.load %arg1[%c1_708, %c0_709, %c0_710, %c1_711, %c1_712] : memref<4x1x4x10x10xf32, #tpu.memory_space<vmem>>, vector<1x1x4x1x8xf32>
    %313 = vector.shape_cast %312 : vector<1x1x4x1x8xf32> to vector<4x8xf32>
    %c52 = arith.constant 52 : index
    %c0_713 = arith.constant 0 : index
    %314 = vector.load %arg7[%c52, %c0_713] : memref<100x64xf32, #tpu.memory_space<vmem>>, vector<4x8xf32>
    tpu.vector_store %arg7[%c52, %c0_713], %313 {strides = array<i32>} : memref<100x64xf32, #tpu.memory_space<vmem>>, vector<4x8xf32>,
    %c1_714 = arith.constant 1 : index
    %c0_715 = arith.constant 0 : index
    %c0_716 = arith.constant 0 : index
    %c2_717 = arith.constant 2 : index
    %c1_718 = arith.constant 1 : index
    %315 = vector.load %arg1[%c1_714, %c0_715, %c0_716, %c2_717, %c1_718] : memref<4x1x4x10x10xf32, #tpu.memory_space<vmem>>, vector<1x1x4x1x8xf32>
    %316 = vector.shape_cast %315 : vector<1x1x4x1x8xf32> to vector<4x8xf32>
    %c52_719 = arith.constant 52 : index
    %c8_720 = arith.constant 8 : index
    %317 = vector.load %arg7[%c52_719, %c8_720] : memref<100x64xf32, #tpu.memory_space<vmem>>, vector<4x8xf32>
    tpu.vector_store %arg7[%c52_719, %c8_720], %316 {strides = array<i32>} : memref<100x64xf32, #tpu.memory_space<vmem>>, vector<4x8xf32>,
    %c1_721 = arith.constant 1 : index
    %c0_722 = arith.constant 0 : index
    %c0_723 = arith.constant 0 : index
    %c3_724 = arith.constant 3 : index
    %c1_725 = arith.constant 1 : index
    %318 = vector.load %arg1[%c1_721, %c0_722, %c0_723, %c3_724, %c1_725] : memref<4x1x4x10x10xf32, #tpu.memory_space<vmem>>, vector<1x1x4x1x8xf32>
    %319 = vector.shape_cast %318 : vector<1x1x4x1x8xf32> to vector<4x8xf32>
    %c52_726 = arith.constant 52 : index
    %c16_727 = arith.constant 16 : index
    %320 = vector.load %arg7[%c52_726, %c16_727] : memref<100x64xf32, #tpu.memory_space<vmem>>, vector<4x8xf32>
    tpu.vector_store %arg7[%c52_726, %c16_727], %319 {strides = array<i32>} : memref<100x64xf32, #tpu.memory_space<vmem>>, vector<4x8xf32>,
    %c1_728 = arith.constant 1 : index
    %c0_729 = arith.constant 0 : index
    %c0_730 = arith.constant 0 : index
    %c4_731 = arith.constant 4 : index
    %c1_732 = arith.constant 1 : index
    %321 = vector.load %arg1[%c1_728, %c0_729, %c0_730, %c4_731, %c1_732] : memref<4x1x4x10x10xf32, #tpu.memory_space<vmem>>, vector<1x1x4x1x8xf32>
    %322 = vector.shape_cast %321 : vector<1x1x4x1x8xf32> to vector<4x8xf32>
    %c52_733 = arith.constant 52 : index
    %c24_734 = arith.constant 24 : index
    %323 = vector.load %arg7[%c52_733, %c24_734] : memref<100x64xf32, #tpu.memory_space<vmem>>, vector<4x8xf32>
    tpu.vector_store %arg7[%c52_733, %c24_734], %322 {strides = array<i32>} : memref<100x64xf32, #tpu.memory_space<vmem>>, vector<4x8xf32>,
    %c1_735 = arith.constant 1 : index
    %c0_736 = arith.constant 0 : index
    %c0_737 = arith.constant 0 : index
    %c5_738 = arith.constant 5 : index
    %c1_739 = arith.constant 1 : index
    %324 = vector.load %arg1[%c1_735, %c0_736, %c0_737, %c5_738, %c1_739] : memref<4x1x4x10x10xf32, #tpu.memory_space<vmem>>, vector<1x1x4x1x8xf32>
    %325 = vector.shape_cast %324 : vector<1x1x4x1x8xf32> to vector<4x8xf32>
    %c52_740 = arith.constant 52 : index
    %c32_741 = arith.constant 32 : index
    %326 = vector.load %arg7[%c52_740, %c32_741] : memref<100x64xf32, #tpu.memory_space<vmem>>, vector<4x8xf32>
    tpu.vector_store %arg7[%c52_740, %c32_741], %325 {strides = array<i32>} : memref<100x64xf32, #tpu.memory_space<vmem>>, vector<4x8xf32>,
    %c1_742 = arith.constant 1 : index
    %c0_743 = arith.constant 0 : index
    %c0_744 = arith.constant 0 : index
    %c6_745 = arith.constant 6 : index
    %c1_746 = arith.constant 1 : index
    %327 = vector.load %arg1[%c1_742, %c0_743, %c0_744, %c6_745, %c1_746] : memref<4x1x4x10x10xf32, #tpu.memory_space<vmem>>, vector<1x1x4x1x8xf32>
    %328 = vector.shape_cast %327 : vector<1x1x4x1x8xf32> to vector<4x8xf32>
    %c52_747 = arith.constant 52 : index
    %c40_748 = arith.constant 40 : index
    %329 = vector.load %arg7[%c52_747, %c40_748] : memref<100x64xf32, #tpu.memory_space<vmem>>, vector<4x8xf32>
    tpu.vector_store %arg7[%c52_747, %c40_748], %328 {strides = array<i32>} : memref<100x64xf32, #tpu.memory_space<vmem>>, vector<4x8xf32>,
    %c1_749 = arith.constant 1 : index
    %c0_750 = arith.constant 0 : index
    %c0_751 = arith.constant 0 : index
    %c7_752 = arith.constant 7 : index
    %c1_753 = arith.constant 1 : index
    %330 = vector.load %arg1[%c1_749, %c0_750, %c0_751, %c7_752, %c1_753] : memref<4x1x4x10x10xf32, #tpu.memory_space<vmem>>, vector<1x1x4x1x8xf32>
    %331 = vector.shape_cast %330 : vector<1x1x4x1x8xf32> to vector<4x8xf32>
    %c52_754 = arith.constant 52 : index
    %c48_755 = arith.constant 48 : index
    %332 = vector.load %arg7[%c52_754, %c48_755] : memref<100x64xf32, #tpu.memory_space<vmem>>, vector<4x8xf32>
    tpu.vector_store %arg7[%c52_754, %c48_755], %331 {strides = array<i32>} : memref<100x64xf32, #tpu.memory_space<vmem>>, vector<4x8xf32>,
    %c1_756 = arith.constant 1 : index
    %c0_757 = arith.constant 0 : index
    %c0_758 = arith.constant 0 : index
    %c8_759 = arith.constant 8 : index
    %c1_760 = arith.constant 1 : index
    %333 = vector.load %arg1[%c1_756, %c0_757, %c0_758, %c8_759, %c1_760] : memref<4x1x4x10x10xf32, #tpu.memory_space<vmem>>, vector<1x1x4x1x8xf32>
    %334 = vector.shape_cast %333 : vector<1x1x4x1x8xf32> to vector<4x8xf32>
    %c52_761 = arith.constant 52 : index
    %c56_762 = arith.constant 56 : index
    %335 = vector.load %arg7[%c52_761, %c56_762] : memref<100x64xf32, #tpu.memory_space<vmem>>, vector<4x8xf32>
    tpu.vector_store %arg7[%c52_761, %c56_762], %334 {strides = array<i32>} : memref<100x64xf32, #tpu.memory_space<vmem>>, vector<4x8xf32>,
    %c0_763 = arith.constant 0 : index
    %c0_764 = arith.constant 0 : index
    %c0_765 = arith.constant 0 : index
    %c1_766 = arith.constant 1 : index
    %c2_767 = arith.constant 2 : index
    %336 = vector.load %arg1[%c0_763, %c0_764, %c0_765, %c1_766, %c2_767] : memref<4x1x4x10x10xf32, #tpu.memory_space<vmem>>, vector<1x1x4x1x8xf32>
    %337 = vector.shape_cast %336 : vector<1x1x4x1x8xf32> to vector<4x8xf32>
    %c56_768 = arith.constant 56 : index
    %c0_769 = arith.constant 0 : index
    %338 = vector.load %arg7[%c56_768, %c0_769] : memref<100x64xf32, #tpu.memory_space<vmem>>, vector<4x8xf32>
    tpu.vector_store %arg7[%c56_768, %c0_769], %337 {strides = array<i32>} : memref<100x64xf32, #tpu.memory_space<vmem>>, vector<4x8xf32>,
    %c0_770 = arith.constant 0 : index
    %c0_771 = arith.constant 0 : index
    %c0_772 = arith.constant 0 : index
    %c2_773 = arith.constant 2 : index
    %c2_774 = arith.constant 2 : index
    %339 = vector.load %arg1[%c0_770, %c0_771, %c0_772, %c2_773, %c2_774] : memref<4x1x4x10x10xf32, #tpu.memory_space<vmem>>, vector<1x1x4x1x8xf32>
    %340 = vector.shape_cast %339 : vector<1x1x4x1x8xf32> to vector<4x8xf32>
    %c56_775 = arith.constant 56 : index
    %c8_776 = arith.constant 8 : index
    %341 = vector.load %arg7[%c56_775, %c8_776] : memref<100x64xf32, #tpu.memory_space<vmem>>, vector<4x8xf32>
    tpu.vector_store %arg7[%c56_775, %c8_776], %340 {strides = array<i32>} : memref<100x64xf32, #tpu.memory_space<vmem>>, vector<4x8xf32>,
    %c0_777 = arith.constant 0 : index
    %c0_778 = arith.constant 0 : index
    %c0_779 = arith.constant 0 : index
    %c3_780 = arith.constant 3 : index
    %c2_781 = arith.constant 2 : index
    %342 = vector.load %arg1[%c0_777, %c0_778, %c0_779, %c3_780, %c2_781] : memref<4x1x4x10x10xf32, #tpu.memory_space<vmem>>, vector<1x1x4x1x8xf32>
    %343 = vector.shape_cast %342 : vector<1x1x4x1x8xf32> to vector<4x8xf32>
    %c56_782 = arith.constant 56 : index
    %c16_783 = arith.constant 16 : index
    %344 = vector.load %arg7[%c56_782, %c16_783] : memref<100x64xf32, #tpu.memory_space<vmem>>, vector<4x8xf32>
    tpu.vector_store %arg7[%c56_782, %c16_783], %343 {strides = array<i32>} : memref<100x64xf32, #tpu.memory_space<vmem>>, vector<4x8xf32>,
    %c0_784 = arith.constant 0 : index
    %c0_785 = arith.constant 0 : index
    %c0_786 = arith.constant 0 : index
    %c4_787 = arith.constant 4 : index
    %c2_788 = arith.constant 2 : index
    %345 = vector.load %arg1[%c0_784, %c0_785, %c0_786, %c4_787, %c2_788] : memref<4x1x4x10x10xf32, #tpu.memory_space<vmem>>, vector<1x1x4x1x8xf32>
    %346 = vector.shape_cast %345 : vector<1x1x4x1x8xf32> to vector<4x8xf32>
    %c56_789 = arith.constant 56 : index
    %c24_790 = arith.constant 24 : index
    %347 = vector.load %arg7[%c56_789, %c24_790] : memref<100x64xf32, #tpu.memory_space<vmem>>, vector<4x8xf32>
    tpu.vector_store %arg7[%c56_789, %c24_790], %346 {strides = array<i32>} : memref<100x64xf32, #tpu.memory_space<vmem>>, vector<4x8xf32>,
    %c0_791 = arith.constant 0 : index
    %c0_792 = arith.constant 0 : index
    %c0_793 = arith.constant 0 : index
    %c5_794 = arith.constant 5 : index
    %c2_795 = arith.constant 2 : index
    %348 = vector.load %arg1[%c0_791, %c0_792, %c0_793, %c5_794, %c2_795] : memref<4x1x4x10x10xf32, #tpu.memory_space<vmem>>, vector<1x1x4x1x8xf32>
    %349 = vector.shape_cast %348 : vector<1x1x4x1x8xf32> to vector<4x8xf32>
    %c56_796 = arith.constant 56 : index
    %c32_797 = arith.constant 32 : index
    %350 = vector.load %arg7[%c56_796, %c32_797] : memref<100x64xf32, #tpu.memory_space<vmem>>, vector<4x8xf32>
    tpu.vector_store %arg7[%c56_796, %c32_797], %349 {strides = array<i32>} : memref<100x64xf32, #tpu.memory_space<vmem>>, vector<4x8xf32>,
    %c0_798 = arith.constant 0 : index
    %c0_799 = arith.constant 0 : index
    %c0_800 = arith.constant 0 : index
    %c6_801 = arith.constant 6 : index
    %c2_802 = arith.constant 2 : index
    %351 = vector.load %arg1[%c0_798, %c0_799, %c0_800, %c6_801, %c2_802] : memref<4x1x4x10x10xf32, #tpu.memory_space<vmem>>, vector<1x1x4x1x8xf32>
    %352 = vector.shape_cast %351 : vector<1x1x4x1x8xf32> to vector<4x8xf32>
    %c56_803 = arith.constant 56 : index
    %c40_804 = arith.constant 40 : index
    %353 = vector.load %arg7[%c56_803, %c40_804] : memref<100x64xf32, #tpu.memory_space<vmem>>, vector<4x8xf32>
    tpu.vector_store %arg7[%c56_803, %c40_804], %352 {strides = array<i32>} : memref<100x64xf32, #tpu.memory_space<vmem>>, vector<4x8xf32>,
    %c0_805 = arith.constant 0 : index
    %c0_806 = arith.constant 0 : index
    %c0_807 = arith.constant 0 : index
    %c7_808 = arith.constant 7 : index
    %c2_809 = arith.constant 2 : index
    %354 = vector.load %arg1[%c0_805, %c0_806, %c0_807, %c7_808, %c2_809] : memref<4x1x4x10x10xf32, #tpu.memory_space<vmem>>, vector<1x1x4x1x8xf32>
    %355 = vector.shape_cast %354 : vector<1x1x4x1x8xf32> to vector<4x8xf32>
    %c56_810 = arith.constant 56 : index
    %c48_811 = arith.constant 48 : index
    %356 = vector.load %arg7[%c56_810, %c48_811] : memref<100x64xf32, #tpu.memory_space<vmem>>, vector<4x8xf32>
    tpu.vector_store %arg7[%c56_810, %c48_811], %355 {strides = array<i32>} : memref<100x64xf32, #tpu.memory_space<vmem>>, vector<4x8xf32>,
    %c0_812 = arith.constant 0 : index
    %c0_813 = arith.constant 0 : index
    %c0_814 = arith.constant 0 : index
    %c8_815 = arith.constant 8 : index
    %c2_816 = arith.constant 2 : index
    %357 = vector.load %arg1[%c0_812, %c0_813, %c0_814, %c8_815, %c2_816] : memref<4x1x4x10x10xf32, #tpu.memory_space<vmem>>, vector<1x1x4x1x8xf32>
    %358 = vector.shape_cast %357 : vector<1x1x4x1x8xf32> to vector<4x8xf32>
    %c56_817 = arith.constant 56 : index
    %c56_818 = arith.constant 56 : index
    %359 = vector.load %arg7[%c56_817, %c56_818] : memref<100x64xf32, #tpu.memory_space<vmem>>, vector<4x8xf32>
    tpu.vector_store %arg7[%c56_817, %c56_818], %358 {strides = array<i32>} : memref<100x64xf32, #tpu.memory_space<vmem>>, vector<4x8xf32>,
    %c2_819 = arith.constant 2 : index
    %c0_820 = arith.constant 0 : index
    %c0_821 = arith.constant 0 : index
    %c1_822 = arith.constant 1 : index
    %c0_823 = arith.constant 0 : index
    %360 = vector.load %arg1[%c2_819, %c0_820, %c0_821, %c1_822, %c0_823] : memref<4x1x4x10x10xf32, #tpu.memory_space<vmem>>, vector<1x1x4x1x8xf32>
    %361 = vector.shape_cast %360 : vector<1x1x4x1x8xf32> to vector<4x8xf32>
    %c60 = arith.constant 60 : index
    %c0_824 = arith.constant 0 : index
    %362 = vector.load %arg7[%c60, %c0_824] : memref<100x64xf32, #tpu.memory_space<vmem>>, vector<4x8xf32>
    tpu.vector_store %arg7[%c60, %c0_824], %361 {strides = array<i32>} : memref<100x64xf32, #tpu.memory_space<vmem>>, vector<4x8xf32>,
    %c2_825 = arith.constant 2 : index
    %c0_826 = arith.constant 0 : index
    %c0_827 = arith.constant 0 : index
    %c2_828 = arith.constant 2 : index
    %c0_829 = arith.constant 0 : index
    %363 = vector.load %arg1[%c2_825, %c0_826, %c0_827, %c2_828, %c0_829] : memref<4x1x4x10x10xf32, #tpu.memory_space<vmem>>, vector<1x1x4x1x8xf32>
    %364 = vector.shape_cast %363 : vector<1x1x4x1x8xf32> to vector<4x8xf32>
    %c60_830 = arith.constant 60 : index
    %c8_831 = arith.constant 8 : index
    %365 = vector.load %arg7[%c60_830, %c8_831] : memref<100x64xf32, #tpu.memory_space<vmem>>, vector<4x8xf32>
    tpu.vector_store %arg7[%c60_830, %c8_831], %364 {strides = array<i32>} : memref<100x64xf32, #tpu.memory_space<vmem>>, vector<4x8xf32>,
    %c2_832 = arith.constant 2 : index
    %c0_833 = arith.constant 0 : index
    %c0_834 = arith.constant 0 : index
    %c3_835 = arith.constant 3 : index
    %c0_836 = arith.constant 0 : index
    %366 = vector.load %arg1[%c2_832, %c0_833, %c0_834, %c3_835, %c0_836] : memref<4x1x4x10x10xf32, #tpu.memory_space<vmem>>, vector<1x1x4x1x8xf32>
    %367 = vector.shape_cast %366 : vector<1x1x4x1x8xf32> to vector<4x8xf32>
    %c60_837 = arith.constant 60 : index
    %c16_838 = arith.constant 16 : index
    %368 = vector.load %arg7[%c60_837, %c16_838] : memref<100x64xf32, #tpu.memory_space<vmem>>, vector<4x8xf32>
    tpu.vector_store %arg7[%c60_837, %c16_838], %367 {strides = array<i32>} : memref<100x64xf32, #tpu.memory_space<vmem>>, vector<4x8xf32>,
    %c2_839 = arith.constant 2 : index
    %c0_840 = arith.constant 0 : index
    %c0_841 = arith.constant 0 : index
    %c4_842 = arith.constant 4 : index
    %c0_843 = arith.constant 0 : index
    %369 = vector.load %arg1[%c2_839, %c0_840, %c0_841, %c4_842, %c0_843] : memref<4x1x4x10x10xf32, #tpu.memory_space<vmem>>, vector<1x1x4x1x8xf32>
    %370 = vector.shape_cast %369 : vector<1x1x4x1x8xf32> to vector<4x8xf32>
    %c60_844 = arith.constant 60 : index
    %c24_845 = arith.constant 24 : index
    %371 = vector.load %arg7[%c60_844, %c24_845] : memref<100x64xf32, #tpu.memory_space<vmem>>, vector<4x8xf32>
    tpu.vector_store %arg7[%c60_844, %c24_845], %370 {strides = array<i32>} : memref<100x64xf32, #tpu.memory_space<vmem>>, vector<4x8xf32>,
    %c2_846 = arith.constant 2 : index
    %c0_847 = arith.constant 0 : index
    %c0_848 = arith.constant 0 : index
    %c5_849 = arith.constant 5 : index
    %c0_850 = arith.constant 0 : index
    %372 = vector.load %arg1[%c2_846, %c0_847, %c0_848, %c5_849, %c0_850] : memref<4x1x4x10x10xf32, #tpu.memory_space<vmem>>, vector<1x1x4x1x8xf32>
    %373 = vector.shape_cast %372 : vector<1x1x4x1x8xf32> to vector<4x8xf32>
    %c60_851 = arith.constant 60 : index
    %c32_852 = arith.constant 32 : index
    %374 = vector.load %arg7[%c60_851, %c32_852] : memref<100x64xf32, #tpu.memory_space<vmem>>, vector<4x8xf32>
    tpu.vector_store %arg7[%c60_851, %c32_852], %373 {strides = array<i32>} : memref<100x64xf32, #tpu.memory_space<vmem>>, vector<4x8xf32>,
    %c2_853 = arith.constant 2 : index
    %c0_854 = arith.constant 0 : index
    %c0_855 = arith.constant 0 : index
    %c6_856 = arith.constant 6 : index
    %c0_857 = arith.constant 0 : index
    %375 = vector.load %arg1[%c2_853, %c0_854, %c0_855, %c6_856, %c0_857] : memref<4x1x4x10x10xf32, #tpu.memory_space<vmem>>, vector<1x1x4x1x8xf32>
    %376 = vector.shape_cast %375 : vector<1x1x4x1x8xf32> to vector<4x8xf32>
    %c60_858 = arith.constant 60 : index
    %c40_859 = arith.constant 40 : index
    %377 = vector.load %arg7[%c60_858, %c40_859] : memref<100x64xf32, #tpu.memory_space<vmem>>, vector<4x8xf32>
    tpu.vector_store %arg7[%c60_858, %c40_859], %376 {strides = array<i32>} : memref<100x64xf32, #tpu.memory_space<vmem>>, vector<4x8xf32>,
    %c2_860 = arith.constant 2 : index
    %c0_861 = arith.constant 0 : index
    %c0_862 = arith.constant 0 : index
    %c7_863 = arith.constant 7 : index
    %c0_864 = arith.constant 0 : index
    %378 = vector.load %arg1[%c2_860, %c0_861, %c0_862, %c7_863, %c0_864] : memref<4x1x4x10x10xf32, #tpu.memory_space<vmem>>, vector<1x1x4x1x8xf32>
    %379 = vector.shape_cast %378 : vector<1x1x4x1x8xf32> to vector<4x8xf32>
    %c60_865 = arith.constant 60 : index
    %c48_866 = arith.constant 48 : index
    %380 = vector.load %arg7[%c60_865, %c48_866] : memref<100x64xf32, #tpu.memory_space<vmem>>, vector<4x8xf32>
    tpu.vector_store %arg7[%c60_865, %c48_866], %379 {strides = array<i32>} : memref<100x64xf32, #tpu.memory_space<vmem>>, vector<4x8xf32>,
    %c2_867 = arith.constant 2 : index
    %c0_868 = arith.constant 0 : index
    %c0_869 = arith.constant 0 : index
    %c8_870 = arith.constant 8 : index
    %c0_871 = arith.constant 0 : index
    %381 = vector.load %arg1[%c2_867, %c0_868, %c0_869, %c8_870, %c0_871] : memref<4x1x4x10x10xf32, #tpu.memory_space<vmem>>, vector<1x1x4x1x8xf32>
    %382 = vector.shape_cast %381 : vector<1x1x4x1x8xf32> to vector<4x8xf32>
    %c60_872 = arith.constant 60 : index
    %c56_873 = arith.constant 56 : index
    %383 = vector.load %arg7[%c60_872, %c56_873] : memref<100x64xf32, #tpu.memory_space<vmem>>, vector<4x8xf32>
    tpu.vector_store %arg7[%c60_872, %c56_873], %382 {strides = array<i32>} : memref<100x64xf32, #tpu.memory_space<vmem>>, vector<4x8xf32>,
    %c3_874 = arith.constant 3 : index
    %c0_875 = arith.constant 0 : index
    %c0_876 = arith.constant 0 : index
    %c1_877 = arith.constant 1 : index
    %c0_878 = arith.constant 0 : index
    %384 = vector.load %arg1[%c3_874, %c0_875, %c0_876, %c1_877, %c0_878] : memref<4x1x4x10x10xf32, #tpu.memory_space<vmem>>, vector<1x1x4x1x8xf32>
    %385 = vector.shape_cast %384 : vector<1x1x4x1x8xf32> to vector<4x8xf32>
    %c64 = arith.constant 64 : index
    %c0_879 = arith.constant 0 : index
    %386 = vector.load %arg7[%c64, %c0_879] : memref<100x64xf32, #tpu.memory_space<vmem>>, vector<4x8xf32>
    tpu.vector_store %arg7[%c64, %c0_879], %385 {strides = array<i32>} : memref<100x64xf32, #tpu.memory_space<vmem>>, vector<4x8xf32>,
    %c3_880 = arith.constant 3 : index
    %c0_881 = arith.constant 0 : index
    %c0_882 = arith.constant 0 : index
    %c2_883 = arith.constant 2 : index
    %c0_884 = arith.constant 0 : index
    %387 = vector.load %arg1[%c3_880, %c0_881, %c0_882, %c2_883, %c0_884] : memref<4x1x4x10x10xf32, #tpu.memory_space<vmem>>, vector<1x1x4x1x8xf32>
    %388 = vector.shape_cast %387 : vector<1x1x4x1x8xf32> to vector<4x8xf32>
    %c64_885 = arith.constant 64 : index
    %c8_886 = arith.constant 8 : index
    %389 = vector.load %arg7[%c64_885, %c8_886] : memref<100x64xf32, #tpu.memory_space<vmem>>, vector<4x8xf32>
    tpu.vector_store %arg7[%c64_885, %c8_886], %388 {strides = array<i32>} : memref<100x64xf32, #tpu.memory_space<vmem>>, vector<4x8xf32>,
    %c3_887 = arith.constant 3 : index
    %c0_888 = arith.constant 0 : index
    %c0_889 = arith.constant 0 : index
    %c3_890 = arith.constant 3 : index
    %c0_891 = arith.constant 0 : index
    %390 = vector.load %arg1[%c3_887, %c0_888, %c0_889, %c3_890, %c0_891] : memref<4x1x4x10x10xf32, #tpu.memory_space<vmem>>, vector<1x1x4x1x8xf32>
    %391 = vector.shape_cast %390 : vector<1x1x4x1x8xf32> to vector<4x8xf32>
    %c64_892 = arith.constant 64 : index
    %c16_893 = arith.constant 16 : index
    %392 = vector.load %arg7[%c64_892, %c16_893] : memref<100x64xf32, #tpu.memory_space<vmem>>, vector<4x8xf32>
    tpu.vector_store %arg7[%c64_892, %c16_893], %391 {strides = array<i32>} : memref<100x64xf32, #tpu.memory_space<vmem>>, vector<4x8xf32>,
    %c3_894 = arith.constant 3 : index
    %c0_895 = arith.constant 0 : index
    %c0_896 = arith.constant 0 : index
    %c4_897 = arith.constant 4 : index
    %c0_898 = arith.constant 0 : index
    %393 = vector.load %arg1[%c3_894, %c0_895, %c0_896, %c4_897, %c0_898] : memref<4x1x4x10x10xf32, #tpu.memory_space<vmem>>, vector<1x1x4x1x8xf32>
    %394 = vector.shape_cast %393 : vector<1x1x4x1x8xf32> to vector<4x8xf32>
    %c64_899 = arith.constant 64 : index
    %c24_900 = arith.constant 24 : index
    %395 = vector.load %arg7[%c64_899, %c24_900] : memref<100x64xf32, #tpu.memory_space<vmem>>, vector<4x8xf32>
    tpu.vector_store %arg7[%c64_899, %c24_900], %394 {strides = array<i32>} : memref<100x64xf32, #tpu.memory_space<vmem>>, vector<4x8xf32>,
    %c3_901 = arith.constant 3 : index
    %c0_902 = arith.constant 0 : index
    %c0_903 = arith.constant 0 : index
    %c5_904 = arith.constant 5 : index
    %c0_905 = arith.constant 0 : index
    %396 = vector.load %arg1[%c3_901, %c0_902, %c0_903, %c5_904, %c0_905] : memref<4x1x4x10x10xf32, #tpu.memory_space<vmem>>, vector<1x1x4x1x8xf32>
    %397 = vector.shape_cast %396 : vector<1x1x4x1x8xf32> to vector<4x8xf32>
    %c64_906 = arith.constant 64 : index
    %c32_907 = arith.constant 32 : index
    %398 = vector.load %arg7[%c64_906, %c32_907] : memref<100x64xf32, #tpu.memory_space<vmem>>, vector<4x8xf32>
    tpu.vector_store %arg7[%c64_906, %c32_907], %397 {strides = array<i32>} : memref<100x64xf32, #tpu.memory_space<vmem>>, vector<4x8xf32>,
    %c3_908 = arith.constant 3 : index
    %c0_909 = arith.constant 0 : index
    %c0_910 = arith.constant 0 : index
    %c6_911 = arith.constant 6 : index
    %c0_912 = arith.constant 0 : index
    %399 = vector.load %arg1[%c3_908, %c0_909, %c0_910, %c6_911, %c0_912] : memref<4x1x4x10x10xf32, #tpu.memory_space<vmem>>, vector<1x1x4x1x8xf32>
    %400 = vector.shape_cast %399 : vector<1x1x4x1x8xf32> to vector<4x8xf32>
    %c64_913 = arith.constant 64 : index
    %c40_914 = arith.constant 40 : index
    %401 = vector.load %arg7[%c64_913, %c40_914] : memref<100x64xf32, #tpu.memory_space<vmem>>, vector<4x8xf32>
    tpu.vector_store %arg7[%c64_913, %c40_914], %400 {strides = array<i32>} : memref<100x64xf32, #tpu.memory_space<vmem>>, vector<4x8xf32>,
    %c3_915 = arith.constant 3 : index
    %c0_916 = arith.constant 0 : index
    %c0_917 = arith.constant 0 : index
    %c7_918 = arith.constant 7 : index
    %c0_919 = arith.constant 0 : index
    %402 = vector.load %arg1[%c3_915, %c0_916, %c0_917, %c7_918, %c0_919] : memref<4x1x4x10x10xf32, #tpu.memory_space<vmem>>, vector<1x1x4x1x8xf32>
    %403 = vector.shape_cast %402 : vector<1x1x4x1x8xf32> to vector<4x8xf32>
    %c64_920 = arith.constant 64 : index
    %c48_921 = arith.constant 48 : index
    %404 = vector.load %arg7[%c64_920, %c48_921] : memref<100x64xf32, #tpu.memory_space<vmem>>, vector<4x8xf32>
    tpu.vector_store %arg7[%c64_920, %c48_921], %403 {strides = array<i32>} : memref<100x64xf32, #tpu.memory_space<vmem>>, vector<4x8xf32>,
    %c3_922 = arith.constant 3 : index
    %c0_923 = arith.constant 0 : index
    %c0_924 = arith.constant 0 : index
    %c8_925 = arith.constant 8 : index
    %c0_926 = arith.constant 0 : index
    %405 = vector.load %arg1[%c3_922, %c0_923, %c0_924, %c8_925, %c0_926] : memref<4x1x4x10x10xf32, #tpu.memory_space<vmem>>, vector<1x1x4x1x8xf32>
    %406 = vector.shape_cast %405 : vector<1x1x4x1x8xf32> to vector<4x8xf32>
    %c64_927 = arith.constant 64 : index
    %c56_928 = arith.constant 56 : index
    %407 = vector.load %arg7[%c64_927, %c56_928] : memref<100x64xf32, #tpu.memory_space<vmem>>, vector<4x8xf32>
    tpu.vector_store %arg7[%c64_927, %c56_928], %406 {strides = array<i32>} : memref<100x64xf32, #tpu.memory_space<vmem>>, vector<4x8xf32>,
    %c2_929 = arith.constant 2 : index
    %c0_930 = arith.constant 0 : index
    %c0_931 = arith.constant 0 : index
    %c1_932 = arith.constant 1 : index
    %c1_933 = arith.constant 1 : index
    %408 = vector.load %arg1[%c2_929, %c0_930, %c0_931, %c1_932, %c1_933] : memref<4x1x4x10x10xf32, #tpu.memory_space<vmem>>, vector<1x1x4x1x8xf32>
    %409 = vector.shape_cast %408 : vector<1x1x4x1x8xf32> to vector<4x8xf32>
    %c68 = arith.constant 68 : index
    %c0_934 = arith.constant 0 : index
    %410 = vector.load %arg7[%c68, %c0_934] : memref<100x64xf32, #tpu.memory_space<vmem>>, vector<4x8xf32>
    tpu.vector_store %arg7[%c68, %c0_934], %409 {strides = array<i32>} : memref<100x64xf32, #tpu.memory_space<vmem>>, vector<4x8xf32>,
    %c2_935 = arith.constant 2 : index
    %c0_936 = arith.constant 0 : index
    %c0_937 = arith.constant 0 : index
    %c2_938 = arith.constant 2 : index
    %c1_939 = arith.constant 1 : index
    %411 = vector.load %arg1[%c2_935, %c0_936, %c0_937, %c2_938, %c1_939] : memref<4x1x4x10x10xf32, #tpu.memory_space<vmem>>, vector<1x1x4x1x8xf32>
    %412 = vector.shape_cast %411 : vector<1x1x4x1x8xf32> to vector<4x8xf32>
    %c68_940 = arith.constant 68 : index
    %c8_941 = arith.constant 8 : index
    %413 = vector.load %arg7[%c68_940, %c8_941] : memref<100x64xf32, #tpu.memory_space<vmem>>, vector<4x8xf32>
    tpu.vector_store %arg7[%c68_940, %c8_941], %412 {strides = array<i32>} : memref<100x64xf32, #tpu.memory_space<vmem>>, vector<4x8xf32>,
    %c2_942 = arith.constant 2 : index
    %c0_943 = arith.constant 0 : index
    %c0_944 = arith.constant 0 : index
    %c3_945 = arith.constant 3 : index
    %c1_946 = arith.constant 1 : index
    %414 = vector.load %arg1[%c2_942, %c0_943, %c0_944, %c3_945, %c1_946] : memref<4x1x4x10x10xf32, #tpu.memory_space<vmem>>, vector<1x1x4x1x8xf32>
    %415 = vector.shape_cast %414 : vector<1x1x4x1x8xf32> to vector<4x8xf32>
    %c68_947 = arith.constant 68 : index
    %c16_948 = arith.constant 16 : index
    %416 = vector.load %arg7[%c68_947, %c16_948] : memref<100x64xf32, #tpu.memory_space<vmem>>, vector<4x8xf32>
    tpu.vector_store %arg7[%c68_947, %c16_948], %415 {strides = array<i32>} : memref<100x64xf32, #tpu.memory_space<vmem>>, vector<4x8xf32>,
    %c2_949 = arith.constant 2 : index
    %c0_950 = arith.constant 0 : index
    %c0_951 = arith.constant 0 : index
    %c4_952 = arith.constant 4 : index
    %c1_953 = arith.constant 1 : index
    %417 = vector.load %arg1[%c2_949, %c0_950, %c0_951, %c4_952, %c1_953] : memref<4x1x4x10x10xf32, #tpu.memory_space<vmem>>, vector<1x1x4x1x8xf32>
    %418 = vector.shape_cast %417 : vector<1x1x4x1x8xf32> to vector<4x8xf32>
    %c68_954 = arith.constant 68 : index
    %c24_955 = arith.constant 24 : index
    %419 = vector.load %arg7[%c68_954, %c24_955] : memref<100x64xf32, #tpu.memory_space<vmem>>, vector<4x8xf32>
    tpu.vector_store %arg7[%c68_954, %c24_955], %418 {strides = array<i32>} : memref<100x64xf32, #tpu.memory_space<vmem>>, vector<4x8xf32>,
    %c2_956 = arith.constant 2 : index
    %c0_957 = arith.constant 0 : index
    %c0_958 = arith.constant 0 : index
    %c5_959 = arith.constant 5 : index
    %c1_960 = arith.constant 1 : index
    %420 = vector.load %arg1[%c2_956, %c0_957, %c0_958, %c5_959, %c1_960] : memref<4x1x4x10x10xf32, #tpu.memory_space<vmem>>, vector<1x1x4x1x8xf32>
    %421 = vector.shape_cast %420 : vector<1x1x4x1x8xf32> to vector<4x8xf32>
    %c68_961 = arith.constant 68 : index
    %c32_962 = arith.constant 32 : index
    %422 = vector.load %arg7[%c68_961, %c32_962] : memref<100x64xf32, #tpu.memory_space<vmem>>, vector<4x8xf32>
    tpu.vector_store %arg7[%c68_961, %c32_962], %421 {strides = array<i32>} : memref<100x64xf32, #tpu.memory_space<vmem>>, vector<4x8xf32>,
    %c2_963 = arith.constant 2 : index
    %c0_964 = arith.constant 0 : index
    %c0_965 = arith.constant 0 : index
    %c6_966 = arith.constant 6 : index
    %c1_967 = arith.constant 1 : index
    %423 = vector.load %arg1[%c2_963, %c0_964, %c0_965, %c6_966, %c1_967] : memref<4x1x4x10x10xf32, #tpu.memory_space<vmem>>, vector<1x1x4x1x8xf32>
    %424 = vector.shape_cast %423 : vector<1x1x4x1x8xf32> to vector<4x8xf32>
    %c68_968 = arith.constant 68 : index
    %c40_969 = arith.constant 40 : index
    %425 = vector.load %arg7[%c68_968, %c40_969] : memref<100x64xf32, #tpu.memory_space<vmem>>, vector<4x8xf32>
    tpu.vector_store %arg7[%c68_968, %c40_969], %424 {strides = array<i32>} : memref<100x64xf32, #tpu.memory_space<vmem>>, vector<4x8xf32>,
    %c2_970 = arith.constant 2 : index
    %c0_971 = arith.constant 0 : index
    %c0_972 = arith.constant 0 : index
    %c7_973 = arith.constant 7 : index
    %c1_974 = arith.constant 1 : index
    %426 = vector.load %arg1[%c2_970, %c0_971, %c0_972, %c7_973, %c1_974] : memref<4x1x4x10x10xf32, #tpu.memory_space<vmem>>, vector<1x1x4x1x8xf32>
    %427 = vector.shape_cast %426 : vector<1x1x4x1x8xf32> to vector<4x8xf32>
    %c68_975 = arith.constant 68 : index
    %c48_976 = arith.constant 48 : index
    %428 = vector.load %arg7[%c68_975, %c48_976] : memref<100x64xf32, #tpu.memory_space<vmem>>, vector<4x8xf32>
    tpu.vector_store %arg7[%c68_975, %c48_976], %427 {strides = array<i32>} : memref<100x64xf32, #tpu.memory_space<vmem>>, vector<4x8xf32>,
    %c2_977 = arith.constant 2 : index
    %c0_978 = arith.constant 0 : index
    %c0_979 = arith.constant 0 : index
    %c8_980 = arith.constant 8 : index
    %c1_981 = arith.constant 1 : index
    %429 = vector.load %arg1[%c2_977, %c0_978, %c0_979, %c8_980, %c1_981] : memref<4x1x4x10x10xf32, #tpu.memory_space<vmem>>, vector<1x1x4x1x8xf32>
    %430 = vector.shape_cast %429 : vector<1x1x4x1x8xf32> to vector<4x8xf32>
    %c68_982 = arith.constant 68 : index
    %c56_983 = arith.constant 56 : index
    %431 = vector.load %arg7[%c68_982, %c56_983] : memref<100x64xf32, #tpu.memory_space<vmem>>, vector<4x8xf32>
    tpu.vector_store %arg7[%c68_982, %c56_983], %430 {strides = array<i32>} : memref<100x64xf32, #tpu.memory_space<vmem>>, vector<4x8xf32>,
    %c3_984 = arith.constant 3 : index
    %c0_985 = arith.constant 0 : index
    %c0_986 = arith.constant 0 : index
    %c1_987 = arith.constant 1 : index
    %c1_988 = arith.constant 1 : index
    %432 = vector.load %arg1[%c3_984, %c0_985, %c0_986, %c1_987, %c1_988] : memref<4x1x4x10x10xf32, #tpu.memory_space<vmem>>, vector<1x1x4x1x8xf32>
    %433 = vector.shape_cast %432 : vector<1x1x4x1x8xf32> to vector<4x8xf32>
    %c72 = arith.constant 72 : index
    %c0_989 = arith.constant 0 : index
    %434 = vector.load %arg7[%c72, %c0_989] : memref<100x64xf32, #tpu.memory_space<vmem>>, vector<4x8xf32>
    tpu.vector_store %arg7[%c72, %c0_989], %433 {strides = array<i32>} : memref<100x64xf32, #tpu.memory_space<vmem>>, vector<4x8xf32>,
    %c3_990 = arith.constant 3 : index
    %c0_991 = arith.constant 0 : index
    %c0_992 = arith.constant 0 : index
    %c2_993 = arith.constant 2 : index
    %c1_994 = arith.constant 1 : index
    %435 = vector.load %arg1[%c3_990, %c0_991, %c0_992, %c2_993, %c1_994] : memref<4x1x4x10x10xf32, #tpu.memory_space<vmem>>, vector<1x1x4x1x8xf32>
    %436 = vector.shape_cast %435 : vector<1x1x4x1x8xf32> to vector<4x8xf32>
    %c72_995 = arith.constant 72 : index
    %c8_996 = arith.constant 8 : index
    %437 = vector.load %arg7[%c72_995, %c8_996] : memref<100x64xf32, #tpu.memory_space<vmem>>, vector<4x8xf32>
    tpu.vector_store %arg7[%c72_995, %c8_996], %436 {strides = array<i32>} : memref<100x64xf32, #tpu.memory_space<vmem>>, vector<4x8xf32>,
    %c3_997 = arith.constant 3 : index
    %c0_998 = arith.constant 0 : index
    %c0_999 = arith.constant 0 : index
    %c3_1000 = arith.constant 3 : index
    %c1_1001 = arith.constant 1 : index
    %438 = vector.load %arg1[%c3_997, %c0_998, %c0_999, %c3_1000, %c1_1001] : memref<4x1x4x10x10xf32, #tpu.memory_space<vmem>>, vector<1x1x4x1x8xf32>
    %439 = vector.shape_cast %438 : vector<1x1x4x1x8xf32> to vector<4x8xf32>
    %c72_1002 = arith.constant 72 : index
    %c16_1003 = arith.constant 16 : index
    %440 = vector.load %arg7[%c72_1002, %c16_1003] : memref<100x64xf32, #tpu.memory_space<vmem>>, vector<4x8xf32>
    tpu.vector_store %arg7[%c72_1002, %c16_1003], %439 {strides = array<i32>} : memref<100x64xf32, #tpu.memory_space<vmem>>, vector<4x8xf32>,
    %c3_1004 = arith.constant 3 : index
    %c0_1005 = arith.constant 0 : index
    %c0_1006 = arith.constant 0 : index
    %c4_1007 = arith.constant 4 : index
    %c1_1008 = arith.constant 1 : index
    %441 = vector.load %arg1[%c3_1004, %c0_1005, %c0_1006, %c4_1007, %c1_1008] : memref<4x1x4x10x10xf32, #tpu.memory_space<vmem>>, vector<1x1x4x1x8xf32>
    %442 = vector.shape_cast %441 : vector<1x1x4x1x8xf32> to vector<4x8xf32>
    %c72_1009 = arith.constant 72 : index
    %c24_1010 = arith.constant 24 : index
    %443 = vector.load %arg7[%c72_1009, %c24_1010] : memref<100x64xf32, #tpu.memory_space<vmem>>, vector<4x8xf32>
    tpu.vector_store %arg7[%c72_1009, %c24_1010], %442 {strides = array<i32>} : memref<100x64xf32, #tpu.memory_space<vmem>>, vector<4x8xf32>,
    %c3_1011 = arith.constant 3 : index
    %c0_1012 = arith.constant 0 : index
    %c0_1013 = arith.constant 0 : index
    %c5_1014 = arith.constant 5 : index
    %c1_1015 = arith.constant 1 : index
    %444 = vector.load %arg1[%c3_1011, %c0_1012, %c0_1013, %c5_1014, %c1_1015] : memref<4x1x4x10x10xf32, #tpu.memory_space<vmem>>, vector<1x1x4x1x8xf32>
    %445 = vector.shape_cast %444 : vector<1x1x4x1x8xf32> to vector<4x8xf32>
    %c72_1016 = arith.constant 72 : index
    %c32_1017 = arith.constant 32 : index
    %446 = vector.load %arg7[%c72_1016, %c32_1017] : memref<100x64xf32, #tpu.memory_space<vmem>>, vector<4x8xf32>
    tpu.vector_store %arg7[%c72_1016, %c32_1017], %445 {strides = array<i32>} : memref<100x64xf32, #tpu.memory_space<vmem>>, vector<4x8xf32>,
    %c3_1018 = arith.constant 3 : index
    %c0_1019 = arith.constant 0 : index
    %c0_1020 = arith.constant 0 : index
    %c6_1021 = arith.constant 6 : index
    %c1_1022 = arith.constant 1 : index
    %447 = vector.load %arg1[%c3_1018, %c0_1019, %c0_1020, %c6_1021, %c1_1022] : memref<4x1x4x10x10xf32, #tpu.memory_space<vmem>>, vector<1x1x4x1x8xf32>
    %448 = vector.shape_cast %447 : vector<1x1x4x1x8xf32> to vector<4x8xf32>
    %c72_1023 = arith.constant 72 : index
    %c40_1024 = arith.constant 40 : index
    %449 = vector.load %arg7[%c72_1023, %c40_1024] : memref<100x64xf32, #tpu.memory_space<vmem>>, vector<4x8xf32>
    tpu.vector_store %arg7[%c72_1023, %c40_1024], %448 {strides = array<i32>} : memref<100x64xf32, #tpu.memory_space<vmem>>, vector<4x8xf32>,
    %c3_1025 = arith.constant 3 : index
    %c0_1026 = arith.constant 0 : index
    %c0_1027 = arith.constant 0 : index
    %c7_1028 = arith.constant 7 : index
    %c1_1029 = arith.constant 1 : index
    %450 = vector.load %arg1[%c3_1025, %c0_1026, %c0_1027, %c7_1028, %c1_1029] : memref<4x1x4x10x10xf32, #tpu.memory_space<vmem>>, vector<1x1x4x1x8xf32>
    %451 = vector.shape_cast %450 : vector<1x1x4x1x8xf32> to vector<4x8xf32>
    %c72_1030 = arith.constant 72 : index
    %c48_1031 = arith.constant 48 : index
    %452 = vector.load %arg7[%c72_1030, %c48_1031] : memref<100x64xf32, #tpu.memory_space<vmem>>, vector<4x8xf32>
    tpu.vector_store %arg7[%c72_1030, %c48_1031], %451 {strides = array<i32>} : memref<100x64xf32, #tpu.memory_space<vmem>>, vector<4x8xf32>,
    %c3_1032 = arith.constant 3 : index
    %c0_1033 = arith.constant 0 : index
    %c0_1034 = arith.constant 0 : index
    %c8_1035 = arith.constant 8 : index
    %c1_1036 = arith.constant 1 : index
    %453 = vector.load %arg1[%c3_1032, %c0_1033, %c0_1034, %c8_1035, %c1_1036] : memref<4x1x4x10x10xf32, #tpu.memory_space<vmem>>, vector<1x1x4x1x8xf32>
    %454 = vector.shape_cast %453 : vector<1x1x4x1x8xf32> to vector<4x8xf32>
    %c72_1037 = arith.constant 72 : index
    %c56_1038 = arith.constant 56 : index
    %455 = vector.load %arg7[%c72_1037, %c56_1038] : memref<100x64xf32, #tpu.memory_space<vmem>>, vector<4x8xf32>
    tpu.vector_store %arg7[%c72_1037, %c56_1038], %454 {strides = array<i32>} : memref<100x64xf32, #tpu.memory_space<vmem>>, vector<4x8xf32>,
    %c2_1039 = arith.constant 2 : index
    %c0_1040 = arith.constant 0 : index
    %c0_1041 = arith.constant 0 : index
    %c1_1042 = arith.constant 1 : index
    %c2_1043 = arith.constant 2 : index
    %456 = vector.load %arg1[%c2_1039, %c0_1040, %c0_1041, %c1_1042, %c2_1043] : memref<4x1x4x10x10xf32, #tpu.memory_space<vmem>>, vector<1x1x4x1x8xf32>
    %457 = vector.shape_cast %456 : vector<1x1x4x1x8xf32> to vector<4x8xf32>
    %c76 = arith.constant 76 : index
    %c0_1044 = arith.constant 0 : index
    %458 = vector.load %arg7[%c76, %c0_1044] : memref<100x64xf32, #tpu.memory_space<vmem>>, vector<4x8xf32>
    tpu.vector_store %arg7[%c76, %c0_1044], %457 {strides = array<i32>} : memref<100x64xf32, #tpu.memory_space<vmem>>, vector<4x8xf32>,
    %c2_1045 = arith.constant 2 : index
    %c0_1046 = arith.constant 0 : index
    %c0_1047 = arith.constant 0 : index
    %c2_1048 = arith.constant 2 : index
    %c2_1049 = arith.constant 2 : index
    %459 = vector.load %arg1[%c2_1045, %c0_1046, %c0_1047, %c2_1048, %c2_1049] : memref<4x1x4x10x10xf32, #tpu.memory_space<vmem>>, vector<1x1x4x1x8xf32>
    %460 = vector.shape_cast %459 : vector<1x1x4x1x8xf32> to vector<4x8xf32>
    %c76_1050 = arith.constant 76 : index
    %c8_1051 = arith.constant 8 : index
    %461 = vector.load %arg7[%c76_1050, %c8_1051] : memref<100x64xf32, #tpu.memory_space<vmem>>, vector<4x8xf32>
    tpu.vector_store %arg7[%c76_1050, %c8_1051], %460 {strides = array<i32>} : memref<100x64xf32, #tpu.memory_space<vmem>>, vector<4x8xf32>,
    %c2_1052 = arith.constant 2 : index
    %c0_1053 = arith.constant 0 : index
    %c0_1054 = arith.constant 0 : index
    %c3_1055 = arith.constant 3 : index
    %c2_1056 = arith.constant 2 : index
    %462 = vector.load %arg1[%c2_1052, %c0_1053, %c0_1054, %c3_1055, %c2_1056] : memref<4x1x4x10x10xf32, #tpu.memory_space<vmem>>, vector<1x1x4x1x8xf32>
    %463 = vector.shape_cast %462 : vector<1x1x4x1x8xf32> to vector<4x8xf32>
    %c76_1057 = arith.constant 76 : index
    %c16_1058 = arith.constant 16 : index
    %464 = vector.load %arg7[%c76_1057, %c16_1058] : memref<100x64xf32, #tpu.memory_space<vmem>>, vector<4x8xf32>
    tpu.vector_store %arg7[%c76_1057, %c16_1058], %463 {strides = array<i32>} : memref<100x64xf32, #tpu.memory_space<vmem>>, vector<4x8xf32>,
    %c2_1059 = arith.constant 2 : index
    %c0_1060 = arith.constant 0 : index
    %c0_1061 = arith.constant 0 : index
    %c4_1062 = arith.constant 4 : index
    %c2_1063 = arith.constant 2 : index
    %465 = vector.load %arg1[%c2_1059, %c0_1060, %c0_1061, %c4_1062, %c2_1063] : memref<4x1x4x10x10xf32, #tpu.memory_space<vmem>>, vector<1x1x4x1x8xf32>
    %466 = vector.shape_cast %465 : vector<1x1x4x1x8xf32> to vector<4x8xf32>
    %c76_1064 = arith.constant 76 : index
    %c24_1065 = arith.constant 24 : index
    %467 = vector.load %arg7[%c76_1064, %c24_1065] : memref<100x64xf32, #tpu.memory_space<vmem>>, vector<4x8xf32>
    tpu.vector_store %arg7[%c76_1064, %c24_1065], %466 {strides = array<i32>} : memref<100x64xf32, #tpu.memory_space<vmem>>, vector<4x8xf32>,
    %c2_1066 = arith.constant 2 : index
    %c0_1067 = arith.constant 0 : index
    %c0_1068 = arith.constant 0 : index
    %c5_1069 = arith.constant 5 : index
    %c2_1070 = arith.constant 2 : index
    %468 = vector.load %arg1[%c2_1066, %c0_1067, %c0_1068, %c5_1069, %c2_1070] : memref<4x1x4x10x10xf32, #tpu.memory_space<vmem>>, vector<1x1x4x1x8xf32>
    %469 = vector.shape_cast %468 : vector<1x1x4x1x8xf32> to vector<4x8xf32>
    %c76_1071 = arith.constant 76 : index
    %c32_1072 = arith.constant 32 : index
    %470 = vector.load %arg7[%c76_1071, %c32_1072] : memref<100x64xf32, #tpu.memory_space<vmem>>, vector<4x8xf32>
    tpu.vector_store %arg7[%c76_1071, %c32_1072], %469 {strides = array<i32>} : memref<100x64xf32, #tpu.memory_space<vmem>>, vector<4x8xf32>,
    %c2_1073 = arith.constant 2 : index
    %c0_1074 = arith.constant 0 : index
    %c0_1075 = arith.constant 0 : index
    %c6_1076 = arith.constant 6 : index
    %c2_1077 = arith.constant 2 : index
    %471 = vector.load %arg1[%c2_1073, %c0_1074, %c0_1075, %c6_1076, %c2_1077] : memref<4x1x4x10x10xf32, #tpu.memory_space<vmem>>, vector<1x1x4x1x8xf32>
    %472 = vector.shape_cast %471 : vector<1x1x4x1x8xf32> to vector<4x8xf32>
    %c76_1078 = arith.constant 76 : index
    %c40_1079 = arith.constant 40 : index
    %473 = vector.load %arg7[%c76_1078, %c40_1079] : memref<100x64xf32, #tpu.memory_space<vmem>>, vector<4x8xf32>
    tpu.vector_store %arg7[%c76_1078, %c40_1079], %472 {strides = array<i32>} : memref<100x64xf32, #tpu.memory_space<vmem>>, vector<4x8xf32>,
    %c2_1080 = arith.constant 2 : index
    %c0_1081 = arith.constant 0 : index
    %c0_1082 = arith.constant 0 : index
    %c7_1083 = arith.constant 7 : index
    %c2_1084 = arith.constant 2 : index
    %474 = vector.load %arg1[%c2_1080, %c0_1081, %c0_1082, %c7_1083, %c2_1084] : memref<4x1x4x10x10xf32, #tpu.memory_space<vmem>>, vector<1x1x4x1x8xf32>
    %475 = vector.shape_cast %474 : vector<1x1x4x1x8xf32> to vector<4x8xf32>
    %c76_1085 = arith.constant 76 : index
    %c48_1086 = arith.constant 48 : index
    %476 = vector.load %arg7[%c76_1085, %c48_1086] : memref<100x64xf32, #tpu.memory_space<vmem>>, vector<4x8xf32>
    tpu.vector_store %arg7[%c76_1085, %c48_1086], %475 {strides = array<i32>} : memref<100x64xf32, #tpu.memory_space<vmem>>, vector<4x8xf32>,
    %c2_1087 = arith.constant 2 : index
    %c0_1088 = arith.constant 0 : index
    %c0_1089 = arith.constant 0 : index
    %c8_1090 = arith.constant 8 : index
    %c2_1091 = arith.constant 2 : index
    %477 = vector.load %arg1[%c2_1087, %c0_1088, %c0_1089, %c8_1090, %c2_1091] : memref<4x1x4x10x10xf32, #tpu.memory_space<vmem>>, vector<1x1x4x1x8xf32>
    %478 = vector.shape_cast %477 : vector<1x1x4x1x8xf32> to vector<4x8xf32>
    %c76_1092 = arith.constant 76 : index
    %c56_1093 = arith.constant 56 : index
    %479 = vector.load %arg7[%c76_1092, %c56_1093] : memref<100x64xf32, #tpu.memory_space<vmem>>, vector<4x8xf32>
    tpu.vector_store %arg7[%c76_1092, %c56_1093], %478 {strides = array<i32>} : memref<100x64xf32, #tpu.memory_space<vmem>>, vector<4x8xf32>,
    %c0_1094 = arith.constant 0 : index
    %c0_1095 = arith.constant 0 : index
    %c0_1096 = arith.constant 0 : index
    %c2_1097 = arith.constant 2 : index
    %c0_1098 = arith.constant 0 : index
    %480 = vector.load %arg1[%c0_1094, %c0_1095, %c0_1096, %c2_1097, %c0_1098] : memref<4x1x4x10x10xf32, #tpu.memory_space<vmem>>, vector<1x1x4x1x8xf32>
    %481 = vector.shape_cast %480 : vector<1x1x4x1x8xf32> to vector<4x8xf32>
    %c80 = arith.constant 80 : index
    %c0_1099 = arith.constant 0 : index
    %482 = vector.load %arg7[%c80, %c0_1099] : memref<100x64xf32, #tpu.memory_space<vmem>>, vector<4x8xf32>
    tpu.vector_store %arg7[%c80, %c0_1099], %481 {strides = array<i32>} : memref<100x64xf32, #tpu.memory_space<vmem>>, vector<4x8xf32>,
    %c0_1100 = arith.constant 0 : index
    %c0_1101 = arith.constant 0 : index
    %c0_1102 = arith.constant 0 : index
    %c3_1103 = arith.constant 3 : index
    %c0_1104 = arith.constant 0 : index
    %483 = vector.load %arg1[%c0_1100, %c0_1101, %c0_1102, %c3_1103, %c0_1104] : memref<4x1x4x10x10xf32, #tpu.memory_space<vmem>>, vector<1x1x4x1x8xf32>
    %484 = vector.shape_cast %483 : vector<1x1x4x1x8xf32> to vector<4x8xf32>
    %c80_1105 = arith.constant 80 : index
    %c8_1106 = arith.constant 8 : index
    %485 = vector.load %arg7[%c80_1105, %c8_1106] : memref<100x64xf32, #tpu.memory_space<vmem>>, vector<4x8xf32>
    tpu.vector_store %arg7[%c80_1105, %c8_1106], %484 {strides = array<i32>} : memref<100x64xf32, #tpu.memory_space<vmem>>, vector<4x8xf32>,
    %c0_1107 = arith.constant 0 : index
    %c0_1108 = arith.constant 0 : index
    %c0_1109 = arith.constant 0 : index
    %c4_1110 = arith.constant 4 : index
    %c0_1111 = arith.constant 0 : index
    %486 = vector.load %arg1[%c0_1107, %c0_1108, %c0_1109, %c4_1110, %c0_1111] : memref<4x1x4x10x10xf32, #tpu.memory_space<vmem>>, vector<1x1x4x1x8xf32>
    %487 = vector.shape_cast %486 : vector<1x1x4x1x8xf32> to vector<4x8xf32>
    %c80_1112 = arith.constant 80 : index
    %c16_1113 = arith.constant 16 : index
    %488 = vector.load %arg7[%c80_1112, %c16_1113] : memref<100x64xf32, #tpu.memory_space<vmem>>, vector<4x8xf32>
    tpu.vector_store %arg7[%c80_1112, %c16_1113], %487 {strides = array<i32>} : memref<100x64xf32, #tpu.memory_space<vmem>>, vector<4x8xf32>,
    %c0_1114 = arith.constant 0 : index
    %c0_1115 = arith.constant 0 : index
    %c0_1116 = arith.constant 0 : index
    %c5_1117 = arith.constant 5 : index
    %c0_1118 = arith.constant 0 : index
    %489 = vector.load %arg1[%c0_1114, %c0_1115, %c0_1116, %c5_1117, %c0_1118] : memref<4x1x4x10x10xf32, #tpu.memory_space<vmem>>, vector<1x1x4x1x8xf32>
    %490 = vector.shape_cast %489 : vector<1x1x4x1x8xf32> to vector<4x8xf32>
    %c80_1119 = arith.constant 80 : index
    %c24_1120 = arith.constant 24 : index
    %491 = vector.load %arg7[%c80_1119, %c24_1120] : memref<100x64xf32, #tpu.memory_space<vmem>>, vector<4x8xf32>
    tpu.vector_store %arg7[%c80_1119, %c24_1120], %490 {strides = array<i32>} : memref<100x64xf32, #tpu.memory_space<vmem>>, vector<4x8xf32>,
    %c0_1121 = arith.constant 0 : index
    %c0_1122 = arith.constant 0 : index
    %c0_1123 = arith.constant 0 : index
    %c6_1124 = arith.constant 6 : index
    %c0_1125 = arith.constant 0 : index
    %492 = vector.load %arg1[%c0_1121, %c0_1122, %c0_1123, %c6_1124, %c0_1125] : memref<4x1x4x10x10xf32, #tpu.memory_space<vmem>>, vector<1x1x4x1x8xf32>
    %493 = vector.shape_cast %492 : vector<1x1x4x1x8xf32> to vector<4x8xf32>
    %c80_1126 = arith.constant 80 : index
    %c32_1127 = arith.constant 32 : index
    %494 = vector.load %arg7[%c80_1126, %c32_1127] : memref<100x64xf32, #tpu.memory_space<vmem>>, vector<4x8xf32>
    tpu.vector_store %arg7[%c80_1126, %c32_1127], %493 {strides = array<i32>} : memref<100x64xf32, #tpu.memory_space<vmem>>, vector<4x8xf32>,
    %c0_1128 = arith.constant 0 : index
    %c0_1129 = arith.constant 0 : index
    %c0_1130 = arith.constant 0 : index
    %c7_1131 = arith.constant 7 : index
    %c0_1132 = arith.constant 0 : index
    %495 = vector.load %arg1[%c0_1128, %c0_1129, %c0_1130, %c7_1131, %c0_1132] : memref<4x1x4x10x10xf32, #tpu.memory_space<vmem>>, vector<1x1x4x1x8xf32>
    %496 = vector.shape_cast %495 : vector<1x1x4x1x8xf32> to vector<4x8xf32>
    %c80_1133 = arith.constant 80 : index
    %c40_1134 = arith.constant 40 : index
    %497 = vector.load %arg7[%c80_1133, %c40_1134] : memref<100x64xf32, #tpu.memory_space<vmem>>, vector<4x8xf32>
    tpu.vector_store %arg7[%c80_1133, %c40_1134], %496 {strides = array<i32>} : memref<100x64xf32, #tpu.memory_space<vmem>>, vector<4x8xf32>,
    %c0_1135 = arith.constant 0 : index
    %c0_1136 = arith.constant 0 : index
    %c0_1137 = arith.constant 0 : index
    %c8_1138 = arith.constant 8 : index
    %c0_1139 = arith.constant 0 : index
    %498 = vector.load %arg1[%c0_1135, %c0_1136, %c0_1137, %c8_1138, %c0_1139] : memref<4x1x4x10x10xf32, #tpu.memory_space<vmem>>, vector<1x1x4x1x8xf32>
    %499 = vector.shape_cast %498 : vector<1x1x4x1x8xf32> to vector<4x8xf32>
    %c80_1140 = arith.constant 80 : index
    %c48_1141 = arith.constant 48 : index
    %500 = vector.load %arg7[%c80_1140, %c48_1141] : memref<100x64xf32, #tpu.memory_space<vmem>>, vector<4x8xf32>
    tpu.vector_store %arg7[%c80_1140, %c48_1141], %499 {strides = array<i32>} : memref<100x64xf32, #tpu.memory_space<vmem>>, vector<4x8xf32>,
    %c0_1142 = arith.constant 0 : index
    %c0_1143 = arith.constant 0 : index
    %c0_1144 = arith.constant 0 : index
    %c9 = arith.constant 9 : index
    %c0_1145 = arith.constant 0 : index
    %501 = vector.load %arg1[%c0_1142, %c0_1143, %c0_1144, %c9, %c0_1145] : memref<4x1x4x10x10xf32, #tpu.memory_space<vmem>>, vector<1x1x4x1x8xf32>
    %502 = vector.shape_cast %501 : vector<1x1x4x1x8xf32> to vector<4x8xf32>
    %c80_1146 = arith.constant 80 : index
    %c56_1147 = arith.constant 56 : index
    %503 = vector.load %arg7[%c80_1146, %c56_1147] : memref<100x64xf32, #tpu.memory_space<vmem>>, vector<4x8xf32>
    tpu.vector_store %arg7[%c80_1146, %c56_1147], %502 {strides = array<i32>} : memref<100x64xf32, #tpu.memory_space<vmem>>, vector<4x8xf32>,
    %c1_1148 = arith.constant 1 : index
    %c0_1149 = arith.constant 0 : index
    %c0_1150 = arith.constant 0 : index
    %c2_1151 = arith.constant 2 : index
    %c0_1152 = arith.constant 0 : index
    %504 = vector.load %arg1[%c1_1148, %c0_1149, %c0_1150, %c2_1151, %c0_1152] : memref<4x1x4x10x10xf32, #tpu.memory_space<vmem>>, vector<1x1x4x1x8xf32>
    %505 = vector.shape_cast %504 : vector<1x1x4x1x8xf32> to vector<4x8xf32>
    %c84 = arith.constant 84 : index
    %c0_1153 = arith.constant 0 : index
    %506 = vector.load %arg7[%c84, %c0_1153] : memref<100x64xf32, #tpu.memory_space<vmem>>, vector<4x8xf32>
    tpu.vector_store %arg7[%c84, %c0_1153], %505 {strides = array<i32>} : memref<100x64xf32, #tpu.memory_space<vmem>>, vector<4x8xf32>,
    %c1_1154 = arith.constant 1 : index
    %c0_1155 = arith.constant 0 : index
    %c0_1156 = arith.constant 0 : index
    %c3_1157 = arith.constant 3 : index
    %c0_1158 = arith.constant 0 : index
    %507 = vector.load %arg1[%c1_1154, %c0_1155, %c0_1156, %c3_1157, %c0_1158] : memref<4x1x4x10x10xf32, #tpu.memory_space<vmem>>, vector<1x1x4x1x8xf32>
    %508 = vector.shape_cast %507 : vector<1x1x4x1x8xf32> to vector<4x8xf32>
    %c84_1159 = arith.constant 84 : index
    %c8_1160 = arith.constant 8 : index
    %509 = vector.load %arg7[%c84_1159, %c8_1160] : memref<100x64xf32, #tpu.memory_space<vmem>>, vector<4x8xf32>
    tpu.vector_store %arg7[%c84_1159, %c8_1160], %508 {strides = array<i32>} : memref<100x64xf32, #tpu.memory_space<vmem>>, vector<4x8xf32>,
    %c1_1161 = arith.constant 1 : index
    %c0_1162 = arith.constant 0 : index
    %c0_1163 = arith.constant 0 : index
    %c4_1164 = arith.constant 4 : index
    %c0_1165 = arith.constant 0 : index
    %510 = vector.load %arg1[%c1_1161, %c0_1162, %c0_1163, %c4_1164, %c0_1165] : memref<4x1x4x10x10xf32, #tpu.memory_space<vmem>>, vector<1x1x4x1x8xf32>
    %511 = vector.shape_cast %510 : vector<1x1x4x1x8xf32> to vector<4x8xf32>
    %c84_1166 = arith.constant 84 : index
    %c16_1167 = arith.constant 16 : index
    %512 = vector.load %arg7[%c84_1166, %c16_1167] : memref<100x64xf32, #tpu.memory_space<vmem>>, vector<4x8xf32>
    tpu.vector_store %arg7[%c84_1166, %c16_1167], %511 {strides = array<i32>} : memref<100x64xf32, #tpu.memory_space<vmem>>, vector<4x8xf32>,
    %c1_1168 = arith.constant 1 : index
    %c0_1169 = arith.constant 0 : index
    %c0_1170 = arith.constant 0 : index
    %c5_1171 = arith.constant 5 : index
    %c0_1172 = arith.constant 0 : index
    %513 = vector.load %arg1[%c1_1168, %c0_1169, %c0_1170, %c5_1171, %c0_1172] : memref<4x1x4x10x10xf32, #tpu.memory_space<vmem>>, vector<1x1x4x1x8xf32>
    %514 = vector.shape_cast %513 : vector<1x1x4x1x8xf32> to vector<4x8xf32>
    %c84_1173 = arith.constant 84 : index
    %c24_1174 = arith.constant 24 : index
    %515 = vector.load %arg7[%c84_1173, %c24_1174] : memref<100x64xf32, #tpu.memory_space<vmem>>, vector<4x8xf32>
    tpu.vector_store %arg7[%c84_1173, %c24_1174], %514 {strides = array<i32>} : memref<100x64xf32, #tpu.memory_space<vmem>>, vector<4x8xf32>,
    %c1_1175 = arith.constant 1 : index
    %c0_1176 = arith.constant 0 : index
    %c0_1177 = arith.constant 0 : index
    %c6_1178 = arith.constant 6 : index
    %c0_1179 = arith.constant 0 : index
    %516 = vector.load %arg1[%c1_1175, %c0_1176, %c0_1177, %c6_1178, %c0_1179] : memref<4x1x4x10x10xf32, #tpu.memory_space<vmem>>, vector<1x1x4x1x8xf32>
    %517 = vector.shape_cast %516 : vector<1x1x4x1x8xf32> to vector<4x8xf32>
    %c84_1180 = arith.constant 84 : index
    %c32_1181 = arith.constant 32 : index
    %518 = vector.load %arg7[%c84_1180, %c32_1181] : memref<100x64xf32, #tpu.memory_space<vmem>>, vector<4x8xf32>
    tpu.vector_store %arg7[%c84_1180, %c32_1181], %517 {strides = array<i32>} : memref<100x64xf32, #tpu.memory_space<vmem>>, vector<4x8xf32>,
    %c1_1182 = arith.constant 1 : index
    %c0_1183 = arith.constant 0 : index
    %c0_1184 = arith.constant 0 : index
    %c7_1185 = arith.constant 7 : index
    %c0_1186 = arith.constant 0 : index
    %519 = vector.load %arg1[%c1_1182, %c0_1183, %c0_1184, %c7_1185, %c0_1186] : memref<4x1x4x10x10xf32, #tpu.memory_space<vmem>>, vector<1x1x4x1x8xf32>
    %520 = vector.shape_cast %519 : vector<1x1x4x1x8xf32> to vector<4x8xf32>
    %c84_1187 = arith.constant 84 : index
    %c40_1188 = arith.constant 40 : index
    %521 = vector.load %arg7[%c84_1187, %c40_1188] : memref<100x64xf32, #tpu.memory_space<vmem>>, vector<4x8xf32>
    tpu.vector_store %arg7[%c84_1187, %c40_1188], %520 {strides = array<i32>} : memref<100x64xf32, #tpu.memory_space<vmem>>, vector<4x8xf32>,
    %c1_1189 = arith.constant 1 : index
    %c0_1190 = arith.constant 0 : index
    %c0_1191 = arith.constant 0 : index
    %c8_1192 = arith.constant 8 : index
    %c0_1193 = arith.constant 0 : index
    %522 = vector.load %arg1[%c1_1189, %c0_1190, %c0_1191, %c8_1192, %c0_1193] : memref<4x1x4x10x10xf32, #tpu.memory_space<vmem>>, vector<1x1x4x1x8xf32>
    %523 = vector.shape_cast %522 : vector<1x1x4x1x8xf32> to vector<4x8xf32>
    %c84_1194 = arith.constant 84 : index
    %c48_1195 = arith.constant 48 : index
    %524 = vector.load %arg7[%c84_1194, %c48_1195] : memref<100x64xf32, #tpu.memory_space<vmem>>, vector<4x8xf32>
    tpu.vector_store %arg7[%c84_1194, %c48_1195], %523 {strides = array<i32>} : memref<100x64xf32, #tpu.memory_space<vmem>>, vector<4x8xf32>,
    %c1_1196 = arith.constant 1 : index
    %c0_1197 = arith.constant 0 : index
    %c0_1198 = arith.constant 0 : index
    %c9_1199 = arith.constant 9 : index
    %c0_1200 = arith.constant 0 : index
    %525 = vector.load %arg1[%c1_1196, %c0_1197, %c0_1198, %c9_1199, %c0_1200] : memref<4x1x4x10x10xf32, #tpu.memory_space<vmem>>, vector<1x1x4x1x8xf32>
    %526 = vector.shape_cast %525 : vector<1x1x4x1x8xf32> to vector<4x8xf32>
    %c84_1201 = arith.constant 84 : index
    %c56_1202 = arith.constant 56 : index
    %527 = vector.load %arg7[%c84_1201, %c56_1202] : memref<100x64xf32, #tpu.memory_space<vmem>>, vector<4x8xf32>
    tpu.vector_store %arg7[%c84_1201, %c56_1202], %526 {strides = array<i32>} : memref<100x64xf32, #tpu.memory_space<vmem>>, vector<4x8xf32>,
    %c0_1203 = arith.constant 0 : index
    %c0_1204 = arith.constant 0 : index
    %c0_1205 = arith.constant 0 : index
    %c2_1206 = arith.constant 2 : index
    %c1_1207 = arith.constant 1 : index
    %528 = vector.load %arg1[%c0_1203, %c0_1204, %c0_1205, %c2_1206, %c1_1207] : memref<4x1x4x10x10xf32, #tpu.memory_space<vmem>>, vector<1x1x4x1x8xf32>
    %529 = vector.shape_cast %528 : vector<1x1x4x1x8xf32> to vector<4x8xf32>
    %c88 = arith.constant 88 : index
    %c0_1208 = arith.constant 0 : index
    %530 = vector.load %arg7[%c88, %c0_1208] : memref<100x64xf32, #tpu.memory_space<vmem>>, vector<4x8xf32>
    tpu.vector_store %arg7[%c88, %c0_1208], %529 {strides = array<i32>} : memref<100x64xf32, #tpu.memory_space<vmem>>, vector<4x8xf32>,
    %c0_1209 = arith.constant 0 : index
    %c0_1210 = arith.constant 0 : index
    %c0_1211 = arith.constant 0 : index
    %c3_1212 = arith.constant 3 : index
    %c1_1213 = arith.constant 1 : index
    %531 = vector.load %arg1[%c0_1209, %c0_1210, %c0_1211, %c3_1212, %c1_1213] : memref<4x1x4x10x10xf32, #tpu.memory_space<vmem>>, vector<1x1x4x1x8xf32>
    %532 = vector.shape_cast %531 : vector<1x1x4x1x8xf32> to vector<4x8xf32>
    %c88_1214 = arith.constant 88 : index
    %c8_1215 = arith.constant 8 : index
    %533 = vector.load %arg7[%c88_1214, %c8_1215] : memref<100x64xf32, #tpu.memory_space<vmem>>, vector<4x8xf32>
    tpu.vector_store %arg7[%c88_1214, %c8_1215], %532 {strides = array<i32>} : memref<100x64xf32, #tpu.memory_space<vmem>>, vector<4x8xf32>,
    %c0_1216 = arith.constant 0 : index
    %c0_1217 = arith.constant 0 : index
    %c0_1218 = arith.constant 0 : index
    %c4_1219 = arith.constant 4 : index
    %c1_1220 = arith.constant 1 : index
    %534 = vector.load %arg1[%c0_1216, %c0_1217, %c0_1218, %c4_1219, %c1_1220] : memref<4x1x4x10x10xf32, #tpu.memory_space<vmem>>, vector<1x1x4x1x8xf32>
    %535 = vector.shape_cast %534 : vector<1x1x4x1x8xf32> to vector<4x8xf32>
    %c88_1221 = arith.constant 88 : index
    %c16_1222 = arith.constant 16 : index
    %536 = vector.load %arg7[%c88_1221, %c16_1222] : memref<100x64xf32, #tpu.memory_space<vmem>>, vector<4x8xf32>
    tpu.vector_store %arg7[%c88_1221, %c16_1222], %535 {strides = array<i32>} : memref<100x64xf32, #tpu.memory_space<vmem>>, vector<4x8xf32>,
    %c0_1223 = arith.constant 0 : index
    %c0_1224 = arith.constant 0 : index
    %c0_1225 = arith.constant 0 : index
    %c5_1226 = arith.constant 5 : index
    %c1_1227 = arith.constant 1 : index
    %537 = vector.load %arg1[%c0_1223, %c0_1224, %c0_1225, %c5_1226, %c1_1227] : memref<4x1x4x10x10xf32, #tpu.memory_space<vmem>>, vector<1x1x4x1x8xf32>
    %538 = vector.shape_cast %537 : vector<1x1x4x1x8xf32> to vector<4x8xf32>
    %c88_1228 = arith.constant 88 : index
    %c24_1229 = arith.constant 24 : index
    %539 = vector.load %arg7[%c88_1228, %c24_1229] : memref<100x64xf32, #tpu.memory_space<vmem>>, vector<4x8xf32>
    tpu.vector_store %arg7[%c88_1228, %c24_1229], %538 {strides = array<i32>} : memref<100x64xf32, #tpu.memory_space<vmem>>, vector<4x8xf32>,
    %c0_1230 = arith.constant 0 : index
    %c0_1231 = arith.constant 0 : index
    %c0_1232 = arith.constant 0 : index
    %c6_1233 = arith.constant 6 : index
    %c1_1234 = arith.constant 1 : index
    %540 = vector.load %arg1[%c0_1230, %c0_1231, %c0_1232, %c6_1233, %c1_1234] : memref<4x1x4x10x10xf32, #tpu.memory_space<vmem>>, vector<1x1x4x1x8xf32>
    %541 = vector.shape_cast %540 : vector<1x1x4x1x8xf32> to vector<4x8xf32>
    %c88_1235 = arith.constant 88 : index
    %c32_1236 = arith.constant 32 : index
    %542 = vector.load %arg7[%c88_1235, %c32_1236] : memref<100x64xf32, #tpu.memory_space<vmem>>, vector<4x8xf32>
    tpu.vector_store %arg7[%c88_1235, %c32_1236], %541 {strides = array<i32>} : memref<100x64xf32, #tpu.memory_space<vmem>>, vector<4x8xf32>,
    %c0_1237 = arith.constant 0 : index
    %c0_1238 = arith.constant 0 : index
    %c0_1239 = arith.constant 0 : index
    %c7_1240 = arith.constant 7 : index
    %c1_1241 = arith.constant 1 : index
    %543 = vector.load %arg1[%c0_1237, %c0_1238, %c0_1239, %c7_1240, %c1_1241] : memref<4x1x4x10x10xf32, #tpu.memory_space<vmem>>, vector<1x1x4x1x8xf32>
    %544 = vector.shape_cast %543 : vector<1x1x4x1x8xf32> to vector<4x8xf32>
    %c88_1242 = arith.constant 88 : index
    %c40_1243 = arith.constant 40 : index
    %545 = vector.load %arg7[%c88_1242, %c40_1243] : memref<100x64xf32, #tpu.memory_space<vmem>>, vector<4x8xf32>
    tpu.vector_store %arg7[%c88_1242, %c40_1243], %544 {strides = array<i32>} : memref<100x64xf32, #tpu.memory_space<vmem>>, vector<4x8xf32>,
    %c0_1244 = arith.constant 0 : index
    %c0_1245 = arith.constant 0 : index
    %c0_1246 = arith.constant 0 : index
    %c8_1247 = arith.constant 8 : index
    %c1_1248 = arith.constant 1 : index
    %546 = vector.load %arg1[%c0_1244, %c0_1245, %c0_1246, %c8_1247, %c1_1248] : memref<4x1x4x10x10xf32, #tpu.memory_space<vmem>>, vector<1x1x4x1x8xf32>
    %547 = vector.shape_cast %546 : vector<1x1x4x1x8xf32> to vector<4x8xf32>
    %c88_1249 = arith.constant 88 : index
    %c48_1250 = arith.constant 48 : index
    %548 = vector.load %arg7[%c88_1249, %c48_1250] : memref<100x64xf32, #tpu.memory_space<vmem>>, vector<4x8xf32>
    tpu.vector_store %arg7[%c88_1249, %c48_1250], %547 {strides = array<i32>} : memref<100x64xf32, #tpu.memory_space<vmem>>, vector<4x8xf32>,
    %c0_1251 = arith.constant 0 : index
    %c0_1252 = arith.constant 0 : index
    %c0_1253 = arith.constant 0 : index
    %c9_1254 = arith.constant 9 : index
    %c1_1255 = arith.constant 1 : index
    %549 = vector.load %arg1[%c0_1251, %c0_1252, %c0_1253, %c9_1254, %c1_1255] : memref<4x1x4x10x10xf32, #tpu.memory_space<vmem>>, vector<1x1x4x1x8xf32>
    %550 = vector.shape_cast %549 : vector<1x1x4x1x8xf32> to vector<4x8xf32>
    %c88_1256 = arith.constant 88 : index
    %c56_1257 = arith.constant 56 : index
    %551 = vector.load %arg7[%c88_1256, %c56_1257] : memref<100x64xf32, #tpu.memory_space<vmem>>, vector<4x8xf32>
    tpu.vector_store %arg7[%c88_1256, %c56_1257], %550 {strides = array<i32>} : memref<100x64xf32, #tpu.memory_space<vmem>>, vector<4x8xf32>,
    %c1_1258 = arith.constant 1 : index
    %c0_1259 = arith.constant 0 : index
    %c0_1260 = arith.constant 0 : index
    %c2_1261 = arith.constant 2 : index
    %c1_1262 = arith.constant 1 : index
    %552 = vector.load %arg1[%c1_1258, %c0_1259, %c0_1260, %c2_1261, %c1_1262] : memref<4x1x4x10x10xf32, #tpu.memory_space<vmem>>, vector<1x1x4x1x8xf32>
    %553 = vector.shape_cast %552 : vector<1x1x4x1x8xf32> to vector<4x8xf32>
    %c92 = arith.constant 92 : index
    %c0_1263 = arith.constant 0 : index
    %554 = vector.load %arg7[%c92, %c0_1263] : memref<100x64xf32, #tpu.memory_space<vmem>>, vector<4x8xf32>
    tpu.vector_store %arg7[%c92, %c0_1263], %553 {strides = array<i32>} : memref<100x64xf32, #tpu.memory_space<vmem>>, vector<4x8xf32>,
    %c1_1264 = arith.constant 1 : index
    %c0_1265 = arith.constant 0 : index
    %c0_1266 = arith.constant 0 : index
    %c3_1267 = arith.constant 3 : index
    %c1_1268 = arith.constant 1 : index
    %555 = vector.load %arg1[%c1_1264, %c0_1265, %c0_1266, %c3_1267, %c1_1268] : memref<4x1x4x10x10xf32, #tpu.memory_space<vmem>>, vector<1x1x4x1x8xf32>
    %556 = vector.shape_cast %555 : vector<1x1x4x1x8xf32> to vector<4x8xf32>
    %c92_1269 = arith.constant 92 : index
    %c8_1270 = arith.constant 8 : index
    %557 = vector.load %arg7[%c92_1269, %c8_1270] : memref<100x64xf32, #tpu.memory_space<vmem>>, vector<4x8xf32>
    tpu.vector_store %arg7[%c92_1269, %c8_1270], %556 {strides = array<i32>} : memref<100x64xf32, #tpu.memory_space<vmem>>, vector<4x8xf32>,
    %c1_1271 = arith.constant 1 : index
    %c0_1272 = arith.constant 0 : index
    %c0_1273 = arith.constant 0 : index
    %c4_1274 = arith.constant 4 : index
    %c1_1275 = arith.constant 1 : index
    %558 = vector.load %arg1[%c1_1271, %c0_1272, %c0_1273, %c4_1274, %c1_1275] : memref<4x1x4x10x10xf32, #tpu.memory_space<vmem>>, vector<1x1x4x1x8xf32>
    %559 = vector.shape_cast %558 : vector<1x1x4x1x8xf32> to vector<4x8xf32>
    %c92_1276 = arith.constant 92 : index
    %c16_1277 = arith.constant 16 : index
    %560 = vector.load %arg7[%c92_1276, %c16_1277] : memref<100x64xf32, #tpu.memory_space<vmem>>, vector<4x8xf32>
    tpu.vector_store %arg7[%c92_1276, %c16_1277], %559 {strides = array<i32>} : memref<100x64xf32, #tpu.memory_space<vmem>>, vector<4x8xf32>,
    %c1_1278 = arith.constant 1 : index
    %c0_1279 = arith.constant 0 : index
    %c0_1280 = arith.constant 0 : index
    %c5_1281 = arith.constant 5 : index
    %c1_1282 = arith.constant 1 : index
    %561 = vector.load %arg1[%c1_1278, %c0_1279, %c0_1280, %c5_1281, %c1_1282] : memref<4x1x4x10x10xf32, #tpu.memory_space<vmem>>, vector<1x1x4x1x8xf32>
    %562 = vector.shape_cast %561 : vector<1x1x4x1x8xf32> to vector<4x8xf32>
    %c92_1283 = arith.constant 92 : index
    %c24_1284 = arith.constant 24 : index
    %563 = vector.load %arg7[%c92_1283, %c24_1284] : memref<100x64xf32, #tpu.memory_space<vmem>>, vector<4x8xf32>
    tpu.vector_store %arg7[%c92_1283, %c24_1284], %562 {strides = array<i32>} : memref<100x64xf32, #tpu.memory_space<vmem>>, vector<4x8xf32>,
    %c1_1285 = arith.constant 1 : index
    %c0_1286 = arith.constant 0 : index
    %c0_1287 = arith.constant 0 : index
    %c6_1288 = arith.constant 6 : index
    %c1_1289 = arith.constant 1 : index
    %564 = vector.load %arg1[%c1_1285, %c0_1286, %c0_1287, %c6_1288, %c1_1289] : memref<4x1x4x10x10xf32, #tpu.memory_space<vmem>>, vector<1x1x4x1x8xf32>
    %565 = vector.shape_cast %564 : vector<1x1x4x1x8xf32> to vector<4x8xf32>
    %c92_1290 = arith.constant 92 : index
    %c32_1291 = arith.constant 32 : index
    %566 = vector.load %arg7[%c92_1290, %c32_1291] : memref<100x64xf32, #tpu.memory_space<vmem>>, vector<4x8xf32>
    tpu.vector_store %arg7[%c92_1290, %c32_1291], %565 {strides = array<i32>} : memref<100x64xf32, #tpu.memory_space<vmem>>, vector<4x8xf32>,
    %c1_1292 = arith.constant 1 : index
    %c0_1293 = arith.constant 0 : index
    %c0_1294 = arith.constant 0 : index
    %c7_1295 = arith.constant 7 : index
    %c1_1296 = arith.constant 1 : index
    %567 = vector.load %arg1[%c1_1292, %c0_1293, %c0_1294, %c7_1295, %c1_1296] : memref<4x1x4x10x10xf32, #tpu.memory_space<vmem>>, vector<1x1x4x1x8xf32>
    %568 = vector.shape_cast %567 : vector<1x1x4x1x8xf32> to vector<4x8xf32>
    %c92_1297 = arith.constant 92 : index
    %c40_1298 = arith.constant 40 : index
    %569 = vector.load %arg7[%c92_1297, %c40_1298] : memref<100x64xf32, #tpu.memory_space<vmem>>, vector<4x8xf32>
    tpu.vector_store %arg7[%c92_1297, %c40_1298], %568 {strides = array<i32>} : memref<100x64xf32, #tpu.memory_space<vmem>>, vector<4x8xf32>,
    %c1_1299 = arith.constant 1 : index
    %c0_1300 = arith.constant 0 : index
    %c0_1301 = arith.constant 0 : index
    %c8_1302 = arith.constant 8 : index
    %c1_1303 = arith.constant 1 : index
    %570 = vector.load %arg1[%c1_1299, %c0_1300, %c0_1301, %c8_1302, %c1_1303] : memref<4x1x4x10x10xf32, #tpu.memory_space<vmem>>, vector<1x1x4x1x8xf32>
    %571 = vector.shape_cast %570 : vector<1x1x4x1x8xf32> to vector<4x8xf32>
    %c92_1304 = arith.constant 92 : index
    %c48_1305 = arith.constant 48 : index
    %572 = vector.load %arg7[%c92_1304, %c48_1305] : memref<100x64xf32, #tpu.memory_space<vmem>>, vector<4x8xf32>
    tpu.vector_store %arg7[%c92_1304, %c48_1305], %571 {strides = array<i32>} : memref<100x64xf32, #tpu.memory_space<vmem>>, vector<4x8xf32>,
    %c1_1306 = arith.constant 1 : index
    %c0_1307 = arith.constant 0 : index
    %c0_1308 = arith.constant 0 : index
    %c9_1309 = arith.constant 9 : index
    %c1_1310 = arith.constant 1 : index
    %573 = vector.load %arg1[%c1_1306, %c0_1307, %c0_1308, %c9_1309, %c1_1310] : memref<4x1x4x10x10xf32, #tpu.memory_space<vmem>>, vector<1x1x4x1x8xf32>
    %574 = vector.shape_cast %573 : vector<1x1x4x1x8xf32> to vector<4x8xf32>
    %c92_1311 = arith.constant 92 : index
    %c56_1312 = arith.constant 56 : index
    %575 = vector.load %arg7[%c92_1311, %c56_1312] : memref<100x64xf32, #tpu.memory_space<vmem>>, vector<4x8xf32>
    tpu.vector_store %arg7[%c92_1311, %c56_1312], %574 {strides = array<i32>} : memref<100x64xf32, #tpu.memory_space<vmem>>, vector<4x8xf32>,
    %c0_1313 = arith.constant 0 : index
    %c0_1314 = arith.constant 0 : index
    %c0_1315 = arith.constant 0 : index
    %c2_1316 = arith.constant 2 : index
    %c2_1317 = arith.constant 2 : index
    %576 = vector.load %arg1[%c0_1313, %c0_1314, %c0_1315, %c2_1316, %c2_1317] : memref<4x1x4x10x10xf32, #tpu.memory_space<vmem>>, vector<1x1x4x1x8xf32>
    %577 = vector.shape_cast %576 : vector<1x1x4x1x8xf32> to vector<4x8xf32>
    %c96 = arith.constant 96 : index
    %c0_1318 = arith.constant 0 : index
    %578 = vector.load %arg7[%c96, %c0_1318] : memref<100x64xf32, #tpu.memory_space<vmem>>, vector<4x8xf32>
    tpu.vector_store %arg7[%c96, %c0_1318], %577 {strides = array<i32>} : memref<100x64xf32, #tpu.memory_space<vmem>>, vector<4x8xf32>,
    %c0_1319 = arith.constant 0 : index
    %c0_1320 = arith.constant 0 : index
    %c0_1321 = arith.constant 0 : index
    %c3_1322 = arith.constant 3 : index
    %c2_1323 = arith.constant 2 : index
    %579 = vector.load %arg1[%c0_1319, %c0_1320, %c0_1321, %c3_1322, %c2_1323] : memref<4x1x4x10x10xf32, #tpu.memory_space<vmem>>, vector<1x1x4x1x8xf32>
    %580 = vector.shape_cast %579 : vector<1x1x4x1x8xf32> to vector<4x8xf32>
    %c96_1324 = arith.constant 96 : index
    %c8_1325 = arith.constant 8 : index
    %581 = vector.load %arg7[%c96_1324, %c8_1325] : memref<100x64xf32, #tpu.memory_space<vmem>>, vector<4x8xf32>
    tpu.vector_store %arg7[%c96_1324, %c8_1325], %580 {strides = array<i32>} : memref<100x64xf32, #tpu.memory_space<vmem>>, vector<4x8xf32>,
    %c0_1326 = arith.constant 0 : index
    %c0_1327 = arith.constant 0 : index
    %c0_1328 = arith.constant 0 : index
    %c4_1329 = arith.constant 4 : index
    %c2_1330 = arith.constant 2 : index
    %582 = vector.load %arg1[%c0_1326, %c0_1327, %c0_1328, %c4_1329, %c2_1330] : memref<4x1x4x10x10xf32, #tpu.memory_space<vmem>>, vector<1x1x4x1x8xf32>
    %583 = vector.shape_cast %582 : vector<1x1x4x1x8xf32> to vector<4x8xf32>
    %c96_1331 = arith.constant 96 : index
    %c16_1332 = arith.constant 16 : index
    %584 = vector.load %arg7[%c96_1331, %c16_1332] : memref<100x64xf32, #tpu.memory_space<vmem>>, vector<4x8xf32>
    tpu.vector_store %arg7[%c96_1331, %c16_1332], %583 {strides = array<i32>} : memref<100x64xf32, #tpu.memory_space<vmem>>, vector<4x8xf32>,
    %c0_1333 = arith.constant 0 : index
    %c0_1334 = arith.constant 0 : index
    %c0_1335 = arith.constant 0 : index
    %c5_1336 = arith.constant 5 : index
    %c2_1337 = arith.constant 2 : index
    %585 = vector.load %arg1[%c0_1333, %c0_1334, %c0_1335, %c5_1336, %c2_1337] : memref<4x1x4x10x10xf32, #tpu.memory_space<vmem>>, vector<1x1x4x1x8xf32>
    %586 = vector.shape_cast %585 : vector<1x1x4x1x8xf32> to vector<4x8xf32>
    %c96_1338 = arith.constant 96 : index
    %c24_1339 = arith.constant 24 : index
    %587 = vector.load %arg7[%c96_1338, %c24_1339] : memref<100x64xf32, #tpu.memory_space<vmem>>, vector<4x8xf32>
    tpu.vector_store %arg7[%c96_1338, %c24_1339], %586 {strides = array<i32>} : memref<100x64xf32, #tpu.memory_space<vmem>>, vector<4x8xf32>,
    %c0_1340 = arith.constant 0 : index
    %c0_1341 = arith.constant 0 : index
    %c0_1342 = arith.constant 0 : index
    %c6_1343 = arith.constant 6 : index
    %c2_1344 = arith.constant 2 : index
    %588 = vector.load %arg1[%c0_1340, %c0_1341, %c0_1342, %c6_1343, %c2_1344] : memref<4x1x4x10x10xf32, #tpu.memory_space<vmem>>, vector<1x1x4x1x8xf32>
    %589 = vector.shape_cast %588 : vector<1x1x4x1x8xf32> to vector<4x8xf32>
    %c96_1345 = arith.constant 96 : index
    %c32_1346 = arith.constant 32 : index
    %590 = vector.load %arg7[%c96_1345, %c32_1346] : memref<100x64xf32, #tpu.memory_space<vmem>>, vector<4x8xf32>
    tpu.vector_store %arg7[%c96_1345, %c32_1346], %589 {strides = array<i32>} : memref<100x64xf32, #tpu.memory_space<vmem>>, vector<4x8xf32>,
    %c0_1347 = arith.constant 0 : index
    %c0_1348 = arith.constant 0 : index
    %c0_1349 = arith.constant 0 : index
    %c7_1350 = arith.constant 7 : index
    %c2_1351 = arith.constant 2 : index
    %591 = vector.load %arg1[%c0_1347, %c0_1348, %c0_1349, %c7_1350, %c2_1351] : memref<4x1x4x10x10xf32, #tpu.memory_space<vmem>>, vector<1x1x4x1x8xf32>
    %592 = vector.shape_cast %591 : vector<1x1x4x1x8xf32> to vector<4x8xf32>
    %c96_1352 = arith.constant 96 : index
    %c40_1353 = arith.constant 40 : index
    %593 = vector.load %arg7[%c96_1352, %c40_1353] : memref<100x64xf32, #tpu.memory_space<vmem>>, vector<4x8xf32>
    tpu.vector_store %arg7[%c96_1352, %c40_1353], %592 {strides = array<i32>} : memref<100x64xf32, #tpu.memory_space<vmem>>, vector<4x8xf32>,
    %c0_1354 = arith.constant 0 : index
    %c0_1355 = arith.constant 0 : index
    %c0_1356 = arith.constant 0 : index
    %c8_1357 = arith.constant 8 : index
    %c2_1358 = arith.constant 2 : index
    %594 = vector.load %arg1[%c0_1354, %c0_1355, %c0_1356, %c8_1357, %c2_1358] : memref<4x1x4x10x10xf32, #tpu.memory_space<vmem>>, vector<1x1x4x1x8xf32>
    %595 = vector.shape_cast %594 : vector<1x1x4x1x8xf32> to vector<4x8xf32>
    %c96_1359 = arith.constant 96 : index
    %c48_1360 = arith.constant 48 : index
    %596 = vector.load %arg7[%c96_1359, %c48_1360] : memref<100x64xf32, #tpu.memory_space<vmem>>, vector<4x8xf32>
    tpu.vector_store %arg7[%c96_1359, %c48_1360], %595 {strides = array<i32>} : memref<100x64xf32, #tpu.memory_space<vmem>>, vector<4x8xf32>,
    %c0_1361 = arith.constant 0 : index
    %c0_1362 = arith.constant 0 : index
    %c0_1363 = arith.constant 0 : index
    %c9_1364 = arith.constant 9 : index
    %c2_1365 = arith.constant 2 : index
    %597 = vector.load %arg1[%c0_1361, %c0_1362, %c0_1363, %c9_1364, %c2_1365] : memref<4x1x4x10x10xf32, #tpu.memory_space<vmem>>, vector<1x1x4x1x8xf32>
    %598 = vector.shape_cast %597 : vector<1x1x4x1x8xf32> to vector<4x8xf32>
    %c96_1366 = arith.constant 96 : index
    %c56_1367 = arith.constant 56 : index
    %599 = vector.load %arg7[%c96_1366, %c56_1367] : memref<100x64xf32, #tpu.memory_space<vmem>>, vector<4x8xf32>
    tpu.vector_store %arg7[%c96_1366, %c56_1367], %598 {strides = array<i32>} : memref<100x64xf32, #tpu.memory_space<vmem>>, vector<4x8xf32>,
    %c0_1368 = arith.constant 0 : index
    %c0_1369 = arith.constant 0 : index
    %600 = vector.load %arg2[%c0_1368, %c0_1369] : memref<8x100xf32, #tpu.memory_space<vmem>>, vector<8x100xf32>
    %c0_1370 = arith.constant 0 : index
    %c0_1371 = arith.constant 0 : index
    %601 = vector.load %arg7[%c0_1370, %c0_1371] : memref<100x64xf32, #tpu.memory_space<vmem>>, vector<100x64xf32>
    %cst = arith.constant dense<0.000000e+00> : vector<8x64xf32>
    %602 = tpu.matmul %600, %601, %cst {dimension_numbers = #tpu.dot_dimension_numbers<[1], [0], [0], [1], [0, 0, 1, 1], [], []>} : vector<8x100xf32>, vector<100x64xf32>, vector<8x64xf32> -> vector<8x64xf32>
    %c0_1372 = arith.constant 0 : index
    %c0_1373 = arith.constant 0 : index
    %603 = vector.load %arg3[%c0_1372, %c0_1373] : memref<8x1xf32, #tpu.memory_space<vmem>>, vector<8x1xf32>
    %604 = vector.broadcast %603 : vector<8x1xf32> to vector<8x64xf32>
    %605 = arith.addf %602, %604 : vector<8x64xf32>
    %c0_1374 = arith.constant 0 : index
    %c0_1375 = arith.constant 0 : index
    %c0_1376 = arith.constant 0 : index
    %606 = vector.load %arg4[%c0_1374, %c0_1375, %c0_1376] : memref<1x8x64xf32, #tpu.memory_space<vmem>>, vector<1x8x64xf32>
    %607 = vector.shape_cast %606 : vector<1x8x64xf32> to vector<8x64xf32>
    %608 = vector.shape_cast %605 : vector<8x64xf32> to vector<1x8x64xf32>
    tpu.vector_store %arg4[%c0_1374, %c0_1375, %c0_1376], %608 {strides = array<i32>} : memref<1x8x64xf32, #tpu.memory_space<vmem>>, vector<1x8x64xf32>,
    %cst_1377 = arith.constant dense<0.000000e+00> : vector<8xf32>
    %609 = vector.multi_reduction <add>, %605, %cst_1377 [1] : vector<8x64xf32> to vector<8xf32>
    %610 = vector.shape_cast %609 : vector<8xf32> to vector<8x1xf32>
    %c0_1378 = arith.constant 0 : index
    %c0_1379 = arith.constant 0 : index
    %c0_1380 = arith.constant 0 : index
    %611 = vector.load %arg5[%c0_1378, %c0_1379, %c0_1380] : memref<1x8x1xf32, #tpu.memory_space<vmem>>, vector<1x8x1xf32>
    %612 = vector.shape_cast %611 : vector<1x8x1xf32> to vector<8x1xf32>
    %613 = vector.shape_cast %610 : vector<8x1xf32> to vector<1x8x1xf32>
    tpu.vector_store %arg5[%c0_1378, %c0_1379, %c0_1380], %613 {strides = array<i32>} : memref<1x8x1xf32, #tpu.memory_space<vmem>>, vector<1x8x1xf32>,
    %614 = arith.mulf %605, %605 : vector<8x64xf32>
    %cst_1381 = arith.constant dense<0.000000e+00> : vector<8xf32>
    %615 = vector.multi_reduction <add>, %614, %cst_1381 [1] : vector<8x64xf32> to vector<8xf32>
    %616 = vector.shape_cast %615 : vector<8xf32> to vector<8x1xf32>
    %c0_1382 = arith.constant 0 : index
    %c0_1383 = arith.constant 0 : index
    %c0_1384 = arith.constant 0 : index
    %617 = vector.load %arg6[%c0_1382, %c0_1383, %c0_1384] : memref<1x8x1xf32, #tpu.memory_space<vmem>>, vector<1x8x1xf32>
    %618 = vector.shape_cast %617 : vector<1x8x1xf32> to vector<8x1xf32>
    %619 = vector.shape_cast %616 : vector<8x1xf32> to vector<1x8x1xf32>
    tpu.vector_store %arg6[%c0_1382, %c0_1383, %c0_1384], %619 {strides = array<i32>} : memref<1x8x1xf32, #tpu.memory_space<vmem>>, vector<1x8x1xf32>,
    return
  }
  func.func @transform_0(%arg0: i32) -> (i32, i32, i32, i32, i32) {
    %c0_i32 = arith.constant 0 : i32
    %c0_i32_0 = arith.constant 0 : i32
    %c0_i32_1 = arith.constant 0 : i32
    %c0_i32_2 = arith.constant 0 : i32
    %c0_i32_3 = arith.constant 0 : i32
    return %c0_i32, %arg0, %c0_i32_0, %c0_i32_1, %c0_i32_2 : i32, i32, i32, i32, i32
  }
  func.func @transform_1(%arg0: i32) -> (i32, i32) {
    %c0_i32 = arith.constant 0 : i32
    %c0_i32_0 = arith.constant 0 : i32
    %c0_i32_1 = arith.constant 0 : i32
    return %c0_i32, %c0_i32_0 : i32, i32
  }
  func.func @transform_2(%arg0: i32) -> (i32, i32) {
    %c0_i32 = arith.constant 0 : i32
    %c0_i32_0 = arith.constant 0 : i32
    %c0_i32_1 = arith.constant 0 : i32
    return %c0_i32, %c0_i32_0 : i32, i32
  }
  func.func @transform_3(%arg0: i32) -> (i32, i32, i32) {
    %c0_i32 = arith.constant 0 : i32
    %c0_i32_0 = arith.constant 0 : i32
    %c0_i32_1 = arith.constant 0 : i32
    return %arg0, %c0_i32, %c0_i32_0 : i32, i32, i32
  }
  func.func @transform_4(%arg0: i32) -> (i32, i32, i32) {
    %c0_i32 = arith.constant 0 : i32
    %c0_i32_0 = arith.constant 0 : i32
    %c0_i32_1 = arith.constant 0 : i32
    return %arg0, %c0_i32, %c0_i32_0 : i32, i32, i32
  }
  func.func @transform_5(%arg0: i32) -> (i32, i32, i32) {
    %c0_i32 = arith.constant 0 : i32
    %c0_i32_0 = arith.constant 0 : i32
    %c0_i32_1 = arith.constant 0 : i32
    return %arg0, %c0_i32, %c0_i32_0 : i32, i32, i32
  }
}

module attributes {stable_mosaic.version = 11 : i64} {
  func.func @_bn_apply_relu_kernel(%arg0: i32, %arg1: i32, %arg2: memref<1x8x64xf32, #tpu.memory_space<vmem>>, %arg3: memref<8x1xf32, #tpu.memory_space<vmem>>, %arg4: memref<8x1xf32, #tpu.memory_space<vmem>>, %arg5: memref<1x8x64xf32, #tpu.memory_space<vmem>>) attributes {dimension_semantics = [#tpu.dimension_semantics<parallel>, #tpu.dimension_semantics<parallel>], iteration_bounds = array<i64: 2, 1>, scalar_prefetch = 0 : i64, scratch_operands = 0 : i64, tpu.core_type = #tpu.core_type<tc>, window_params = [{transform_indices = @transform_0, window_bounds = array<i64: 1, 8, 64>}, {pipeline_mode = #tpu.pipeline_mode<synchronous>, transform_indices = @transform_1, window_bounds = array<i64: 8, 1>}, {pipeline_mode = #tpu.pipeline_mode<synchronous>, transform_indices = @transform_2, window_bounds = array<i64: 8, 1>}, {transform_indices = @transform_3, window_bounds = array<i64: 1, 8, 64>}]} {
    %c0 = arith.constant 0 : index
    %c0_0 = arith.constant 0 : index
    %c0_1 = arith.constant 0 : index
    %0 = vector.load %arg2[%c0, %c0_0, %c0_1] : memref<1x8x64xf32, #tpu.memory_space<vmem>>, vector<1x8x64xf32>
    %c0_2 = arith.constant 0 : index
    %c0_3 = arith.constant 0 : index
    %1 = vector.load %arg3[%c0_2, %c0_3] : memref<8x1xf32, #tpu.memory_space<vmem>>, vector<8x1xf32>
    %2 = vector.shape_cast %1 : vector<8x1xf32> to vector<1x8x1xf32>
    %3 = vector.broadcast %2 : vector<1x8x1xf32> to vector<1x8x64xf32>
    %4 = arith.mulf %0, %3 : vector<1x8x64xf32>
    %c0_4 = arith.constant 0 : index
    %c0_5 = arith.constant 0 : index
    %5 = vector.load %arg4[%c0_4, %c0_5] : memref<8x1xf32, #tpu.memory_space<vmem>>, vector<8x1xf32>
    %6 = vector.shape_cast %5 : vector<8x1xf32> to vector<1x8x1xf32>
    %7 = vector.broadcast %6 : vector<1x8x1xf32> to vector<1x8x64xf32>
    %8 = arith.addf %4, %7 : vector<1x8x64xf32>
    %cst = arith.constant 0.000000e+00 : f32
    %9 = vector.broadcast %cst : f32 to vector<1x8x64xf32>
    %10 = arith.maximumf %8, %9 : vector<1x8x64xf32>
    %c0_6 = arith.constant 0 : index
    %c0_7 = arith.constant 0 : index
    %c0_8 = arith.constant 0 : index
    %11 = vector.load %arg5[%c0_6, %c0_7, %c0_8] : memref<1x8x64xf32, #tpu.memory_space<vmem>>, vector<1x8x64xf32>
    tpu.vector_store %arg5[%c0_6, %c0_7, %c0_8], %10 {strides = array<i32>} : memref<1x8x64xf32, #tpu.memory_space<vmem>>, vector<1x8x64xf32>,
    return
  }
  func.func @transform_0(%arg0: i32, %arg1: i32) -> (i32, i32, i32) {
    %c0_i32 = arith.constant 0 : i32
    %c0_i32_0 = arith.constant 0 : i32
    return %arg0, %c0_i32, %arg1 : i32, i32, i32
  }
  func.func @transform_1(%arg0: i32, %arg1: i32) -> (i32, i32) {
    %c0_i32 = arith.constant 0 : i32
    %c0_i32_0 = arith.constant 0 : i32
    %c0_i32_1 = arith.constant 0 : i32
    return %c0_i32, %c0_i32_0 : i32, i32
  }
  func.func @transform_2(%arg0: i32, %arg1: i32) -> (i32, i32) {
    %c0_i32 = arith.constant 0 : i32
    %c0_i32_0 = arith.constant 0 : i32
    %c0_i32_1 = arith.constant 0 : i32
    return %c0_i32, %c0_i32_0 : i32, i32
  }
  func.func @transform_3(%arg0: i32, %arg1: i32) -> (i32, i32, i32) {
    %c0_i32 = arith.constant 0 : i32
    %c0_i32_0 = arith.constant 0 : i32
    return %arg0, %c0_i32, %arg1 : i32, i32, i32
  }
}

</mosaic_0001>

<llo_original>
// kernel: a_call__.3
$region0: #{a_call__.3}
  #allocation0 [shape = 'u32[]', space=smem, size = 0x4, offset = 0x4, fixed_abs, tag = 'smem constant byte address 0x4 - core index']
  #allocation1 [shape = 'u32[144,128]{1,0:T(1,128)}', space=vmem, size = 0x12000, scoped, tag = 'internal scratch']
  %s0 = inlined_call_operand.vmem [shape: f32[2,8,64], index: 0, kind: input, shape index: {}]
  %s1 = inlined_call_operand.vmem [shape: f32[8,1], index: 1, kind: input, shape index: {}]
  %s2 = inlined_call_operand.vmem [shape: f32[8,1], index: 2, kind: input, shape index: {}]
  %s3 = inlined_call_operand.vmem [shape: f32[2,8,64], index: 3, kind: output, shape index: {}]
  %s4 = sld [smem:[#allocation0]]
  $region45: #{a_call__.3} parent=0
    _
  %s6 = ssub.s32 1, %s4
  %s7 = scalar_select 0, %s6, %s4
  loop: start=0, step=1, limit=4
  $region2: #{a_call__.3} parent=0 // loop_pre_header
    _
  $region3: #{a_call__.3} parent=0 // loop_header
    %s9 = sphi 0, %s13
    %p10 = scmp.ge.s32.totalorder %s9, 4
    %s16 = sphi 0, %s28
    %s17 = sphi 0, %s24
    %s18 = sphi 0, %s16
    %s19 = sphi 0, %s17
    %s20 = sphi 0, %s18
    %s21 = sphi 0, %s19
    %s33 = sphi 0, %s35
    %s36 = sphi 0, %s33
    %s37 = sphi 0, %s36
    %s53 = sphi 0, %s37
    %s57 = sphi 0, %s57
    %s59 = sphi 0, %s57
    %s60 = sphi 0, %s59
    %s74 = sphi 0, %s60
    %s78 = sphi 0, %s78
    %s80 = sphi 0, %s78
    %s81 = sphi 0, %s80
    %s95 = sphi 0, %s81
    %s103 = sphi 0, %s105
    %s106 = sphi 0, %s103
    %s107 = sphi 0, %s106
    %s123 = sphi 0, %s107
  $region4: #{a_call__.3} parent=0 // loop_header_branch
    %12 = sbr.rel (%p10) target = $region8
  $region5: #{a_call__.3} parent=0 // loop_body
    %s14 = ssub.s32 %s9, 1
    %s15 = ssub.s32 %s9, 2
    %s22 = sadd.s32 1, %s17
    %p23 = scmp.ge.s32.totalorder %s22, 1
    %s24 = scalar_select %p23, 0, %s22
    %s25 = sadd.s32 1, %s16
    %s26 = scalar_select %p23, %s25, %s16
    %p27 = scmp.ge.s32.totalorder %s26, 2
    %s28 = scalar_select %p27, 0, %s26
    %s29 = ssub.s32 %s16, %s28
    %s30 = ssub.s32 %s17, %s24
    %s31 = sor.u32 %s29, %s30
    %p32 = scmp.eq.s32.totalorder %s31, 0
    %s34 = sadd.s32 %s33, 1
    %s35 = scalar_select %p32, %s33, %s34
    %p38 = pneg %p32
    %p39 = scmp.eq.s32.totalorder %s9, 1
    %p40 = por %p38, %p39
    %p41 = scmp.ne.s32.totalorder %s33, %s36
    %p42 = scmp.eq.s32.totalorder %s9, 0
    %p43 = por %p41, %p42
    %p44 = scmp.ne.s32.totalorder %s33, %s36
    %p45 = scmp.eq.s32.totalorder %s14, 1
    %p46 = por %p44, %p45
    %p47 = scmp.ne.s32.totalorder %s36, %s37
    %p48 = scmp.eq.s32.totalorder %s14, 0
    %p49 = por %p47, %p48
    %p50 = scmp.ne.s32.totalorder %s36, %s37
    %p51 = scmp.eq.s32.totalorder %s15, 1
    %p52 = por %p50, %p51
    %p54 = scmp.ne.s32.totalorder %s37, %s53
    %p55 = scmp.eq.s32.totalorder %s15, 0
    %p56 = por %p54, %p55
    %s58 = sadd.s32 %s57, 1
    %p61 = scmp.eq.s32.totalorder %s9, 1
    %p62 = scmp.ne.s32.totalorder %s57, %s59
    %p63 = scmp.eq.s32.totalorder %s9, 0
    %p64 = por %p62, %p63
    %p65 = scmp.ne.s32.totalorder %s57, %s59
    %p66 = scmp.eq.s32.totalorder %s14, 1
    %p67 = por %p65, %p66
    %p68 = scmp.ne.s32.totalorder %s59, %s60
    %p69 = scmp.eq.s32.totalorder %s14, 0
    %p70 = por %p68, %p69
    %p71 = scmp.ne.s32.totalorder %s59, %s60
    %p72 = scmp.eq.s32.totalorder %s15, 1
    %p73 = por %p71, %p72
    %p75 = scmp.ne.s32.totalorder %s60, %s74
    %p76 = scmp.eq.s32.totalorder %s15, 0
    %p77 = por %p75, %p76
    %s79 = sadd.s32 %s78, 1
    %p82 = scmp.eq.s32.totalorder %s9, 1
    %p83 = scmp.ne.s32.totalorder %s78, %s80
    %p84 = scmp.eq.s32.totalorder %s9, 0
    %p85 = por %p83, %p84
    %p86 = scmp.ne.s32.totalorder %s78, %s80
    %p87 = scmp.eq.s32.totalorder %s14, 1
    %p88 = por %p86, %p87
    %p89 = scmp.ne.s32.totalorder %s80, %s81
    %p90 = scmp.eq.s32.totalorder %s14, 0
    %p91 = por %p89, %p90
    %p92 = scmp.ne.s32.totalorder %s80, %s81
    %p93 = scmp.eq.s32.totalorder %s15, 1
    %p94 = por %p92, %p93
    %p96 = scmp.ne.s32.totalorder %s81, %s95
    %p97 = scmp.eq.s32.totalorder %s15, 0
    %p98 = por %p96, %p97
    %s99 = ssub.s32 %s16, %s28
    %s100 = ssub.s32 %s17, %s24
    %s101 = sor.u32 %s99, %s100
    %p102 = scmp.eq.s32.totalorder %s101, 0
    %s104 = sadd.s32 %s103, 1
    %s105 = scalar_select %p102, %s103, %s104
    %p108 = pneg %p102
    %p109 = scmp.eq.s32.totalorder %s9, 1
    %p110 = por %p108, %p109
    %p111 = scmp.ne.s32.totalorder %s103, %s106
    %p112 = scmp.eq.s32.totalorder %s9, 0
    %p113 = por %p111, %p112
    %p114 = scmp.ne.s32.totalorder %s103, %s106
    %p115 = scmp.eq.s32.totalorder %s14, 1
    %p116 = por %p114, %p115
    %p117 = scmp.ne.s32.totalorder %s106, %s107
    %p118 = scmp.eq.s32.totalorder %s14, 0
    %p119 = por %p117, %p118
    %p120 = scmp.ne.s32.totalorder %s106, %s107
    %p121 = scmp.eq.s32.totalorder %s15, 1
    %p122 = por %p120, %p121
    %p124 = scmp.ne.s32.totalorder %s107, %s123
    %p125 = scmp.eq.s32.totalorder %s15, 0
    %p126 = por %p124, %p125
    %p127 = scmp.le.s32.totalorder 1, %s9
    %p128 = scmp.lt.s32.totalorder %s9, 3
    %p129 = pnand %p127, %p128
    %p130 = pneg %p129
    // Predicated region
    $region9: #{a_call__.3} parent=5 // pred_check
      _
    $region10: #{a_call__.3} parent=5 // pred_check_branch
      %132 = sbr.rel (%p129) target = $region12
    $region11: #{a_call__.3} parent=5 // pred_region
      %s133 = ssub.s32 %s9, 1
      // Predicated region
      $region13: #{a_call__.3} parent=11 // pred_check
        %p134 = pneg %p70
      $region14: #{a_call__.3} parent=11 // pred_check_branch
        %136 = sbr.rel (%p134) target = $region16
      $region15: #{a_call__.3} parent=11 // pred_region
        _
      $region16: #{a_call__.3} parent=11 // pred_fallthru
        _
      // Predicated region
      $region17: #{a_call__.3} parent=11 // pred_check
        %p137 = pneg %p91
      $region18: #{a_call__.3} parent=11 // pred_check_branch
        %139 = sbr.rel (%p137) target = $region20
      $region19: #{a_call__.3} parent=11 // pred_region
        _
      $region20: #{a_call__.3} parent=11 // pred_fallthru
        _
    $region12: #{a_call__.3} parent=5 // pred_fallthru
      _
    %p140 = scmp.lt.s32.totalorder %s9, 2
    // Predicated region
    $region21: #{a_call__.3} parent=5 // pred_check
      %p141 = pneg %p140
    $region22: #{a_call__.3} parent=5 // pred_check_branch
      %143 = sbr.rel (%p141) target = $region24
    $region23: #{a_call__.3} parent=5 // pred_region
      // Predicated region
      $region25: #{a_call__.3} parent=23 // pred_check
        %p144 = pneg %p43
      $region26: #{a_call__.3} parent=23 // pred_check_branch
        %146 = sbr.rel (%p144) target = $region28
      $region27: #{a_call__.3} parent=23 // pred_region
        %p147 = scmp.lt.s32.totalorder %s16, 1
        %s148 = scalar_select %p147, %s16, 1
        %p149 = scmp.lt.s32.totalorder %s17, 0
        %s150 = scalar_select %p149, %s17, 0
        %s151 = sadd.s32 %s150, %s148
        %s152 = smul.addr %s151, 8
        %s153 = scalar_lea.vmem %s0, %s152
      $region28: #{a_call__.3} parent=23 // pred_fallthru
        _
    $region24: #{a_call__.3} parent=5 // pred_fallthru
      _
    %p154 = scmp.le.s32.totalorder 1, %s9
    %p155 = scmp.lt.s32.totalorder %s9, 3
    %p156 = pnand %p154, %p155
    %p157 = pneg %p156
    // Predicated region
    $region29: #{a_call__.3} parent=5 // pred_check
      _
    $region30: #{a_call__.3} parent=5 // pred_check_branch
      %159 = sbr.rel (%p156) target = $region32
    $region31: #{a_call__.3} parent=5 // pred_region
      %s160 = ssub.s32 %s9, 1
      %p161 = scmp.lt.s32.totalorder %s18, 1
      %s162 = scalar_select %p161, %s18, 1
      %p163 = scmp.lt.s32.totalorder %s19, 0
      %s164 = scalar_select %p163, %s19, 0
      %s165 = sadd.s32 %s164, %s162
      %s166 = smul.addr %s165, 8
      %s167 = scalar_lea.vmem %s0, %s166
      %p168 = pneg %p49
      %p169 = pneg %p46
      %p170 = pneg %p70
      %p171 = pneg %p67
      %p172 = pneg %p91
      %p173 = pneg %p88
      %p174 = pneg %p119
      %p175 = pneg %p116
      %p176 = scmp.lt.s32.totalorder %s18, 1
      %s177 = scalar_select %p176, %s18, 1
      %p178 = scmp.lt.s32.totalorder %s19, 0
      %s179 = scalar_select %p178, %s19, 0
      %s180 = sadd.s32 %s179, %s177
      %s181 = smul.addr %s180, 8
      %s182 = scalar_lea.vmem %s3, %s181
      %p183 = scmp.lt.s32.totalorder %s18, 1
      %s184 = scalar_select %p183, %s18, 1
      %p185 = scmp.lt.s32.totalorder %s19, 0
      %s186 = scalar_select %p185, %s19, 0
      %s187 = sadd.s32 %s186, %s184
      %s188 = smul.addr %s187, 8
      %s189 = scalar_lea.vmem %s0, %s188
      %p190 = scmp.lt.s32.totalorder %s18, 1
      %s191 = scalar_select %p190, %s18, 1
      %p192 = scmp.lt.s32.totalorder %s19, 0
      %s193 = scalar_select %p192, %s19, 0
      %s194 = sadd.s32 %s193, %s191
      %s195 = smul.addr %s194, 8
      %s196 = scalar_lea.vmem %s3, %s195
      %v197 = vld [vmem:[%s189] sm:$0xff]
      %v198 = vld [vmem:[%s1] sm:$0xff]
      %200 = vset.pattern.permute.xlu0 0
      %201 = vperm.xlu0 %200, %v198
      %v202 = vpop.permute.xlu0 %201
      %v204 = vmul.f32 %v197, %v202
      %v205 = vld [vmem:[%s2] sm:$0xff]
      %207 = vset.pattern.permute.xlu0 0
      %208 = vperm.xlu0 %207, %v205
      %v209 = vpop.permute.xlu0 %208
      %v211 = vadd.f32 %v204, %v209
      %v212 = vmax.f32 %v211, 0.0
      %vm213 = vcmask 523264
      %214 = vst.msk [vmem:[%s196] sm:$0xff] %vm213, %v212
      %p215 = scmp.lt.s32.totalorder %s18, 1
      %s216 = scalar_select %p215, %s18, 1
      %p217 = scmp.lt.s32.totalorder %s19, 0
      %s218 = scalar_select %p217, %s19, 0
      %s219 = sadd.s32 %s218, %s216
      %s220 = smul.addr %s219, 8
      %s221 = scalar_lea.vmem %s3, %s220
      // Predicated region
      $region33: #{a_call__.3} parent=31 // pred_check
        %p222 = pneg %p116
      $region34: #{a_call__.3} parent=31 // pred_check_branch
        %224 = sbr.rel (%p222) target = $region36
      $region35: #{a_call__.3} parent=31 // pred_region
        _
      $region36: #{a_call__.3} parent=31 // pred_fallthru
        _
    $region32: #{a_call__.3} parent=5 // pred_fallthru
      _
    %p225 = scmp.le.s32.totalorder 2, %s9
    // Predicated region
    $region37: #{a_call__.3} parent=5 // pred_check
      %p226 = pneg %p225
    $region38: #{a_call__.3} parent=5 // pred_check_branch
      %228 = sbr.rel (%p226) target = $region40
    $region39: #{a_call__.3} parent=5 // pred_region
      %s229 = ssub.s32 %s9, 2
      // Predicated region
      $region41: #{a_call__.3} parent=39 // pred_check
        %p230 = pneg %p122
      $region42: #{a_call__.3} parent=39 // pred_check_branch
        %232 = sbr.rel (%p230) target = $region44
      $region43: #{a_call__.3} parent=39 // pred_region
        %p233 = scmp.lt.s32.totalorder %s20, 1
        %s234 = scalar_select %p233, %s20, 1
        %p235 = scmp.lt.s32.totalorder %s21, 0
        %s236 = scalar_select %p235, %s21, 0
        %s237 = sadd.s32 %s236, %s234
        %s238 = smul.addr %s237, 8
        %s239 = scalar_lea.vmem %s3, %s238
      $region44: #{a_call__.3} parent=39 // pred_fallthru
        _
    $region40: #{a_call__.3} parent=5 // pred_fallthru
      _
  $region6: #{a_call__.3} parent=0 // loop_footer
    %s13 = sadd.s32 1, %s9
  $region7: #{a_call__.3} parent=0 // loop_footer_branch
    %8 = sbr.rel target = $region3
  $region8: #{a_call__.3} parent=0 // loop_exit
    _

// kernel: a_call__.2
$region0: #{a_call__.2}
  #allocation0 [shape = 'u32[]', space=smem, size = 0x4, offset = 0x4, fixed_abs, tag = 'smem constant byte address 0x4 - core index']
  #allocation1 [shape = 'u32[144,128]{1,0:T(1,128)}', space=vmem, size = 0x12000, scoped, tag = 'internal scratch']
  #allocation2 [shape = 'f32[100,64]{1,0:T(8,128)}', space=vmem, size = 0xd000, scoped, tag = 'scratch operand']
  %s0 = inlined_call_operand.vmem [shape: f32[4,2,4,10,10], index: 0, kind: input, shape index: {}]
  %s1 = inlined_call_operand.vmem [shape: f32[8,100], index: 1, kind: input, shape index: {}]
  %s2 = inlined_call_operand.vmem [shape: f32[8,1], index: 2, kind: input, shape index: {}]
  %s3 = inlined_call_operand.vmem [shape: f32[2,8,64], index: 3, kind: output, shape index: {0}]
  %s4 = inlined_call_operand.vmem [shape: f32[2,8,1], index: 4, kind: output, shape index: {1}]
  %s5 = inlined_call_operand.vmem [shape: f32[2,8,1], index: 5, kind: output, shape index: {2}]
  %6 = xla_tuple %s3, %s4, %s5
  %s7 = sld [smem:[#allocation0]]
  $region99: #{a_call__.2} parent=0
    _
  %s9 = ssub.s32 1, %s7
  %s10 = scalar_select 0, %s9, %s7
  $region1: #{a_call__.2} parent=0
    #allocation3 [shape = 'u8[262144]{0}', space=vmem, size = 0x40000, scoped, tag = 'input window, operand 0']
    loop: start=0, step=1, limit=4
    $region2: #{a_call__.2} parent=1 // loop_pre_header
      _
    $region3: #{a_call__.2} parent=1 // loop_header
      %s12 = sphi 0, %s16
      %p13 = scmp.ge.s32.totalorder %s12, 4
      %s22 = sphi 0, %s24
      %s25 = sphi 0, %s22
      %s26 = sphi 0, %s25
      %s42 = sphi 0, %s26
      %s46 = sphi 0, %s46
      %s48 = sphi 0, %s46
      %s49 = sphi 0, %s48
      %s63 = sphi 0, %s49
      %s67 = sphi 0, %s67
      %s69 = sphi 0, %s67
      %s70 = sphi 0, %s69
      %s84 = sphi 0, %s70
      %s90 = sphi 0, %s92
      %s93 = sphi 0, %s90
      %s94 = sphi 0, %s93
      %s110 = sphi 0, %s94
      %s116 = sphi 0, %s118
      %s119 = sphi 0, %s116
      %s120 = sphi 0, %s119
      %s136 = sphi 0, %s120
      %s142 = sphi 0, %s144
      %s145 = sphi 0, %s142
      %s146 = sphi 0, %s145
      %s162 = sphi 0, %s146
    $region4: #{a_call__.2} parent=1 // loop_header_branch
      %15 = sbr.rel (%p13) target = $region8
    $region5: #{a_call__.2} parent=1 // loop_body
      %s17 = ssub.s32 %s12, 1
      %s18 = ssub.s32 %s12, 2
      %s19 = sadd.s32 %s12, 1
      %s20 = ssub.s32 %s12, %s19
      %p21 = scmp.eq.s32.totalorder %s20, 0
      %s23 = sadd.s32 %s22, 1
      %s24 = scalar_select %p21, %s22, %s23
      %p27 = pneg %p21
      %p28 = scmp.eq.s32.totalorder %s12, 1
      %p29 = por %p27, %p28
      %p30 = scmp.ne.s32.totalorder %s22, %s25
      %p31 = scmp.eq.s32.totalorder %s12, 0
      %p32 = por %p30, %p31
      %p33 = scmp.ne.s32.totalorder %s22, %s25
      %p34 = scmp.eq.s32.totalorder %s17, 1
      %p35 = por %p33, %p34
      %p36 = scmp.ne.s32.totalorder %s25, %s26
      %p37 = scmp.eq.s32.totalorder %s17, 0
      %p38 = por %p36, %p37
      %p39 = scmp.ne.s32.totalorder %s25, %s26
      %p40 = scmp.eq.s32.totalorder %s18, 1
      %p41 = por %p39, %p40
      %p43 = scmp.ne.s32.totalorder %s26, %s42
      %p44 = scmp.eq.s32.totalorder %s18, 0
      %p45 = por %p43, %p44
      %s47 = sadd.s32 %s46, 1
      %p50 = scmp.eq.s32.totalorder %s12, 1
      %p51 = scmp.ne.s32.totalorder %s46, %s48
      %p52 = scmp.eq.s32.totalorder %s12, 0
      %p53 = por %p51, %p52
      %p54 = scmp.ne.s32.totalorder %s46, %s48
      %p55 = scmp.eq.s32.totalorder %s17, 1
      %p56 = por %p54, %p55
      %p57 = scmp.ne.s32.totalorder %s48, %s49
      %p58 = scmp.eq.s32.totalorder %s17, 0
      %p59 = por %p57, %p58
      %p60 = scmp.ne.s32.totalorder %s48, %s49
      %p61 = scmp.eq.s32.totalorder %s18, 1
      %p62 = por %p60, %p61
      %p64 = scmp.ne.s32.totalorder %s49, %s63
      %p65 = scmp.eq.s32.totalorder %s18, 0
      %p66 = por %p64, %p65
      %s68 = sadd.s32 %s67, 1
      %p71 = scmp.eq.s32.totalorder %s12, 1
      %p72 = scmp.ne.s32.totalorder %s67, %s69
      %p73 = scmp.eq.s32.totalorder %s12, 0
      %p74 = por %p72, %p73
      %p75 = scmp.ne.s32.totalorder %s67, %s69
      %p76 = scmp.eq.s32.totalorder %s17, 1
      %p77 = por %p75, %p76
      %p78 = scmp.ne.s32.totalorder %s69, %s70
      %p79 = scmp.eq.s32.totalorder %s17, 0
      %p80 = por %p78, %p79
      %p81 = scmp.ne.s32.totalorder %s69, %s70
      %p82 = scmp.eq.s32.totalorder %s18, 1
      %p83 = por %p81, %p82
      %p85 = scmp.ne.s32.totalorder %s70, %s84
      %p86 = scmp.eq.s32.totalorder %s18, 0
      %p87 = por %p85, %p86
      %s88 = ssub.s32 %s12, %s19
      %p89 = scmp.eq.s32.totalorder %s88, 0
      %s91 = sadd.s32 %s90, 1
      %s92 = scalar_select %p89, %s90, %s91
      %p95 = pneg %p89
      %p96 = scmp.eq.s32.totalorder %s12, 1
      %p97 = por %p95, %p96
      %p98 = scmp.ne.s32.totalorder %s90, %s93
      %p99 = scmp.eq.s32.totalorder %s12, 0
      %p100 = por %p98, %p99
      %p101 = scmp.ne.s32.totalorder %s90, %s93
      %p102 = scmp.eq.s32.totalorder %s17, 1
      %p103 = por %p101, %p102
      %p104 = scmp.ne.s32.totalorder %s93, %s94
      %p105 = scmp.eq.s32.totalorder %s17, 0
      %p106 = por %p104, %p105
      %p107 = scmp.ne.s32.totalorder %s93, %s94
      %p108 = scmp.eq.s32.totalorder %s18, 1
      %p109 = por %p107, %p108
      %p111 = scmp.ne.s32.totalorder %s94, %s110
      %p112 = scmp.eq.s32.totalorder %s18, 0
      %p113 = por %p111, %p112
      %s114 = ssub.s32 %s12, %s19
      %p115 = scmp.eq.s32.totalorder %s114, 0
      %s117 = sadd.s32 %s116, 1
      %s118 = scalar_select %p115, %s116, %s117
      %p121 = pneg %p115
      %p122 = scmp.eq.s32.totalorder %s12, 1
      %p123 = por %p121, %p122
      %p124 = scmp.ne.s32.totalorder %s116, %s119
      %p125 = scmp.eq.s32.totalorder %s12, 0
      %p126 = por %p124, %p125
      %p127 = scmp.ne.s32.totalorder %s116, %s119
      %p128 = scmp.eq.s32.totalorder %s17, 1
      %p129 = por %p127, %p128
      %p130 = scmp.ne.s32.totalorder %s119, %s120
      %p131 = scmp.eq.s32.totalorder %s17, 0
      %p132 = por %p130, %p131
      %p133 = scmp.ne.s32.totalorder %s119, %s120
      %p134 = scmp.eq.s32.totalorder %s18, 1
      %p135 = por %p133, %p134
      %p137 = scmp.ne.s32.totalorder %s120, %s136
      %p138 = scmp.eq.s32.totalorder %s18, 0
      %p139 = por %p137, %p138
      %s140 = ssub.s32 %s12, %s19
      %p141 = scmp.eq.s32.totalorder %s140, 0
      %s143 = sadd.s32 %s142, 1
      %s144 = scalar_select %p141, %s142, %s143
      %p147 = pneg %p141
      %p148 = scmp.eq.s32.totalorder %s12, 1
      %p149 = por %p147, %p148
      %p150 = scmp.ne.s32.totalorder %s142, %s145
      %p151 = scmp.eq.s32.totalorder %s12, 0
      %p152 = por %p150, %p151
      %p153 = scmp.ne.s32.totalorder %s142, %s145
      %p154 = scmp.eq.s32.totalorder %s17, 1
      %p155 = por %p153, %p154
      %p156 = scmp.ne.s32.totalorder %s145, %s146
      %p157 = scmp.eq.s32.totalorder %s17, 0
      %p158 = por %p156, %p157
      %p159 = scmp.ne.s32.totalorder %s145, %s146
      %p160 = scmp.eq.s32.totalorder %s18, 1
      %p161 = por %p159, %p160
      %p163 = scmp.ne.s32.totalorder %s146, %s162
      %p164 = scmp.eq.s32.totalorder %s18, 0
      %p165 = por %p163, %p164
      %p166 = scmp.le.s32.totalorder 1, %s12
      %p167 = scmp.lt.s32.totalorder %s12, 3
      %p168 = pnand %p166, %p167
      %p169 = pneg %p168
      // Predicated region
      $region9: #{a_call__.2} parent=5 // pred_check
        _
      $region10: #{a_call__.2} parent=5 // pred_check_branch
        %171 = sbr.rel (%p168) target = $region12
      $region11: #{a_call__.2} parent=5 // pred_region
        %s172 = ssub.s32 %s12, 1
        // Predicated region
        $region13: #{a_call__.2} parent=11 // pred_check
          %p173 = pneg %p59
        $region14: #{a_call__.2} parent=11 // pred_check_branch
          %175 = sbr.rel (%p173) target = $region16
        $region15: #{a_call__.2} parent=11 // pred_region
          _
        $region16: #{a_call__.2} parent=11 // pred_fallthru
          _
        // Predicated region
        $region17: #{a_call__.2} parent=11 // pred_check
          %p176 = pneg %p80
        $region18: #{a_call__.2} parent=11 // pred_check_branch
          %178 = sbr.rel (%p176) target = $region20
        $region19: #{a_call__.2} parent=11 // pred_region
          _
        $region20: #{a_call__.2} parent=11 // pred_fallthru
          _
      $region12: #{a_call__.2} parent=5 // pred_fallthru
        _
      %p179 = scmp.lt.s32.totalorder %s12, 2
      // Predicated region
      $region21: #{a_call__.2} parent=5 // pred_check
        %p180 = pneg %p179
      $region22: #{a_call__.2} parent=5 // pred_check_branch
        %182 = sbr.rel (%p180) target = $region24
      $region23: #{a_call__.2} parent=5 // pred_region
        // Predicated region
        $region25: #{a_call__.2} parent=23 // pred_check
          %p183 = pneg %p32
        $region26: #{a_call__.2} parent=23 // pred_check_branch
          %185 = sbr.rel (%p183) target = $region28
        $region27: #{a_call__.2} parent=23 // pred_region
          %s186 = sand.u32 %s22, 1
          %s187 = sand.u32 %s22, 1
          %s188 = smul.addr %s187, 256
          %s189 = scalar_lea.vmem [#allocation3], %s188
          %s190 = smul.addr %s12, 8
          %s191 = smul.addr %s190, 8
          %s192 = scalar_lea.vmem %s0, %s191
          // Predicated region
          $region29: #{a_call__.2} parent=27 // pred_check
            _
          $region30: #{a_call__.2} parent=27 // pred_check_branch
            %194 = sbr.rel (0) target = $region32
          $region31: #{a_call__.2} parent=27 // pred_region
            // Predicated region
            $region33: #{a_call__.2} parent=31 // pred_check
              _
            $region34: #{a_call__.2} parent=31 // pred_check_branch
              %196 = sbr.rel (0) target = $region36
            $region35: #{a_call__.2} parent=31 // pred_region
              // Predicated region
              $region48: #{a_call__.2} parent=35 // pred_check
                _
              $region49: #{a_call__.2} parent=35 // pred_check_branch
                %273 = sbr.rel (0) target = $region51
              $region50: #{a_call__.2} parent=35 // pred_region
                loop: start=0, step=1, limit=1
                $region52: #{a_call__.2} parent=50 // loop_pre_header
                  _
                $region53: #{a_call__.2} parent=50 // loop_header
                  %s275 = sphi 0, %s279
                  %p276 = scmp.ge.s32.totalorder %s275, 1
                  %s280 = sphi %s192, %s192
                  %s281 = sphi %s189, %s189
                $region54: #{a_call__.2} parent=50 // loop_header_branch
                  %278 = sbr.rel (%p276) target = $region58
                $region55: #{a_call__.2} parent=50 // loop_body
                  %v282 = vld [vmem:[%s280] sm:$0xff]
                  %283 = vst [vmem:[%s281] sm:$0xff] %v282
                  %v284 = vld [vmem:[%s280 + $0x8] sm:$0xff]
                  %285 = vst [vmem:[%s281 + $0x8] sm:$0xff] %v284
                  %v286 = vld [vmem:[%s280 + $0x10] sm:$0xff]
                  %287 = vst [vmem:[%s281 + $0x10] sm:$0xff] %v286
                  %v288 = vld [vmem:[%s280 + $0x18] sm:$0xff]
                  %289 = vst [vmem:[%s281 + $0x18] sm:$0xff] %v288
                  %v290 = vld [vmem:[%s280 + $0x20] sm:$0xff]
                  %291 = vst [vmem:[%s281 + $0x20] sm:$0xff] %v290
                  %v292 = vld [vmem:[%s280 + $0x28] sm:$0xff]
                  %293 = vst [vmem:[%s281 + $0x28] sm:$0xff] %v292
                  %v294 = vld [vmem:[%s280 + $0x30] sm:$0xff]
                  %295 = vst [vmem:[%s281 + $0x30] sm:$0xff] %v294
                  %v296 = vld [vmem:[%s280 + $0x38] sm:$0xff]
                  %297 = vst [vmem:[%s281 + $0x38] sm:$0xff] %v296
                  %v298 = vld [vmem:[%s280 + $0x80] sm:$0xff]
                  %299 = vst [vmem:[%s281 + $0x40] sm:$0xff] %v298
                  %v300 = vld [vmem:[%s280 + $0x88] sm:$0xff]
                  %301 = vst [vmem:[%s281 + $0x48] sm:$0xff] %v300
                  %v302 = vld [vmem:[%s280 + $0x90] sm:$0xff]
                  %303 = vst [vmem:[%s281 + $0x50] sm:$0xff] %v302
                  %v304 = vld [vmem:[%s280 + $0x98] sm:$0xff]
                  %305 = vst [vmem:[%s281 + $0x58] sm:$0xff] %v304
                  %v306 = vld [vmem:[%s280 + $0xa0] sm:$0xff]
                  %307 = vst [vmem:[%s281 + $0x60] sm:$0xff] %v306
                  %v308 = vld [vmem:[%s280 + $0xa8] sm:$0xff]
                  %309 = vst [vmem:[%s281 + $0x68] sm:$0xff] %v308
                  %v310 = vld [vmem:[%s280 + $0xb0] sm:$0xff]
                  %311 = vst [vmem:[%s281 + $0x70] sm:$0xff] %v310
                  %v312 = vld [vmem:[%s280 + $0xb8] sm:$0xff]
                  %313 = vst [vmem:[%s281 + $0x78] sm:$0xff] %v312
                  %v314 = vld [vmem:[%s280 + $0x100] sm:$0xff]
                  %315 = vst [vmem:[%s281 + $0x80] sm:$0xff] %v314
                  %v316 = vld [vmem:[%s280 + $0x108] sm:$0xff]
                  %317 = vst [vmem:[%s281 + $0x88] sm:$0xff] %v316
                  %v318 = vld [vmem:[%s280 + $0x110] sm:$0xff]
                  %319 = vst [vmem:[%s281 + $0x90] sm:$0xff] %v318
                  %v320 = vld [vmem:[%s280 + $0x118] sm:$0xff]
                  %321 = vst [vmem:[%s281 + $0x98] sm:$0xff] %v320
                  %v322 = vld [vmem:[%s280 + $0x120] sm:$0xff]
                  %323 = vst [vmem:[%s281 + $0xa0] sm:$0xff] %v322
                  %v324 = vld [vmem:[%s280 + $0x128] sm:$0xff]
                  %325 = vst [vmem:[%s281 + $0xa8] sm:$0xff] %v324
                  %v326 = vld [vmem:[%s280 + $0x130] sm:$0xff]
                  %327 = vst [vmem:[%s281 + $0xb0] sm:$0xff] %v326
                  %v328 = vld [vmem:[%s280 + $0x138] sm:$0xff]
                  %329 = vst [vmem:[%s281 + $0xb8] sm:$0xff] %v328
                  %v330 = vld [vmem:[%s280 + $0x180] sm:$0xff]
                  %331 = vst [vmem:[%s281 + $0xc0] sm:$0xff] %v330
                  %v332 = vld [vmem:[%s280 + $0x188] sm:$0xff]
                  %333 = vst [vmem:[%s281 + $0xc8] sm:$0xff] %v332
                  %v334 = vld [vmem:[%s280 + $0x190] sm:$0xff]
                  %335 = vst [vmem:[%s281 + $0xd0] sm:$0xff] %v334
                  %v336 = vld [vmem:[%s280 + $0x198] sm:$0xff]
                  %337 = vst [vmem:[%s281 + $0xd8] sm:$0xff] %v336
                  %v338 = vld [vmem:[%s280 + $0x1a0] sm:$0xff]
                  %339 = vst [vmem:[%s281 + $0xe0] sm:$0xff] %v338
                  %v340 = vld [vmem:[%s280 + $0x1a8] sm:$0xff]
                  %341 = vst [vmem:[%s281 + $0xe8] sm:$0xff] %v340
                  %v342 = vld [vmem:[%s280 + $0x1b0] sm:$0xff]
                  %343 = vst [vmem:[%s281 + $0xf0] sm:$0xff] %v342
                  %v344 = vld [vmem:[%s280 + $0x1b8] sm:$0xff]
                  %345 = vst [vmem:[%s281 + $0xf8] sm:$0xff] %v344
                $region56: #{a_call__.2} parent=50 // loop_footer
                  %s279 = sadd.s32 1, %s275
                $region57: #{a_call__.2} parent=50 // loop_footer_branch
                  %274 = sbr.rel target = $region53
                $region58: #{a_call__.2} parent=50 // loop_exit
                  _
              $region51: #{a_call__.2} parent=35 // pred_fallthru
                _
              // Predicated region
              $region59: #{a_call__.2} parent=35 // pred_check
                _
              $region60: #{a_call__.2} parent=35 // pred_check_branch
                %347 = sbr.rel target = $region62
              $region61: #{a_call__.2} parent=35 // pred_region
                _
              $region62: #{a_call__.2} parent=35 // pred_fallthru
                _
            $region36: #{a_call__.2} parent=31 // pred_fallthru
              _
            // Predicated region
            $region37: #{a_call__.2} parent=31 // pred_check
              _
            $region38: #{a_call__.2} parent=31 // pred_check_branch
              %198 = sbr.rel target = $region40
            $region39: #{a_call__.2} parent=31 // pred_region
              loop: start=0, step=1, limit=1
              $region41: #{a_call__.2} parent=39 // loop_pre_header
                _
              $region42: #{a_call__.2} parent=39 // loop_header
                %s201 = sphi 0, %s205
                %p202 = scmp.ge.s32.totalorder %s201, 1
                %s206 = sphi %s192, %s192
                %s207 = sphi %s189, %s189
              $region43: #{a_call__.2} parent=39 // loop_header_branch
                %204 = sbr.rel (%p202) target = $region47
              $region44: #{a_call__.2} parent=39 // loop_body
                %v208 = vld [vmem:[%s206] sm:$0xff]
                %209 = vst [vmem:[%s207] sm:$0xff] %v208
                %v210 = vld [vmem:[%s206 + $0x8] sm:$0xff]
                %211 = vst [vmem:[%s207 + $0x8] sm:$0xff] %v210
                %v212 = vld [vmem:[%s206 + $0x10] sm:$0xff]
                %213 = vst [vmem:[%s207 + $0x10] sm:$0xff] %v212
                %v214 = vld [vmem:[%s206 + $0x18] sm:$0xff]
                %215 = vst [vmem:[%s207 + $0x18] sm:$0xff] %v214
                %v216 = vld [vmem:[%s206 + $0x20] sm:$0xff]
                %217 = vst [vmem:[%s207 + $0x20] sm:$0xff] %v216
                %v218 = vld [vmem:[%s206 + $0x28] sm:$0xff]
                %219 = vst [vmem:[%s207 + $0x28] sm:$0xff] %v218
                %v220 = vld [vmem:[%s206 + $0x30] sm:$0xff]
                %221 = vst [vmem:[%s207 + $0x30] sm:$0xff] %v220
                %v222 = vld [vmem:[%s206 + $0x38] sm:$0xff]
                %223 = vst [vmem:[%s207 + $0x38] sm:$0xff] %v222
                %v224 = vld [vmem:[%s206 + $0x80] sm:$0xff]
                %225 = vst [vmem:[%s207 + $0x40] sm:$0xff] %v224
                %v226 = vld [vmem:[%s206 + $0x88] sm:$0xff]
                %227 = vst [vmem:[%s207 + $0x48] sm:$0xff] %v226
                %v228 = vld [vmem:[%s206 + $0x90] sm:$0xff]
                %229 = vst [vmem:[%s207 + $0x50] sm:$0xff] %v228
                %v230 = vld [vmem:[%s206 + $0x98] sm:$0xff]
                %231 = vst [vmem:[%s207 + $0x58] sm:$0xff] %v230
                %v232 = vld [vmem:[%s206 + $0xa0] sm:$0xff]
                %233 = vst [vmem:[%s207 + $0x60] sm:$0xff] %v232
                %v234 = vld [vmem:[%s206 + $0xa8] sm:$0xff]
                %235 = vst [vmem:[%s207 + $0x68] sm:$0xff] %v234
                %v236 = vld [vmem:[%s206 + $0xb0] sm:$0xff]
                %237 = vst [vmem:[%s207 + $0x70] sm:$0xff] %v236
                %v238 = vld [vmem:[%s206 + $0xb8] sm:$0xff]
                %239 = vst [vmem:[%s207 + $0x78] sm:$0xff] %v238
                %v240 = vld [vmem:[%s206 + $0x100] sm:$0xff]
                %241 = vst [vmem:[%s207 + $0x80] sm:$0xff] %v240
                %v242 = vld [vmem:[%s206 + $0x108] sm:$0xff]
                %243 = vst [vmem:[%s207 + $0x88] sm:$0xff] %v242
                %v244 = vld [vmem:[%s206 + $0x110] sm:$0xff]
                %245 = vst [vmem:[%s207 + $0x90] sm:$0xff] %v244
                %v246 = vld [vmem:[%s206 + $0x118] sm:$0xff]
                %247 = vst [vmem:[%s207 + $0x98] sm:$0xff] %v246
                %v248 = vld [vmem:[%s206 + $0x120] sm:$0xff]
                %249 = vst [vmem:[%s207 + $0xa0] sm:$0xff] %v248
                %v250 = vld [vmem:[%s206 + $0x128] sm:$0xff]
                %251 = vst [vmem:[%s207 + $0xa8] sm:$0xff] %v250
                %v252 = vld [vmem:[%s206 + $0x130] sm:$0xff]
                %253 = vst [vmem:[%s207 + $0xb0] sm:$0xff] %v252
                %v254 = vld [vmem:[%s206 + $0x138] sm:$0xff]
                %255 = vst [vmem:[%s207 + $0xb8] sm:$0xff] %v254
                %v256 = vld [vmem:[%s206 + $0x180] sm:$0xff]
                %257 = vst [vmem:[%s207 + $0xc0] sm:$0xff] %v256
                %v258 = vld [vmem:[%s206 + $0x188] sm:$0xff]
                %259 = vst [vmem:[%s207 + $0xc8] sm:$0xff] %v258
                %v260 = vld [vmem:[%s206 + $0x190] sm:$0xff]
                %261 = vst [vmem:[%s207 + $0xd0] sm:$0xff] %v260
                %v262 = vld [vmem:[%s206 + $0x198] sm:$0xff]
                %263 = vst [vmem:[%s207 + $0xd8] sm:$0xff] %v262
                %v264 = vld [vmem:[%s206 + $0x1a0] sm:$0xff]
                %265 = vst [vmem:[%s207 + $0xe0] sm:$0xff] %v264
                %v266 = vld [vmem:[%s206 + $0x1a8] sm:$0xff]
                %267 = vst [vmem:[%s207 + $0xe8] sm:$0xff] %v266
                %v268 = vld [vmem:[%s206 + $0x1b0] sm:$0xff]
                %269 = vst [vmem:[%s207 + $0xf0] sm:$0xff] %v268
                %v270 = vld [vmem:[%s206 + $0x1b8] sm:$0xff]
                %271 = vst [vmem:[%s207 + $0xf8] sm:$0xff] %v270
              $region45: #{a_call__.2} parent=39 // loop_footer
                %s205 = sadd.s32 1, %s201
              $region46: #{a_call__.2} parent=39 // loop_footer_branch
                %200 = sbr.rel target = $region42
              $region47: #{a_call__.2} parent=39 // loop_exit
                _
            $region40: #{a_call__.2} parent=31 // pred_fallthru
              _
          $region32: #{a_call__.2} parent=27 // pred_fallthru
            _
          %348 = vnop
        $region28: #{a_call__.2} parent=23 // pred_fallthru
          _
      $region24: #{a_call__.2} parent=5 // pred_fallthru
        _
      %p349 = scmp.le.s32.totalorder 1, %s12
      %p350 = scmp.lt.s32.totalorder %s12, 3
      %p351 = pnand %p349, %p350
      %p352 = pneg %p351
      // Predicated region
      $region63: #{a_call__.2} parent=5 // pred_check
        _
      $region64: #{a_call__.2} parent=5 // pred_check_branch
        %354 = sbr.rel (%p351) target = $region66
      $region65: #{a_call__.2} parent=5 // pred_region
        %s355 = ssub.s32 %s12, 1
        %s356 = sand.u32 %s25, 1
        %s357 = sand.u32 %s25, 1
        %s358 = smul.addr %s357, 256
        %s359 = scalar_lea.vmem [#allocation3], %s358
        // Predicated region
        $region67: #{a_call__.2} parent=65 // pred_check
          %p360 = pneg %p38
        $region68: #{a_call__.2} parent=65 // pred_check_branch
          %362 = sbr.rel (%p360) target = $region70
        $region69: #{a_call__.2} parent=65 // pred_region
          _
        $region70: #{a_call__.2} parent=65 // pred_fallthru
          _
        %s363 = sand.u32 %s25, 1
        %s364 = sand.u32 %s25, 1
        %s365 = smul.addr %s364, 256
        %s366 = scalar_lea.vmem [#allocation3], %s365
        %p367 = pneg %p38
        %p368 = pneg %p35
        %p369 = pneg %p59
        %p370 = pneg %p56
        %p371 = pneg %p80
        %p372 = pneg %p77
        %p373 = pneg %p106
        %p374 = pneg %p103
        %p375 = scmp.lt.s32.totalorder %s17, 1
        %s376 = scalar_select %p375, %s17, 1
        %s377 = smul.addr %s376, 8
        %s378 = scalar_lea.vmem %s3, %s377
        %p379 = pneg %p132
        %p380 = pneg %p129
        %p381 = scmp.lt.s32.totalorder %s17, 1
        %s382 = scalar_select %p381, %s17, 1
        %s383 = smul.addr %s382, 8
        %s384 = scalar_lea.vmem %s4, %s383
        %p385 = pneg %p158
        %p386 = pneg %p155
        %p387 = scmp.lt.s32.totalorder %s17, 1
        %s388 = scalar_select %p387, %s17, 1
        %s389 = smul.addr %s388, 8
        %s390 = scalar_lea.vmem %s5, %s389
        %p391 = scmp.lt.s32.totalorder %s17, 1
        %s392 = scalar_select %p391, %s17, 1
        %s393 = smul.addr %s392, 8
        %s394 = scalar_lea.vmem %s3, %s393
        %p395 = scmp.lt.s32.totalorder %s17, 1
        %s396 = scalar_select %p395, %s17, 1
        %s397 = smul.addr %s396, 8
        %s398 = scalar_lea.vmem %s4, %s397
        %p399 = scmp.lt.s32.totalorder %s17, 1
        %s400 = scalar_select %p399, %s17, 1
        %s401 = smul.addr %s400, 8
        %s402 = scalar_lea.vmem %s5, %s401
        %v403 = vld [vmem:[%s359] sm:$0x1]
        %v404 = vld [vmem:[%s359 + $0x10] sm:$0x1]
        %v405 = vld [vmem:[%s359 + $0x20] sm:$0x1]
        %v406 = vld [vmem:[%s359 + $0x30] sm:$0x1]
        %v411 = vrot.slane %v404, 7
        %vm412 = vcmask 1041409
        %v413 = vsel %vm412, %v411, %v403
        %v414 = vrot.slane %v405, 6
        %vm415 = vcmask 1042434
        %v416 = vsel %vm415, %v414, %v413
        %v417 = vrot.slane %v406, 5
        %vm418 = vcmask 1043459
        %v419 = vsel %vm418, %v417, %v416
        %vm421 = vcmask 60416
        %422 = vst.msk [vmem:[#allocation2] sm:$0xf] %vm421, %v419
        %v423 = vld [vmem:[%s359 + $0x1] sm:$0x1]
        %v424 = vld [vmem:[%s359 + $0x11] sm:$0x1]
        %v425 = vld [vmem:[%s359 + $0x21] sm:$0x1]
        %v426 = vld [vmem:[%s359 + $0x31] sm:$0x1]
        %v431 = vrot.slane %v424, 7
        %v432 = vsel %vm412, %v431, %v423
        %v433 = vrot.slane %v425, 6
        %v434 = vsel %vm415, %v433, %v432
        %v435 = vrot.slane %v426, 5
        %v436 = vsel %vm418, %v435, %v434
        %437 = vrot.lane.b32.xlu0 %v436, 8
        %v438 = vpop.permute.xlu0 %437
        %vm440 = vcmask 126016
        %441 = vst.msk [vmem:[#allocation2] sm:$0xf] %vm440, %v438
        %v442 = vld [vmem:[%s359 + $0x2] sm:$0x1]
        %v443 = vld [vmem:[%s359 + $0x12] sm:$0x1]
        %v444 = vld [vmem:[%s359 + $0x22] sm:$0x1]
        %v445 = vld [vmem:[%s359 + $0x32] sm:$0x1]
        %v450 = vrot.slane %v443, 7
        %v451 = vsel %vm412, %v450, %v442
        %v452 = vrot.slane %v444, 6
        %v453 = vsel %vm415, %v452, %v451
        %v454 = vrot.slane %v445, 5
        %v455 = vsel %vm418, %v454, %v453
        %456 = vrot.lane.b32.xlu0 %v455, 16
        %v457 = vpop.permute.xlu0 %456
        %vm459 = vcmask 191616
        %460 = vst.msk [vmem:[#allocation2] sm:$0xf] %vm459, %v457
        %v461 = vld [vmem:[%s359 + $0x3] sm:$0x1]
        %v462 = vld [vmem:[%s359 + $0x13] sm:$0x1]
        %v463 = vld [vmem:[%s359 + $0x23] sm:$0x1]
        %v464 = vld [vmem:[%s359 + $0x33] sm:$0x1]
        %v469 = vrot.slane %v462, 7
        %v470 = vsel %vm412, %v469, %v461
        %v471 = vrot.slane %v463, 6
        %v472 = vsel %vm415, %v471, %v470
        %v473 = vrot.slane %v464, 5
        %v474 = vsel %vm418, %v473, %v472
        %475 = vrot.lane.b32.xlu0 %v474, 24
        %v476 = vpop.permute.xlu0 %475
        %vm478 = vcmask 257216
        %479 = vst.msk [vmem:[#allocation2] sm:$0xf] %vm478, %v476
        %v480 = vld [vmem:[%s359 + $0x4] sm:$0x1]
        %v481 = vld [vmem:[%s359 + $0x14] sm:$0x1]
        %v482 = vld [vmem:[%s359 + $0x24] sm:$0x1]
        %v483 = vld [vmem:[%s359 + $0x34] sm:$0x1]
        %v488 = vrot.slane %v481, 7
        %v489 = vsel %vm412, %v488, %v480
        %v490 = vrot.slane %v482, 6
        %v491 = vsel %vm415, %v490, %v489
        %v492 = vrot.slane %v483, 5
        %v493 = vsel %vm418, %v492, %v491
        %494 = vrot.lane.b32.xlu0 %v493, 32
        %v495 = vpop.permute.xlu0 %494
        %vm497 = vcmask 322816
        %498 = vst.msk [vmem:[#allocation2] sm:$0xf] %vm497, %v495
        %v499 = vld [vmem:[%s359 + $0x5] sm:$0x1]
        %v500 = vld [vmem:[%s359 + $0x15] sm:$0x1]
        %v501 = vld [vmem:[%s359 + $0x25] sm:$0x1]
        %v502 = vld [vmem:[%s359 + $0x35] sm:$0x1]
        %v507 = vrot.slane %v500, 7
        %v508 = vsel %vm412, %v507, %v499
        %v509 = vrot.slane %v501, 6
        %v510 = vsel %vm415, %v509, %v508
        %v511 = vrot.slane %v502, 5
        %v512 = vsel %vm418, %v511, %v510
        %513 = vrot.lane.b32.xlu0 %v512, 40
        %v514 = vpop.permute.xlu0 %513
        %vm516 = vcmask 388416
        %517 = vst.msk [vmem:[#allocation2] sm:$0xf] %vm516, %v514
        %v518 = vld [vmem:[%s359 + $0x6] sm:$0x1]
        %v519 = vld [vmem:[%s359 + $0x16] sm:$0x1]
        %v520 = vld [vmem:[%s359 + $0x26] sm:$0x1]
        %v521 = vld [vmem:[%s359 + $0x36] sm:$0x1]
        %v526 = vrot.slane %v519, 7
        %v527 = vsel %vm412, %v526, %v518
        %v528 = vrot.slane %v520, 6
        %v529 = vsel %vm415, %v528, %v527
        %v530 = vrot.slane %v521, 5
        %v531 = vsel %vm418, %v530, %v529
        %532 = vrot.lane.b32.xlu0 %v531, 48
        %v533 = vpop.permute.xlu0 %532
        %vm535 = vcmask 454016
        %536 = vst.msk [vmem:[#allocation2] sm:$0xf] %vm535, %v533
        %v537 = vld [vmem:[%s359 + $0x7] sm:$0x1]
        %v538 = vld [vmem:[%s359 + $0x17] sm:$0x1]
        %v539 = vld [vmem:[%s359 + $0x27] sm:$0x1]
        %v540 = vld [vmem:[%s359 + $0x37] sm:$0x1]
        %v545 = vrot.slane %v538, 7
        %v546 = vsel %vm412, %v545, %v537
        %v547 = vrot.slane %v539, 6
        %v548 = vsel %vm415, %v547, %v546
        %v549 = vrot.slane %v540, 5
        %v550 = vsel %vm418, %v549, %v548
        %551 = vrot.lane.b32.xlu0 %v550, 56
        %v552 = vpop.permute.xlu0 %551
        %vm554 = vcmask 519616
        %555 = vst.msk [vmem:[#allocation2] sm:$0xf] %vm554, %v552
        %s556 = scalar_lea.vmem %s359, 64 [#allocation3]
        %v557 = vld [vmem:[%s556] sm:$0x1]
        %v558 = vld [vmem:[%s556 + $0x10] sm:$0x1]
        %v559 = vld [vmem:[%s556 + $0x20] sm:$0x1]
        %v560 = vld [vmem:[%s556 + $0x30] sm:$0x1]
        %v565 = vrot.slane %v558, 7
        %v566 = vsel %vm412, %v565, %v557
        %v567 = vrot.slane %v559, 6
        %v568 = vsel %vm415, %v567, %v566
        %v569 = vrot.slane %v560, 5
        %v570 = vsel %vm418, %v569, %v568
        %572 = vst.msk [vmem:[#allocation2 + $0x4] sm:$0xf] %vm421, %v570
        %v573 = vld [vmem:[%s556 + $0x1] sm:$0x1]
        %v574 = vld [vmem:[%s556 + $0x11] sm:$0x1]
        %v575 = vld [vmem:[%s556 + $0x21] sm:$0x1]
        %v576 = vld [vmem:[%s556 + $0x31] sm:$0x1]
        %v581 = vrot.slane %v574, 7
        %v582 = vsel %vm412, %v581, %v573
        %v583 = vrot.slane %v575, 6
        %v584 = vsel %vm415, %v583, %v582
        %v585 = vrot.slane %v576, 5
        %v586 = vsel %vm418, %v585, %v584
        %587 = vrot.lane.b32.xlu0 %v586, 8
        %v588 = vpop.permute.xlu0 %587
        %590 = vst.msk [vmem:[#allocation2 + $0x4] sm:$0xf] %vm440, %v588
        %v591 = vld [vmem:[%s556 + $0x2] sm:$0x1]
        %v592 = vld [vmem:[%s556 + $0x12] sm:$0x1]
        %v593 = vld [vmem:[%s556 + $0x22] sm:$0x1]
        %v594 = vld [vmem:[%s556 + $0x32] sm:$0x1]
        %v599 = vrot.slane %v592, 7
        %v600 = vsel %vm412, %v599, %v591
        %v601 = vrot.slane %v593, 6
        %v602 = vsel %vm415, %v601, %v600
        %v603 = vrot.slane %v594, 5
        %v604 = vsel %vm418, %v603, %v602
        %605 = vrot.lane.b32.xlu0 %v604, 16
        %v606 = vpop.permute.xlu0 %605
        %608 = vst.msk [vmem:[#allocation2 + $0x4] sm:$0xf] %vm459, %v606
        %v609 = vld [vmem:[%s556 + $0x3] sm:$0x1]
        %v610 = vld [vmem:[%s556 + $0x13] sm:$0x1]
        %v611 = vld [vmem:[%s556 + $0x23] sm:$0x1]
        %v612 = vld [vmem:[%s556 + $0x33] sm:$0x1]
        %v617 = vrot.slane %v610, 7
        %v618 = vsel %vm412, %v617, %v609
        %v619 = vrot.slane %v611, 6
        %v620 = vsel %vm415, %v619, %v618
        %v621 = vrot.slane %v612, 5
        %v622 = vsel %vm418, %v621, %v620
        %623 = vrot.lane.b32.xlu0 %v622, 24
        %v624 = vpop.permute.xlu0 %623
        %626 = vst.msk [vmem:[#allocation2 + $0x4] sm:$0xf] %vm478, %v624
        %v627 = vld [vmem:[%s556 + $0x4] sm:$0x1]
        %v628 = vld [vmem:[%s556 + $0x14] sm:$0x1]
        %v629 = vld [vmem:[%s556 + $0x24] sm:$0x1]
        %v630 = vld [vmem:[%s556 + $0x34] sm:$0x1]
        %v635 = vrot.slane %v628, 7
        %v636 = vsel %vm412, %v635, %v627
        %v637 = vrot.slane %v629, 6
        %v638 = vsel %vm415, %v637, %v636
        %v639 = vrot.slane %v630, 5
        %v640 = vsel %vm418, %v639, %v638
        %641 = vrot.lane.b32.xlu0 %v640, 32
        %v642 = vpop.permute.xlu0 %641
        %644 = vst.msk [vmem:[#allocation2 + $0x4] sm:$0xf] %vm497, %v642
        %v645 = vld [vmem:[%s556 + $0x5] sm:$0x1]
        %v646 = vld [vmem:[%s556 + $0x15] sm:$0x1]
        %v647 = vld [vmem:[%s556 + $0x25] sm:$0x1]
        %v648 = vld [vmem:[%s556 + $0x35] sm:$0x1]
        %v653 = vrot.slane %v646, 7
        %v654 = vsel %vm412, %v653, %v645
        %v655 = vrot.slane %v647, 6
        %v656 = vsel %vm415, %v655, %v654
        %v657 = vrot.slane %v648, 5
        %v658 = vsel %vm418, %v657, %v656
        %659 = vrot.lane.b32.xlu0 %v658, 40
        %v660 = vpop.permute.xlu0 %659
        %662 = vst.msk [vmem:[#allocation2 + $0x4] sm:$0xf] %vm516, %v660
        %v663 = vld [vmem:[%s556 + $0x6] sm:$0x1]
        %v664 = vld [vmem:[%s556 + $0x16] sm:$0x1]
        %v665 = vld [vmem:[%s556 + $0x26] sm:$0x1]
        %v666 = vld [vmem:[%s556 + $0x36] sm:$0x1]
        %v671 = vrot.slane %v664, 7
        %v672 = vsel %vm412, %v671, %v663
        %v673 = vrot.slane %v665, 6
        %v674 = vsel %vm415, %v673, %v672
        %v675 = vrot.slane %v666, 5
        %v676 = vsel %vm418, %v675, %v674
        %677 = vrot.lane.b32.xlu0 %v676, 48
        %v678 = vpop.permute.xlu0 %677
        %680 = vst.msk [vmem:[#allocation2 + $0x4] sm:$0xf] %vm535, %v678
        %v681 = vld [vmem:[%s556 + $0x7] sm:$0x1]
        %v682 = vld [vmem:[%s556 + $0x17] sm:$0x1]
        %v683 = vld [vmem:[%s556 + $0x27] sm:$0x1]
        %v684 = vld [vmem:[%s556 + $0x37] sm:$0x1]
        %v689 = vrot.slane %v682, 7
        %v690 = vsel %vm412, %v689, %v681
        %v691 = vrot.slane %v683, 6
        %v692 = vsel %vm415, %v691, %v690
        %v693 = vrot.slane %v684, 5
        %v694 = vsel %vm418, %v693, %v692
        %695 = vrot.lane.b32.xlu0 %v694, 56
        %v696 = vpop.permute.xlu0 %695
        %698 = vst.msk [vmem:[#allocation2 + $0x4] sm:$0xf] %vm554, %v696
        %v699 = vld [vmem:[%s359] sm:$0x1]
        %v700 = vld [vmem:[%s359 + $0x10] sm:$0x1]
        %v701 = vld [vmem:[%s359 + $0x20] sm:$0x1]
        %v702 = vld [vmem:[%s359 + $0x30] sm:$0x1]
        %v707 = vrot.slane %v700, 7
        %v708 = vsel %vm412, %v707, %v699
        %v709 = vrot.slane %v701, 6
        %v710 = vsel %vm415, %v709, %v708
        %v711 = vrot.slane %v702, 5
        %v712 = vsel %vm418, %v711, %v710
        %713 = vrot.lane.b32.xlu0 %v712, 127
        %v714 = vpop.permute.xlu0 %713
        %716 = vst.msk [vmem:[#allocation2 + $0x8] sm:$0xf] %vm421, %v714
        %v717 = vld [vmem:[%s359 + $0x1] sm:$0x1]
        %v718 = vld [vmem:[%s359 + $0x11] sm:$0x1]
        %v719 = vld [vmem:[%s359 + $0x21] sm:$0x1]
        %v720 = vld [vmem:[%s359 + $0x31] sm:$0x1]
        %v725 = vrot.slane %v718, 7
        %v726 = vsel %vm412, %v725, %v717
        %v727 = vrot.slane %v719, 6
        %v728 = vsel %vm415, %v727, %v726
        %v729 = vrot.slane %v720, 5
        %v730 = vsel %vm418, %v729, %v728
        %731 = vrot.lane.b32.xlu0 %v730, 7
        %v732 = vpop.permute.xlu0 %731
        %734 = vst.msk [vmem:[#allocation2 + $0x8] sm:$0xf] %vm440, %v732
        %v735 = vld [vmem:[%s359 + $0x2] sm:$0x1]
        %v736 = vld [vmem:[%s359 + $0x12] sm:$0x1]
        %v737 = vld [vmem:[%s359 + $0x22] sm:$0x1]
        %v738 = vld [vmem:[%s359 + $0x32] sm:$0x1]
        %v743 = vrot.slane %v736, 7
        %v744 = vsel %vm412, %v743, %v735
        %v745 = vrot.slane %v737, 6
        %v746 = vsel %vm415, %v745, %v744
        %v747 = vrot.slane %v738, 5
        %v748 = vsel %vm418, %v747, %v746
        %749 = vrot.lane.b32.xlu0 %v748, 15
        %v750 = vpop.permute.xlu0 %749
        %752 = vst.msk [vmem:[#allocation2 + $0x8] sm:$0xf] %vm459, %v750
        %v753 = vld [vmem:[%s359 + $0x3] sm:$0x1]
        %v754 = vld [vmem:[%s359 + $0x13] sm:$0x1]
        %v755 = vld [vmem:[%s359 + $0x23] sm:$0x1]
        %v756 = vld [vmem:[%s359 + $0x33] sm:$0x1]
        %v761 = vrot.slane %v754, 7
        %v762 = vsel %vm412, %v761, %v753
        %v763 = vrot.slane %v755, 6
        %v764 = vsel %vm415, %v763, %v762
        %v765 = vrot.slane %v756, 5
        %v766 = vsel %vm418, %v765, %v764
        %767 = vrot.lane.b32.xlu0 %v766, 23
        %v768 = vpop.permute.xlu0 %767
        %770 = vst.msk [vmem:[#allocation2 + $0x8] sm:$0xf] %vm478, %v768
        %v771 = vld [vmem:[%s359 + $0x4] sm:$0x1]
        %v772 = vld [vmem:[%s359 + $0x14] sm:$0x1]
        %v773 = vld [vmem:[%s359 + $0x24] sm:$0x1]
        %v774 = vld [vmem:[%s359 + $0x34] sm:$0x1]
        %v779 = vrot.slane %v772, 7
        %v780 = vsel %vm412, %v779, %v771
        %v781 = vrot.slane %v773, 6
        %v782 = vsel %vm415, %v781, %v780
        %v783 = vrot.slane %v774, 5
        %v784 = vsel %vm418, %v783, %v782
        %785 = vrot.lane.b32.xlu0 %v784, 31
        %v786 = vpop.permute.xlu0 %785
        %788 = vst.msk [vmem:[#allocation2 + $0x8] sm:$0xf] %vm497, %v786
        %v789 = vld [vmem:[%s359 + $0x5] sm:$0x1]
        %v790 = vld [vmem:[%s359 + $0x15] sm:$0x1]
        %v791 = vld [vmem:[%s359 + $0x25] sm:$0x1]
        %v792 = vld [vmem:[%s359 + $0x35] sm:$0x1]
        %v797 = vrot.slane %v790, 7
        %v798 = vsel %vm412, %v797, %v789
        %v799 = vrot.slane %v791, 6
        %v800 = vsel %vm415, %v799, %v798
        %v801 = vrot.slane %v792, 5
        %v802 = vsel %vm418, %v801, %v800
        %803 = vrot.lane.b32.xlu0 %v802, 39
        %v804 = vpop.permute.xlu0 %803
        %806 = vst.msk [vmem:[#allocation2 + $0x8] sm:$0xf] %vm516, %v804
        %v807 = vld [vmem:[%s359 + $0x6] sm:$0x1]
        %v808 = vld [vmem:[%s359 + $0x16] sm:$0x1]
        %v809 = vld [vmem:[%s359 + $0x26] sm:$0x1]
        %v810 = vld [vmem:[%s359 + $0x36] sm:$0x1]
        %v815 = vrot.slane %v808, 7
        %v816 = vsel %vm412, %v815, %v807
        %v817 = vrot.slane %v809, 6
        %v818 = vsel %vm415, %v817, %v816
        %v819 = vrot.slane %v810, 5
        %v820 = vsel %vm418, %v819, %v818
        %821 = vrot.lane.b32.xlu0 %v820, 47
        %v822 = vpop.permute.xlu0 %821
        %824 = vst.msk [vmem:[#allocation2 + $0x8] sm:$0xf] %vm535, %v822
        %v825 = vld [vmem:[%s359 + $0x7] sm:$0x1]
        %v826 = vld [vmem:[%s359 + $0x17] sm:$0x1]
        %v827 = vld [vmem:[%s359 + $0x27] sm:$0x1]
        %v828 = vld [vmem:[%s359 + $0x37] sm:$0x1]
        %v833 = vrot.slane %v826, 7
        %v834 = vsel %vm412, %v833, %v825
        %v835 = vrot.slane %v827, 6
        %v836 = vsel %vm415, %v835, %v834
        %v837 = vrot.slane %v828, 5
        %v838 = vsel %vm418, %v837, %v836
        %839 = vrot.lane.b32.xlu0 %v838, 55
        %v840 = vpop.permute.xlu0 %839
        %842 = vst.msk [vmem:[#allocation2 + $0x8] sm:$0xf] %vm554, %v840
        %v843 = vld [vmem:[%s556] sm:$0x1]
        %v844 = vld [vmem:[%s556 + $0x10] sm:$0x1]
        %v845 = vld [vmem:[%s556 + $0x20] sm:$0x1]
        %v846 = vld [vmem:[%s556 + $0x30] sm:$0x1]
        %v851 = vrot.slane %v844, 7
        %v852 = vsel %vm412, %v851, %v843
        %v853 = vrot.slane %v845, 6
        %v854 = vsel %vm415, %v853, %v852
        %v855 = vrot.slane %v846, 5
        %v856 = vsel %vm418, %v855, %v854
        %857 = vrot.lane.b32.xlu0 %v856, 127
        %v858 = vpop.permute.xlu0 %857
        %860 = vst.msk [vmem:[#allocation2 + $0xc] sm:$0xf] %vm421, %v858
        %v861 = vld [vmem:[%s556 + $0x1] sm:$0x1]
        %v862 = vld [vmem:[%s556 + $0x11] sm:$0x1]
        %v863 = vld [vmem:[%s556 + $0x21] sm:$0x1]
        %v864 = vld [vmem:[%s556 + $0x31] sm:$0x1]
        %v869 = vrot.slane %v862, 7
        %v870 = vsel %vm412, %v869, %v861
        %v871 = vrot.slane %v863, 6
        %v872 = vsel %vm415, %v871, %v870
        %v873 = vrot.slane %v864, 5
        %v874 = vsel %vm418, %v873, %v872
        %875 = vrot.lane.b32.xlu0 %v874, 7
        %v876 = vpop.permute.xlu0 %875
        %878 = vst.msk [vmem:[#allocation2 + $0xc] sm:$0xf] %vm440, %v876
        %v879 = vld [vmem:[%s556 + $0x2] sm:$0x1]
        %v880 = vld [vmem:[%s556 + $0x12] sm:$0x1]
        %v881 = vld [vmem:[%s556 + $0x22] sm:$0x1]
        %v882 = vld [vmem:[%s556 + $0x32] sm:$0x1]
        %v887 = vrot.slane %v880, 7
        %v888 = vsel %vm412, %v887, %v879
        %v889 = vrot.slane %v881, 6
        %v890 = vsel %vm415, %v889, %v888
        %v891 = vrot.slane %v882, 5
        %v892 = vsel %vm418, %v891, %v890
        %893 = vrot.lane.b32.xlu0 %v892, 15
        %v894 = vpop.permute.xlu0 %893
        %896 = vst.msk [vmem:[#allocation2 + $0xc] sm:$0xf] %vm459, %v894
        %v897 = vld [vmem:[%s556 + $0x3] sm:$0x1]
        %v898 = vld [vmem:[%s556 + $0x13] sm:$0x1]
        %v899 = vld [vmem:[%s556 + $0x23] sm:$0x1]
        %v900 = vld [vmem:[%s556 + $0x33] sm:$0x1]
        %v905 = vrot.slane %v898, 7
        %v906 = vsel %vm412, %v905, %v897
        %v907 = vrot.slane %v899, 6
        %v908 = vsel %vm415, %v907, %v906
        %v909 = vrot.slane %v900, 5
        %v910 = vsel %vm418, %v909, %v908
        %911 = vrot.lane.b32.xlu0 %v910, 23
        %v912 = vpop.permute.xlu0 %911
        %914 = vst.msk [vmem:[#allocation2 + $0xc] sm:$0xf] %vm478, %v912
        %v915 = vld [vmem:[%s556 + $0x4] sm:$0x1]
        %v916 = vld [vmem:[%s556 + $0x14] sm:$0x1]
        %v917 = vld [vmem:[%s556 + $0x24] sm:$0x1]
        %v918 = vld [vmem:[%s556 + $0x34] sm:$0x1]
        %v923 = vrot.slane %v916, 7
        %v924 = vsel %vm412, %v923, %v915
        %v925 = vrot.slane %v917, 6
        %v926 = vsel %vm415, %v925, %v924
        %v927 = vrot.slane %v918, 5
        %v928 = vsel %vm418, %v927, %v926
        %929 = vrot.lane.b32.xlu0 %v928, 31
        %v930 = vpop.permute.xlu0 %929
        %932 = vst.msk [vmem:[#allocation2 + $0xc] sm:$0xf] %vm497, %v930
        %v933 = vld [vmem:[%s556 + $0x5] sm:$0x1]
        %v934 = vld [vmem:[%s556 + $0x15] sm:$0x1]
        %v935 = vld [vmem:[%s556 + $0x25] sm:$0x1]
        %v936 = vld [vmem:[%s556 + $0x35] sm:$0x1]
        %v941 = vrot.slane %v934, 7
        %v942 = vsel %vm412, %v941, %v933
        %v943 = vrot.slane %v935, 6
        %v944 = vsel %vm415, %v943, %v942
        %v945 = vrot.slane %v936, 5
        %v946 = vsel %vm418, %v945, %v944
        %947 = vrot.lane.b32.xlu0 %v946, 39
        %v948 = vpop.permute.xlu0 %947
        %950 = vst.msk [vmem:[#allocation2 + $0xc] sm:$0xf] %vm516, %v948
        %v951 = vld [vmem:[%s556 + $0x6] sm:$0x1]
        %v952 = vld [vmem:[%s556 + $0x16] sm:$0x1]
        %v953 = vld [vmem:[%s556 + $0x26] sm:$0x1]
        %v954 = vld [vmem:[%s556 + $0x36] sm:$0x1]
        %v959 = vrot.slane %v952, 7
        %v960 = vsel %vm412, %v959, %v951
        %v961 = vrot.slane %v953, 6
        %v962 = vsel %vm415, %v961, %v960
        %v963 = vrot.slane %v954, 5
        %v964 = vsel %vm418, %v963, %v962
        %965 = vrot.lane.b32.xlu0 %v964, 47
        %v966 = vpop.permute.xlu0 %965
        %968 = vst.msk [vmem:[#allocation2 + $0xc] sm:$0xf] %vm535, %v966
        %v969 = vld [vmem:[%s556 + $0x7] sm:$0x1]
        %v970 = vld [vmem:[%s556 + $0x17] sm:$0x1]
        %v971 = vld [vmem:[%s556 + $0x27] sm:$0x1]
        %v972 = vld [vmem:[%s556 + $0x37] sm:$0x1]
        %v977 = vrot.slane %v970, 7
        %v978 = vsel %vm412, %v977, %v969
        %v979 = vrot.slane %v971, 6
        %v980 = vsel %vm415, %v979, %v978
        %v981 = vrot.slane %v972, 5
        %v982 = vsel %vm418, %v981, %v980
        %983 = vrot.lane.b32.xlu0 %v982, 55
        %v984 = vpop.permute.xlu0 %983
        %986 = vst.msk [vmem:[#allocation2 + $0xc] sm:$0xf] %vm554, %v984
        %v987 = vld [vmem:[%s359] sm:$0x1]
        %v988 = vld [vmem:[%s359 + $0x10] sm:$0x1]
        %v989 = vld [vmem:[%s359 + $0x20] sm:$0x1]
        %v990 = vld [vmem:[%s359 + $0x30] sm:$0x1]
        %v995 = vrot.slane %v988, 7
        %v996 = vsel %vm412, %v995, %v987
        %v997 = vrot.slane %v989, 6
        %v998 = vsel %vm415, %v997, %v996
        %v999 = vrot.slane %v990, 5
        %v1000 = vsel %vm418, %v999, %v998
        %1001 = vrot.lane.b32.xlu0 %v1000, 126
        %v1002 = vpop.permute.xlu0 %1001
        %1004 = vst.msk [vmem:[#allocation2 + $0x10] sm:$0xf] %vm421, %v1002
        %v1005 = vld [vmem:[%s359 + $0x1] sm:$0x1]
        %v1006 = vld [vmem:[%s359 + $0x11] sm:$0x1]
        %v1007 = vld [vmem:[%s359 + $0x21] sm:$0x1]
        %v1008 = vld [vmem:[%s359 + $0x31] sm:$0x1]
        %v1013 = vrot.slane %v1006, 7
        %v1014 = vsel %vm412, %v1013, %v1005
        %v1015 = vrot.slane %v1007, 6
        %v1016 = vsel %vm415, %v1015, %v1014
        %v1017 = vrot.slane %v1008, 5
        %v1018 = vsel %vm418, %v1017, %v1016
        %1019 = vrot.lane.b32.xlu0 %v1018, 6
        %v1020 = vpop.permute.xlu0 %1019
        %1022 = vst.msk [vmem:[#allocation2 + $0x10] sm:$0xf] %vm440, %v1020
        %v1023 = vld [vmem:[%s359 + $0x2] sm:$0x1]
        %v1024 = vld [vmem:[%s359 + $0x12] sm:$0x1]
        %v1025 = vld [vmem:[%s359 + $0x22] sm:$0x1]
        %v1026 = vld [vmem:[%s359 + $0x32] sm:$0x1]
        %v1031 = vrot.slane %v1024, 7
        %v1032 = vsel %vm412, %v1031, %v1023
        %v1033 = vrot.slane %v1025, 6
        %v1034 = vsel %vm415, %v1033, %v1032
        %v1035 = vrot.slane %v1026, 5
        %v1036 = vsel %vm418, %v1035, %v1034
        %1037 = vrot.lane.b32.xlu0 %v1036, 14
        %v1038 = vpop.permute.xlu0 %1037
        %1040 = vst.msk [vmem:[#allocation2 + $0x10] sm:$0xf] %vm459, %v1038
        %v1041 = vld [vmem:[%s359 + $0x3] sm:$0x1]
        %v1042 = vld [vmem:[%s359 + $0x13] sm:$0x1]
        %v1043 = vld [vmem:[%s359 + $0x23] sm:$0x1]
        %v1044 = vld [vmem:[%s359 + $0x33] sm:$0x1]
        %v1049 = vrot.slane %v1042, 7
        %v1050 = vsel %vm412, %v1049, %v1041
        %v1051 = vrot.slane %v1043, 6
        %v1052 = vsel %vm415, %v1051, %v1050
        %v1053 = vrot.slane %v1044, 5
        %v1054 = vsel %vm418, %v1053, %v1052
        %1055 = vrot.lane.b32.xlu0 %v1054, 22
        %v1056 = vpop.permute.xlu0 %1055
        %1058 = vst.msk [vmem:[#allocation2 + $0x10] sm:$0xf] %vm478, %v1056
        %v1059 = vld [vmem:[%s359 + $0x4] sm:$0x1]
        %v1060 = vld [vmem:[%s359 + $0x14] sm:$0x1]
        %v1061 = vld [vmem:[%s359 + $0x24] sm:$0x1]
        %v1062 = vld [vmem:[%s359 + $0x34] sm:$0x1]
        %v1067 = vrot.slane %v1060, 7
        %v1068 = vsel %vm412, %v1067, %v1059
        %v1069 = vrot.slane %v1061, 6
        %v1070 = vsel %vm415, %v1069, %v1068
        %v1071 = vrot.slane %v1062, 5
        %v1072 = vsel %vm418, %v1071, %v1070
        %1073 = vrot.lane.b32.xlu0 %v1072, 30
        %v1074 = vpop.permute.xlu0 %1073
        %1076 = vst.msk [vmem:[#allocation2 + $0x10] sm:$0xf] %vm497, %v1074
        %v1077 = vld [vmem:[%s359 + $0x5] sm:$0x1]
        %v1078 = vld [vmem:[%s359 + $0x15] sm:$0x1]
        %v1079 = vld [vmem:[%s359 + $0x25] sm:$0x1]
        %v1080 = vld [vmem:[%s359 + $0x35] sm:$0x1]
        %v1085 = vrot.slane %v1078, 7
        %v1086 = vsel %vm412, %v1085, %v1077
        %v1087 = vrot.slane %v1079, 6
        %v1088 = vsel %vm415, %v1087, %v1086
        %v1089 = vrot.slane %v1080, 5
        %v1090 = vsel %vm418, %v1089, %v1088
        %1091 = vrot.lane.b32.xlu0 %v1090, 38
        %v1092 = vpop.permute.xlu0 %1091
        %1094 = vst.msk [vmem:[#allocation2 + $0x10] sm:$0xf] %vm516, %v1092
        %v1095 = vld [vmem:[%s359 + $0x6] sm:$0x1]
        %v1096 = vld [vmem:[%s359 + $0x16] sm:$0x1]
        %v1097 = vld [vmem:[%s359 + $0x26] sm:$0x1]
        %v1098 = vld [vmem:[%s359 + $0x36] sm:$0x1]
        %v1103 = vrot.slane %v1096, 7
        %v1104 = vsel %vm412, %v1103, %v1095
        %v1105 = vrot.slane %v1097, 6
        %v1106 = vsel %vm415, %v1105, %v1104
        %v1107 = vrot.slane %v1098, 5
        %v1108 = vsel %vm418, %v1107, %v1106
        %1109 = vrot.lane.b32.xlu0 %v1108, 46
        %v1110 = vpop.permute.xlu0 %1109
        %1112 = vst.msk [vmem:[#allocation2 + $0x10] sm:$0xf] %vm535, %v1110
        %v1113 = vld [vmem:[%s359 + $0x7] sm:$0x1]
        %v1114 = vld [vmem:[%s359 + $0x17] sm:$0x1]
        %v1115 = vld [vmem:[%s359 + $0x27] sm:$0x1]
        %v1116 = vld [vmem:[%s359 + $0x37] sm:$0x1]
        %v1121 = vrot.slane %v1114, 7
        %v1122 = vsel %vm412, %v1121, %v1113
        %v1123 = vrot.slane %v1115, 6
        %v1124 = vsel %vm415, %v1123, %v1122
        %v1125 = vrot.slane %v1116, 5
        %v1126 = vsel %vm418, %v1125, %v1124
        %1127 = vrot.lane.b32.xlu0 %v1126, 54
        %v1128 = vpop.permute.xlu0 %1127
        %1130 = vst.msk [vmem:[#allocation2 + $0x10] sm:$0xf] %vm554, %v1128
        %s1131 = scalar_lea.vmem %s359, 128 [#allocation3]
        %v1132 = vld [vmem:[%s1131] sm:$0x1]
        %v1133 = vld [vmem:[%s1131 + $0x10] sm:$0x1]
        %v1134 = vld [vmem:[%s1131 + $0x20] sm:$0x1]
        %v1135 = vld [vmem:[%s1131 + $0x30] sm:$0x1]
        %v1140 = vrot.slane %v1133, 7
        %v1141 = vsel %vm412, %v1140, %v1132
        %v1142 = vrot.slane %v1134, 6
        %v1143 = vsel %vm415, %v1142, %v1141
        %v1144 = vrot.slane %v1135, 5
        %v1145 = vsel %vm418, %v1144, %v1143
        %1147 = vst.msk [vmem:[#allocation2 + $0x14] sm:$0xf] %vm421, %v1145
        %v1148 = vld [vmem:[%s1131 + $0x1] sm:$0x1]
        %v1149 = vld [vmem:[%s1131 + $0x11] sm:$0x1]
        %v1150 = vld [vmem:[%s1131 + $0x21] sm:$0x1]
        %v1151 = vld [vmem:[%s1131 + $0x31] sm:$0x1]
        %v1156 = vrot.slane %v1149, 7
        %v1157 = vsel %vm412, %v1156, %v1148
        %v1158 = vrot.slane %v1150, 6
        %v1159 = vsel %vm415, %v1158, %v1157
        %v1160 = vrot.slane %v1151, 5
        %v1161 = vsel %vm418, %v1160, %v1159
        %1162 = vrot.lane.b32.xlu0 %v1161, 8
        %v1163 = vpop.permute.xlu0 %1162
        %1165 = vst.msk [vmem:[#allocation2 + $0x14] sm:$0xf] %vm440, %v1163
        %v1166 = vld [vmem:[%s1131 + $0x2] sm:$0x1]
        %v1167 = vld [vmem:[%s1131 + $0x12] sm:$0x1]
        %v1168 = vld [vmem:[%s1131 + $0x22] sm:$0x1]
        %v1169 = vld [vmem:[%s1131 + $0x32] sm:$0x1]
        %v1174 = vrot.slane %v1167, 7
        %v1175 = vsel %vm412, %v1174, %v1166
        %v1176 = vrot.slane %v1168, 6
        %v1177 = vsel %vm415, %v1176, %v1175
        %v1178 = vrot.slane %v1169, 5
        %v1179 = vsel %vm418, %v1178, %v1177
        %1180 = vrot.lane.b32.xlu0 %v1179, 16
        %v1181 = vpop.permute.xlu0 %1180
        %1183 = vst.msk [vmem:[#allocation2 + $0x14] sm:$0xf] %vm459, %v1181
        %v1184 = vld [vmem:[%s1131 + $0x3] sm:$0x1]
        %v1185 = vld [vmem:[%s1131 + $0x13] sm:$0x1]
        %v1186 = vld [vmem:[%s1131 + $0x23] sm:$0x1]
        %v1187 = vld [vmem:[%s1131 + $0x33] sm:$0x1]
        %v1192 = vrot.slane %v1185, 7
        %v1193 = vsel %vm412, %v1192, %v1184
        %v1194 = vrot.slane %v1186, 6
        %v1195 = vsel %vm415, %v1194, %v1193
        %v1196 = vrot.slane %v1187, 5
        %v1197 = vsel %vm418, %v1196, %v1195
        %1198 = vrot.lane.b32.xlu0 %v1197, 24
        %v1199 = vpop.permute.xlu0 %1198
        %1201 = vst.msk [vmem:[#allocation2 + $0x14] sm:$0xf] %vm478, %v1199
        %v1202 = vld [vmem:[%s1131 + $0x4] sm:$0x1]
        %v1203 = vld [vmem:[%s1131 + $0x14] sm:$0x1]
        %v1204 = vld [vmem:[%s1131 + $0x24] sm:$0x1]
        %v1205 = vld [vmem:[%s1131 + $0x34] sm:$0x1]
        %v1210 = vrot.slane %v1203, 7
        %v1211 = vsel %vm412, %v1210, %v1202
        %v1212 = vrot.slane %v1204, 6
        %v1213 = vsel %vm415, %v1212, %v1211
        %v1214 = vrot.slane %v1205, 5
        %v1215 = vsel %vm418, %v1214, %v1213
        %1216 = vrot.lane.b32.xlu0 %v1215, 32
        %v1217 = vpop.permute.xlu0 %1216
        %1219 = vst.msk [vmem:[#allocation2 + $0x14] sm:$0xf] %vm497, %v1217
        %v1220 = vld [vmem:[%s1131 + $0x5] sm:$0x1]
        %v1221 = vld [vmem:[%s1131 + $0x15] sm:$0x1]
        %v1222 = vld [vmem:[%s1131 + $0x25] sm:$0x1]
        %v1223 = vld [vmem:[%s1131 + $0x35] sm:$0x1]
        %v1228 = vrot.slane %v1221, 7
        %v1229 = vsel %vm412, %v1228, %v1220
        %v1230 = vrot.slane %v1222, 6
        %v1231 = vsel %vm415, %v1230, %v1229
        %v1232 = vrot.slane %v1223, 5
        %v1233 = vsel %vm418, %v1232, %v1231
        %1234 = vrot.lane.b32.xlu0 %v1233, 40
        %v1235 = vpop.permute.xlu0 %1234
        %1237 = vst.msk [vmem:[#allocation2 + $0x14] sm:$0xf] %vm516, %v1235
        %v1238 = vld [vmem:[%s1131 + $0x6] sm:$0x1]
        %v1239 = vld [vmem:[%s1131 + $0x16] sm:$0x1]
        %v1240 = vld [vmem:[%s1131 + $0x26] sm:$0x1]
        %v1241 = vld [vmem:[%s1131 + $0x36] sm:$0x1]
        %v1246 = vrot.slane %v1239, 7
        %v1247 = vsel %vm412, %v1246, %v1238
        %v1248 = vrot.slane %v1240, 6
        %v1249 = vsel %vm415, %v1248, %v1247
        %v1250 = vrot.slane %v1241, 5
        %v1251 = vsel %vm418, %v1250, %v1249
        %1252 = vrot.lane.b32.xlu0 %v1251, 48
        %v1253 = vpop.permute.xlu0 %1252
        %1255 = vst.msk [vmem:[#allocation2 + $0x14] sm:$0xf] %vm535, %v1253
        %v1256 = vld [vmem:[%s1131 + $0x7] sm:$0x1]
        %v1257 = vld [vmem:[%s1131 + $0x17] sm:$0x1]
        %v1258 = vld [vmem:[%s1131 + $0x27] sm:$0x1]
        %v1259 = vld [vmem:[%s1131 + $0x37] sm:$0x1]
        %v1264 = vrot.slane %v1257, 7
        %v1265 = vsel %vm412, %v1264, %v1256
        %v1266 = vrot.slane %v1258, 6
        %v1267 = vsel %vm415, %v1266, %v1265
        %v1268 = vrot.slane %v1259, 5
        %v1269 = vsel %vm418, %v1268, %v1267
        %1270 = vrot.lane.b32.xlu0 %v1269, 56
        %v1271 = vpop.permute.xlu0 %1270
        %1273 = vst.msk [vmem:[#allocation2 + $0x14] sm:$0xf] %vm554, %v1271
        %s1274 = scalar_lea.vmem %s359, 192 [#allocation3]
        %v1275 = vld [vmem:[%s1274] sm:$0x1]
        %v1276 = vld [vmem:[%s1274 + $0x10] sm:$0x1]
        %v1277 = vld [vmem:[%s1274 + $0x20] sm:$0x1]
        %v1278 = vld [vmem:[%s1274 + $0x30] sm:$0x1]
        %v1283 = vrot.slane %v1276, 7
        %v1284 = vsel %vm412, %v1283, %v1275
        %v1285 = vrot.slane %v1277, 6
        %v1286 = vsel %vm415, %v1285, %v1284
        %v1287 = vrot.slane %v1278, 5
        %v1288 = vsel %vm418, %v1287, %v1286
        %1290 = vst.msk [vmem:[#allocation2 + $0x18] sm:$0xf] %vm421, %v1288
        %v1291 = vld [vmem:[%s1274 + $0x1] sm:$0x1]
        %v1292 = vld [vmem:[%s1274 + $0x11] sm:$0x1]
        %v1293 = vld [vmem:[%s1274 + $0x21] sm:$0x1]
        %v1294 = vld [vmem:[%s1274 + $0x31] sm:$0x1]
        %v1299 = vrot.slane %v1292, 7
        %v1300 = vsel %vm412, %v1299, %v1291
        %v1301 = vrot.slane %v1293, 6
        %v1302 = vsel %vm415, %v1301, %v1300
        %v1303 = vrot.slane %v1294, 5
        %v1304 = vsel %vm418, %v1303, %v1302
        %1305 = vrot.lane.b32.xlu0 %v1304, 8
        %v1306 = vpop.permute.xlu0 %1305
        %1308 = vst.msk [vmem:[#allocation2 + $0x18] sm:$0xf] %vm440, %v1306
        %v1309 = vld [vmem:[%s1274 + $0x2] sm:$0x1]
        %v1310 = vld [vmem:[%s1274 + $0x12] sm:$0x1]
        %v1311 = vld [vmem:[%s1274 + $0x22] sm:$0x1]
        %v1312 = vld [vmem:[%s1274 + $0x32] sm:$0x1]
        %v1317 = vrot.slane %v1310, 7
        %v1318 = vsel %vm412, %v1317, %v1309
        %v1319 = vrot.slane %v1311, 6
        %v1320 = vsel %vm415, %v1319, %v1318
        %v1321 = vrot.slane %v1312, 5
        %v1322 = vsel %vm418, %v1321, %v1320
        %1323 = vrot.lane.b32.xlu0 %v1322, 16
        %v1324 = vpop.permute.xlu0 %1323
        %1326 = vst.msk [vmem:[#allocation2 + $0x18] sm:$0xf] %vm459, %v1324
        %v1327 = vld [vmem:[%s1274 + $0x3] sm:$0x1]
        %v1328 = vld [vmem:[%s1274 + $0x13] sm:$0x1]
        %v1329 = vld [vmem:[%s1274 + $0x23] sm:$0x1]
        %v1330 = vld [vmem:[%s1274 + $0x33] sm:$0x1]
        %v1335 = vrot.slane %v1328, 7
        %v1336 = vsel %vm412, %v1335, %v1327
        %v1337 = vrot.slane %v1329, 6
        %v1338 = vsel %vm415, %v1337, %v1336
        %v1339 = vrot.slane %v1330, 5
        %v1340 = vsel %vm418, %v1339, %v1338
        %1341 = vrot.lane.b32.xlu0 %v1340, 24
        %v1342 = vpop.permute.xlu0 %1341
        %1344 = vst.msk [vmem:[#allocation2 + $0x18] sm:$0xf] %vm478, %v1342
        %v1345 = vld [vmem:[%s1274 + $0x4] sm:$0x1]
        %v1346 = vld [vmem:[%s1274 + $0x14] sm:$0x1]
        %v1347 = vld [vmem:[%s1274 + $0x24] sm:$0x1]
        %v1348 = vld [vmem:[%s1274 + $0x34] sm:$0x1]
        %v1353 = vrot.slane %v1346, 7
        %v1354 = vsel %vm412, %v1353, %v1345
        %v1355 = vrot.slane %v1347, 6
        %v1356 = vsel %vm415, %v1355, %v1354
        %v1357 = vrot.slane %v1348, 5
        %v1358 = vsel %vm418, %v1357, %v1356
        %1359 = vrot.lane.b32.xlu0 %v1358, 32
        %v1360 = vpop.permute.xlu0 %1359
        %1362 = vst.msk [vmem:[#allocation2 + $0x18] sm:$0xf] %vm497, %v1360
        %v1363 = vld [vmem:[%s1274 + $0x5] sm:$0x1]
        %v1364 = vld [vmem:[%s1274 + $0x15] sm:$0x1]
        %v1365 = vld [vmem:[%s1274 + $0x25] sm:$0x1]
        %v1366 = vld [vmem:[%s1274 + $0x35] sm:$0x1]
        %v1371 = vrot.slane %v1364, 7
        %v1372 = vsel %vm412, %v1371, %v1363
        %v1373 = vrot.slane %v1365, 6
        %v1374 = vsel %vm415, %v1373, %v1372
        %v1375 = vrot.slane %v1366, 5
        %v1376 = vsel %vm418, %v1375, %v1374
        %1377 = vrot.lane.b32.xlu0 %v1376, 40
        %v1378 = vpop.permute.xlu0 %1377
        %1380 = vst.msk [vmem:[#allocation2 + $0x18] sm:$0xf] %vm516, %v1378
        %v1381 = vld [vmem:[%s1274 + $0x6] sm:$0x1]
        %v1382 = vld [vmem:[%s1274 + $0x16] sm:$0x1]
        %v1383 = vld [vmem:[%s1274 + $0x26] sm:$0x1]
        %v1384 = vld [vmem:[%s1274 + $0x36] sm:$0x1]
        %v1389 = vrot.slane %v1382, 7
        %v1390 = vsel %vm412, %v1389, %v1381
        %v1391 = vrot.slane %v1383, 6
        %v1392 = vsel %vm415, %v1391, %v1390
        %v1393 = vrot.slane %v1384, 5
        %v1394 = vsel %vm418, %v1393, %v1392
        %1395 = vrot.lane.b32.xlu0 %v1394, 48
        %v1396 = vpop.permute.xlu0 %1395
        %1398 = vst.msk [vmem:[#allocation2 + $0x18] sm:$0xf] %vm535, %v1396
        %v1399 = vld [vmem:[%s1274 + $0x7] sm:$0x1]
        %v1400 = vld [vmem:[%s1274 + $0x17] sm:$0x1]
        %v1401 = vld [vmem:[%s1274 + $0x27] sm:$0x1]
        %v1402 = vld [vmem:[%s1274 + $0x37] sm:$0x1]
        %v1407 = vrot.slane %v1400, 7
        %v1408 = vsel %vm412, %v1407, %v1399
        %v1409 = vrot.slane %v1401, 6
        %v1410 = vsel %vm415, %v1409, %v1408
        %v1411 = vrot.slane %v1402, 5
        %v1412 = vsel %vm418, %v1411, %v1410
        %1413 = vrot.lane.b32.xlu0 %v1412, 56
        %v1414 = vpop.permute.xlu0 %1413
        %1416 = vst.msk [vmem:[#allocation2 + $0x18] sm:$0xf] %vm554, %v1414
        %v1417 = vld [vmem:[%s1131] sm:$0x1]
        %v1418 = vld [vmem:[%s1131 + $0x10] sm:$0x1]
        %v1419 = vld [vmem:[%s1131 + $0x20] sm:$0x1]
        %v1420 = vld [vmem:[%s1131 + $0x30] sm:$0x1]
        %v1425 = vrot.slane %v1418, 7
        %v1426 = vsel %vm412, %v1425, %v1417
        %v1427 = vrot.slane %v1419, 6
        %v1428 = vsel %vm415, %v1427, %v1426
        %v1429 = vrot.slane %v1420, 5
        %v1430 = vsel %vm418, %v1429, %v1428
        %1431 = vrot.lane.b32.xlu0 %v1430, 127
        %v1432 = vpop.permute.xlu0 %1431
        %1434 = vst.msk [vmem:[#allocation2 + $0x1c] sm:$0xf] %vm421, %v1432
        %v1435 = vld [vmem:[%s1131 + $0x1] sm:$0x1]
        %v1436 = vld [vmem:[%s1131 + $0x11] sm:$0x1]
        %v1437 = vld [vmem:[%s1131 + $0x21] sm:$0x1]
        %v1438 = vld [vmem:[%s1131 + $0x31] sm:$0x1]
        %v1443 = vrot.slane %v1436, 7
        %v1444 = vsel %vm412, %v1443, %v1435
        %v1445 = vrot.slane %v1437, 6
        %v1446 = vsel %vm415, %v1445, %v1444
        %v1447 = vrot.slane %v1438, 5
        %v1448 = vsel %vm418, %v1447, %v1446
        %1449 = vrot.lane.b32.xlu0 %v1448, 7
        %v1450 = vpop.permute.xlu0 %1449
        %1452 = vst.msk [vmem:[#allocation2 + $0x1c] sm:$0xf] %vm440, %v1450
        %v1453 = vld [vmem:[%s1131 + $0x2] sm:$0x1]
        %v1454 = vld [vmem:[%s1131 + $0x12] sm:$0x1]
        %v1455 = vld [vmem:[%s1131 + $0x22] sm:$0x1]
        %v1456 = vld [vmem:[%s1131 + $0x32] sm:$0x1]
        %v1461 = vrot.slane %v1454, 7
        %v1462 = vsel %vm412, %v1461, %v1453
        %v1463 = vrot.slane %v1455, 6
        %v1464 = vsel %vm415, %v1463, %v1462
        %v1465 = vrot.slane %v1456, 5
        %v1466 = vsel %vm418, %v1465, %v1464
        %1467 = vrot.lane.b32.xlu0 %v1466, 15
        %v1468 = vpop.permute.xlu0 %1467
        %1470 = vst.msk [vmem:[#allocation2 + $0x1c] sm:$0xf] %vm459, %v1468
        %v1471 = vld [vmem:[%s1131 + $0x3] sm:$0x1]
        %v1472 = vld [vmem:[%s1131 + $0x13] sm:$0x1]
        %v1473 = vld [vmem:[%s1131 + $0x23] sm:$0x1]
        %v1474 = vld [vmem:[%s1131 + $0x33] sm:$0x1]
        %v1479 = vrot.slane %v1472, 7
        %v1480 = vsel %vm412, %v1479, %v1471
        %v1481 = vrot.slane %v1473, 6
        %v1482 = vsel %vm415, %v1481, %v1480
        %v1483 = vrot.slane %v1474, 5
        %v1484 = vsel %vm418, %v1483, %v1482
        %1485 = vrot.lane.b32.xlu0 %v1484, 23
        %v1486 = vpop.permute.xlu0 %1485
        %1488 = vst.msk [vmem:[#allocation2 + $0x1c] sm:$0xf] %vm478, %v1486
        %v1489 = vld [vmem:[%s1131 + $0x4] sm:$0x1]
        %v1490 = vld [vmem:[%s1131 + $0x14] sm:$0x1]
        %v1491 = vld [vmem:[%s1131 + $0x24] sm:$0x1]
        %v1492 = vld [vmem:[%s1131 + $0x34] sm:$0x1]
        %v1497 = vrot.slane %v1490, 7
        %v1498 = vsel %vm412, %v1497, %v1489
        %v1499 = vrot.slane %v1491, 6
        %v1500 = vsel %vm415, %v1499, %v1498
        %v1501 = vrot.slane %v1492, 5
        %v1502 = vsel %vm418, %v1501, %v1500
        %1503 = vrot.lane.b32.xlu0 %v1502, 31
        %v1504 = vpop.permute.xlu0 %1503
        %1506 = vst.msk [vmem:[#allocation2 + $0x1c] sm:$0xf] %vm497, %v1504
        %v1507 = vld [vmem:[%s1131 + $0x5] sm:$0x1]
        %v1508 = vld [vmem:[%s1131 + $0x15] sm:$0x1]
        %v1509 = vld [vmem:[%s1131 + $0x25] sm:$0x1]
        %v1510 = vld [vmem:[%s1131 + $0x35] sm:$0x1]
        %v1515 = vrot.slane %v1508, 7
        %v1516 = vsel %vm412, %v1515, %v1507
        %v1517 = vrot.slane %v1509, 6
        %v1518 = vsel %vm415, %v1517, %v1516
        %v1519 = vrot.slane %v1510, 5
        %v1520 = vsel %vm418, %v1519, %v1518
        %1521 = vrot.lane.b32.xlu0 %v1520, 39
        %v1522 = vpop.permute.xlu0 %1521
        %1524 = vst.msk [vmem:[#allocation2 + $0x1c] sm:$0xf] %vm516, %v1522
        %v1525 = vld [vmem:[%s1131 + $0x6] sm:$0x1]
        %v1526 = vld [vmem:[%s1131 + $0x16] sm:$0x1]
        %v1527 = vld [vmem:[%s1131 + $0x26] sm:$0x1]
        %v1528 = vld [vmem:[%s1131 + $0x36] sm:$0x1]
        %v1533 = vrot.slane %v1526, 7
        %v1534 = vsel %vm412, %v1533, %v1525
        %v1535 = vrot.slane %v1527, 6
        %v1536 = vsel %vm415, %v1535, %v1534
        %v1537 = vrot.slane %v1528, 5
        %v1538 = vsel %vm418, %v1537, %v1536
        %1539 = vrot.lane.b32.xlu0 %v1538, 47
        %v1540 = vpop.permute.xlu0 %1539
        %1542 = vst.msk [vmem:[#allocation2 + $0x1c] sm:$0xf] %vm535, %v1540
        %v1543 = vld [vmem:[%s1131 + $0x7] sm:$0x1]
        %v1544 = vld [vmem:[%s1131 + $0x17] sm:$0x1]
        %v1545 = vld [vmem:[%s1131 + $0x27] sm:$0x1]
        %v1546 = vld [vmem:[%s1131 + $0x37] sm:$0x1]
        %v1551 = vrot.slane %v1544, 7
        %v1552 = vsel %vm412, %v1551, %v1543
        %v1553 = vrot.slane %v1545, 6
        %v1554 = vsel %vm415, %v1553, %v1552
        %v1555 = vrot.slane %v1546, 5
        %v1556 = vsel %vm418, %v1555, %v1554
        %1557 = vrot.lane.b32.xlu0 %v1556, 55
        %v1558 = vpop.permute.xlu0 %1557
        %1560 = vst.msk [vmem:[#allocation2 + $0x1c] sm:$0xf] %vm554, %v1558
        %v1561 = vld [vmem:[%s1274] sm:$0x1]
        %v1562 = vld [vmem:[%s1274 + $0x10] sm:$0x1]
        %v1563 = vld [vmem:[%s1274 + $0x20] sm:$0x1]
        %v1564 = vld [vmem:[%s1274 + $0x30] sm:$0x1]
        %v1569 = vrot.slane %v1562, 7
        %v1570 = vsel %vm412, %v1569, %v1561
        %v1571 = vrot.slane %v1563, 6
        %v1572 = vsel %vm415, %v1571, %v1570
        %v1573 = vrot.slane %v1564, 5
        %v1574 = vsel %vm418, %v1573, %v1572
        %1575 = vrot.lane.b32.xlu0 %v1574, 127
        %v1576 = vpop.permute.xlu0 %1575
        %1578 = vst.msk [vmem:[#allocation2 + $0x20] sm:$0xf] %vm421, %v1576
        %v1579 = vld [vmem:[%s1274 + $0x1] sm:$0x1]
        %v1580 = vld [vmem:[%s1274 + $0x11] sm:$0x1]
        %v1581 = vld [vmem:[%s1274 + $0x21] sm:$0x1]
        %v1582 = vld [vmem:[%s1274 + $0x31] sm:$0x1]
        %v1587 = vrot.slane %v1580, 7
        %v1588 = vsel %vm412, %v1587, %v1579
        %v1589 = vrot.slane %v1581, 6
        %v1590 = vsel %vm415, %v1589, %v1588
        %v1591 = vrot.slane %v1582, 5
        %v1592 = vsel %vm418, %v1591, %v1590
        %1593 = vrot.lane.b32.xlu0 %v1592, 7
        %v1594 = vpop.permute.xlu0 %1593
        %1596 = vst.msk [vmem:[#allocation2 + $0x20] sm:$0xf] %vm440, %v1594
        %v1597 = vld [vmem:[%s1274 + $0x2] sm:$0x1]
        %v1598 = vld [vmem:[%s1274 + $0x12] sm:$0x1]
        %v1599 = vld [vmem:[%s1274 + $0x22] sm:$0x1]
        %v1600 = vld [vmem:[%s1274 + $0x32] sm:$0x1]
        %v1605 = vrot.slane %v1598, 7
        %v1606 = vsel %vm412, %v1605, %v1597
        %v1607 = vrot.slane %v1599, 6
        %v1608 = vsel %vm415, %v1607, %v1606
        %v1609 = vrot.slane %v1600, 5
        %v1610 = vsel %vm418, %v1609, %v1608
        %1611 = vrot.lane.b32.xlu0 %v1610, 15
        %v1612 = vpop.permute.xlu0 %1611
        %1614 = vst.msk [vmem:[#allocation2 + $0x20] sm:$0xf] %vm459, %v1612
        %v1615 = vld [vmem:[%s1274 + $0x3] sm:$0x1]
        %v1616 = vld [vmem:[%s1274 + $0x13] sm:$0x1]
        %v1617 = vld [vmem:[%s1274 + $0x23] sm:$0x1]
        %v1618 = vld [vmem:[%s1274 + $0x33] sm:$0x1]
        %v1623 = vrot.slane %v1616, 7
        %v1624 = vsel %vm412, %v1623, %v1615
        %v1625 = vrot.slane %v1617, 6
        %v1626 = vsel %vm415, %v1625, %v1624
        %v1627 = vrot.slane %v1618, 5
        %v1628 = vsel %vm418, %v1627, %v1626
        %1629 = vrot.lane.b32.xlu0 %v1628, 23
        %v1630 = vpop.permute.xlu0 %1629
        %1632 = vst.msk [vmem:[#allocation2 + $0x20] sm:$0xf] %vm478, %v1630
        %v1633 = vld [vmem:[%s1274 + $0x4] sm:$0x1]
        %v1634 = vld [vmem:[%s1274 + $0x14] sm:$0x1]
        %v1635 = vld [vmem:[%s1274 + $0x24] sm:$0x1]
        %v1636 = vld [vmem:[%s1274 + $0x34] sm:$0x1]
        %v1641 = vrot.slane %v1634, 7
        %v1642 = vsel %vm412, %v1641, %v1633
        %v1643 = vrot.slane %v1635, 6
        %v1644 = vsel %vm415, %v1643, %v1642
        %v1645 = vrot.slane %v1636, 5
        %v1646 = vsel %vm418, %v1645, %v1644
        %1647 = vrot.lane.b32.xlu0 %v1646, 31
        %v1648 = vpop.permute.xlu0 %1647
        %1650 = vst.msk [vmem:[#allocation2 + $0x20] sm:$0xf] %vm497, %v1648
        %v1651 = vld [vmem:[%s1274 + $0x5] sm:$0x1]
        %v1652 = vld [vmem:[%s1274 + $0x15] sm:$0x1]
        %v1653 = vld [vmem:[%s1274 + $0x25] sm:$0x1]
        %v1654 = vld [vmem:[%s1274 + $0x35] sm:$0x1]
        %v1659 = vrot.slane %v1652, 7
        %v1660 = vsel %vm412, %v1659, %v1651
        %v1661 = vrot.slane %v1653, 6
        %v1662 = vsel %vm415, %v1661, %v1660
        %v1663 = vrot.slane %v1654, 5
        %v1664 = vsel %vm418, %v1663, %v1662
        %1665 = vrot.lane.b32.xlu0 %v1664, 39
        %v1666 = vpop.permute.xlu0 %1665
        %1668 = vst.msk [vmem:[#allocation2 + $0x20] sm:$0xf] %vm516, %v1666
        %v1669 = vld [vmem:[%s1274 + $0x6] sm:$0x1]
        %v1670 = vld [vmem:[%s1274 + $0x16] sm:$0x1]
        %v1671 = vld [vmem:[%s1274 + $0x26] sm:$0x1]
        %v1672 = vld [vmem:[%s1274 + $0x36] sm:$0x1]
        %v1677 = vrot.slane %v1670, 7
        %v1678 = vsel %vm412, %v1677, %v1669
        %v1679 = vrot.slane %v1671, 6
        %v1680 = vsel %vm415, %v1679, %v1678
        %v1681 = vrot.slane %v1672, 5
        %v1682 = vsel %vm418, %v1681, %v1680
        %1683 = vrot.lane.b32.xlu0 %v1682, 47
        %v1684 = vpop.permute.xlu0 %1683
        %1686 = vst.msk [vmem:[#allocation2 + $0x20] sm:$0xf] %vm535, %v1684
        %v1687 = vld [vmem:[%s1274 + $0x7] sm:$0x1]
        %v1688 = vld [vmem:[%s1274 + $0x17] sm:$0x1]
        %v1689 = vld [vmem:[%s1274 + $0x27] sm:$0x1]
        %v1690 = vld [vmem:[%s1274 + $0x37] sm:$0x1]
        %v1695 = vrot.slane %v1688, 7
        %v1696 = vsel %vm412, %v1695, %v1687
        %v1697 = vrot.slane %v1689, 6
        %v1698 = vsel %vm415, %v1697, %v1696
        %v1699 = vrot.slane %v1690, 5
        %v1700 = vsel %vm418, %v1699, %v1698
        %1701 = vrot.lane.b32.xlu0 %v1700, 55
        %v1702 = vpop.permute.xlu0 %1701
        %1704 = vst.msk [vmem:[#allocation2 + $0x20] sm:$0xf] %vm554, %v1702
        %v1705 = vld [vmem:[%s1131] sm:$0x1]
        %v1706 = vld [vmem:[%s1131 + $0x10] sm:$0x1]
        %v1707 = vld [vmem:[%s1131 + $0x20] sm:$0x1]
        %v1708 = vld [vmem:[%s1131 + $0x30] sm:$0x1]
        %v1713 = vrot.slane %v1706, 7
        %v1714 = vsel %vm412, %v1713, %v1705
        %v1715 = vrot.slane %v1707, 6
        %v1716 = vsel %vm415, %v1715, %v1714
        %v1717 = vrot.slane %v1708, 5
        %v1718 = vsel %vm418, %v1717, %v1716
        %1719 = vrot.lane.b32.xlu0 %v1718, 126
        %v1720 = vpop.permute.xlu0 %1719
        %1722 = vst.msk [vmem:[#allocation2 + $0x24] sm:$0xf] %vm421, %v1720
        %v1723 = vld [vmem:[%s1131 + $0x1] sm:$0x1]
        %v1724 = vld [vmem:[%s1131 + $0x11] sm:$0x1]
        %v1725 = vld [vmem:[%s1131 + $0x21] sm:$0x1]
        %v1726 = vld [vmem:[%s1131 + $0x31] sm:$0x1]
        %v1731 = vrot.slane %v1724, 7
        %v1732 = vsel %vm412, %v1731, %v1723
        %v1733 = vrot.slane %v1725, 6
        %v1734 = vsel %vm415, %v1733, %v1732
        %v1735 = vrot.slane %v1726, 5
        %v1736 = vsel %vm418, %v1735, %v1734
        %1737 = vrot.lane.b32.xlu0 %v1736, 6
        %v1738 = vpop.permute.xlu0 %1737
        %1740 = vst.msk [vmem:[#allocation2 + $0x24] sm:$0xf] %vm440, %v1738
        %v1741 = vld [vmem:[%s1131 + $0x2] sm:$0x1]
        %v1742 = vld [vmem:[%s1131 + $0x12] sm:$0x1]
        %v1743 = vld [vmem:[%s1131 + $0x22] sm:$0x1]
        %v1744 = vld [vmem:[%s1131 + $0x32] sm:$0x1]
        %v1749 = vrot.slane %v1742, 7
        %v1750 = vsel %vm412, %v1749, %v1741
        %v1751 = vrot.slane %v1743, 6
        %v1752 = vsel %vm415, %v1751, %v1750
        %v1753 = vrot.slane %v1744, 5
        %v1754 = vsel %vm418, %v1753, %v1752
        %1755 = vrot.lane.b32.xlu0 %v1754, 14
        %v1756 = vpop.permute.xlu0 %1755
        %1758 = vst.msk [vmem:[#allocation2 + $0x24] sm:$0xf] %vm459, %v1756
        %v1759 = vld [vmem:[%s1131 + $0x3] sm:$0x1]
        %v1760 = vld [vmem:[%s1131 + $0x13] sm:$0x1]
        %v1761 = vld [vmem:[%s1131 + $0x23] sm:$0x1]
        %v1762 = vld [vmem:[%s1131 + $0x33] sm:$0x1]
        %v1767 = vrot.slane %v1760, 7
        %v1768 = vsel %vm412, %v1767, %v1759
        %v1769 = vrot.slane %v1761, 6
        %v1770 = vsel %vm415, %v1769, %v1768
        %v1771 = vrot.slane %v1762, 5
        %v1772 = vsel %vm418, %v1771, %v1770
        %1773 = vrot.lane.b32.xlu0 %v1772, 22
        %v1774 = vpop.permute.xlu0 %1773
        %1776 = vst.msk [vmem:[#allocation2 + $0x24] sm:$0xf] %vm478, %v1774
        %v1777 = vld [vmem:[%s1131 + $0x4] sm:$0x1]
        %v1778 = vld [vmem:[%s1131 + $0x14] sm:$0x1]
        %v1779 = vld [vmem:[%s1131 + $0x24] sm:$0x1]
        %v1780 = vld [vmem:[%s1131 + $0x34] sm:$0x1]
        %v1785 = vrot.slane %v1778, 7
        %v1786 = vsel %vm412, %v1785, %v1777
        %v1787 = vrot.slane %v1779, 6
        %v1788 = vsel %vm415, %v1787, %v1786
        %v1789 = vrot.slane %v1780, 5
        %v1790 = vsel %vm418, %v1789, %v1788
        %1791 = vrot.lane.b32.xlu0 %v1790, 30
        %v1792 = vpop.permute.xlu0 %1791
        %1794 = vst.msk [vmem:[#allocation2 + $0x24] sm:$0xf] %vm497, %v1792
        %v1795 = vld [vmem:[%s1131 + $0x5] sm:$0x1]
        %v1796 = vld [vmem:[%s1131 + $0x15] sm:$0x1]
        %v1797 = vld [vmem:[%s1131 + $0x25] sm:$0x1]
        %v1798 = vld [vmem:[%s1131 + $0x35] sm:$0x1]
        %v1803 = vrot.slane %v1796, 7
        %v1804 = vsel %vm412, %v1803, %v1795
        %v1805 = vrot.slane %v1797, 6
        %v1806 = vsel %vm415, %v1805, %v1804
        %v1807 = vrot.slane %v1798, 5
        %v1808 = vsel %vm418, %v1807, %v1806
        %1809 = vrot.lane.b32.xlu0 %v1808, 38
        %v1810 = vpop.permute.xlu0 %1809
        %1812 = vst.msk [vmem:[#allocation2 + $0x24] sm:$0xf] %vm516, %v1810
        %v1813 = vld [vmem:[%s1131 + $0x6] sm:$0x1]
        %v1814 = vld [vmem:[%s1131 + $0x16] sm:$0x1]
        %v1815 = vld [vmem:[%s1131 + $0x26] sm:$0x1]
        %v1816 = vld [vmem:[%s1131 + $0x36] sm:$0x1]
        %v1821 = vrot.slane %v1814, 7
        %v1822 = vsel %vm412, %v1821, %v1813
        %v1823 = vrot.slane %v1815, 6
        %v1824 = vsel %vm415, %v1823, %v1822
        %v1825 = vrot.slane %v1816, 5
        %v1826 = vsel %vm418, %v1825, %v1824
        %1827 = vrot.lane.b32.xlu0 %v1826, 46
        %v1828 = vpop.permute.xlu0 %1827
        %1830 = vst.msk [vmem:[#allocation2 + $0x24] sm:$0xf] %vm535, %v1828
        %v1831 = vld [vmem:[%s1131 + $0x7] sm:$0x1]
        %v1832 = vld [vmem:[%s1131 + $0x17] sm:$0x1]
        %v1833 = vld [vmem:[%s1131 + $0x27] sm:$0x1]
        %v1834 = vld [vmem:[%s1131 + $0x37] sm:$0x1]
        %v1839 = vrot.slane %v1832, 7
        %v1840 = vsel %vm412, %v1839, %v1831
        %v1841 = vrot.slane %v1833, 6
        %v1842 = vsel %vm415, %v1841, %v1840
        %v1843 = vrot.slane %v1834, 5
        %v1844 = vsel %vm418, %v1843, %v1842
        %1845 = vrot.lane.b32.xlu0 %v1844, 54
        %v1846 = vpop.permute.xlu0 %1845
        %1848 = vst.msk [vmem:[#allocation2 + $0x24] sm:$0xf] %vm554, %v1846
        %v1849 = vld [vmem:[%s359 + $0x1] sm:$0x1]
        %v1850 = vld [vmem:[%s359 + $0x11] sm:$0x1]
        %v1851 = vld [vmem:[%s359 + $0x21] sm:$0x1]
        %v1852 = vld [vmem:[%s359 + $0x31] sm:$0x1]
        %v1857 = vrot.slane %v1850, 7
        %v1858 = vsel %vm412, %v1857, %v1849
        %v1859 = vrot.slane %v1851, 6
        %v1860 = vsel %vm415, %v1859, %v1858
        %v1861 = vrot.slane %v1852, 5
        %v1862 = vsel %vm418, %v1861, %v1860
        %1864 = vst.msk [vmem:[#allocation2 + $0x28] sm:$0xf] %vm421, %v1862
        %v1865 = vld [vmem:[%s359 + $0x2] sm:$0x1]
        %v1866 = vld [vmem:[%s359 + $0x12] sm:$0x1]
        %v1867 = vld [vmem:[%s359 + $0x22] sm:$0x1]
        %v1868 = vld [vmem:[%s359 + $0x32] sm:$0x1]
        %v1873 = vrot.slane %v1866, 7
        %v1874 = vsel %vm412, %v1873, %v1865
        %v1875 = vrot.slane %v1867, 6
        %v1876 = vsel %vm415, %v1875, %v1874
        %v1877 = vrot.slane %v1868, 5
        %v1878 = vsel %vm418, %v1877, %v1876
        %1879 = vrot.lane.b32.xlu0 %v1878, 8
        %v1880 = vpop.permute.xlu0 %1879
        %1882 = vst.msk [vmem:[#allocation2 + $0x28] sm:$0xf] %vm440, %v1880
        %v1883 = vld [vmem:[%s359 + $0x3] sm:$0x1]
        %v1884 = vld [vmem:[%s359 + $0x13] sm:$0x1]
        %v1885 = vld [vmem:[%s359 + $0x23] sm:$0x1]
        %v1886 = vld [vmem:[%s359 + $0x33] sm:$0x1]
        %v1891 = vrot.slane %v1884, 7
        %v1892 = vsel %vm412, %v1891, %v1883
        %v1893 = vrot.slane %v1885, 6
        %v1894 = vsel %vm415, %v1893, %v1892
        %v1895 = vrot.slane %v1886, 5
        %v1896 = vsel %vm418, %v1895, %v1894
        %1897 = vrot.lane.b32.xlu0 %v1896, 16
        %v1898 = vpop.permute.xlu0 %1897
        %1900 = vst.msk [vmem:[#allocation2 + $0x28] sm:$0xf] %vm459, %v1898
        %v1901 = vld [vmem:[%s359 + $0x4] sm:$0x1]
        %v1902 = vld [vmem:[%s359 + $0x14] sm:$0x1]
        %v1903 = vld [vmem:[%s359 + $0x24] sm:$0x1]
        %v1904 = vld [vmem:[%s359 + $0x34] sm:$0x1]
        %v1909 = vrot.slane %v1902, 7
        %v1910 = vsel %vm412, %v1909, %v1901
        %v1911 = vrot.slane %v1903, 6
        %v1912 = vsel %vm415, %v1911, %v1910
        %v1913 = vrot.slane %v1904, 5
        %v1914 = vsel %vm418, %v1913, %v1912
        %1915 = vrot.lane.b32.xlu0 %v1914, 24
        %v1916 = vpop.permute.xlu0 %1915
        %1918 = vst.msk [vmem:[#allocation2 + $0x28] sm:$0xf] %vm478, %v1916
        %v1919 = vld [vmem:[%s359 + $0x5] sm:$0x1]
        %v1920 = vld [vmem:[%s359 + $0x15] sm:$0x1]
        %v1921 = vld [vmem:[%s359 + $0x25] sm:$0x1]
        %v1922 = vld [vmem:[%s359 + $0x35] sm:$0x1]
        %v1927 = vrot.slane %v1920, 7
        %v1928 = vsel %vm412, %v1927, %v1919
        %v1929 = vrot.slane %v1921, 6
        %v1930 = vsel %vm415, %v1929, %v1928
        %v1931 = vrot.slane %v1922, 5
        %v1932 = vsel %vm418, %v1931, %v1930
        %1933 = vrot.lane.b32.xlu0 %v1932, 32
        %v1934 = vpop.permute.xlu0 %1933
        %1936 = vst.msk [vmem:[#allocation2 + $0x28] sm:$0xf] %vm497, %v1934
        %v1937 = vld [vmem:[%s359 + $0x6] sm:$0x1]
        %v1938 = vld [vmem:[%s359 + $0x16] sm:$0x1]
        %v1939 = vld [vmem:[%s359 + $0x26] sm:$0x1]
        %v1940 = vld [vmem:[%s359 + $0x36] sm:$0x1]
        %v1945 = vrot.slane %v1938, 7
        %v1946 = vsel %vm412, %v1945, %v1937
        %v1947 = vrot.slane %v1939, 6
        %v1948 = vsel %vm415, %v1947, %v1946
        %v1949 = vrot.slane %v1940, 5
        %v1950 = vsel %vm418, %v1949, %v1948
        %1951 = vrot.lane.b32.xlu0 %v1950, 40
        %v1952 = vpop.permute.xlu0 %1951
        %1954 = vst.msk [vmem:[#allocation2 + $0x28] sm:$0xf] %vm516, %v1952
        %v1955 = vld [vmem:[%s359 + $0x7] sm:$0x1]
        %v1956 = vld [vmem:[%s359 + $0x17] sm:$0x1]
        %v1957 = vld [vmem:[%s359 + $0x27] sm:$0x1]
        %v1958 = vld [vmem:[%s359 + $0x37] sm:$0x1]
        %v1963 = vrot.slane %v1956, 7
        %v1964 = vsel %vm412, %v1963, %v1955
        %v1965 = vrot.slane %v1957, 6
        %v1966 = vsel %vm415, %v1965, %v1964
        %v1967 = vrot.slane %v1958, 5
        %v1968 = vsel %vm418, %v1967, %v1966
        %1969 = vrot.lane.b32.xlu0 %v1968, 48
        %v1970 = vpop.permute.xlu0 %1969
        %1972 = vst.msk [vmem:[#allocation2 + $0x28] sm:$0xf] %vm535, %v1970
        %v1973 = vld [vmem:[%s359 + $0x8] sm:$0x1]
        %v1974 = vld [vmem:[%s359 + $0x18] sm:$0x1]
        %v1975 = vld [vmem:[%s359 + $0x28] sm:$0x1]
        %v1976 = vld [vmem:[%s359 + $0x38] sm:$0x1]
        %v1981 = vrot.slane %v1974, 7
        %v1982 = vsel %vm412, %v1981, %v1973
        %v1983 = vrot.slane %v1975, 6
        %v1984 = vsel %vm415, %v1983, %v1982
        %v1985 = vrot.slane %v1976, 5
        %v1986 = vsel %vm418, %v1985, %v1984
        %1987 = vrot.lane.b32.xlu0 %v1986, 56
        %v1988 = vpop.permute.xlu0 %1987
        %1990 = vst.msk [vmem:[#allocation2 + $0x28] sm:$0xf] %vm554, %v1988
        %v1991 = vld [vmem:[%s556 + $0x1] sm:$0x1]
        %v1992 = vld [vmem:[%s556 + $0x11] sm:$0x1]
        %v1993 = vld [vmem:[%s556 + $0x21] sm:$0x1]
        %v1994 = vld [vmem:[%s556 + $0x31] sm:$0x1]
        %v1999 = vrot.slane %v1992, 7
        %v2000 = vsel %vm412, %v1999, %v1991
        %v2001 = vrot.slane %v1993, 6
        %v2002 = vsel %vm415, %v2001, %v2000
        %v2003 = vrot.slane %v1994, 5
        %v2004 = vsel %vm418, %v2003, %v2002
        %2006 = vst.msk [vmem:[#allocation2 + $0x2c] sm:$0xf] %vm421, %v2004
        %v2007 = vld [vmem:[%s556 + $0x2] sm:$0x1]
        %v2008 = vld [vmem:[%s556 + $0x12] sm:$0x1]
        %v2009 = vld [vmem:[%s556 + $0x22] sm:$0x1]
        %v2010 = vld [vmem:[%s556 + $0x32] sm:$0x1]
        %v2015 = vrot.slane %v2008, 7
        %v2016 = vsel %vm412, %v2015, %v2007
        %v2017 = vrot.slane %v2009, 6
        %v2018 = vsel %vm415, %v2017, %v2016
        %v2019 = vrot.slane %v2010, 5
        %v2020 = vsel %vm418, %v2019, %v2018
        %2021 = vrot.lane.b32.xlu0 %v2020, 8
        %v2022 = vpop.permute.xlu0 %2021
        %2024 = vst.msk [vmem:[#allocation2 + $0x2c] sm:$0xf] %vm440, %v2022
        %v2025 = vld [vmem:[%s556 + $0x3] sm:$0x1]
        %v2026 = vld [vmem:[%s556 + $0x13] sm:$0x1]
        %v2027 = vld [vmem:[%s556 + $0x23] sm:$0x1]
        %v2028 = vld [vmem:[%s556 + $0x33] sm:$0x1]
        %v2033 = vrot.slane %v2026, 7
        %v2034 = vsel %vm412, %v2033, %v2025
        %v2035 = vrot.slane %v2027, 6
        %v2036 = vsel %vm415, %v2035, %v2034
        %v2037 = vrot.slane %v2028, 5
        %v2038 = vsel %vm418, %v2037, %v2036
        %2039 = vrot.lane.b32.xlu0 %v2038, 16
        %v2040 = vpop.permute.xlu0 %2039
        %2042 = vst.msk [vmem:[#allocation2 + $0x2c] sm:$0xf] %vm459, %v2040
        %v2043 = vld [vmem:[%s556 + $0x4] sm:$0x1]
        %v2044 = vld [vmem:[%s556 + $0x14] sm:$0x1]
        %v2045 = vld [vmem:[%s556 + $0x24] sm:$0x1]
        %v2046 = vld [vmem:[%s556 + $0x34] sm:$0x1]
        %v2051 = vrot.slane %v2044, 7
        %v2052 = vsel %vm412, %v2051, %v2043
        %v2053 = vrot.slane %v2045, 6
        %v2054 = vsel %vm415, %v2053, %v2052
        %v2055 = vrot.slane %v2046, 5
        %v2056 = vsel %vm418, %v2055, %v2054
        %2057 = vrot.lane.b32.xlu0 %v2056, 24
        %v2058 = vpop.permute.xlu0 %2057
        %2060 = vst.msk [vmem:[#allocation2 + $0x2c] sm:$0xf] %vm478, %v2058
        %v2061 = vld [vmem:[%s556 + $0x5] sm:$0x1]
        %v2062 = vld [vmem:[%s556 + $0x15] sm:$0x1]
        %v2063 = vld [vmem:[%s556 + $0x25] sm:$0x1]
        %v2064 = vld [vmem:[%s556 + $0x35] sm:$0x1]
        %v2069 = vrot.slane %v2062, 7
        %v2070 = vsel %vm412, %v2069, %v2061
        %v2071 = vrot.slane %v2063, 6
        %v2072 = vsel %vm415, %v2071, %v2070
        %v2073 = vrot.slane %v2064, 5
        %v2074 = vsel %vm418, %v2073, %v2072
        %2075 = vrot.lane.b32.xlu0 %v2074, 32
        %v2076 = vpop.permute.xlu0 %2075
        %2078 = vst.msk [vmem:[#allocation2 + $0x2c] sm:$0xf] %vm497, %v2076
        %v2079 = vld [vmem:[%s556 + $0x6] sm:$0x1]
        %v2080 = vld [vmem:[%s556 + $0x16] sm:$0x1]
        %v2081 = vld [vmem:[%s556 + $0x26] sm:$0x1]
        %v2082 = vld [vmem:[%s556 + $0x36] sm:$0x1]
        %v2087 = vrot.slane %v2080, 7
        %v2088 = vsel %vm412, %v2087, %v2079
        %v2089 = vrot.slane %v2081, 6
        %v2090 = vsel %vm415, %v2089, %v2088
        %v2091 = vrot.slane %v2082, 5
        %v2092 = vsel %vm418, %v2091, %v2090
        %2093 = vrot.lane.b32.xlu0 %v2092, 40
        %v2094 = vpop.permute.xlu0 %2093
        %2096 = vst.msk [vmem:[#allocation2 + $0x2c] sm:$0xf] %vm516, %v2094
        %v2097 = vld [vmem:[%s556 + $0x7] sm:$0x1]
        %v2098 = vld [vmem:[%s556 + $0x17] sm:$0x1]
        %v2099 = vld [vmem:[%s556 + $0x27] sm:$0x1]
        %v2100 = vld [vmem:[%s556 + $0x37] sm:$0x1]
        %v2105 = vrot.slane %v2098, 7
        %v2106 = vsel %vm412, %v2105, %v2097
        %v2107 = vrot.slane %v2099, 6
        %v2108 = vsel %vm415, %v2107, %v2106
        %v2109 = vrot.slane %v2100, 5
        %v2110 = vsel %vm418, %v2109, %v2108
        %2111 = vrot.lane.b32.xlu0 %v2110, 48
        %v2112 = vpop.permute.xlu0 %2111
        %2114 = vst.msk [vmem:[#allocation2 + $0x2c] sm:$0xf] %vm535, %v2112
        %v2115 = vld [vmem:[%s556 + $0x8] sm:$0x1]
        %v2116 = vld [vmem:[%s556 + $0x18] sm:$0x1]
        %v2117 = vld [vmem:[%s556 + $0x28] sm:$0x1]
        %v2118 = vld [vmem:[%s556 + $0x38] sm:$0x1]
        %v2123 = vrot.slane %v2116, 7
        %v2124 = vsel %vm412, %v2123, %v2115
        %v2125 = vrot.slane %v2117, 6
        %v2126 = vsel %vm415, %v2125, %v2124
        %v2127 = vrot.slane %v2118, 5
        %v2128 = vsel %vm418, %v2127, %v2126
        %2129 = vrot.lane.b32.xlu0 %v2128, 56
        %v2130 = vpop.permute.xlu0 %2129
        %2132 = vst.msk [vmem:[#allocation2 + $0x2c] sm:$0xf] %vm554, %v2130
        %v2133 = vld [vmem:[%s359 + $0x1] sm:$0x1]
        %v2134 = vld [vmem:[%s359 + $0x11] sm:$0x1]
        %v2135 = vld [vmem:[%s359 + $0x21] sm:$0x1]
        %v2136 = vld [vmem:[%s359 + $0x31] sm:$0x1]
        %v2141 = vrot.slane %v2134, 7
        %v2142 = vsel %vm412, %v2141, %v2133
        %v2143 = vrot.slane %v2135, 6
        %v2144 = vsel %vm415, %v2143, %v2142
        %v2145 = vrot.slane %v2136, 5
        %v2146 = vsel %vm418, %v2145, %v2144
        %2147 = vrot.lane.b32.xlu0 %v2146, 127
        %v2148 = vpop.permute.xlu0 %2147
        %2150 = vst.msk [vmem:[#allocation2 + $0x30] sm:$0xf] %vm421, %v2148
        %v2151 = vld [vmem:[%s359 + $0x2] sm:$0x1]
        %v2152 = vld [vmem:[%s359 + $0x12] sm:$0x1]
        %v2153 = vld [vmem:[%s359 + $0x22] sm:$0x1]
        %v2154 = vld [vmem:[%s359 + $0x32] sm:$0x1]
        %v2159 = vrot.slane %v2152, 7
        %v2160 = vsel %vm412, %v2159, %v2151
        %v2161 = vrot.slane %v2153, 6
        %v2162 = vsel %vm415, %v2161, %v2160
        %v2163 = vrot.slane %v2154, 5
        %v2164 = vsel %vm418, %v2163, %v2162
        %2165 = vrot.lane.b32.xlu0 %v2164, 7
        %v2166 = vpop.permute.xlu0 %2165
        %2168 = vst.msk [vmem:[#allocation2 + $0x30] sm:$0xf] %vm440, %v2166
        %v2169 = vld [vmem:[%s359 + $0x3] sm:$0x1]
        %v2170 = vld [vmem:[%s359 + $0x13] sm:$0x1]
        %v2171 = vld [vmem:[%s359 + $0x23] sm:$0x1]
        %v2172 = vld [vmem:[%s359 + $0x33] sm:$0x1]
        %v2177 = vrot.slane %v2170, 7
        %v2178 = vsel %vm412, %v2177, %v2169
        %v2179 = vrot.slane %v2171, 6
        %v2180 = vsel %vm415, %v2179, %v2178
        %v2181 = vrot.slane %v2172, 5
        %v2182 = vsel %vm418, %v2181, %v2180
        %2183 = vrot.lane.b32.xlu0 %v2182, 15
        %v2184 = vpop.permute.xlu0 %2183
        %2186 = vst.msk [vmem:[#allocation2 + $0x30] sm:$0xf] %vm459, %v2184
        %v2187 = vld [vmem:[%s359 + $0x4] sm:$0x1]
        %v2188 = vld [vmem:[%s359 + $0x14] sm:$0x1]
        %v2189 = vld [vmem:[%s359 + $0x24] sm:$0x1]
        %v2190 = vld [vmem:[%s359 + $0x34] sm:$0x1]
        %v2195 = vrot.slane %v2188, 7
        %v2196 = vsel %vm412, %v2195, %v2187
        %v2197 = vrot.slane %v2189, 6
        %v2198 = vsel %vm415, %v2197, %v2196
        %v2199 = vrot.slane %v2190, 5
        %v2200 = vsel %vm418, %v2199, %v2198
        %2201 = vrot.lane.b32.xlu0 %v2200, 23
        %v2202 = vpop.permute.xlu0 %2201
        %2204 = vst.msk [vmem:[#allocation2 + $0x30] sm:$0xf] %vm478, %v2202
        %v2205 = vld [vmem:[%s359 + $0x5] sm:$0x1]
        %v2206 = vld [vmem:[%s359 + $0x15] sm:$0x1]
        %v2207 = vld [vmem:[%s359 + $0x25] sm:$0x1]
        %v2208 = vld [vmem:[%s359 + $0x35] sm:$0x1]
        %v2213 = vrot.slane %v2206, 7
        %v2214 = vsel %vm412, %v2213, %v2205
        %v2215 = vrot.slane %v2207, 6
        %v2216 = vsel %vm415, %v2215, %v2214
        %v2217 = vrot.slane %v2208, 5
        %v2218 = vsel %vm418, %v2217, %v2216
        %2219 = vrot.lane.b32.xlu0 %v2218, 31
        %v2220 = vpop.permute.xlu0 %2219
        %2222 = vst.msk [vmem:[#allocation2 + $0x30] sm:$0xf] %vm497, %v2220
        %v2223 = vld [vmem:[%s359 + $0x6] sm:$0x1]
        %v2224 = vld [vmem:[%s359 + $0x16] sm:$0x1]
        %v2225 = vld [vmem:[%s359 + $0x26] sm:$0x1]
        %v2226 = vld [vmem:[%s359 + $0x36] sm:$0x1]
        %v2231 = vrot.slane %v2224, 7
        %v2232 = vsel %vm412, %v2231, %v2223
        %v2233 = vrot.slane %v2225, 6
        %v2234 = vsel %vm415, %v2233, %v2232
        %v2235 = vrot.slane %v2226, 5
        %v2236 = vsel %vm418, %v2235, %v2234
        %2237 = vrot.lane.b32.xlu0 %v2236, 39
        %v2238 = vpop.permute.xlu0 %2237
        %2240 = vst.msk [vmem:[#allocation2 + $0x30] sm:$0xf] %vm516, %v2238
        %v2241 = vld [vmem:[%s359 + $0x7] sm:$0x1]
        %v2242 = vld [vmem:[%s359 + $0x17] sm:$0x1]
        %v2243 = vld [vmem:[%s359 + $0x27] sm:$0x1]
        %v2244 = vld [vmem:[%s359 + $0x37] sm:$0x1]
        %v2249 = vrot.slane %v2242, 7
        %v2250 = vsel %vm412, %v2249, %v2241
        %v2251 = vrot.slane %v2243, 6
        %v2252 = vsel %vm415, %v2251, %v2250
        %v2253 = vrot.slane %v2244, 5
        %v2254 = vsel %vm418, %v2253, %v2252
        %2255 = vrot.lane.b32.xlu0 %v2254, 47
        %v2256 = vpop.permute.xlu0 %2255
        %2258 = vst.msk [vmem:[#allocation2 + $0x30] sm:$0xf] %vm535, %v2256
        %v2259 = vld [vmem:[%s359 + $0x8] sm:$0x1]
        %v2260 = vld [vmem:[%s359 + $0x18] sm:$0x1]
        %v2261 = vld [vmem:[%s359 + $0x28] sm:$0x1]
        %v2262 = vld [vmem:[%s359 + $0x38] sm:$0x1]
        %v2267 = vrot.slane %v2260, 7
        %v2268 = vsel %vm412, %v2267, %v2259
        %v2269 = vrot.slane %v2261, 6
        %v2270 = vsel %vm415, %v2269, %v2268
        %v2271 = vrot.slane %v2262, 5
        %v2272 = vsel %vm418, %v2271, %v2270
        %2273 = vrot.lane.b32.xlu0 %v2272, 55
        %v2274 = vpop.permute.xlu0 %2273
        %2276 = vst.msk [vmem:[#allocation2 + $0x30] sm:$0xf] %vm554, %v2274
        %v2277 = vld [vmem:[%s556 + $0x1] sm:$0x1]
        %v2278 = vld [vmem:[%s556 + $0x11] sm:$0x1]
        %v2279 = vld [vmem:[%s556 + $0x21] sm:$0x1]
        %v2280 = vld [vmem:[%s556 + $0x31] sm:$0x1]
        %v2285 = vrot.slane %v2278, 7
        %v2286 = vsel %vm412, %v2285, %v2277
        %v2287 = vrot.slane %v2279, 6
        %v2288 = vsel %vm415, %v2287, %v2286
        %v2289 = vrot.slane %v2280, 5
        %v2290 = vsel %vm418, %v2289, %v2288
        %2291 = vrot.lane.b32.xlu0 %v2290, 127
        %v2292 = vpop.permute.xlu0 %2291
        %2294 = vst.msk [vmem:[#allocation2 + $0x34] sm:$0xf] %vm421, %v2292
        %v2295 = vld [vmem:[%s556 + $0x2] sm:$0x1]
        %v2296 = vld [vmem:[%s556 + $0x12] sm:$0x1]
        %v2297 = vld [vmem:[%s556 + $0x22] sm:$0x1]
        %v2298 = vld [vmem:[%s556 + $0x32] sm:$0x1]
        %v2303 = vrot.slane %v2296, 7
        %v2304 = vsel %vm412, %v2303, %v2295
        %v2305 = vrot.slane %v2297, 6
        %v2306 = vsel %vm415, %v2305, %v2304
        %v2307 = vrot.slane %v2298, 5
        %v2308 = vsel %vm418, %v2307, %v2306
        %2309 = vrot.lane.b32.xlu0 %v2308, 7
        %v2310 = vpop.permute.xlu0 %2309
        %2312 = vst.msk [vmem:[#allocation2 + $0x34] sm:$0xf] %vm440, %v2310
        %v2313 = vld [vmem:[%s556 + $0x3] sm:$0x1]
        %v2314 = vld [vmem:[%s556 + $0x13] sm:$0x1]
        %v2315 = vld [vmem:[%s556 + $0x23] sm:$0x1]
        %v2316 = vld [vmem:[%s556 + $0x33] sm:$0x1]
        %v2321 = vrot.slane %v2314, 7
        %v2322 = vsel %vm412, %v2321, %v2313
        %v2323 = vrot.slane %v2315, 6
        %v2324 = vsel %vm415, %v2323, %v2322
        %v2325 = vrot.slane %v2316, 5
        %v2326 = vsel %vm418, %v2325, %v2324
        %2327 = vrot.lane.b32.xlu0 %v2326, 15
        %v2328 = vpop.permute.xlu0 %2327
        %2330 = vst.msk [vmem:[#allocation2 + $0x34] sm:$0xf] %vm459, %v2328
        %v2331 = vld [vmem:[%s556 + $0x4] sm:$0x1]
        %v2332 = vld [vmem:[%s556 + $0x14] sm:$0x1]
        %v2333 = vld [vmem:[%s556 + $0x24] sm:$0x1]
        %v2334 = vld [vmem:[%s556 + $0x34] sm:$0x1]
        %v2339 = vrot.slane %v2332, 7
        %v2340 = vsel %vm412, %v2339, %v2331
        %v2341 = vrot.slane %v2333, 6
        %v2342 = vsel %vm415, %v2341, %v2340
        %v2343 = vrot.slane %v2334, 5
        %v2344 = vsel %vm418, %v2343, %v2342
        %2345 = vrot.lane.b32.xlu0 %v2344, 23
        %v2346 = vpop.permute.xlu0 %2345
        %2348 = vst.msk [vmem:[#allocation2 + $0x34] sm:$0xf] %vm478, %v2346
        %v2349 = vld [vmem:[%s556 + $0x5] sm:$0x1]
        %v2350 = vld [vmem:[%s556 + $0x15] sm:$0x1]
        %v2351 = vld [vmem:[%s556 + $0x25] sm:$0x1]
        %v2352 = vld [vmem:[%s556 + $0x35] sm:$0x1]
        %v2357 = vrot.slane %v2350, 7
        %v2358 = vsel %vm412, %v2357, %v2349
        %v2359 = vrot.slane %v2351, 6
        %v2360 = vsel %vm415, %v2359, %v2358
        %v2361 = vrot.slane %v2352, 5
        %v2362 = vsel %vm418, %v2361, %v2360
        %2363 = vrot.lane.b32.xlu0 %v2362, 31
        %v2364 = vpop.permute.xlu0 %2363
        %2366 = vst.msk [vmem:[#allocation2 + $0x34] sm:$0xf] %vm497, %v2364
        %v2367 = vld [vmem:[%s556 + $0x6] sm:$0x1]
        %v2368 = vld [vmem:[%s556 + $0x16] sm:$0x1]
        %v2369 = vld [vmem:[%s556 + $0x26] sm:$0x1]
        %v2370 = vld [vmem:[%s556 + $0x36] sm:$0x1]
        %v2375 = vrot.slane %v2368, 7
        %v2376 = vsel %vm412, %v2375, %v2367
        %v2377 = vrot.slane %v2369, 6
        %v2378 = vsel %vm415, %v2377, %v2376
        %v2379 = vrot.slane %v2370, 5
        %v2380 = vsel %vm418, %v2379, %v2378
        %2381 = vrot.lane.b32.xlu0 %v2380, 39
        %v2382 = vpop.permute.xlu0 %2381
        %2384 = vst.msk [vmem:[#allocation2 + $0x34] sm:$0xf] %vm516, %v2382
        %v2385 = vld [vmem:[%s556 + $0x7] sm:$0x1]
        %v2386 = vld [vmem:[%s556 + $0x17] sm:$0x1]
        %v2387 = vld [vmem:[%s556 + $0x27] sm:$0x1]
        %v2388 = vld [vmem:[%s556 + $0x37] sm:$0x1]
        %v2393 = vrot.slane %v2386, 7
        %v2394 = vsel %vm412, %v2393, %v2385
        %v2395 = vrot.slane %v2387, 6
        %v2396 = vsel %vm415, %v2395, %v2394
        %v2397 = vrot.slane %v2388, 5
        %v2398 = vsel %vm418, %v2397, %v2396
        %2399 = vrot.lane.b32.xlu0 %v2398, 47
        %v2400 = vpop.permute.xlu0 %2399
        %2402 = vst.msk [vmem:[#allocation2 + $0x34] sm:$0xf] %vm535, %v2400
        %v2403 = vld [vmem:[%s556 + $0x8] sm:$0x1]
        %v2404 = vld [vmem:[%s556 + $0x18] sm:$0x1]
        %v2405 = vld [vmem:[%s556 + $0x28] sm:$0x1]
        %v2406 = vld [vmem:[%s556 + $0x38] sm:$0x1]
        %v2411 = vrot.slane %v2404, 7
        %v2412 = vsel %vm412, %v2411, %v2403
        %v2413 = vrot.slane %v2405, 6
        %v2414 = vsel %vm415, %v2413, %v2412
        %v2415 = vrot.slane %v2406, 5
        %v2416 = vsel %vm418, %v2415, %v2414
        %2417 = vrot.lane.b32.xlu0 %v2416, 55
        %v2418 = vpop.permute.xlu0 %2417
        %2420 = vst.msk [vmem:[#allocation2 + $0x34] sm:$0xf] %vm554, %v2418
        %v2421 = vld [vmem:[%s359 + $0x1] sm:$0x1]
        %v2422 = vld [vmem:[%s359 + $0x11] sm:$0x1]
        %v2423 = vld [vmem:[%s359 + $0x21] sm:$0x1]
        %v2424 = vld [vmem:[%s359 + $0x31] sm:$0x1]
        %v2429 = vrot.slane %v2422, 7
        %v2430 = vsel %vm412, %v2429, %v2421
        %v2431 = vrot.slane %v2423, 6
        %v2432 = vsel %vm415, %v2431, %v2430
        %v2433 = vrot.slane %v2424, 5
        %v2434 = vsel %vm418, %v2433, %v2432
        %2435 = vrot.lane.b32.xlu0 %v2434, 126
        %v2436 = vpop.permute.xlu0 %2435
        %2438 = vst.msk [vmem:[#allocation2 + $0x38] sm:$0xf] %vm421, %v2436
        %v2439 = vld [vmem:[%s359 + $0x2] sm:$0x1]
        %v2440 = vld [vmem:[%s359 + $0x12] sm:$0x1]
        %v2441 = vld [vmem:[%s359 + $0x22] sm:$0x1]
        %v2442 = vld [vmem:[%s359 + $0x32] sm:$0x1]
        %v2447 = vrot.slane %v2440, 7
        %v2448 = vsel %vm412, %v2447, %v2439
        %v2449 = vrot.slane %v2441, 6
        %v2450 = vsel %vm415, %v2449, %v2448
        %v2451 = vrot.slane %v2442, 5
        %v2452 = vsel %vm418, %v2451, %v2450
        %2453 = vrot.lane.b32.xlu0 %v2452, 6
        %v2454 = vpop.permute.xlu0 %2453
        %2456 = vst.msk [vmem:[#allocation2 + $0x38] sm:$0xf] %vm440, %v2454
        %v2457 = vld [vmem:[%s359 + $0x3] sm:$0x1]
        %v2458 = vld [vmem:[%s359 + $0x13] sm:$0x1]
        %v2459 = vld [vmem:[%s359 + $0x23] sm:$0x1]
        %v2460 = vld [vmem:[%s359 + $0x33] sm:$0x1]
        %v2465 = vrot.slane %v2458, 7
        %v2466 = vsel %vm412, %v2465, %v2457
        %v2467 = vrot.slane %v2459, 6
        %v2468 = vsel %vm415, %v2467, %v2466
        %v2469 = vrot.slane %v2460, 5
        %v2470 = vsel %vm418, %v2469, %v2468
        %2471 = vrot.lane.b32.xlu0 %v2470, 14
        %v2472 = vpop.permute.xlu0 %2471
        %2474 = vst.msk [vmem:[#allocation2 + $0x38] sm:$0xf] %vm459, %v2472
        %v2475 = vld [vmem:[%s359 + $0x4] sm:$0x1]
        %v2476 = vld [vmem:[%s359 + $0x14] sm:$0x1]
        %v2477 = vld [vmem:[%s359 + $0x24] sm:$0x1]
        %v2478 = vld [vmem:[%s359 + $0x34] sm:$0x1]
        %v2483 = vrot.slane %v2476, 7
        %v2484 = vsel %vm412, %v2483, %v2475
        %v2485 = vrot.slane %v2477, 6
        %v2486 = vsel %vm415, %v2485, %v2484
        %v2487 = vrot.slane %v2478, 5
        %v2488 = vsel %vm418, %v2487, %v2486
        %2489 = vrot.lane.b32.xlu0 %v2488, 22
        %v2490 = vpop.permute.xlu0 %2489
        %2492 = vst.msk [vmem:[#allocation2 + $0x38] sm:$0xf] %vm478, %v2490
        %v2493 = vld [vmem:[%s359 + $0x5] sm:$0x1]
        %v2494 = vld [vmem:[%s359 + $0x15] sm:$0x1]
        %v2495 = vld [vmem:[%s359 + $0x25] sm:$0x1]
        %v2496 = vld [vmem:[%s359 + $0x35] sm:$0x1]
        %v2501 = vrot.slane %v2494, 7
        %v2502 = vsel %vm412, %v2501, %v2493
        %v2503 = vrot.slane %v2495, 6
        %v2504 = vsel %vm415, %v2503, %v2502
        %v2505 = vrot.slane %v2496, 5
        %v2506 = vsel %vm418, %v2505, %v2504
        %2507 = vrot.lane.b32.xlu0 %v2506, 30
        %v2508 = vpop.permute.xlu0 %2507
        %2510 = vst.msk [vmem:[#allocation2 + $0x38] sm:$0xf] %vm497, %v2508
        %v2511 = vld [vmem:[%s359 + $0x6] sm:$0x1]
        %v2512 = vld [vmem:[%s359 + $0x16] sm:$0x1]
        %v2513 = vld [vmem:[%s359 + $0x26] sm:$0x1]
        %v2514 = vld [vmem:[%s359 + $0x36] sm:$0x1]
        %v2519 = vrot.slane %v2512, 7
        %v2520 = vsel %vm412, %v2519, %v2511
        %v2521 = vrot.slane %v2513, 6
        %v2522 = vsel %vm415, %v2521, %v2520
        %v2523 = vrot.slane %v2514, 5
        %v2524 = vsel %vm418, %v2523, %v2522
        %2525 = vrot.lane.b32.xlu0 %v2524, 38
        %v2526 = vpop.permute.xlu0 %2525
        %2528 = vst.msk [vmem:[#allocation2 + $0x38] sm:$0xf] %vm516, %v2526
        %v2529 = vld [vmem:[%s359 + $0x7] sm:$0x1]
        %v2530 = vld [vmem:[%s359 + $0x17] sm:$0x1]
        %v2531 = vld [vmem:[%s359 + $0x27] sm:$0x1]
        %v2532 = vld [vmem:[%s359 + $0x37] sm:$0x1]
        %v2537 = vrot.slane %v2530, 7
        %v2538 = vsel %vm412, %v2537, %v2529
        %v2539 = vrot.slane %v2531, 6
        %v2540 = vsel %vm415, %v2539, %v2538
        %v2541 = vrot.slane %v2532, 5
        %v2542 = vsel %vm418, %v2541, %v2540
        %2543 = vrot.lane.b32.xlu0 %v2542, 46
        %v2544 = vpop.permute.xlu0 %2543
        %2546 = vst.msk [vmem:[#allocation2 + $0x38] sm:$0xf] %vm535, %v2544
        %v2547 = vld [vmem:[%s359 + $0x8] sm:$0x1]
        %v2548 = vld [vmem:[%s359 + $0x18] sm:$0x1]
        %v2549 = vld [vmem:[%s359 + $0x28] sm:$0x1]
        %v2550 = vld [vmem:[%s359 + $0x38] sm:$0x1]
        %v2555 = vrot.slane %v2548, 7
        %v2556 = vsel %vm412, %v2555, %v2547
        %v2557 = vrot.slane %v2549, 6
        %v2558 = vsel %vm415, %v2557, %v2556
        %v2559 = vrot.slane %v2550, 5
        %v2560 = vsel %vm418, %v2559, %v2558
        %2561 = vrot.lane.b32.xlu0 %v2560, 54
        %v2562 = vpop.permute.xlu0 %2561
        %2564 = vst.msk [vmem:[#allocation2 + $0x38] sm:$0xf] %vm554, %v2562
        %v2565 = vld [vmem:[%s1131 + $0x1] sm:$0x1]
        %v2566 = vld [vmem:[%s1131 + $0x11] sm:$0x1]
        %v2567 = vld [vmem:[%s1131 + $0x21] sm:$0x1]
        %v2568 = vld [vmem:[%s1131 + $0x31] sm:$0x1]
        %v2573 = vrot.slane %v2566, 7
        %v2574 = vsel %vm412, %v2573, %v2565
        %v2575 = vrot.slane %v2567, 6
        %v2576 = vsel %vm415, %v2575, %v2574
        %v2577 = vrot.slane %v2568, 5
        %v2578 = vsel %vm418, %v2577, %v2576
        %2580 = vst.msk [vmem:[#allocation2 + $0x3c] sm:$0xf] %vm421, %v2578
        %v2581 = vld [vmem:[%s1131 + $0x2] sm:$0x1]
        %v2582 = vld [vmem:[%s1131 + $0x12] sm:$0x1]
        %v2583 = vld [vmem:[%s1131 + $0x22] sm:$0x1]
        %v2584 = vld [vmem:[%s1131 + $0x32] sm:$0x1]
        %v2589 = vrot.slane %v2582, 7
        %v2590 = vsel %vm412, %v2589, %v2581
        %v2591 = vrot.slane %v2583, 6
        %v2592 = vsel %vm415, %v2591, %v2590
        %v2593 = vrot.slane %v2584, 5
        %v2594 = vsel %vm418, %v2593, %v2592
        %2595 = vrot.lane.b32.xlu0 %v2594, 8
        %v2596 = vpop.permute.xlu0 %2595
        %2598 = vst.msk [vmem:[#allocation2 + $0x3c] sm:$0xf] %vm440, %v2596
        %v2599 = vld [vmem:[%s1131 + $0x3] sm:$0x1]
        %v2600 = vld [vmem:[%s1131 + $0x13] sm:$0x1]
        %v2601 = vld [vmem:[%s1131 + $0x23] sm:$0x1]
        %v2602 = vld [vmem:[%s1131 + $0x33] sm:$0x1]
        %v2607 = vrot.slane %v2600, 7
        %v2608 = vsel %vm412, %v2607, %v2599
        %v2609 = vrot.slane %v2601, 6
        %v2610 = vsel %vm415, %v2609, %v2608
        %v2611 = vrot.slane %v2602, 5
        %v2612 = vsel %vm418, %v2611, %v2610
        %2613 = vrot.lane.b32.xlu0 %v2612, 16
        %v2614 = vpop.permute.xlu0 %2613
        %2616 = vst.msk [vmem:[#allocation2 + $0x3c] sm:$0xf] %vm459, %v2614
        %v2617 = vld [vmem:[%s1131 + $0x4] sm:$0x1]
        %v2618 = vld [vmem:[%s1131 + $0x14] sm:$0x1]
        %v2619 = vld [vmem:[%s1131 + $0x24] sm:$0x1]
        %v2620 = vld [vmem:[%s1131 + $0x34] sm:$0x1]
        %v2625 = vrot.slane %v2618, 7
        %v2626 = vsel %vm412, %v2625, %v2617
        %v2627 = vrot.slane %v2619, 6
        %v2628 = vsel %vm415, %v2627, %v2626
        %v2629 = vrot.slane %v2620, 5
        %v2630 = vsel %vm418, %v2629, %v2628
        %2631 = vrot.lane.b32.xlu0 %v2630, 24
        %v2632 = vpop.permute.xlu0 %2631
        %2634 = vst.msk [vmem:[#allocation2 + $0x3c] sm:$0xf] %vm478, %v2632
        %v2635 = vld [vmem:[%s1131 + $0x5] sm:$0x1]
        %v2636 = vld [vmem:[%s1131 + $0x15] sm:$0x1]
        %v2637 = vld [vmem:[%s1131 + $0x25] sm:$0x1]
        %v2638 = vld [vmem:[%s1131 + $0x35] sm:$0x1]
        %v2643 = vrot.slane %v2636, 7
        %v2644 = vsel %vm412, %v2643, %v2635
        %v2645 = vrot.slane %v2637, 6
        %v2646 = vsel %vm415, %v2645, %v2644
        %v2647 = vrot.slane %v2638, 5
        %v2648 = vsel %vm418, %v2647, %v2646
        %2649 = vrot.lane.b32.xlu0 %v2648, 32
        %v2650 = vpop.permute.xlu0 %2649
        %2652 = vst.msk [vmem:[#allocation2 + $0x3c] sm:$0xf] %vm497, %v2650
        %v2653 = vld [vmem:[%s1131 + $0x6] sm:$0x1]
        %v2654 = vld [vmem:[%s1131 + $0x16] sm:$0x1]
        %v2655 = vld [vmem:[%s1131 + $0x26] sm:$0x1]
        %v2656 = vld [vmem:[%s1131 + $0x36] sm:$0x1]
        %v2661 = vrot.slane %v2654, 7
        %v2662 = vsel %vm412, %v2661, %v2653
        %v2663 = vrot.slane %v2655, 6
        %v2664 = vsel %vm415, %v2663, %v2662
        %v2665 = vrot.slane %v2656, 5
        %v2666 = vsel %vm418, %v2665, %v2664
        %2667 = vrot.lane.b32.xlu0 %v2666, 40
        %v2668 = vpop.permute.xlu0 %2667
        %2670 = vst.msk [vmem:[#allocation2 + $0x3c] sm:$0xf] %vm516, %v2668
        %v2671 = vld [vmem:[%s1131 + $0x7] sm:$0x1]
        %v2672 = vld [vmem:[%s1131 + $0x17] sm:$0x1]
        %v2673 = vld [vmem:[%s1131 + $0x27] sm:$0x1]
        %v2674 = vld [vmem:[%s1131 + $0x37] sm:$0x1]
        %v2679 = vrot.slane %v2672, 7
        %v2680 = vsel %vm412, %v2679, %v2671
        %v2681 = vrot.slane %v2673, 6
        %v2682 = vsel %vm415, %v2681, %v2680
        %v2683 = vrot.slane %v2674, 5
        %v2684 = vsel %vm418, %v2683, %v2682
        %2685 = vrot.lane.b32.xlu0 %v2684, 48
        %v2686 = vpop.permute.xlu0 %2685
        %2688 = vst.msk [vmem:[#allocation2 + $0x3c] sm:$0xf] %vm535, %v2686
        %v2689 = vld [vmem:[%s1131 + $0x8] sm:$0x1]
        %v2690 = vld [vmem:[%s1131 + $0x18] sm:$0x1]
        %v2691 = vld [vmem:[%s1131 + $0x28] sm:$0x1]
        %v2692 = vld [vmem:[%s1131 + $0x38] sm:$0x1]
        %v2697 = vrot.slane %v2690, 7
        %v2698 = vsel %vm412, %v2697, %v2689
        %v2699 = vrot.slane %v2691, 6
        %v2700 = vsel %vm415, %v2699, %v2698
        %v2701 = vrot.slane %v2692, 5
        %v2702 = vsel %vm418, %v2701, %v2700
        %2703 = vrot.lane.b32.xlu0 %v2702, 56
        %v2704 = vpop.permute.xlu0 %2703
        %2706 = vst.msk [vmem:[#allocation2 + $0x3c] sm:$0xf] %vm554, %v2704
        %v2707 = vld [vmem:[%s1274 + $0x1] sm:$0x1]
        %v2708 = vld [vmem:[%s1274 + $0x11] sm:$0x1]
        %v2709 = vld [vmem:[%s1274 + $0x21] sm:$0x1]
        %v2710 = vld [vmem:[%s1274 + $0x31] sm:$0x1]
        %v2715 = vrot.slane %v2708, 7
        %v2716 = vsel %vm412, %v2715, %v2707
        %v2717 = vrot.slane %v2709, 6
        %v2718 = vsel %vm415, %v2717, %v2716
        %v2719 = vrot.slane %v2710, 5
        %v2720 = vsel %vm418, %v2719, %v2718
        %2722 = vst.msk [vmem:[#allocation2 + $0x40] sm:$0xf] %vm421, %v2720
        %v2723 = vld [vmem:[%s1274 + $0x2] sm:$0x1]
        %v2724 = vld [vmem:[%s1274 + $0x12] sm:$0x1]
        %v2725 = vld [vmem:[%s1274 + $0x22] sm:$0x1]
        %v2726 = vld [vmem:[%s1274 + $0x32] sm:$0x1]
        %v2731 = vrot.slane %v2724, 7
        %v2732 = vsel %vm412, %v2731, %v2723
        %v2733 = vrot.slane %v2725, 6
        %v2734 = vsel %vm415, %v2733, %v2732
        %v2735 = vrot.slane %v2726, 5
        %v2736 = vsel %vm418, %v2735, %v2734
        %2737 = vrot.lane.b32.xlu0 %v2736, 8
        %v2738 = vpop.permute.xlu0 %2737
        %2740 = vst.msk [vmem:[#allocation2 + $0x40] sm:$0xf] %vm440, %v2738
        %v2741 = vld [vmem:[%s1274 + $0x3] sm:$0x1]
        %v2742 = vld [vmem:[%s1274 + $0x13] sm:$0x1]
        %v2743 = vld [vmem:[%s1274 + $0x23] sm:$0x1]
        %v2744 = vld [vmem:[%s1274 + $0x33] sm:$0x1]
        %v2749 = vrot.slane %v2742, 7
        %v2750 = vsel %vm412, %v2749, %v2741
        %v2751 = vrot.slane %v2743, 6
        %v2752 = vsel %vm415, %v2751, %v2750
        %v2753 = vrot.slane %v2744, 5
        %v2754 = vsel %vm418, %v2753, %v2752
        %2755 = vrot.lane.b32.xlu0 %v2754, 16
        %v2756 = vpop.permute.xlu0 %2755
        %2758 = vst.msk [vmem:[#allocation2 + $0x40] sm:$0xf] %vm459, %v2756
        %v2759 = vld [vmem:[%s1274 + $0x4] sm:$0x1]
        %v2760 = vld [vmem:[%s1274 + $0x14] sm:$0x1]
        %v2761 = vld [vmem:[%s1274 + $0x24] sm:$0x1]
        %v2762 = vld [vmem:[%s1274 + $0x34] sm:$0x1]
        %v2767 = vrot.slane %v2760, 7
        %v2768 = vsel %vm412, %v2767, %v2759
        %v2769 = vrot.slane %v2761, 6
        %v2770 = vsel %vm415, %v2769, %v2768
        %v2771 = vrot.slane %v2762, 5
        %v2772 = vsel %vm418, %v2771, %v2770
        %2773 = vrot.lane.b32.xlu0 %v2772, 24
        %v2774 = vpop.permute.xlu0 %2773
        %2776 = vst.msk [vmem:[#allocation2 + $0x40] sm:$0xf] %vm478, %v2774
        %v2777 = vld [vmem:[%s1274 + $0x5] sm:$0x1]
        %v2778 = vld [vmem:[%s1274 + $0x15] sm:$0x1]
        %v2779 = vld [vmem:[%s1274 + $0x25] sm:$0x1]
        %v2780 = vld [vmem:[%s1274 + $0x35] sm:$0x1]
        %v2785 = vrot.slane %v2778, 7
        %v2786 = vsel %vm412, %v2785, %v2777
        %v2787 = vrot.slane %v2779, 6
        %v2788 = vsel %vm415, %v2787, %v2786
        %v2789 = vrot.slane %v2780, 5
        %v2790 = vsel %vm418, %v2789, %v2788
        %2791 = vrot.lane.b32.xlu0 %v2790, 32
        %v2792 = vpop.permute.xlu0 %2791
        %2794 = vst.msk [vmem:[#allocation2 + $0x40] sm:$0xf] %vm497, %v2792
        %v2795 = vld [vmem:[%s1274 + $0x6] sm:$0x1]
        %v2796 = vld [vmem:[%s1274 + $0x16] sm:$0x1]
        %v2797 = vld [vmem:[%s1274 + $0x26] sm:$0x1]
        %v2798 = vld [vmem:[%s1274 + $0x36] sm:$0x1]
        %v2803 = vrot.slane %v2796, 7
        %v2804 = vsel %vm412, %v2803, %v2795
        %v2805 = vrot.slane %v2797, 6
        %v2806 = vsel %vm415, %v2805, %v2804
        %v2807 = vrot.slane %v2798, 5
        %v2808 = vsel %vm418, %v2807, %v2806
        %2809 = vrot.lane.b32.xlu0 %v2808, 40
        %v2810 = vpop.permute.xlu0 %2809
        %2812 = vst.msk [vmem:[#allocation2 + $0x40] sm:$0xf] %vm516, %v2810
        %v2813 = vld [vmem:[%s1274 + $0x7] sm:$0x1]
        %v2814 = vld [vmem:[%s1274 + $0x17] sm:$0x1]
        %v2815 = vld [vmem:[%s1274 + $0x27] sm:$0x1]
        %v2816 = vld [vmem:[%s1274 + $0x37] sm:$0x1]
        %v2821 = vrot.slane %v2814, 7
        %v2822 = vsel %vm412, %v2821, %v2813
        %v2823 = vrot.slane %v2815, 6
        %v2824 = vsel %vm415, %v2823, %v2822
        %v2825 = vrot.slane %v2816, 5
        %v2826 = vsel %vm418, %v2825, %v2824
        %2827 = vrot.lane.b32.xlu0 %v2826, 48
        %v2828 = vpop.permute.xlu0 %2827
        %2830 = vst.msk [vmem:[#allocation2 + $0x40] sm:$0xf] %vm535, %v2828
        %v2831 = vld [vmem:[%s1274 + $0x8] sm:$0x1]
        %v2832 = vld [vmem:[%s1274 + $0x18] sm:$0x1]
        %v2833 = vld [vmem:[%s1274 + $0x28] sm:$0x1]
        %v2834 = vld [vmem:[%s1274 + $0x38] sm:$0x1]
        %v2839 = vrot.slane %v2832, 7
        %v2840 = vsel %vm412, %v2839, %v2831
        %v2841 = vrot.slane %v2833, 6
        %v2842 = vsel %vm415, %v2841, %v2840
        %v2843 = vrot.slane %v2834, 5
        %v2844 = vsel %vm418, %v2843, %v2842
        %2845 = vrot.lane.b32.xlu0 %v2844, 56
        %v2846 = vpop.permute.xlu0 %2845
        %2848 = vst.msk [vmem:[#allocation2 + $0x40] sm:$0xf] %vm554, %v2846
        %v2849 = vld [vmem:[%s1131 + $0x1] sm:$0x1]
        %v2850 = vld [vmem:[%s1131 + $0x11] sm:$0x1]
        %v2851 = vld [vmem:[%s1131 + $0x21] sm:$0x1]
        %v2852 = vld [vmem:[%s1131 + $0x31] sm:$0x1]
        %v2857 = vrot.slane %v2850, 7
        %v2858 = vsel %vm412, %v2857, %v2849
        %v2859 = vrot.slane %v2851, 6
        %v2860 = vsel %vm415, %v2859, %v2858
        %v2861 = vrot.slane %v2852, 5
        %v2862 = vsel %vm418, %v2861, %v2860
        %2863 = vrot.lane.b32.xlu0 %v2862, 127
        %v2864 = vpop.permute.xlu0 %2863
        %2866 = vst.msk [vmem:[#allocation2 + $0x44] sm:$0xf] %vm421, %v2864
        %v2867 = vld [vmem:[%s1131 + $0x2] sm:$0x1]
        %v2868 = vld [vmem:[%s1131 + $0x12] sm:$0x1]
        %v2869 = vld [vmem:[%s1131 + $0x22] sm:$0x1]
        %v2870 = vld [vmem:[%s1131 + $0x32] sm:$0x1]
        %v2875 = vrot.slane %v2868, 7
        %v2876 = vsel %vm412, %v2875, %v2867
        %v2877 = vrot.slane %v2869, 6
        %v2878 = vsel %vm415, %v2877, %v2876
        %v2879 = vrot.slane %v2870, 5
        %v2880 = vsel %vm418, %v2879, %v2878
        %2881 = vrot.lane.b32.xlu0 %v2880, 7
        %v2882 = vpop.permute.xlu0 %2881
        %2884 = vst.msk [vmem:[#allocation2 + $0x44] sm:$0xf] %vm440, %v2882
        %v2885 = vld [vmem:[%s1131 + $0x3] sm:$0x1]
        %v2886 = vld [vmem:[%s1131 + $0x13] sm:$0x1]
        %v2887 = vld [vmem:[%s1131 + $0x23] sm:$0x1]
        %v2888 = vld [vmem:[%s1131 + $0x33] sm:$0x1]
        %v2893 = vrot.slane %v2886, 7
        %v2894 = vsel %vm412, %v2893, %v2885
        %v2895 = vrot.slane %v2887, 6
        %v2896 = vsel %vm415, %v2895, %v2894
        %v2897 = vrot.slane %v2888, 5
        %v2898 = vsel %vm418, %v2897, %v2896
        %2899 = vrot.lane.b32.xlu0 %v2898, 15
        %v2900 = vpop.permute.xlu0 %2899
        %2902 = vst.msk [vmem:[#allocation2 + $0x44] sm:$0xf] %vm459, %v2900
        %v2903 = vld [vmem:[%s1131 + $0x4] sm:$0x1]
        %v2904 = vld [vmem:[%s1131 + $0x14] sm:$0x1]
        %v2905 = vld [vmem:[%s1131 + $0x24] sm:$0x1]
        %v2906 = vld [vmem:[%s1131 + $0x34] sm:$0x1]
        %v2911 = vrot.slane %v2904, 7
        %v2912 = vsel %vm412, %v2911, %v2903
        %v2913 = vrot.slane %v2905, 6
        %v2914 = vsel %vm415, %v2913, %v2912
        %v2915 = vrot.slane %v2906, 5
        %v2916 = vsel %vm418, %v2915, %v2914
        %2917 = vrot.lane.b32.xlu0 %v2916, 23
        %v2918 = vpop.permute.xlu0 %2917
        %2920 = vst.msk [vmem:[#allocation2 + $0x44] sm:$0xf] %vm478, %v2918
        %v2921 = vld [vmem:[%s1131 + $0x5] sm:$0x1]
        %v2922 = vld [vmem:[%s1131 + $0x15] sm:$0x1]
        %v2923 = vld [vmem:[%s1131 + $0x25] sm:$0x1]
        %v2924 = vld [vmem:[%s1131 + $0x35] sm:$0x1]
        %v2929 = vrot.slane %v2922, 7
        %v2930 = vsel %vm412, %v2929, %v2921
        %v2931 = vrot.slane %v2923, 6
        %v2932 = vsel %vm415, %v2931, %v2930
        %v2933 = vrot.slane %v2924, 5
        %v2934 = vsel %vm418, %v2933, %v2932
        %2935 = vrot.lane.b32.xlu0 %v2934, 31
        %v2936 = vpop.permute.xlu0 %2935
        %2938 = vst.msk [vmem:[#allocation2 + $0x44] sm:$0xf] %vm497, %v2936
        %v2939 = vld [vmem:[%s1131 + $0x6] sm:$0x1]
        %v2940 = vld [vmem:[%s1131 + $0x16] sm:$0x1]
        %v2941 = vld [vmem:[%s1131 + $0x26] sm:$0x1]
        %v2942 = vld [vmem:[%s1131 + $0x36] sm:$0x1]
        %v2947 = vrot.slane %v2940, 7
        %v2948 = vsel %vm412, %v2947, %v2939
        %v2949 = vrot.slane %v2941, 6
        %v2950 = vsel %vm415, %v2949, %v2948
        %v2951 = vrot.slane %v2942, 5
        %v2952 = vsel %vm418, %v2951, %v2950
        %2953 = vrot.lane.b32.xlu0 %v2952, 39
        %v2954 = vpop.permute.xlu0 %2953
        %2956 = vst.msk [vmem:[#allocation2 + $0x44] sm:$0xf] %vm516, %v2954
        %v2957 = vld [vmem:[%s1131 + $0x7] sm:$0x1]
        %v2958 = vld [vmem:[%s1131 + $0x17] sm:$0x1]
        %v2959 = vld [vmem:[%s1131 + $0x27] sm:$0x1]
        %v2960 = vld [vmem:[%s1131 + $0x37] sm:$0x1]
        %v2965 = vrot.slane %v2958, 7
        %v2966 = vsel %vm412, %v2965, %v2957
        %v2967 = vrot.slane %v2959, 6
        %v2968 = vsel %vm415, %v2967, %v2966
        %v2969 = vrot.slane %v2960, 5
        %v2970 = vsel %vm418, %v2969, %v2968
        %2971 = vrot.lane.b32.xlu0 %v2970, 47
        %v2972 = vpop.permute.xlu0 %2971
        %2974 = vst.msk [vmem:[#allocation2 + $0x44] sm:$0xf] %vm535, %v2972
        %v2975 = vld [vmem:[%s1131 + $0x8] sm:$0x1]
        %v2976 = vld [vmem:[%s1131 + $0x18] sm:$0x1]
        %v2977 = vld [vmem:[%s1131 + $0x28] sm:$0x1]
        %v2978 = vld [vmem:[%s1131 + $0x38] sm:$0x1]
        %v2983 = vrot.slane %v2976, 7
        %v2984 = vsel %vm412, %v2983, %v2975
        %v2985 = vrot.slane %v2977, 6
        %v2986 = vsel %vm415, %v2985, %v2984
        %v2987 = vrot.slane %v2978, 5
        %v2988 = vsel %vm418, %v2987, %v2986
        %2989 = vrot.lane.b32.xlu0 %v2988, 55
        %v2990 = vpop.permute.xlu0 %2989
        %2992 = vst.msk [vmem:[#allocation2 + $0x44] sm:$0xf] %vm554, %v2990
        %v2993 = vld [vmem:[%s1274 + $0x1] sm:$0x1]
        %v2994 = vld [vmem:[%s1274 + $0x11] sm:$0x1]
        %v2995 = vld [vmem:[%s1274 + $0x21] sm:$0x1]
        %v2996 = vld [vmem:[%s1274 + $0x31] sm:$0x1]
        %v3001 = vrot.slane %v2994, 7
        %v3002 = vsel %vm412, %v3001, %v2993
        %v3003 = vrot.slane %v2995, 6
        %v3004 = vsel %vm415, %v3003, %v3002
        %v3005 = vrot.slane %v2996, 5
        %v3006 = vsel %vm418, %v3005, %v3004
        %3007 = vrot.lane.b32.xlu0 %v3006, 127
        %v3008 = vpop.permute.xlu0 %3007
        %3010 = vst.msk [vmem:[#allocation2 + $0x48] sm:$0xf] %vm421, %v3008
        %v3011 = vld [vmem:[%s1274 + $0x2] sm:$0x1]
        %v3012 = vld [vmem:[%s1274 + $0x12] sm:$0x1]
        %v3013 = vld [vmem:[%s1274 + $0x22] sm:$0x1]
        %v3014 = vld [vmem:[%s1274 + $0x32] sm:$0x1]
        %v3019 = vrot.slane %v3012, 7
        %v3020 = vsel %vm412, %v3019, %v3011
        %v3021 = vrot.slane %v3013, 6
        %v3022 = vsel %vm415, %v3021, %v3020
        %v3023 = vrot.slane %v3014, 5
        %v3024 = vsel %vm418, %v3023, %v3022
        %3025 = vrot.lane.b32.xlu0 %v3024, 7
        %v3026 = vpop.permute.xlu0 %3025
        %3028 = vst.msk [vmem:[#allocation2 + $0x48] sm:$0xf] %vm440, %v3026
        %v3029 = vld [vmem:[%s1274 + $0x3] sm:$0x1]
        %v3030 = vld [vmem:[%s1274 + $0x13] sm:$0x1]
        %v3031 = vld [vmem:[%s1274 + $0x23] sm:$0x1]
        %v3032 = vld [vmem:[%s1274 + $0x33] sm:$0x1]
        %v3037 = vrot.slane %v3030, 7
        %v3038 = vsel %vm412, %v3037, %v3029
        %v3039 = vrot.slane %v3031, 6
        %v3040 = vsel %vm415, %v3039, %v3038
        %v3041 = vrot.slane %v3032, 5
        %v3042 = vsel %vm418, %v3041, %v3040
        %3043 = vrot.lane.b32.xlu0 %v3042, 15
        %v3044 = vpop.permute.xlu0 %3043
        %3046 = vst.msk [vmem:[#allocation2 + $0x48] sm:$0xf] %vm459, %v3044
        %v3047 = vld [vmem:[%s1274 + $0x4] sm:$0x1]
        %v3048 = vld [vmem:[%s1274 + $0x14] sm:$0x1]
        %v3049 = vld [vmem:[%s1274 + $0x24] sm:$0x1]
        %v3050 = vld [vmem:[%s1274 + $0x34] sm:$0x1]
        %v3055 = vrot.slane %v3048, 7
        %v3056 = vsel %vm412, %v3055, %v3047
        %v3057 = vrot.slane %v3049, 6
        %v3058 = vsel %vm415, %v3057, %v3056
        %v3059 = vrot.slane %v3050, 5
        %v3060 = vsel %vm418, %v3059, %v3058
        %3061 = vrot.lane.b32.xlu0 %v3060, 23
        %v3062 = vpop.permute.xlu0 %3061
        %3064 = vst.msk [vmem:[#allocation2 + $0x48] sm:$0xf] %vm478, %v3062
        %v3065 = vld [vmem:[%s1274 + $0x5] sm:$0x1]
        %v3066 = vld [vmem:[%s1274 + $0x15] sm:$0x1]
        %v3067 = vld [vmem:[%s1274 + $0x25] sm:$0x1]
        %v3068 = vld [vmem:[%s1274 + $0x35] sm:$0x1]
        %v3073 = vrot.slane %v3066, 7
        %v3074 = vsel %vm412, %v3073, %v3065
        %v3075 = vrot.slane %v3067, 6
        %v3076 = vsel %vm415, %v3075, %v3074
        %v3077 = vrot.slane %v3068, 5
        %v3078 = vsel %vm418, %v3077, %v3076
        %3079 = vrot.lane.b32.xlu0 %v3078, 31
        %v3080 = vpop.permute.xlu0 %3079
        %3082 = vst.msk [vmem:[#allocation2 + $0x48] sm:$0xf] %vm497, %v3080
        %v3083 = vld [vmem:[%s1274 + $0x6] sm:$0x1]
        %v3084 = vld [vmem:[%s1274 + $0x16] sm:$0x1]
        %v3085 = vld [vmem:[%s1274 + $0x26] sm:$0x1]
        %v3086 = vld [vmem:[%s1274 + $0x36] sm:$0x1]
        %v3091 = vrot.slane %v3084, 7
        %v3092 = vsel %vm412, %v3091, %v3083
        %v3093 = vrot.slane %v3085, 6
        %v3094 = vsel %vm415, %v3093, %v3092
        %v3095 = vrot.slane %v3086, 5
        %v3096 = vsel %vm418, %v3095, %v3094
        %3097 = vrot.lane.b32.xlu0 %v3096, 39
        %v3098 = vpop.permute.xlu0 %3097
        %3100 = vst.msk [vmem:[#allocation2 + $0x48] sm:$0xf] %vm516, %v3098
        %v3101 = vld [vmem:[%s1274 + $0x7] sm:$0x1]
        %v3102 = vld [vmem:[%s1274 + $0x17] sm:$0x1]
        %v3103 = vld [vmem:[%s1274 + $0x27] sm:$0x1]
        %v3104 = vld [vmem:[%s1274 + $0x37] sm:$0x1]
        %v3109 = vrot.slane %v3102, 7
        %v3110 = vsel %vm412, %v3109, %v3101
        %v3111 = vrot.slane %v3103, 6
        %v3112 = vsel %vm415, %v3111, %v3110
        %v3113 = vrot.slane %v3104, 5
        %v3114 = vsel %vm418, %v3113, %v3112
        %3115 = vrot.lane.b32.xlu0 %v3114, 47
        %v3116 = vpop.permute.xlu0 %3115
        %3118 = vst.msk [vmem:[#allocation2 + $0x48] sm:$0xf] %vm535, %v3116
        %v3119 = vld [vmem:[%s1274 + $0x8] sm:$0x1]
        %v3120 = vld [vmem:[%s1274 + $0x18] sm:$0x1]
        %v3121 = vld [vmem:[%s1274 + $0x28] sm:$0x1]
        %v3122 = vld [vmem:[%s1274 + $0x38] sm:$0x1]
        %v3127 = vrot.slane %v3120, 7
        %v3128 = vsel %vm412, %v3127, %v3119
        %v3129 = vrot.slane %v3121, 6
        %v3130 = vsel %vm415, %v3129, %v3128
        %v3131 = vrot.slane %v3122, 5
        %v3132 = vsel %vm418, %v3131, %v3130
        %3133 = vrot.lane.b32.xlu0 %v3132, 55
        %v3134 = vpop.permute.xlu0 %3133
        %3136 = vst.msk [vmem:[#allocation2 + $0x48] sm:$0xf] %vm554, %v3134
        %v3137 = vld [vmem:[%s1131 + $0x1] sm:$0x1]
        %v3138 = vld [vmem:[%s1131 + $0x11] sm:$0x1]
        %v3139 = vld [vmem:[%s1131 + $0x21] sm:$0x1]
        %v3140 = vld [vmem:[%s1131 + $0x31] sm:$0x1]
        %v3145 = vrot.slane %v3138, 7
        %v3146 = vsel %vm412, %v3145, %v3137
        %v3147 = vrot.slane %v3139, 6
        %v3148 = vsel %vm415, %v3147, %v3146
        %v3149 = vrot.slane %v3140, 5
        %v3150 = vsel %vm418, %v3149, %v3148
        %3151 = vrot.lane.b32.xlu0 %v3150, 126
        %v3152 = vpop.permute.xlu0 %3151
        %3154 = vst.msk [vmem:[#allocation2 + $0x4c] sm:$0xf] %vm421, %v3152
        %v3155 = vld [vmem:[%s1131 + $0x2] sm:$0x1]
        %v3156 = vld [vmem:[%s1131 + $0x12] sm:$0x1]
        %v3157 = vld [vmem:[%s1131 + $0x22] sm:$0x1]
        %v3158 = vld [vmem:[%s1131 + $0x32] sm:$0x1]
        %v3163 = vrot.slane %v3156, 7
        %v3164 = vsel %vm412, %v3163, %v3155
        %v3165 = vrot.slane %v3157, 6
        %v3166 = vsel %vm415, %v3165, %v3164
        %v3167 = vrot.slane %v3158, 5
        %v3168 = vsel %vm418, %v3167, %v3166
        %3169 = vrot.lane.b32.xlu0 %v3168, 6
        %v3170 = vpop.permute.xlu0 %3169
        %3172 = vst.msk [vmem:[#allocation2 + $0x4c] sm:$0xf] %vm440, %v3170
        %v3173 = vld [vmem:[%s1131 + $0x3] sm:$0x1]
        %v3174 = vld [vmem:[%s1131 + $0x13] sm:$0x1]
        %v3175 = vld [vmem:[%s1131 + $0x23] sm:$0x1]
        %v3176 = vld [vmem:[%s1131 + $0x33] sm:$0x1]
        %v3181 = vrot.slane %v3174, 7
        %v3182 = vsel %vm412, %v3181, %v3173
        %v3183 = vrot.slane %v3175, 6
        %v3184 = vsel %vm415, %v3183, %v3182
        %v3185 = vrot.slane %v3176, 5
        %v3186 = vsel %vm418, %v3185, %v3184
        %3187 = vrot.lane.b32.xlu0 %v3186, 14
        %v3188 = vpop.permute.xlu0 %3187
        %3190 = vst.msk [vmem:[#allocation2 + $0x4c] sm:$0xf] %vm459, %v3188
        %v3191 = vld [vmem:[%s1131 + $0x4] sm:$0x1]
        %v3192 = vld [vmem:[%s1131 + $0x14] sm:$0x1]
        %v3193 = vld [vmem:[%s1131 + $0x24] sm:$0x1]
        %v3194 = vld [vmem:[%s1131 + $0x34] sm:$0x1]
        %v3199 = vrot.slane %v3192, 7
        %v3200 = vsel %vm412, %v3199, %v3191
        %v3201 = vrot.slane %v3193, 6
        %v3202 = vsel %vm415, %v3201, %v3200
        %v3203 = vrot.slane %v3194, 5
        %v3204 = vsel %vm418, %v3203, %v3202
        %3205 = vrot.lane.b32.xlu0 %v3204, 22
        %v3206 = vpop.permute.xlu0 %3205
        %3208 = vst.msk [vmem:[#allocation2 + $0x4c] sm:$0xf] %vm478, %v3206
        %v3209 = vld [vmem:[%s1131 + $0x5] sm:$0x1]
        %v3210 = vld [vmem:[%s1131 + $0x15] sm:$0x1]
        %v3211 = vld [vmem:[%s1131 + $0x25] sm:$0x1]
        %v3212 = vld [vmem:[%s1131 + $0x35] sm:$0x1]
        %v3217 = vrot.slane %v3210, 7
        %v3218 = vsel %vm412, %v3217, %v3209
        %v3219 = vrot.slane %v3211, 6
        %v3220 = vsel %vm415, %v3219, %v3218
        %v3221 = vrot.slane %v3212, 5
        %v3222 = vsel %vm418, %v3221, %v3220
        %3223 = vrot.lane.b32.xlu0 %v3222, 30
        %v3224 = vpop.permute.xlu0 %3223
        %3226 = vst.msk [vmem:[#allocation2 + $0x4c] sm:$0xf] %vm497, %v3224
        %v3227 = vld [vmem:[%s1131 + $0x6] sm:$0x1]
        %v3228 = vld [vmem:[%s1131 + $0x16] sm:$0x1]
        %v3229 = vld [vmem:[%s1131 + $0x26] sm:$0x1]
        %v3230 = vld [vmem:[%s1131 + $0x36] sm:$0x1]
        %v3235 = vrot.slane %v3228, 7
        %v3236 = vsel %vm412, %v3235, %v3227
        %v3237 = vrot.slane %v3229, 6
        %v3238 = vsel %vm415, %v3237, %v3236
        %v3239 = vrot.slane %v3230, 5
        %v3240 = vsel %vm418, %v3239, %v3238
        %3241 = vrot.lane.b32.xlu0 %v3240, 38
        %v3242 = vpop.permute.xlu0 %3241
        %3244 = vst.msk [vmem:[#allocation2 + $0x4c] sm:$0xf] %vm516, %v3242
        %v3245 = vld [vmem:[%s1131 + $0x7] sm:$0x1]
        %v3246 = vld [vmem:[%s1131 + $0x17] sm:$0x1]
        %v3247 = vld [vmem:[%s1131 + $0x27] sm:$0x1]
        %v3248 = vld [vmem:[%s1131 + $0x37] sm:$0x1]
        %v3253 = vrot.slane %v3246, 7
        %v3254 = vsel %vm412, %v3253, %v3245
        %v3255 = vrot.slane %v3247, 6
        %v3256 = vsel %vm415, %v3255, %v3254
        %v3257 = vrot.slane %v3248, 5
        %v3258 = vsel %vm418, %v3257, %v3256
        %3259 = vrot.lane.b32.xlu0 %v3258, 46
        %v3260 = vpop.permute.xlu0 %3259
        %3262 = vst.msk [vmem:[#allocation2 + $0x4c] sm:$0xf] %vm535, %v3260
        %v3263 = vld [vmem:[%s1131 + $0x8] sm:$0x1]
        %v3264 = vld [vmem:[%s1131 + $0x18] sm:$0x1]
        %v3265 = vld [vmem:[%s1131 + $0x28] sm:$0x1]
        %v3266 = vld [vmem:[%s1131 + $0x38] sm:$0x1]
        %v3271 = vrot.slane %v3264, 7
        %v3272 = vsel %vm412, %v3271, %v3263
        %v3273 = vrot.slane %v3265, 6
        %v3274 = vsel %vm415, %v3273, %v3272
        %v3275 = vrot.slane %v3266, 5
        %v3276 = vsel %vm418, %v3275, %v3274
        %3277 = vrot.lane.b32.xlu0 %v3276, 54
        %v3278 = vpop.permute.xlu0 %3277
        %3280 = vst.msk [vmem:[#allocation2 + $0x4c] sm:$0xf] %vm554, %v3278
        %v3281 = vld [vmem:[%s359 + $0x2] sm:$0x1]
        %v3282 = vld [vmem:[%s359 + $0x12] sm:$0x1]
        %v3283 = vld [vmem:[%s359 + $0x22] sm:$0x1]
        %v3284 = vld [vmem:[%s359 + $0x32] sm:$0x1]
        %v3289 = vrot.slane %v3282, 7
        %v3290 = vsel %vm412, %v3289, %v3281
        %v3291 = vrot.slane %v3283, 6
        %v3292 = vsel %vm415, %v3291, %v3290
        %v3293 = vrot.slane %v3284, 5
        %v3294 = vsel %vm418, %v3293, %v3292
        %3296 = vst.msk [vmem:[#allocation2 + $0x50] sm:$0xf] %vm421, %v3294
        %v3297 = vld [vmem:[%s359 + $0x3] sm:$0x1]
        %v3298 = vld [vmem:[%s359 + $0x13] sm:$0x1]
        %v3299 = vld [vmem:[%s359 + $0x23] sm:$0x1]
        %v3300 = vld [vmem:[%s359 + $0x33] sm:$0x1]
        %v3305 = vrot.slane %v3298, 7
        %v3306 = vsel %vm412, %v3305, %v3297
        %v3307 = vrot.slane %v3299, 6
        %v3308 = vsel %vm415, %v3307, %v3306
        %v3309 = vrot.slane %v3300, 5
        %v3310 = vsel %vm418, %v3309, %v3308
        %3311 = vrot.lane.b32.xlu0 %v3310, 8
        %v3312 = vpop.permute.xlu0 %3311
        %3314 = vst.msk [vmem:[#allocation2 + $0x50] sm:$0xf] %vm440, %v3312
        %v3315 = vld [vmem:[%s359 + $0x4] sm:$0x1]
        %v3316 = vld [vmem:[%s359 + $0x14] sm:$0x1]
        %v3317 = vld [vmem:[%s359 + $0x24] sm:$0x1]
        %v3318 = vld [vmem:[%s359 + $0x34] sm:$0x1]
        %v3323 = vrot.slane %v3316, 7
        %v3324 = vsel %vm412, %v3323, %v3315
        %v3325 = vrot.slane %v3317, 6
        %v3326 = vsel %vm415, %v3325, %v3324
        %v3327 = vrot.slane %v3318, 5
        %v3328 = vsel %vm418, %v3327, %v3326
        %3329 = vrot.lane.b32.xlu0 %v3328, 16
        %v3330 = vpop.permute.xlu0 %3329
        %3332 = vst.msk [vmem:[#allocation2 + $0x50] sm:$0xf] %vm459, %v3330
        %v3333 = vld [vmem:[%s359 + $0x5] sm:$0x1]
        %v3334 = vld [vmem:[%s359 + $0x15] sm:$0x1]
        %v3335 = vld [vmem:[%s359 + $0x25] sm:$0x1]
        %v3336 = vld [vmem:[%s359 + $0x35] sm:$0x1]
        %v3341 = vrot.slane %v3334, 7
        %v3342 = vsel %vm412, %v3341, %v3333
        %v3343 = vrot.slane %v3335, 6
        %v3344 = vsel %vm415, %v3343, %v3342
        %v3345 = vrot.slane %v3336, 5
        %v3346 = vsel %vm418, %v3345, %v3344
        %3347 = vrot.lane.b32.xlu0 %v3346, 24
        %v3348 = vpop.permute.xlu0 %3347
        %3350 = vst.msk [vmem:[#allocation2 + $0x50] sm:$0xf] %vm478, %v3348
        %v3351 = vld [vmem:[%s359 + $0x6] sm:$0x1]
        %v3352 = vld [vmem:[%s359 + $0x16] sm:$0x1]
        %v3353 = vld [vmem:[%s359 + $0x26] sm:$0x1]
        %v3354 = vld [vmem:[%s359 + $0x36] sm:$0x1]
        %v3359 = vrot.slane %v3352, 7
        %v3360 = vsel %vm412, %v3359, %v3351
        %v3361 = vrot.slane %v3353, 6
        %v3362 = vsel %vm415, %v3361, %v3360
        %v3363 = vrot.slane %v3354, 5
        %v3364 = vsel %vm418, %v3363, %v3362
        %3365 = vrot.lane.b32.xlu0 %v3364, 32
        %v3366 = vpop.permute.xlu0 %3365
        %3368 = vst.msk [vmem:[#allocation2 + $0x50] sm:$0xf] %vm497, %v3366
        %v3369 = vld [vmem:[%s359 + $0x7] sm:$0x1]
        %v3370 = vld [vmem:[%s359 + $0x17] sm:$0x1]
        %v3371 = vld [vmem:[%s359 + $0x27] sm:$0x1]
        %v3372 = vld [vmem:[%s359 + $0x37] sm:$0x1]
        %v3377 = vrot.slane %v3370, 7
        %v3378 = vsel %vm412, %v3377, %v3369
        %v3379 = vrot.slane %v3371, 6
        %v3380 = vsel %vm415, %v3379, %v3378
        %v3381 = vrot.slane %v3372, 5
        %v3382 = vsel %vm418, %v3381, %v3380
        %3383 = vrot.lane.b32.xlu0 %v3382, 40
        %v3384 = vpop.permute.xlu0 %3383
        %3386 = vst.msk [vmem:[#allocation2 + $0x50] sm:$0xf] %vm516, %v3384
        %v3387 = vld [vmem:[%s359 + $0x8] sm:$0x1]
        %v3388 = vld [vmem:[%s359 + $0x18] sm:$0x1]
        %v3389 = vld [vmem:[%s359 + $0x28] sm:$0x1]
        %v3390 = vld [vmem:[%s359 + $0x38] sm:$0x1]
        %v3395 = vrot.slane %v3388, 7
        %v3396 = vsel %vm412, %v3395, %v3387
        %v3397 = vrot.slane %v3389, 6
        %v3398 = vsel %vm415, %v3397, %v3396
        %v3399 = vrot.slane %v3390, 5
        %v3400 = vsel %vm418, %v3399, %v3398
        %3401 = vrot.lane.b32.xlu0 %v3400, 48
        %v3402 = vpop.permute.xlu0 %3401
        %3404 = vst.msk [vmem:[#allocation2 + $0x50] sm:$0xf] %vm535, %v3402
        %v3405 = vld [vmem:[%s359 + $0x9] sm:$0x1]
        %v3406 = vld [vmem:[%s359 + $0x19] sm:$0x1]
        %v3407 = vld [vmem:[%s359 + $0x29] sm:$0x1]
        %v3408 = vld [vmem:[%s359 + $0x39] sm:$0x1]
        %v3413 = vrot.slane %v3406, 7
        %v3414 = vsel %vm412, %v3413, %v3405
        %v3415 = vrot.slane %v3407, 6
        %v3416 = vsel %vm415, %v3415, %v3414
        %v3417 = vrot.slane %v3408, 5
        %v3418 = vsel %vm418, %v3417, %v3416
        %3419 = vrot.lane.b32.xlu0 %v3418, 56
        %v3420 = vpop.permute.xlu0 %3419
        %3422 = vst.msk [vmem:[#allocation2 + $0x50] sm:$0xf] %vm554, %v3420
        %v3423 = vld [vmem:[%s556 + $0x2] sm:$0x1]
        %v3424 = vld [vmem:[%s556 + $0x12] sm:$0x1]
        %v3425 = vld [vmem:[%s556 + $0x22] sm:$0x1]
        %v3426 = vld [vmem:[%s556 + $0x32] sm:$0x1]
        %v3431 = vrot.slane %v3424, 7
        %v3432 = vsel %vm412, %v3431, %v3423
        %v3433 = vrot.slane %v3425, 6
        %v3434 = vsel %vm415, %v3433, %v3432
        %v3435 = vrot.slane %v3426, 5
        %v3436 = vsel %vm418, %v3435, %v3434
        %3438 = vst.msk [vmem:[#allocation2 + $0x54] sm:$0xf] %vm421, %v3436
        %v3439 = vld [vmem:[%s556 + $0x3] sm:$0x1]
        %v3440 = vld [vmem:[%s556 + $0x13] sm:$0x1]
        %v3441 = vld [vmem:[%s556 + $0x23] sm:$0x1]
        %v3442 = vld [vmem:[%s556 + $0x33] sm:$0x1]
        %v3447 = vrot.slane %v3440, 7
        %v3448 = vsel %vm412, %v3447, %v3439
        %v3449 = vrot.slane %v3441, 6
        %v3450 = vsel %vm415, %v3449, %v3448
        %v3451 = vrot.slane %v3442, 5
        %v3452 = vsel %vm418, %v3451, %v3450
        %3453 = vrot.lane.b32.xlu0 %v3452, 8
        %v3454 = vpop.permute.xlu0 %3453
        %3456 = vst.msk [vmem:[#allocation2 + $0x54] sm:$0xf] %vm440, %v3454
        %v3457 = vld [vmem:[%s556 + $0x4] sm:$0x1]
        %v3458 = vld [vmem:[%s556 + $0x14] sm:$0x1]
        %v3459 = vld [vmem:[%s556 + $0x24] sm:$0x1]
        %v3460 = vld [vmem:[%s556 + $0x34] sm:$0x1]
        %v3465 = vrot.slane %v3458, 7
        %v3466 = vsel %vm412, %v3465, %v3457
        %v3467 = vrot.slane %v3459, 6
        %v3468 = vsel %vm415, %v3467, %v3466
        %v3469 = vrot.slane %v3460, 5
        %v3470 = vsel %vm418, %v3469, %v3468
        %3471 = vrot.lane.b32.xlu0 %v3470, 16
        %v3472 = vpop.permute.xlu0 %3471
        %3474 = vst.msk [vmem:[#allocation2 + $0x54] sm:$0xf] %vm459, %v3472
        %v3475 = vld [vmem:[%s556 + $0x5] sm:$0x1]
        %v3476 = vld [vmem:[%s556 + $0x15] sm:$0x1]
        %v3477 = vld [vmem:[%s556 + $0x25] sm:$0x1]
        %v3478 = vld [vmem:[%s556 + $0x35] sm:$0x1]
        %v3483 = vrot.slane %v3476, 7
        %v3484 = vsel %vm412, %v3483, %v3475
        %v3485 = vrot.slane %v3477, 6
        %v3486 = vsel %vm415, %v3485, %v3484
        %v3487 = vrot.slane %v3478, 5
        %v3488 = vsel %vm418, %v3487, %v3486
        %3489 = vrot.lane.b32.xlu0 %v3488, 24
        %v3490 = vpop.permute.xlu0 %3489
        %3492 = vst.msk [vmem:[#allocation2 + $0x54] sm:$0xf] %vm478, %v3490
        %v3493 = vld [vmem:[%s556 + $0x6] sm:$0x1]
        %v3494 = vld [vmem:[%s556 + $0x16] sm:$0x1]
        %v3495 = vld [vmem:[%s556 + $0x26] sm:$0x1]
        %v3496 = vld [vmem:[%s556 + $0x36] sm:$0x1]
        %v3501 = vrot.slane %v3494, 7
        %v3502 = vsel %vm412, %v3501, %v3493
        %v3503 = vrot.slane %v3495, 6
        %v3504 = vsel %vm415, %v3503, %v3502
        %v3505 = vrot.slane %v3496, 5
        %v3506 = vsel %vm418, %v3505, %v3504
        %3507 = vrot.lane.b32.xlu0 %v3506, 32
        %v3508 = vpop.permute.xlu0 %3507
        %3510 = vst.msk [vmem:[#allocation2 + $0x54] sm:$0xf] %vm497, %v3508
        %v3511 = vld [vmem:[%s556 + $0x7] sm:$0x1]
        %v3512 = vld [vmem:[%s556 + $0x17] sm:$0x1]
        %v3513 = vld [vmem:[%s556 + $0x27] sm:$0x1]
        %v3514 = vld [vmem:[%s556 + $0x37] sm:$0x1]
        %v3519 = vrot.slane %v3512, 7
        %v3520 = vsel %vm412, %v3519, %v3511
        %v3521 = vrot.slane %v3513, 6
        %v3522 = vsel %vm415, %v3521, %v3520
        %v3523 = vrot.slane %v3514, 5
        %v3524 = vsel %vm418, %v3523, %v3522
        %3525 = vrot.lane.b32.xlu0 %v3524, 40
        %v3526 = vpop.permute.xlu0 %3525
        %3528 = vst.msk [vmem:[#allocation2 + $0x54] sm:$0xf] %vm516, %v3526
        %v3529 = vld [vmem:[%s556 + $0x8] sm:$0x1]
        %v3530 = vld [vmem:[%s556 + $0x18] sm:$0x1]
        %v3531 = vld [vmem:[%s556 + $0x28] sm:$0x1]
        %v3532 = vld [vmem:[%s556 + $0x38] sm:$0x1]
        %v3537 = vrot.slane %v3530, 7
        %v3538 = vsel %vm412, %v3537, %v3529
        %v3539 = vrot.slane %v3531, 6
        %v3540 = vsel %vm415, %v3539, %v3538
        %v3541 = vrot.slane %v3532, 5
        %v3542 = vsel %vm418, %v3541, %v3540
        %3543 = vrot.lane.b32.xlu0 %v3542, 48
        %v3544 = vpop.permute.xlu0 %3543
        %3546 = vst.msk [vmem:[#allocation2 + $0x54] sm:$0xf] %vm535, %v3544
        %v3547 = vld [vmem:[%s556 + $0x9] sm:$0x1]
        %v3548 = vld [vmem:[%s556 + $0x19] sm:$0x1]
        %v3549 = vld [vmem:[%s556 + $0x29] sm:$0x1]
        %v3550 = vld [vmem:[%s556 + $0x39] sm:$0x1]
        %v3555 = vrot.slane %v3548, 7
        %v3556 = vsel %vm412, %v3555, %v3547
        %v3557 = vrot.slane %v3549, 6
        %v3558 = vsel %vm415, %v3557, %v3556
        %v3559 = vrot.slane %v3550, 5
        %v3560 = vsel %vm418, %v3559, %v3558
        %3561 = vrot.lane.b32.xlu0 %v3560, 56
        %v3562 = vpop.permute.xlu0 %3561
        %3564 = vst.msk [vmem:[#allocation2 + $0x54] sm:$0xf] %vm554, %v3562
        %v3565 = vld [vmem:[%s359 + $0x2] sm:$0x1]
        %v3566 = vld [vmem:[%s359 + $0x12] sm:$0x1]
        %v3567 = vld [vmem:[%s359 + $0x22] sm:$0x1]
        %v3568 = vld [vmem:[%s359 + $0x32] sm:$0x1]
        %v3573 = vrot.slane %v3566, 7
        %v3574 = vsel %vm412, %v3573, %v3565
        %v3575 = vrot.slane %v3567, 6
        %v3576 = vsel %vm415, %v3575, %v3574
        %v3577 = vrot.slane %v3568, 5
        %v3578 = vsel %vm418, %v3577, %v3576
        %3579 = vrot.lane.b32.xlu0 %v3578, 127
        %v3580 = vpop.permute.xlu0 %3579
        %3582 = vst.msk [vmem:[#allocation2 + $0x58] sm:$0xf] %vm421, %v3580
        %v3583 = vld [vmem:[%s359 + $0x3] sm:$0x1]
        %v3584 = vld [vmem:[%s359 + $0x13] sm:$0x1]
        %v3585 = vld [vmem:[%s359 + $0x23] sm:$0x1]
        %v3586 = vld [vmem:[%s359 + $0x33] sm:$0x1]
        %v3591 = vrot.slane %v3584, 7
        %v3592 = vsel %vm412, %v3591, %v3583
        %v3593 = vrot.slane %v3585, 6
        %v3594 = vsel %vm415, %v3593, %v3592
        %v3595 = vrot.slane %v3586, 5
        %v3596 = vsel %vm418, %v3595, %v3594
        %3597 = vrot.lane.b32.xlu0 %v3596, 7
        %v3598 = vpop.permute.xlu0 %3597
        %3600 = vst.msk [vmem:[#allocation2 + $0x58] sm:$0xf] %vm440, %v3598
        %v3601 = vld [vmem:[%s359 + $0x4] sm:$0x1]
        %v3602 = vld [vmem:[%s359 + $0x14] sm:$0x1]
        %v3603 = vld [vmem:[%s359 + $0x24] sm:$0x1]
        %v3604 = vld [vmem:[%s359 + $0x34] sm:$0x1]
        %v3609 = vrot.slane %v3602, 7
        %v3610 = vsel %vm412, %v3609, %v3601
        %v3611 = vrot.slane %v3603, 6
        %v3612 = vsel %vm415, %v3611, %v3610
        %v3613 = vrot.slane %v3604, 5
        %v3614 = vsel %vm418, %v3613, %v3612
        %3615 = vrot.lane.b32.xlu0 %v3614, 15
        %v3616 = vpop.permute.xlu0 %3615
        %3618 = vst.msk [vmem:[#allocation2 + $0x58] sm:$0xf] %vm459, %v3616
        %v3619 = vld [vmem:[%s359 + $0x5] sm:$0x1]
        %v3620 = vld [vmem:[%s359 + $0x15] sm:$0x1]
        %v3621 = vld [vmem:[%s359 + $0x25] sm:$0x1]
        %v3622 = vld [vmem:[%s359 + $0x35] sm:$0x1]
        %v3627 = vrot.slane %v3620, 7
        %v3628 = vsel %vm412, %v3627, %v3619
        %v3629 = vrot.slane %v3621, 6
        %v3630 = vsel %vm415, %v3629, %v3628
        %v3631 = vrot.slane %v3622, 5
        %v3632 = vsel %vm418, %v3631, %v3630
        %3633 = vrot.lane.b32.xlu0 %v3632, 23
        %v3634 = vpop.permute.xlu0 %3633
        %3636 = vst.msk [vmem:[#allocation2 + $0x58] sm:$0xf] %vm478, %v3634
        %v3637 = vld [vmem:[%s359 + $0x6] sm:$0x1]
        %v3638 = vld [vmem:[%s359 + $0x16] sm:$0x1]
        %v3639 = vld [vmem:[%s359 + $0x26] sm:$0x1]
        %v3640 = vld [vmem:[%s359 + $0x36] sm:$0x1]
        %v3645 = vrot.slane %v3638, 7
        %v3646 = vsel %vm412, %v3645, %v3637
        %v3647 = vrot.slane %v3639, 6
        %v3648 = vsel %vm415, %v3647, %v3646
        %v3649 = vrot.slane %v3640, 5
        %v3650 = vsel %vm418, %v3649, %v3648
        %3651 = vrot.lane.b32.xlu0 %v3650, 31
        %v3652 = vpop.permute.xlu0 %3651
        %3654 = vst.msk [vmem:[#allocation2 + $0x58] sm:$0xf] %vm497, %v3652
        %v3655 = vld [vmem:[%s359 + $0x7] sm:$0x1]
        %v3656 = vld [vmem:[%s359 + $0x17] sm:$0x1]
        %v3657 = vld [vmem:[%s359 + $0x27] sm:$0x1]
        %v3658 = vld [vmem:[%s359 + $0x37] sm:$0x1]
        %v3663 = vrot.slane %v3656, 7
        %v3664 = vsel %vm412, %v3663, %v3655
        %v3665 = vrot.slane %v3657, 6
        %v3666 = vsel %vm415, %v3665, %v3664
        %v3667 = vrot.slane %v3658, 5
        %v3668 = vsel %vm418, %v3667, %v3666
        %3669 = vrot.lane.b32.xlu0 %v3668, 39
        %v3670 = vpop.permute.xlu0 %3669
        %3672 = vst.msk [vmem:[#allocation2 + $0x58] sm:$0xf] %vm516, %v3670
        %v3673 = vld [vmem:[%s359 + $0x8] sm:$0x1]
        %v3674 = vld [vmem:[%s359 + $0x18] sm:$0x1]
        %v3675 = vld [vmem:[%s359 + $0x28] sm:$0x1]
        %v3676 = vld [vmem:[%s359 + $0x38] sm:$0x1]
        %v3681 = vrot.slane %v3674, 7
        %v3682 = vsel %vm412, %v3681, %v3673
        %v3683 = vrot.slane %v3675, 6
        %v3684 = vsel %vm415, %v3683, %v3682
        %v3685 = vrot.slane %v3676, 5
        %v3686 = vsel %vm418, %v3685, %v3684
        %3687 = vrot.lane.b32.xlu0 %v3686, 47
        %v3688 = vpop.permute.xlu0 %3687
        %3690 = vst.msk [vmem:[#allocation2 + $0x58] sm:$0xf] %vm535, %v3688
        %v3691 = vld [vmem:[%s359 + $0x9] sm:$0x1]
        %v3692 = vld [vmem:[%s359 + $0x19] sm:$0x1]
        %v3693 = vld [vmem:[%s359 + $0x29] sm:$0x1]
        %v3694 = vld [vmem:[%s359 + $0x39] sm:$0x1]
        %v3699 = vrot.slane %v3692, 7
        %v3700 = vsel %vm412, %v3699, %v3691
        %v3701 = vrot.slane %v3693, 6
        %v3702 = vsel %vm415, %v3701, %v3700
        %v3703 = vrot.slane %v3694, 5
        %v3704 = vsel %vm418, %v3703, %v3702
        %3705 = vrot.lane.b32.xlu0 %v3704, 55
        %v3706 = vpop.permute.xlu0 %3705
        %3708 = vst.msk [vmem:[#allocation2 + $0x58] sm:$0xf] %vm554, %v3706
        %v3709 = vld [vmem:[%s556 + $0x2] sm:$0x1]
        %v3710 = vld [vmem:[%s556 + $0x12] sm:$0x1]
        %v3711 = vld [vmem:[%s556 + $0x22] sm:$0x1]
        %v3712 = vld [vmem:[%s556 + $0x32] sm:$0x1]
        %v3717 = vrot.slane %v3710, 7
        %v3718 = vsel %vm412, %v3717, %v3709
        %v3719 = vrot.slane %v3711, 6
        %v3720 = vsel %vm415, %v3719, %v3718
        %v3721 = vrot.slane %v3712, 5
        %v3722 = vsel %vm418, %v3721, %v3720
        %3723 = vrot.lane.b32.xlu0 %v3722, 127
        %v3724 = vpop.permute.xlu0 %3723
        %3726 = vst.msk [vmem:[#allocation2 + $0x5c] sm:$0xf] %vm421, %v3724
        %v3727 = vld [vmem:[%s556 + $0x3] sm:$0x1]
        %v3728 = vld [vmem:[%s556 + $0x13] sm:$0x1]
        %v3729 = vld [vmem:[%s556 + $0x23] sm:$0x1]
        %v3730 = vld [vmem:[%s556 + $0x33] sm:$0x1]
        %v3735 = vrot.slane %v3728, 7
        %v3736 = vsel %vm412, %v3735, %v3727
        %v3737 = vrot.slane %v3729, 6
        %v3738 = vsel %vm415, %v3737, %v3736
        %v3739 = vrot.slane %v3730, 5
        %v3740 = vsel %vm418, %v3739, %v3738
        %3741 = vrot.lane.b32.xlu0 %v3740, 7
        %v3742 = vpop.permute.xlu0 %3741
        %3744 = vst.msk [vmem:[#allocation2 + $0x5c] sm:$0xf] %vm440, %v3742
        %v3745 = vld [vmem:[%s556 + $0x4] sm:$0x1]
        %v3746 = vld [vmem:[%s556 + $0x14] sm:$0x1]
        %v3747 = vld [vmem:[%s556 + $0x24] sm:$0x1]
        %v3748 = vld [vmem:[%s556 + $0x34] sm:$0x1]
        %v3753 = vrot.slane %v3746, 7
        %v3754 = vsel %vm412, %v3753, %v3745
        %v3755 = vrot.slane %v3747, 6
        %v3756 = vsel %vm415, %v3755, %v3754
        %v3757 = vrot.slane %v3748, 5
        %v3758 = vsel %vm418, %v3757, %v3756
        %3759 = vrot.lane.b32.xlu0 %v3758, 15
        %v3760 = vpop.permute.xlu0 %3759
        %3762 = vst.msk [vmem:[#allocation2 + $0x5c] sm:$0xf] %vm459, %v3760
        %v3763 = vld [vmem:[%s556 + $0x5] sm:$0x1]
        %v3764 = vld [vmem:[%s556 + $0x15] sm:$0x1]
        %v3765 = vld [vmem:[%s556 + $0x25] sm:$0x1]
        %v3766 = vld [vmem:[%s556 + $0x35] sm:$0x1]
        %v3771 = vrot.slane %v3764, 7
        %v3772 = vsel %vm412, %v3771, %v3763
        %v3773 = vrot.slane %v3765, 6
        %v3774 = vsel %vm415, %v3773, %v3772
        %v3775 = vrot.slane %v3766, 5
        %v3776 = vsel %vm418, %v3775, %v3774
        %3777 = vrot.lane.b32.xlu0 %v3776, 23
        %v3778 = vpop.permute.xlu0 %3777
        %3780 = vst.msk [vmem:[#allocation2 + $0x5c] sm:$0xf] %vm478, %v3778
        %v3781 = vld [vmem:[%s556 + $0x6] sm:$0x1]
        %v3782 = vld [vmem:[%s556 + $0x16] sm:$0x1]
        %v3783 = vld [vmem:[%s556 + $0x26] sm:$0x1]
        %v3784 = vld [vmem:[%s556 + $0x36] sm:$0x1]
        %v3789 = vrot.slane %v3782, 7
        %v3790 = vsel %vm412, %v3789, %v3781
        %v3791 = vrot.slane %v3783, 6
        %v3792 = vsel %vm415, %v3791, %v3790
        %v3793 = vrot.slane %v3784, 5
        %v3794 = vsel %vm418, %v3793, %v3792
        %3795 = vrot.lane.b32.xlu0 %v3794, 31
        %v3796 = vpop.permute.xlu0 %3795
        %3798 = vst.msk [vmem:[#allocation2 + $0x5c] sm:$0xf] %vm497, %v3796
        %v3799 = vld [vmem:[%s556 + $0x7] sm:$0x1]
        %v3800 = vld [vmem:[%s556 + $0x17] sm:$0x1]
        %v3801 = vld [vmem:[%s556 + $0x27] sm:$0x1]
        %v3802 = vld [vmem:[%s556 + $0x37] sm:$0x1]
        %v3807 = vrot.slane %v3800, 7
        %v3808 = vsel %vm412, %v3807, %v3799
        %v3809 = vrot.slane %v3801, 6
        %v3810 = vsel %vm415, %v3809, %v3808
        %v3811 = vrot.slane %v3802, 5
        %v3812 = vsel %vm418, %v3811, %v3810
        %3813 = vrot.lane.b32.xlu0 %v3812, 39
        %v3814 = vpop.permute.xlu0 %3813
        %3816 = vst.msk [vmem:[#allocation2 + $0x5c] sm:$0xf] %vm516, %v3814
        %v3817 = vld [vmem:[%s556 + $0x8] sm:$0x1]
        %v3818 = vld [vmem:[%s556 + $0x18] sm:$0x1]
        %v3819 = vld [vmem:[%s556 + $0x28] sm:$0x1]
        %v3820 = vld [vmem:[%s556 + $0x38] sm:$0x1]
        %v3825 = vrot.slane %v3818, 7
        %v3826 = vsel %vm412, %v3825, %v3817
        %v3827 = vrot.slane %v3819, 6
        %v3828 = vsel %vm415, %v3827, %v3826
        %v3829 = vrot.slane %v3820, 5
        %v3830 = vsel %vm418, %v3829, %v3828
        %3831 = vrot.lane.b32.xlu0 %v3830, 47
        %v3832 = vpop.permute.xlu0 %3831
        %3834 = vst.msk [vmem:[#allocation2 + $0x5c] sm:$0xf] %vm535, %v3832
        %v3835 = vld [vmem:[%s556 + $0x9] sm:$0x1]
        %v3836 = vld [vmem:[%s556 + $0x19] sm:$0x1]
        %v3837 = vld [vmem:[%s556 + $0x29] sm:$0x1]
        %v3838 = vld [vmem:[%s556 + $0x39] sm:$0x1]
        %v3843 = vrot.slane %v3836, 7
        %v3844 = vsel %vm412, %v3843, %v3835
        %v3845 = vrot.slane %v3837, 6
        %v3846 = vsel %vm415, %v3845, %v3844
        %v3847 = vrot.slane %v3838, 5
        %v3848 = vsel %vm418, %v3847, %v3846
        %3849 = vrot.lane.b32.xlu0 %v3848, 55
        %v3850 = vpop.permute.xlu0 %3849
        %3852 = vst.msk [vmem:[#allocation2 + $0x5c] sm:$0xf] %vm554, %v3850
        %v3853 = vld [vmem:[%s359 + $0x2] sm:$0x1]
        %v3854 = vld [vmem:[%s359 + $0x12] sm:$0x1]
        %v3855 = vld [vmem:[%s359 + $0x22] sm:$0x1]
        %v3856 = vld [vmem:[%s359 + $0x32] sm:$0x1]
        %v3861 = vrot.slane %v3854, 7
        %v3862 = vsel %vm412, %v3861, %v3853
        %v3863 = vrot.slane %v3855, 6
        %v3864 = vsel %vm415, %v3863, %v3862
        %v3865 = vrot.slane %v3856, 5
        %v3866 = vsel %vm418, %v3865, %v3864
        %3867 = vrot.lane.b32.xlu0 %v3866, 126
        %v3868 = vpop.permute.xlu0 %3867
        %3870 = vst.msk [vmem:[#allocation2 + $0x60] sm:$0xf] %vm421, %v3868
        %v3871 = vld [vmem:[%s359 + $0x3] sm:$0x1]
        %v3872 = vld [vmem:[%s359 + $0x13] sm:$0x1]
        %v3873 = vld [vmem:[%s359 + $0x23] sm:$0x1]
        %v3874 = vld [vmem:[%s359 + $0x33] sm:$0x1]
        %v3879 = vrot.slane %v3872, 7
        %v3880 = vsel %vm412, %v3879, %v3871
        %v3881 = vrot.slane %v3873, 6
        %v3882 = vsel %vm415, %v3881, %v3880
        %v3883 = vrot.slane %v3874, 5
        %v3884 = vsel %vm418, %v3883, %v3882
        %3885 = vrot.lane.b32.xlu0 %v3884, 6
        %v3886 = vpop.permute.xlu0 %3885
        %3888 = vst.msk [vmem:[#allocation2 + $0x60] sm:$0xf] %vm440, %v3886
        %v3889 = vld [vmem:[%s359 + $0x4] sm:$0x1]
        %v3890 = vld [vmem:[%s359 + $0x14] sm:$0x1]
        %v3891 = vld [vmem:[%s359 + $0x24] sm:$0x1]
        %v3892 = vld [vmem:[%s359 + $0x34] sm:$0x1]
        %v3897 = vrot.slane %v3890, 7
        %v3898 = vsel %vm412, %v3897, %v3889
        %v3899 = vrot.slane %v3891, 6
        %v3900 = vsel %vm415, %v3899, %v3898
        %v3901 = vrot.slane %v3892, 5
        %v3902 = vsel %vm418, %v3901, %v3900
        %3903 = vrot.lane.b32.xlu0 %v3902, 14
        %v3904 = vpop.permute.xlu0 %3903
        %3906 = vst.msk [vmem:[#allocation2 + $0x60] sm:$0xf] %vm459, %v3904
        %v3907 = vld [vmem:[%s359 + $0x5] sm:$0x1]
        %v3908 = vld [vmem:[%s359 + $0x15] sm:$0x1]
        %v3909 = vld [vmem:[%s359 + $0x25] sm:$0x1]
        %v3910 = vld [vmem:[%s359 + $0x35] sm:$0x1]
        %v3915 = vrot.slane %v3908, 7
        %v3916 = vsel %vm412, %v3915, %v3907
        %v3917 = vrot.slane %v3909, 6
        %v3918 = vsel %vm415, %v3917, %v3916
        %v3919 = vrot.slane %v3910, 5
        %v3920 = vsel %vm418, %v3919, %v3918
        %3921 = vrot.lane.b32.xlu0 %v3920, 22
        %v3922 = vpop.permute.xlu0 %3921
        %3924 = vst.msk [vmem:[#allocation2 + $0x60] sm:$0xf] %vm478, %v3922
        %v3925 = vld [vmem:[%s359 + $0x6] sm:$0x1]
        %v3926 = vld [vmem:[%s359 + $0x16] sm:$0x1]
        %v3927 = vld [vmem:[%s359 + $0x26] sm:$0x1]
        %v3928 = vld [vmem:[%s359 + $0x36] sm:$0x1]
        %v3933 = vrot.slane %v3926, 7
        %v3934 = vsel %vm412, %v3933, %v3925
        %v3935 = vrot.slane %v3927, 6
        %v3936 = vsel %vm415, %v3935, %v3934
        %v3937 = vrot.slane %v3928, 5
        %v3938 = vsel %vm418, %v3937, %v3936
        %3939 = vrot.lane.b32.xlu0 %v3938, 30
        %v3940 = vpop.permute.xlu0 %3939
        %3942 = vst.msk [vmem:[#allocation2 + $0x60] sm:$0xf] %vm497, %v3940
        %v3943 = vld [vmem:[%s359 + $0x7] sm:$0x1]
        %v3944 = vld [vmem:[%s359 + $0x17] sm:$0x1]
        %v3945 = vld [vmem:[%s359 + $0x27] sm:$0x1]
        %v3946 = vld [vmem:[%s359 + $0x37] sm:$0x1]
        %v3951 = vrot.slane %v3944, 7
        %v3952 = vsel %vm412, %v3951, %v3943
        %v3953 = vrot.slane %v3945, 6
        %v3954 = vsel %vm415, %v3953, %v3952
        %v3955 = vrot.slane %v3946, 5
        %v3956 = vsel %vm418, %v3955, %v3954
        %3957 = vrot.lane.b32.xlu0 %v3956, 38
        %v3958 = vpop.permute.xlu0 %3957
        %3960 = vst.msk [vmem:[#allocation2 + $0x60] sm:$0xf] %vm516, %v3958
        %v3961 = vld [vmem:[%s359 + $0x8] sm:$0x1]
        %v3962 = vld [vmem:[%s359 + $0x18] sm:$0x1]
        %v3963 = vld [vmem:[%s359 + $0x28] sm:$0x1]
        %v3964 = vld [vmem:[%s359 + $0x38] sm:$0x1]
        %v3969 = vrot.slane %v3962, 7
        %v3970 = vsel %vm412, %v3969, %v3961
        %v3971 = vrot.slane %v3963, 6
        %v3972 = vsel %vm415, %v3971, %v3970
        %v3973 = vrot.slane %v3964, 5
        %v3974 = vsel %vm418, %v3973, %v3972
        %3975 = vrot.lane.b32.xlu0 %v3974, 46
        %v3976 = vpop.permute.xlu0 %3975
        %3978 = vst.msk [vmem:[#allocation2 + $0x60] sm:$0xf] %vm535, %v3976
        %v3979 = vld [vmem:[%s359 + $0x9] sm:$0x1]
        %v3980 = vld [vmem:[%s359 + $0x19] sm:$0x1]
        %v3981 = vld [vmem:[%s359 + $0x29] sm:$0x1]
        %v3982 = vld [vmem:[%s359 + $0x39] sm:$0x1]
        %v3987 = vrot.slane %v3980, 7
        %v3988 = vsel %vm412, %v3987, %v3979
        %v3989 = vrot.slane %v3981, 6
        %v3990 = vsel %vm415, %v3989, %v3988
        %v3991 = vrot.slane %v3982, 5
        %v3992 = vsel %vm418, %v3991, %v3990
        %3993 = vrot.lane.b32.xlu0 %v3992, 54
        %v3994 = vpop.permute.xlu0 %3993
        %3996 = vst.msk [vmem:[#allocation2 + $0x60] sm:$0xf] %vm554, %v3994
        %v3997 = vld [vmem:[%s1] sm:$0xff]
        %v3998 = vld [vmem:[#allocation2] sm:$0xff]
        %v3999 = vld [vmem:[#allocation2 + $0x8] sm:$0xff]
        %v4000 = vld [vmem:[#allocation2 + $0x10] sm:$0xff]
        %v4001 = vld [vmem:[#allocation2 + $0x18] sm:$0xff]
        %v4002 = vld [vmem:[#allocation2 + $0x20] sm:$0xff]
        %v4003 = vld [vmem:[#allocation2 + $0x28] sm:$0xff]
        %v4004 = vld [vmem:[#allocation2 + $0x30] sm:$0xff]
        %v4005 = vld [vmem:[#allocation2 + $0x38] sm:$0xff]
        %v4006 = vld [vmem:[#allocation2 + $0x40] sm:$0xff]
        %v4007 = vld [vmem:[#allocation2 + $0x48] sm:$0xff]
        %v4008 = vld [vmem:[#allocation2 + $0x50] sm:$0xff]
        %v4009 = vld [vmem:[#allocation2 + $0x58] sm:$0xff]
        %v4010 = vld [vmem:[#allocation2 + $0x60] sm:$0xf]
        %v4011 = vld [vmem:[%s2] sm:$0xff]
        %4013 = vset.pattern.permute.xlu0 0
        %4014 = vperm.xlu0 %4013, %v4011
        %v4015 = vpop.permute.xlu0 %4014
        %vm4017 = vcmask 818176
        %v4019 = vsel %vm4017, %v3997, 0
        %vm4021 = vcmask 1043456
        %v4023 = vsel %vm4021, %v4010, 0
        %4025 = vmatprep.subr.mxu0 0.0
        %4026 = vmatpush1.msra.mxu0 %v3998
        %4027 = vmatprep.subr.mxu0 0.0
        %4028 = vmatpush1.msra.mxu0 %v3999
        %4029 = vmatprep.subr.mxu0 0.0
        %4030 = vmatpush1.msra.mxu0 %v4000
        %4031 = vmatprep.subr.mxu0 0.0
        %4032 = vmatpush1.msra.mxu0 %v4001
        %4033 = vmatprep.subr.mxu0 0.0
        %4034 = vmatpush1.msra.mxu0 %v4002
        %4035 = vmatprep.subr.mxu0 0.0
        %4036 = vmatpush1.msra.mxu0 %v4003
        %4037 = vmatprep.subr.mxu0 0.0
        %4038 = vmatpush1.msra.mxu0 %v4004
        %4039 = vmatprep.subr.mxu0 0.0
        %4040 = vmatpush1.msra.mxu0 %v4005
        %4041 = vmatprep.subr.mxu0 0.0
        %4042 = vmatpush1.msra.mxu0 %v4006
        %4043 = vmatprep.subr.mxu0 0.0
        %4044 = vmatpush1.msra.mxu0 %v4007
        %4045 = vmatprep.subr.mxu0 0.0
        %4046 = vmatpush1.msra.mxu0 %v4008
        %4047 = vmatprep.subr.mxu0 0.0
        %4048 = vmatpush1.msra.mxu0 %v4009
        %4049 = vmatprep.subr.mxu0 0.0
        %4050 = vmatpush1.msra.mxu0 %v4023
        %4051 = vmatprep.subr.mxu0 0.0
        %4052 = vmatpush1.msra.mxu0 0.0
        %4053 = vmatprep.subr.mxu0 0.0
        %4054 = vmatpush1.msra.mxu0 0.0
        %4055 = vmatprep.subr.mxu0 0.0
        %4056 = vmatpush1.msra.mxu0 0.0
        %4057 = vmatprep.subr.mxu0 0.0
        %4058 = vmatpush1.msra.mxu0 0.0
        %4059 = vmatprep.subr.mxu0 0.0
        %4060 = vmatpush1.msra.mxu0 0.0
        %4061 = vmatprep.subr.mxu0 0.0
        %4062 = vmatpush1.msra.mxu0 0.0
        %4063 = vmatprep.subr.mxu0 0.0
        %4064 = vmatpush1.msra.mxu0 0.0
        %4065 = vmatprep.subr.mxu0 0.0
        %4066 = vmatpush1.msra.mxu0 0.0
        %4067 = vmatprep.subr.mxu0 0.0
        %4068 = vmatpush1.msra.mxu0 0.0
        %4069 = vmatprep.subr.mxu0 0.0
        %4070 = vmatpush1.msra.mxu0 0.0
        %4071 = vmatprep.subr.mxu0 0.0
        %4072 = vmatpush1.msra.mxu0 0.0
        %4073 = vmatprep.subr.mxu0 0.0
        %4074 = vmatpush1.msra.mxu0 0.0
        %4075 = vmatprep.subr.mxu0 0.0
        %4076 = vmatpush1.msra.mxu0 0.0
        %4077 = vmatprep.subr.mxu0 0.0
        %4078 = vmatpush1.msra.mxu0 0.0
        %4079 = vmatprep.subr.mxu0 0.0
        %4080 = vmatpush1.msra.mxu0 0.0
        %4081 = vmatprep.subr.mxu0 0.0
        %4082 = vmatpush1.msra.mxu0 0.0
        %4083 = vmatprep.subr.mxu0 0.0
        %4084 = vmatpush1.msra.mxu0 0.0
        %4085 = vmatprep.subr.mxu0 0.0
        %4086 = vmatpush1.msra.mxu0 0.0
        %4087 = vmatprep.subr.mxu0 0.0
        %4088 = vmatpush1.msra.mxu0 0.0
        %4089 = vmatprep.mubr.f32.mxu0 0.0
        %4090 = vmatmul.mubr.f32.gmra.mrb[0].mxu0 %v4019
        %v4091 = vpop.f32.mrb[0].mxu0
        %v4092 = vadd.f32 %v4015, %v4091
        %v4093 = vpop.f32.mrb[0].mxu0
        %4094 = vdwg.mxu0
        %vm4095 = vcmask 523264
        %4096 = vst.msk [vmem:[%s394] sm:$0xff] %vm4095, %v4092
        %v4097 = vsel %vm4095, %v4092, 0.0
        %4098 = vadd.xlane.f32.xlu0 %v4097
        %v4099 = vpop.xlane.xlu0 %4098
        %vm4100 = vcmask 7168
        %4101 = vst.msk [vmem:[%s398] sm:$0xff] %vm4100, %v4099
        %v4102 = vmul.f32 %v4092, %v4092
        %v4103 = vsel %vm4095, %v4102, 0.0
        %4104 = vadd.xlane.f32.xlu0 %v4103
        %v4105 = vpop.xlane.xlu0 %4104
        %4106 = vst.msk [vmem:[%s402] sm:$0xff] %vm4100, %v4105
        %p4107 = scmp.lt.s32.totalorder %s17, 1
        %s4108 = scalar_select %p4107, %s17, 1
        %s4109 = smul.addr %s4108, 8
        %s4110 = scalar_lea.vmem %s3, %s4109
        %p4111 = scmp.lt.s32.totalorder %s17, 1
        %s4112 = scalar_select %p4111, %s17, 1
        %s4113 = smul.addr %s4112, 8
        %s4114 = scalar_lea.vmem %s4, %s4113
        %p4115 = scmp.lt.s32.totalorder %s17, 1
        %s4116 = scalar_select %p4115, %s17, 1
        %s4117 = smul.addr %s4116, 8
        %s4118 = scalar_lea.vmem %s5, %s4117
        // Predicated region
        $region71: #{a_call__.2} parent=65 // pred_check
          %p4119 = pneg %p103
        $region72: #{a_call__.2} parent=65 // pred_check_branch
          %4121 = sbr.rel (%p4119) target = $region74
        $region73: #{a_call__.2} parent=65 // pred_region
          _
        $region74: #{a_call__.2} parent=65 // pred_fallthru
          _
        // Predicated region
        $region75: #{a_call__.2} parent=65 // pred_check
          %p4122 = pneg %p129
        $region76: #{a_call__.2} parent=65 // pred_check_branch
          %4124 = sbr.rel (%p4122) target = $region78
        $region77: #{a_call__.2} parent=65 // pred_region
          _
        $region78: #{a_call__.2} parent=65 // pred_fallthru
          _
        // Predicated region
        $region79: #{a_call__.2} parent=65 // pred_check
          %p4125 = pneg %p155
        $region80: #{a_call__.2} parent=65 // pred_check_branch
          %4127 = sbr.rel (%p4125) target = $region82
        $region81: #{a_call__.2} parent=65 // pred_region
          _
        $region82: #{a_call__.2} parent=65 // pred_fallthru
          _
      $region66: #{a_call__.2} parent=5 // pred_fallthru
        _
      %p4128 = scmp.le.s32.totalorder 2, %s12
      // Predicated region
      $region83: #{a_call__.2} parent=5 // pred_check
        %p4129 = pneg %p4128
      $region84: #{a_call__.2} parent=5 // pred_check_branch
        %4131 = sbr.rel (%p4129) target = $region86
      $region85: #{a_call__.2} parent=5 // pred_region
        %s4132 = ssub.s32 %s12, 2
        // Predicated region
        $region87: #{a_call__.2} parent=85 // pred_check
          %p4133 = pneg %p109
        $region88: #{a_call__.2} parent=85 // pred_check_branch
          %4135 = sbr.rel (%p4133) target = $region90
        $region89: #{a_call__.2} parent=85 // pred_region
          %p4136 = scmp.lt.s32.totalorder %s18, 1
          %s4137 = scalar_select %p4136, %s18, 1
          %s4138 = smul.addr %s4137, 8
          %s4139 = scalar_lea.vmem %s3, %s4138
        $region90: #{a_call__.2} parent=85 // pred_fallthru
          _
        // Predicated region
        $region91: #{a_call__.2} parent=85 // pred_check
          %p4140 = pneg %p135
        $region92: #{a_call__.2} parent=85 // pred_check_branch
          %4142 = sbr.rel (%p4140) target = $region94
        $region93: #{a_call__.2} parent=85 // pred_region
          %p4143 = scmp.lt.s32.totalorder %s18, 1
          %s4144 = scalar_select %p4143, %s18, 1
          %s4145 = smul.addr %s4144, 8
          %s4146 = scalar_lea.vmem %s4, %s4145
        $region94: #{a_call__.2} parent=85 // pred_fallthru
          _
        // Predicated region
        $region95: #{a_call__.2} parent=85 // pred_check
          %p4147 = pneg %p161
        $region96: #{a_call__.2} parent=85 // pred_check_branch
          %4149 = sbr.rel (%p4147) target = $region98
        $region97: #{a_call__.2} parent=85 // pred_region
          %p4150 = scmp.lt.s32.totalorder %s18, 1
          %s4151 = scalar_select %p4150, %s18, 1
          %s4152 = smul.addr %s4151, 8
          %s4153 = scalar_lea.vmem %s5, %s4152
        $region98: #{a_call__.2} parent=85 // pred_fallthru
          _
      $region86: #{a_call__.2} parent=5 // pred_fallthru
        _
    $region6: #{a_call__.2} parent=1 // loop_footer
      %s16 = sadd.s32 1, %s12
    $region7: #{a_call__.2} parent=1 // loop_footer_branch
      %11 = sbr.rel target = $region3
    $region8: #{a_call__.2} parent=1 // loop_exit
      _

</llo_original>
